<compile_context>
chip_gen: v7x
topology: tpu7x:2x2x1
jax: 0.10.0
libtpu: 0.0.40
codegen_flags: <defaults>
</compile_context>

<pallas_src>
import functools

import numpy as np
import jax
import jax.numpy as jnp
from jax.experimental import pallas as pl
from jax.experimental.pallas import tpu as pltpu


_VMEM_LIMIT_BYTES = 32 * 1024 * 1024  # explicit scoped-VMEM budget (v5e/v6e/v7x safe)


def _round_up(x, m):
    return (x + m - 1) // m * m


def _compiler_params():
    return pltpu.CompilerParams(
        dimension_semantics=("parallel",),     # batch / M-tile axis -> megacore
        vmem_limit_bytes=_VMEM_LIMIT_BYTES,
    )


# ---------------------------------------------------------------------------
# Space-to-depth: turns a stride-s conv into a stride-1 conv with s*s*C input
# channels.  Pure relayout (same byte count) done by XLA on tiny activations —
# this replaces the im2col expansion + HBM round trip of the old version.
# Channel order after s2d is (si, sj, c); the weight packing below matches it.
# ---------------------------------------------------------------------------
def _space_to_depth_nchw(x, s):
    b, c, h, w = x.shape
    x = x.reshape(b, c, h // s, s, w // s, s)
    x = x.transpose(0, 2, 4, 3, 5, 1)          # (b, hb, wb, si, sj, c)
    return x.reshape(b, h // s, w // s, s * s * c)


def _space_to_depth_nhwc(x, s):
    b, h, w, c = x.shape
    x = x.reshape(b, h // s, s, w // s, s, c)
    x = x.transpose(0, 1, 3, 2, 4, 5)          # (b, hb, wb, si, sj, c)
    return x.reshape(b, h // s, w // s, s * s * c)


# ---------------------------------------------------------------------------
# Conv kernel: relu(conv_stride1(x) + b) for ONE sample, expressed as kh*kw
# shifted MXU matmuls.  The activation arrives as a flattened
# (H*W + kw - 1, Cin) slab, so every per-tap operand is a plain contiguous 2-D
# slice (no in-kernel reshape, no strided access, no im2col buffer).
#   output row r = p*W + q  <->  spatial position (p, q);
#   columns q >= ow of each output row are junk and are dropped by the caller.
# ---------------------------------------------------------------------------
def _conv_kernel(x_ref, w_ref, b_ref, o_ref, *, kh, kw, win, out_rows):
    acc = None
    for i in range(kh):                                   # static unroll: <= 9 taps
        for j in range(kw):
            start = i * win + j
            slab = x_ref[start:start + out_rows, :]       # (M, Cin) bf16, unit stride
            part = jnp.dot(slab, w_ref[i * kw + j],       # (Cin, OC) bf16 -> f32 acc
                           preferred_element_type=jnp.float32)
            acc = part if acc is None else acc + part
    acc = jnp.maximum(acc + b_ref[...], 0.0)              # bias + ReLU in f32
    o_ref[...] = acc.astype(o_ref.dtype)


def _conv_layer(x_nhwc, w_packed, b_row, kh, kw):
    """x_nhwc: (B,H,W,Cin); w_packed: (kh*kw, Cin, OC) bf16; b_row: (1, OC) f32."""
    bsz, h, w, cin = x_nhwc.shape
    oh, ow = h - kh + 1, w - kw + 1
    out_rows = oh * w
    oc = w_packed.shape[-1]

    # Flatten spatial dims (free for contiguous NHWC) and pad kw-1 rows so the
    # last tap's slab read stays in bounds (the tail only feeds junk columns).
    x2d = x_nhwc.reshape(bsz, h * w, cin).astype(jnp.bfloat16)
    x2d = jnp.pad(x2d, ((0, 0), (0, kw - 1), (0, 0)))
    rows = x2d.shape[1]

    kernel = functools.partial(_conv_kernel, kh=kh, kw=kw, win=w, out_rows=out_rows)
    out = pl.pallas_call(
        kernel,
        out_shape=jax.ShapeDtypeStruct((bsz, out_rows, oc), jnp.bfloat16),
        grid=(bsz,),                                       # one sample per grid step
        in_specs=[
            pl.BlockSpec((None, rows, cin), lambda i: (i, 0, 0)),   # activation tile
            pl.BlockSpec(w_packed.shape, lambda i: (0, 0, 0)),      # VMEM-resident
            pl.BlockSpec(b_row.shape, lambda i: (0, 0)),            # VMEM-resident
        ],
        out_specs=pl.BlockSpec((None, out_rows, oc), lambda i: (i, 0, 0)),
        compiler_params=_compiler_params(),
    )(x2d, w_packed, b_row)

    # (B, oh*W, OC) -> (B, oh, ow, OC): drop the kw-1 junk columns per row.
    return out.reshape(bsz, oh, w, oc)[:, :, :ow, :]


# ---------------------------------------------------------------------------
# FC head: relu(x @ W7 + b7) @ W8 + b8, both linears fused in one pallas_call.
# W7 (3136x512 bf16, 3.2 MiB) stays VMEM-resident; batch rows are M-tiled.
# ---------------------------------------------------------------------------
def _fc_head_kernel(x_ref, w7_ref, b7_ref, w8_ref, b8_ref, o_ref):
    h = jnp.dot(x_ref[...], w7_ref[...], preferred_element_type=jnp.float32)
    h = jnp.maximum(h + b7_ref[...], 0.0)
    y = jnp.dot(h.astype(jnp.bfloat16), w8_ref[...],
                preferred_element_type=jnp.float32)
    y = y + b8_ref[...]
    o_ref[...] = y[:, : o_ref.shape[-1]]              # keep only the 2 real outputs


def _fc_head(x, w7, b7, w8, b8, n_out):
    bsz, k = x.shape
    mp = _round_up(bsz, 16)                           # bf16 sublane tile is 16
    tile_m = 256                                      # 256*3136*2B = 1.6 MiB / tile
    if mp > tile_m:
        mp = _round_up(bsz, tile_m)
        tm = tile_m
    else:
        tm = mp
    xp = jnp.zeros((mp, k), jnp.bfloat16).at[:bsz].set(x.astype(jnp.bfloat16))

    out = pl.pallas_call(
        _fc_head_kernel,
        out_shape=jax.ShapeDtypeStruct((mp, n_out), jnp.float32),
        grid=(mp // tm,),
        in_specs=[
            pl.BlockSpec((tm, k), lambda i: (i, 0)),        # M-tiled, pipelined
            pl.BlockSpec(w7.shape, lambda i: (0, 0)),       # resident weights
            pl.BlockSpec(b7.shape, lambda i: (0, 0)),
            pl.BlockSpec(w8.shape, lambda i: (0, 0)),
            pl.BlockSpec(b8.shape, lambda i: (0, 0)),
        ],
        out_specs=pl.BlockSpec((tm, n_out), lambda i: (i, 0)),
        compiler_params=_compiler_params(),
    )(xp, w7, b7, w8, b8)
    return out[:bsz]


# ---------------------------------------------------------------------------
# Parameters (PyTorch layouts) and one-time packing into kernel layouts.
# ---------------------------------------------------------------------------
def init_params(key):
    ks = jax.random.split(key, 10)

    def conv_w(k, shape):
        fan_in = shape[1] * shape[2] * shape[3]
        return jax.random.normal(k, shape, jnp.float32) * (1.0 / fan_in) ** 0.5

    def lin_w(k, shape):
        return jax.random.normal(k, shape, jnp.float32) * (1.0 / shape[1]) ** 0.5

    return {
        "w1": conv_w(ks[0], (32, 4, 8, 8)),
        "b1": jax.random.normal(ks[1], (32,), jnp.float32) * 0.01,
        "w2": conv_w(ks[2], (64, 32, 4, 4)),
        "b2": jax.random.normal(ks[3], (64,), jnp.float32) * 0.01,
        "w3": conv_w(ks[4], (64, 64, 3, 3)),
        "b3": jax.random.normal(ks[5], (64,), jnp.float32) * 0.01,
        "w_fc7": lin_w(ks[6], (512, 3136)),   # nn.Linear(3136, 512) layout
        "b_fc7": jax.random.normal(ks[7], (512,), jnp.float32) * 0.01,
        "w_fc8": lin_w(ks[8], (2, 512)),      # nn.Linear(512, 2) layout
        "b_fc8": jax.random.normal(ks[9], (2,), jnp.float32) * 0.01,
    }


def pack_params(p):
    """One-time weight preprocessing (transpose / s2d-pack / pad / bf16 cast)."""

    def pack_conv_s2d(w, s):
        # (OC, C, kh, kw) -> (taps=(kh/s)*(kw/s), s*s*C, OC); tap order (bi, bj),
        # channel order (si, sj, c) -- matches _space_to_depth_* above.
        oc, c, kh, kw = w.shape
        kbh, kbw = kh // s, kw // s
        w = w.reshape(oc, c, kbh, s, kbw, s).transpose(2, 4, 3, 5, 1, 0)
        return w.reshape(kbh * kbw, s * s * c, oc).astype(jnp.bfloat16)

    def pack_conv(w):
        oc, c, kh, kw = w.shape                 # stride-1 conv: no s2d needed
        return w.transpose(2, 3, 1, 0).reshape(kh * kw, c, oc).astype(jnp.bfloat16)

    # fc7: PyTorch flattens NCHW (c*49 + h*7 + w); our activations are NHWC, so
    # permute (512,64,7,7) -> (512,7,7,64) before flattening, then transpose.
    w7 = p["w_fc7"].reshape(512, 64, 7, 7).transpose(0, 2, 3, 1).reshape(512, 3136)
    w7 = w7.T.astype(jnp.bfloat16)                              # (3136, 512)

    # fc8: (2, 512) -> (512, 2); pad N to one 128-lane tile for the in-kernel
    # MXU epilogue (only the first 2 columns are ever written out).
    w8 = jnp.pad(p["w_fc8"].T, ((0, 0), (0, 126))).astype(jnp.bfloat16)   # (512, 128)
    b8 = jnp.pad(p["b_fc8"], (0, 126)).reshape(1, 128).astype(jnp.float32)

    return {
        "w1": pack_conv_s2d(p["w1"], 4), "b1": p["b1"].reshape(1, -1),
        "w2": pack_conv_s2d(p["w2"], 2), "b2": p["b2"].reshape(1, -1),
        "w3": pack_conv(p["w3"]),        "b3": p["b3"].reshape(1, -1),
        "w7": w7,                        "b7": p["b_fc7"].reshape(1, -1),
        "w8": w8,                        "b8": b8,
    }


# ---------------------------------------------------------------------------
# Forward pass (Pallas) and pure-JAX reference (for verification).
# ---------------------------------------------------------------------------
def forward(packed, x):
    """x: (B, 4, 84, 84) NCHW f32 (PyTorch convention) -> (B, 2) Q-values, f32."""
    h = _space_to_depth_nchw(x, 4)                                   # (B,21,21,64)
    h = _conv_layer(h, packed["w1"], packed["b1"], 2, 2)             # (B,20,20,32)
    h = _space_to_depth_nhwc(h, 2)                                   # (B,10,10,128)
    h = _conv_layer(h, packed["w2"], packed["b2"], 2, 2)             # (B,9,9,64)
    h = _conv_layer(h, packed["w3"], packed["b3"], 3, 3)             # (B,7,7,64)
    h = h.reshape(h.shape[0], -1)                                    # NHWC flatten
    # TODO(synk): conv3 + FC head could be fused into a single pallas_call to
    # hide the fc7 weight DMA behind conv3 compute at tiny batch sizes.
    return _fc_head(h, packed["w7"], packed["b7"], packed["w8"], packed["b8"], 2)


def reference_forward(params, x):
    """Pure-JAX f32 reference with PyTorch NCHW semantics."""
    def conv(h, w, b, s):
        y = jax.lax.conv_general_dilated(
            h, w, window_strides=(s, s), padding="VALID",
            dimension_numbers=("NCHW", "OIHW", "NCHW"))
        return jax.nn.relu(y + b[None, :, None, None])

    h = conv(x, params["w1"], params["b1"], 4)
    h = conv(h, params["w2"], params["b2"], 2)
    h = conv(h, params["w3"], params["b3"], 1)
    h = h.reshape(h.shape[0], -1)                        # NCHW flatten (C*H*W)
    h = jax.nn.relu(h @ params["w_fc7"].T + params["b_fc7"])
    return h @ params["w_fc8"].T + params["b_fc8"]


if __name__ == "__main__":
    key = jax.random.PRNGKey(0)
    k_param, k_x = jax.random.split(key)
    params = init_params(k_param)
    packed = pack_params(params)           # one-time weight packing (not per call)

    # 84x84x4 input is what Linear(3136, 512) implies: 84 -> 20 -> 9 -> 7.
    x = jax.random.normal(k_x, (2, 4, 84, 84), jnp.float32)

    fwd = jax.jit(forward)
    out = fwd(packed, x)
    jax.block_until_ready(out)
    assert out.shape == (2, 2) and out.dtype == jnp.float32

    # Verify against the pure-JAX f32 reference (bf16 MXU operands -> loose tol).
    ref = jax.jit(reference_forward)(params, x)
    np.testing.assert_allclose(np.asarray(out), np.asarray(ref), rtol=0.05, atol=0.05)
    print("KERNEL_OK")
</pallas_src>

<mosaic_0001>
module attributes {stable_mosaic.version = 11 : i64} {
  func.func @_conv_kernel(%arg0: i32, %arg1: memref<1x442x64xbf16, #tpu.memory_space<vmem>>, %arg2: memref<4x64x32xbf16, #tpu.memory_space<vmem>>, %arg3: memref<1x32xf32, #tpu.memory_space<vmem>>, %arg4: memref<1x420x32xbf16, #tpu.memory_space<vmem>>) attributes {dimension_semantics = [#tpu.dimension_semantics<parallel>], iteration_bounds = array<i64: 2>, scalar_prefetch = 0 : i64, scratch_operands = 0 : i64, tpu.core_type = #tpu.core_type<tc>, window_params = [{transform_indices = @transform_0, window_bounds = array<i64: 1, 442, 64>}, {pipeline_mode = #tpu.pipeline_mode<synchronous>, transform_indices = @transform_1, window_bounds = array<i64: 4, 64, 32>}, {pipeline_mode = #tpu.pipeline_mode<synchronous>, transform_indices = @transform_2, window_bounds = array<i64: 1, 32>}, {transform_indices = @transform_3, window_bounds = array<i64: 1, 420, 32>}]} {
    %c0 = arith.constant 0 : index
    %c0_0 = arith.constant 0 : index
    %c0_1 = arith.constant 0 : index
    %0 = vector.load %arg1[%c0, %c0_0, %c0_1] : memref<1x442x64xbf16, #tpu.memory_space<vmem>>, vector<1x420x64xbf16>
    %1 = vector.shape_cast %0 : vector<1x420x64xbf16> to vector<420x64xbf16>
    %c0_2 = arith.constant 0 : index
    %c0_3 = arith.constant 0 : index
    %c0_4 = arith.constant 0 : index
    %2 = vector.load %arg2[%c0_2, %c0_3, %c0_4] : memref<4x64x32xbf16, #tpu.memory_space<vmem>>, vector<1x64x32xbf16>
    %3 = vector.shape_cast %2 : vector<1x64x32xbf16> to vector<64x32xbf16>
    %cst = arith.constant dense<0.000000e+00> : vector<420x32xf32>
    %4 = tpu.matmul %1, %3, %cst {dimension_numbers = #tpu.dot_dimension_numbers<[1], [0], [0], [1], [0, 0, 1, 1], [], []>} : vector<420x64xbf16>, vector<64x32xbf16>, vector<420x32xf32> -> vector<420x32xf32>
    %c0_5 = arith.constant 0 : index
    %c1 = arith.constant 1 : index
    %c0_6 = arith.constant 0 : index
    %5 = vector.load %arg1[%c0_5, %c1, %c0_6] : memref<1x442x64xbf16, #tpu.memory_space<vmem>>, vector<1x420x64xbf16>
    %6 = vector.shape_cast %5 : vector<1x420x64xbf16> to vector<420x64xbf16>
    %c1_7 = arith.constant 1 : index
    %c0_8 = arith.constant 0 : index
    %c0_9 = arith.constant 0 : index
    %7 = vector.load %arg2[%c1_7, %c0_8, %c0_9] : memref<4x64x32xbf16, #tpu.memory_space<vmem>>, vector<1x64x32xbf16>
    %8 = vector.shape_cast %7 : vector<1x64x32xbf16> to vector<64x32xbf16>
    %cst_10 = arith.constant dense<0.000000e+00> : vector<420x32xf32>
    %9 = tpu.matmul %6, %8, %cst_10 {dimension_numbers = #tpu.dot_dimension_numbers<[1], [0], [0], [1], [0, 0, 1, 1], [], []>} : vector<420x64xbf16>, vector<64x32xbf16>, vector<420x32xf32> -> vector<420x32xf32>
    %10 = arith.addf %4, %9 : vector<420x32xf32>
    %c0_11 = arith.constant 0 : index
    %c21 = arith.constant 21 : index
    %c0_12 = arith.constant 0 : index
    %11 = vector.load %arg1[%c0_11, %c21, %c0_12] : memref<1x442x64xbf16, #tpu.memory_space<vmem>>, vector<1x420x64xbf16>
    %12 = vector.shape_cast %11 : vector<1x420x64xbf16> to vector<420x64xbf16>
    %c2 = arith.constant 2 : index
    %c0_13 = arith.constant 0 : index
    %c0_14 = arith.constant 0 : index
    %13 = vector.load %arg2[%c2, %c0_13, %c0_14] : memref<4x64x32xbf16, #tpu.memory_space<vmem>>, vector<1x64x32xbf16>
    %14 = vector.shape_cast %13 : vector<1x64x32xbf16> to vector<64x32xbf16>
    %cst_15 = arith.constant dense<0.000000e+00> : vector<420x32xf32>
    %15 = tpu.matmul %12, %14, %cst_15 {dimension_numbers = #tpu.dot_dimension_numbers<[1], [0], [0], [1], [0, 0, 1, 1], [], []>} : vector<420x64xbf16>, vector<64x32xbf16>, vector<420x32xf32> -> vector<420x32xf32>
    %16 = arith.addf %10, %15 : vector<420x32xf32>
    %c0_16 = arith.constant 0 : index
    %c22 = arith.constant 22 : index
    %c0_17 = arith.constant 0 : index
    %17 = vector.load %arg1[%c0_16, %c22, %c0_17] : memref<1x442x64xbf16, #tpu.memory_space<vmem>>, vector<1x420x64xbf16>
    %18 = vector.shape_cast %17 : vector<1x420x64xbf16> to vector<420x64xbf16>
    %c3 = arith.constant 3 : index
    %c0_18 = arith.constant 0 : index
    %c0_19 = arith.constant 0 : index
    %19 = vector.load %arg2[%c3, %c0_18, %c0_19] : memref<4x64x32xbf16, #tpu.memory_space<vmem>>, vector<1x64x32xbf16>
    %20 = vector.shape_cast %19 : vector<1x64x32xbf16> to vector<64x32xbf16>
    %cst_20 = arith.constant dense<0.000000e+00> : vector<420x32xf32>
    %21 = tpu.matmul %18, %20, %cst_20 {dimension_numbers = #tpu.dot_dimension_numbers<[1], [0], [0], [1], [0, 0, 1, 1], [], []>} : vector<420x64xbf16>, vector<64x32xbf16>, vector<420x32xf32> -> vector<420x32xf32>
    %22 = arith.addf %16, %21 : vector<420x32xf32>
    %c0_21 = arith.constant 0 : index
    %c0_22 = arith.constant 0 : index
    %23 = vector.load %arg3[%c0_21, %c0_22] : memref<1x32xf32, #tpu.memory_space<vmem>>, vector<1x32xf32>
    %24 = vector.broadcast %23 : vector<1x32xf32> to vector<420x32xf32>
    %25 = arith.addf %22, %24 : vector<420x32xf32>
    %cst_23 = arith.constant 0.000000e+00 : f32
    %26 = vector.broadcast %cst_23 : f32 to vector<420x32xf32>
    %27 = arith.maximumf %25, %26 : vector<420x32xf32>
    %28 = arith.truncf %27 : vector<420x32xf32> to vector<420x32xbf16>
    %c0_24 = arith.constant 0 : index
    %c0_25 = arith.constant 0 : index
    %c0_26 = arith.constant 0 : index
    %29 = vector.load %arg4[%c0_24, %c0_25, %c0_26] : memref<1x420x32xbf16, #tpu.memory_space<vmem>>, vector<1x420x32xbf16>
    %30 = vector.shape_cast %29 : vector<1x420x32xbf16> to vector<420x32xbf16>
    %31 = vector.shape_cast %28 : vector<420x32xbf16> to vector<1x420x32xbf16>
    tpu.vector_store %arg4[%c0_24, %c0_25, %c0_26], %31 {strides = array<i32>} : memref<1x420x32xbf16, #tpu.memory_space<vmem>>, vector<1x420x32xbf16>,
    return
  }
  func.func @transform_0(%arg0: i32) -> (i32, i32, i32) {
    %c0_i32 = arith.constant 0 : i32
    %c0_i32_0 = arith.constant 0 : i32
    %c0_i32_1 = arith.constant 0 : i32
    return %arg0, %c0_i32, %c0_i32_0 : i32, i32, i32
  }
  func.func @transform_1(%arg0: i32) -> (i32, i32, i32) {
    %c0_i32 = arith.constant 0 : i32
    %c0_i32_0 = arith.constant 0 : i32
    %c0_i32_1 = arith.constant 0 : i32
    %c0_i32_2 = arith.constant 0 : i32
    return %c0_i32, %c0_i32_0, %c0_i32_1 : i32, i32, i32
  }
  func.func @transform_2(%arg0: i32) -> (i32, i32) {
    %c0_i32 = arith.constant 0 : i32
    %c0_i32_0 = arith.constant 0 : i32
    %c0_i32_1 = arith.constant 0 : i32
    return %c0_i32, %c0_i32_0 : i32, i32
  }
  func.func @transform_3(%arg0: i32) -> (i32, i32, i32) {
    %c0_i32 = arith.constant 0 : i32
    %c0_i32_0 = arith.constant 0 : i32
    %c0_i32_1 = arith.constant 0 : i32
    return %arg0, %c0_i32, %c0_i32_0 : i32, i32, i32
  }
}

module attributes {stable_mosaic.version = 11 : i64} {
  func.func @_conv_kernel(%arg0: i32, %arg1: memref<1x101x128xbf16, #tpu.memory_space<vmem>>, %arg2: memref<4x128x64xbf16, #tpu.memory_space<vmem>>, %arg3: memref<1x64xf32, #tpu.memory_space<vmem>>, %arg4: memref<1x90x64xbf16, #tpu.memory_space<vmem>>) attributes {dimension_semantics = [#tpu.dimension_semantics<parallel>], iteration_bounds = array<i64: 2>, scalar_prefetch = 0 : i64, scratch_operands = 0 : i64, tpu.core_type = #tpu.core_type<tc>, window_params = [{transform_indices = @transform_0, window_bounds = array<i64: 1, 101, 128>}, {pipeline_mode = #tpu.pipeline_mode<synchronous>, transform_indices = @transform_1, window_bounds = array<i64: 4, 128, 64>}, {pipeline_mode = #tpu.pipeline_mode<synchronous>, transform_indices = @transform_2, window_bounds = array<i64: 1, 64>}, {transform_indices = @transform_3, window_bounds = array<i64: 1, 90, 64>}]} {
    %c0 = arith.constant 0 : index
    %c0_0 = arith.constant 0 : index
    %c0_1 = arith.constant 0 : index
    %0 = vector.load %arg1[%c0, %c0_0, %c0_1] : memref<1x101x128xbf16, #tpu.memory_space<vmem>>, vector<1x90x128xbf16>
    %1 = vector.shape_cast %0 : vector<1x90x128xbf16> to vector<90x128xbf16>
    %c0_2 = arith.constant 0 : index
    %c0_3 = arith.constant 0 : index
    %c0_4 = arith.constant 0 : index
    %2 = vector.load %arg2[%c0_2, %c0_3, %c0_4] : memref<4x128x64xbf16, #tpu.memory_space<vmem>>, vector<1x128x64xbf16>
    %3 = vector.shape_cast %2 : vector<1x128x64xbf16> to vector<128x64xbf16>
    %cst = arith.constant dense<0.000000e+00> : vector<90x64xf32>
    %4 = tpu.matmul %1, %3, %cst {dimension_numbers = #tpu.dot_dimension_numbers<[1], [0], [0], [1], [0, 0, 1, 1], [], []>} : vector<90x128xbf16>, vector<128x64xbf16>, vector<90x64xf32> -> vector<90x64xf32>
    %c0_5 = arith.constant 0 : index
    %c1 = arith.constant 1 : index
    %c0_6 = arith.constant 0 : index
    %5 = vector.load %arg1[%c0_5, %c1, %c0_6] : memref<1x101x128xbf16, #tpu.memory_space<vmem>>, vector<1x90x128xbf16>
    %6 = vector.shape_cast %5 : vector<1x90x128xbf16> to vector<90x128xbf16>
    %c1_7 = arith.constant 1 : index
    %c0_8 = arith.constant 0 : index
    %c0_9 = arith.constant 0 : index
    %7 = vector.load %arg2[%c1_7, %c0_8, %c0_9] : memref<4x128x64xbf16, #tpu.memory_space<vmem>>, vector<1x128x64xbf16>
    %8 = vector.shape_cast %7 : vector<1x128x64xbf16> to vector<128x64xbf16>
    %cst_10 = arith.constant dense<0.000000e+00> : vector<90x64xf32>
    %9 = tpu.matmul %6, %8, %cst_10 {dimension_numbers = #tpu.dot_dimension_numbers<[1], [0], [0], [1], [0, 0, 1, 1], [], []>} : vector<90x128xbf16>, vector<128x64xbf16>, vector<90x64xf32> -> vector<90x64xf32>
    %10 = arith.addf %4, %9 : vector<90x64xf32>
    %c0_11 = arith.constant 0 : index
    %c10 = arith.constant 10 : index
    %c0_12 = arith.constant 0 : index
    %11 = vector.load %arg1[%c0_11, %c10, %c0_12] : memref<1x101x128xbf16, #tpu.memory_space<vmem>>, vector<1x90x128xbf16>
    %12 = vector.shape_cast %11 : vector<1x90x128xbf16> to vector<90x128xbf16>
    %c2 = arith.constant 2 : index
    %c0_13 = arith.constant 0 : index
    %c0_14 = arith.constant 0 : index
    %13 = vector.load %arg2[%c2, %c0_13, %c0_14] : memref<4x128x64xbf16, #tpu.memory_space<vmem>>, vector<1x128x64xbf16>
    %14 = vector.shape_cast %13 : vector<1x128x64xbf16> to vector<128x64xbf16>
    %cst_15 = arith.constant dense<0.000000e+00> : vector<90x64xf32>
    %15 = tpu.matmul %12, %14, %cst_15 {dimension_numbers = #tpu.dot_dimension_numbers<[1], [0], [0], [1], [0, 0, 1, 1], [], []>} : vector<90x128xbf16>, vector<128x64xbf16>, vector<90x64xf32> -> vector<90x64xf32>
    %16 = arith.addf %10, %15 : vector<90x64xf32>
    %c0_16 = arith.constant 0 : index
    %c11 = arith.constant 11 : index
    %c0_17 = arith.constant 0 : index
    %17 = vector.load %arg1[%c0_16, %c11, %c0_17] : memref<1x101x128xbf16, #tpu.memory_space<vmem>>, vector<1x90x128xbf16>
    %18 = vector.shape_cast %17 : vector<1x90x128xbf16> to vector<90x128xbf16>
    %c3 = arith.constant 3 : index
    %c0_18 = arith.constant 0 : index
    %c0_19 = arith.constant 0 : index
    %19 = vector.load %arg2[%c3, %c0_18, %c0_19] : memref<4x128x64xbf16, #tpu.memory_space<vmem>>, vector<1x128x64xbf16>
    %20 = vector.shape_cast %19 : vector<1x128x64xbf16> to vector<128x64xbf16>
    %cst_20 = arith.constant dense<0.000000e+00> : vector<90x64xf32>
    %21 = tpu.matmul %18, %20, %cst_20 {dimension_numbers = #tpu.dot_dimension_numbers<[1], [0], [0], [1], [0, 0, 1, 1], [], []>} : vector<90x128xbf16>, vector<128x64xbf16>, vector<90x64xf32> -> vector<90x64xf32>
    %22 = arith.addf %16, %21 : vector<90x64xf32>
    %c0_21 = arith.constant 0 : index
    %c0_22 = arith.constant 0 : index
    %23 = vector.load %arg3[%c0_21, %c0_22] : memref<1x64xf32, #tpu.memory_space<vmem>>, vector<1x64xf32>
    %24 = vector.broadcast %23 : vector<1x64xf32> to vector<90x64xf32>
    %25 = arith.addf %22, %24 : vector<90x64xf32>
    %cst_23 = arith.constant 0.000000e+00 : f32
    %26 = vector.broadcast %cst_23 : f32 to vector<90x64xf32>
    %27 = arith.maximumf %25, %26 : vector<90x64xf32>
    %28 = arith.truncf %27 : vector<90x64xf32> to vector<90x64xbf16>
    %c0_24 = arith.constant 0 : index
    %c0_25 = arith.constant 0 : index
    %c0_26 = arith.constant 0 : index
    %29 = vector.load %arg4[%c0_24, %c0_25, %c0_26] : memref<1x90x64xbf16, #tpu.memory_space<vmem>>, vector<1x90x64xbf16>
    %30 = vector.shape_cast %29 : vector<1x90x64xbf16> to vector<90x64xbf16>
    %31 = vector.shape_cast %28 : vector<90x64xbf16> to vector<1x90x64xbf16>
    tpu.vector_store %arg4[%c0_24, %c0_25, %c0_26], %31 {strides = array<i32>} : memref<1x90x64xbf16, #tpu.memory_space<vmem>>, vector<1x90x64xbf16>,
    return
  }
  func.func @transform_0(%arg0: i32) -> (i32, i32, i32) {
    %c0_i32 = arith.constant 0 : i32
    %c0_i32_0 = arith.constant 0 : i32
    %c0_i32_1 = arith.constant 0 : i32
    return %arg0, %c0_i32, %c0_i32_0 : i32, i32, i32
  }
  func.func @transform_1(%arg0: i32) -> (i32, i32, i32) {
    %c0_i32 = arith.constant 0 : i32
    %c0_i32_0 = arith.constant 0 : i32
    %c0_i32_1 = arith.constant 0 : i32
    %c0_i32_2 = arith.constant 0 : i32
    return %c0_i32, %c0_i32_0, %c0_i32_1 : i32, i32, i32
  }
  func.func @transform_2(%arg0: i32) -> (i32, i32) {
    %c0_i32 = arith.constant 0 : i32
    %c0_i32_0 = arith.constant 0 : i32
    %c0_i32_1 = arith.constant 0 : i32
    return %c0_i32, %c0_i32_0 : i32, i32
  }
  func.func @transform_3(%arg0: i32) -> (i32, i32, i32) {
    %c0_i32 = arith.constant 0 : i32
    %c0_i32_0 = arith.constant 0 : i32
    %c0_i32_1 = arith.constant 0 : i32
    return %arg0, %c0_i32, %c0_i32_0 : i32, i32, i32
  }
}

module attributes {stable_mosaic.version = 11 : i64} {
  func.func @_conv_kernel(%arg0: i32, %arg1: memref<1x83x64xbf16, #tpu.memory_space<vmem>>, %arg2: memref<9x64x64xbf16, #tpu.memory_space<vmem>>, %arg3: memref<1x64xf32, #tpu.memory_space<vmem>>, %arg4: memref<1x63x64xbf16, #tpu.memory_space<vmem>>) attributes {dimension_semantics = [#tpu.dimension_semantics<parallel>], iteration_bounds = array<i64: 2>, scalar_prefetch = 0 : i64, scratch_operands = 0 : i64, tpu.core_type = #tpu.core_type<tc>, window_params = [{transform_indices = @transform_0, window_bounds = array<i64: 1, 83, 64>}, {pipeline_mode = #tpu.pipeline_mode<synchronous>, transform_indices = @transform_1, window_bounds = array<i64: 9, 64, 64>}, {pipeline_mode = #tpu.pipeline_mode<synchronous>, transform_indices = @transform_2, window_bounds = array<i64: 1, 64>}, {transform_indices = @transform_3, window_bounds = array<i64: 1, 63, 64>}]} {
    %c0 = arith.constant 0 : index
    %c0_0 = arith.constant 0 : index
    %c0_1 = arith.constant 0 : index
    %0 = vector.load %arg1[%c0, %c0_0, %c0_1] : memref<1x83x64xbf16, #tpu.memory_space<vmem>>, vector<1x63x64xbf16>
    %1 = vector.shape_cast %0 : vector<1x63x64xbf16> to vector<63x64xbf16>
    %c0_2 = arith.constant 0 : index
    %c0_3 = arith.constant 0 : index
    %c0_4 = arith.constant 0 : index
    %2 = vector.load %arg2[%c0_2, %c0_3, %c0_4] : memref<9x64x64xbf16, #tpu.memory_space<vmem>>, vector<1x64x64xbf16>
    %3 = vector.shape_cast %2 : vector<1x64x64xbf16> to vector<64x64xbf16>
    %cst = arith.constant dense<0.000000e+00> : vector<63x64xf32>
    %4 = tpu.matmul %1, %3, %cst {dimension_numbers = #tpu.dot_dimension_numbers<[1], [0], [0], [1], [0, 0, 1, 1], [], []>} : vector<63x64xbf16>, vector<64x64xbf16>, vector<63x64xf32> -> vector<63x64xf32>
    %c0_5 = arith.constant 0 : index
    %c1 = arith.constant 1 : index
    %c0_6 = arith.constant 0 : index
    %5 = vector.load %arg1[%c0_5, %c1, %c0_6] : memref<1x83x64xbf16, #tpu.memory_space<vmem>>, vector<1x63x64xbf16>
    %6 = vector.shape_cast %5 : vector<1x63x64xbf16> to vector<63x64xbf16>
    %c1_7 = arith.constant 1 : index
    %c0_8 = arith.constant 0 : index
    %c0_9 = arith.constant 0 : index
    %7 = vector.load %arg2[%c1_7, %c0_8, %c0_9] : memref<9x64x64xbf16, #tpu.memory_space<vmem>>, vector<1x64x64xbf16>
    %8 = vector.shape_cast %7 : vector<1x64x64xbf16> to vector<64x64xbf16>
    %cst_10 = arith.constant dense<0.000000e+00> : vector<63x64xf32>
    %9 = tpu.matmul %6, %8, %cst_10 {dimension_numbers = #tpu.dot_dimension_numbers<[1], [0], [0], [1], [0, 0, 1, 1], [], []>} : vector<63x64xbf16>, vector<64x64xbf16>, vector<63x64xf32> -> vector<63x64xf32>
    %10 = arith.addf %4, %9 : vector<63x64xf32>
    %c0_11 = arith.constant 0 : index
    %c2 = arith.constant 2 : index
    %c0_12 = arith.constant 0 : index
    %11 = vector.load %arg1[%c0_11, %c2, %c0_12] : memref<1x83x64xbf16, #tpu.memory_space<vmem>>, vector<1x63x64xbf16>
    %12 = vector.shape_cast %11 : vector<1x63x64xbf16> to vector<63x64xbf16>
    %c2_13 = arith.constant 2 : index
    %c0_14 = arith.constant 0 : index
    %c0_15 = arith.constant 0 : index
    %13 = vector.load %arg2[%c2_13, %c0_14, %c0_15] : memref<9x64x64xbf16, #tpu.memory_space<vmem>>, vector<1x64x64xbf16>
    %14 = vector.shape_cast %13 : vector<1x64x64xbf16> to vector<64x64xbf16>
    %cst_16 = arith.constant dense<0.000000e+00> : vector<63x64xf32>
    %15 = tpu.matmul %12, %14, %cst_16 {dimension_numbers = #tpu.dot_dimension_numbers<[1], [0], [0], [1], [0, 0, 1, 1], [], []>} : vector<63x64xbf16>, vector<64x64xbf16>, vector<63x64xf32> -> vector<63x64xf32>
    %16 = arith.addf %10, %15 : vector<63x64xf32>
    %c0_17 = arith.constant 0 : index
    %c9 = arith.constant 9 : index
    %c0_18 = arith.constant 0 : index
    %17 = vector.load %arg1[%c0_17, %c9, %c0_18] : memref<1x83x64xbf16, #tpu.memory_space<vmem>>, vector<1x63x64xbf16>
    %18 = vector.shape_cast %17 : vector<1x63x64xbf16> to vector<63x64xbf16>
    %c3 = arith.constant 3 : index
    %c0_19 = arith.constant 0 : index
    %c0_20 = arith.constant 0 : index
    %19 = vector.load %arg2[%c3, %c0_19, %c0_20] : memref<9x64x64xbf16, #tpu.memory_space<vmem>>, vector<1x64x64xbf16>
    %20 = vector.shape_cast %19 : vector<1x64x64xbf16> to vector<64x64xbf16>
    %cst_21 = arith.constant dense<0.000000e+00> : vector<63x64xf32>
    %21 = tpu.matmul %18, %20, %cst_21 {dimension_numbers = #tpu.dot_dimension_numbers<[1], [0], [0], [1], [0, 0, 1, 1], [], []>} : vector<63x64xbf16>, vector<64x64xbf16>, vector<63x64xf32> -> vector<63x64xf32>
    %22 = arith.addf %16, %21 : vector<63x64xf32>
    %c0_22 = arith.constant 0 : index
    %c10 = arith.constant 10 : index
    %c0_23 = arith.constant 0 : index
    %23 = vector.load %arg1[%c0_22, %c10, %c0_23] : memref<1x83x64xbf16, #tpu.memory_space<vmem>>, vector<1x63x64xbf16>
    %24 = vector.shape_cast %23 : vector<1x63x64xbf16> to vector<63x64xbf16>
    %c4 = arith.constant 4 : index
    %c0_24 = arith.constant 0 : index
    %c0_25 = arith.constant 0 : index
    %25 = vector.load %arg2[%c4, %c0_24, %c0_25] : memref<9x64x64xbf16, #tpu.memory_space<vmem>>, vector<1x64x64xbf16>
    %26 = vector.shape_cast %25 : vector<1x64x64xbf16> to vector<64x64xbf16>
    %cst_26 = arith.constant dense<0.000000e+00> : vector<63x64xf32>
    %27 = tpu.matmul %24, %26, %cst_26 {dimension_numbers = #tpu.dot_dimension_numbers<[1], [0], [0], [1], [0, 0, 1, 1], [], []>} : vector<63x64xbf16>, vector<64x64xbf16>, vector<63x64xf32> -> vector<63x64xf32>
    %28 = arith.addf %22, %27 : vector<63x64xf32>
    %c0_27 = arith.constant 0 : index
    %c11 = arith.constant 11 : index
    %c0_28 = arith.constant 0 : index
    %29 = vector.load %arg1[%c0_27, %c11, %c0_28] : memref<1x83x64xbf16, #tpu.memory_space<vmem>>, vector<1x63x64xbf16>
    %30 = vector.shape_cast %29 : vector<1x63x64xbf16> to vector<63x64xbf16>
    %c5 = arith.constant 5 : index
    %c0_29 = arith.constant 0 : index
    %c0_30 = arith.constant 0 : index
    %31 = vector.load %arg2[%c5, %c0_29, %c0_30] : memref<9x64x64xbf16, #tpu.memory_space<vmem>>, vector<1x64x64xbf16>
    %32 = vector.shape_cast %31 : vector<1x64x64xbf16> to vector<64x64xbf16>
    %cst_31 = arith.constant dense<0.000000e+00> : vector<63x64xf32>
    %33 = tpu.matmul %30, %32, %cst_31 {dimension_numbers = #tpu.dot_dimension_numbers<[1], [0], [0], [1], [0, 0, 1, 1], [], []>} : vector<63x64xbf16>, vector<64x64xbf16>, vector<63x64xf32> -> vector<63x64xf32>
    %34 = arith.addf %28, %33 : vector<63x64xf32>
    %c0_32 = arith.constant 0 : index
    %c18 = arith.constant 18 : index
    %c0_33 = arith.constant 0 : index
    %35 = vector.load %arg1[%c0_32, %c18, %c0_33] : memref<1x83x64xbf16, #tpu.memory_space<vmem>>, vector<1x63x64xbf16>
    %36 = vector.shape_cast %35 : vector<1x63x64xbf16> to vector<63x64xbf16>
    %c6 = arith.constant 6 : index
    %c0_34 = arith.constant 0 : index
    %c0_35 = arith.constant 0 : index
    %37 = vector.load %arg2[%c6, %c0_34, %c0_35] : memref<9x64x64xbf16, #tpu.memory_space<vmem>>, vector<1x64x64xbf16>
    %38 = vector.shape_cast %37 : vector<1x64x64xbf16> to vector<64x64xbf16>
    %cst_36 = arith.constant dense<0.000000e+00> : vector<63x64xf32>
    %39 = tpu.matmul %36, %38, %cst_36 {dimension_numbers = #tpu.dot_dimension_numbers<[1], [0], [0], [1], [0, 0, 1, 1], [], []>} : vector<63x64xbf16>, vector<64x64xbf16>, vector<63x64xf32> -> vector<63x64xf32>
    %40 = arith.addf %34, %39 : vector<63x64xf32>
    %c0_37 = arith.constant 0 : index
    %c19 = arith.constant 19 : index
    %c0_38 = arith.constant 0 : index
    %41 = vector.load %arg1[%c0_37, %c19, %c0_38] : memref<1x83x64xbf16, #tpu.memory_space<vmem>>, vector<1x63x64xbf16>
    %42 = vector.shape_cast %41 : vector<1x63x64xbf16> to vector<63x64xbf16>
    %c7 = arith.constant 7 : index
    %c0_39 = arith.constant 0 : index
    %c0_40 = arith.constant 0 : index
    %43 = vector.load %arg2[%c7, %c0_39, %c0_40] : memref<9x64x64xbf16, #tpu.memory_space<vmem>>, vector<1x64x64xbf16>
    %44 = vector.shape_cast %43 : vector<1x64x64xbf16> to vector<64x64xbf16>
    %cst_41 = arith.constant dense<0.000000e+00> : vector<63x64xf32>
    %45 = tpu.matmul %42, %44, %cst_41 {dimension_numbers = #tpu.dot_dimension_numbers<[1], [0], [0], [1], [0, 0, 1, 1], [], []>} : vector<63x64xbf16>, vector<64x64xbf16>, vector<63x64xf32> -> vector<63x64xf32>
    %46 = arith.addf %40, %45 : vector<63x64xf32>
    %c0_42 = arith.constant 0 : index
    %c20 = arith.constant 20 : index
    %c0_43 = arith.constant 0 : index
    %47 = vector.load %arg1[%c0_42, %c20, %c0_43] : memref<1x83x64xbf16, #tpu.memory_space<vmem>>, vector<1x63x64xbf16>
    %48 = vector.shape_cast %47 : vector<1x63x64xbf16> to vector<63x64xbf16>
    %c8 = arith.constant 8 : index
    %c0_44 = arith.constant 0 : index
    %c0_45 = arith.constant 0 : index
    %49 = vector.load %arg2[%c8, %c0_44, %c0_45] : memref<9x64x64xbf16, #tpu.memory_space<vmem>>, vector<1x64x64xbf16>
    %50 = vector.shape_cast %49 : vector<1x64x64xbf16> to vector<64x64xbf16>
    %cst_46 = arith.constant dense<0.000000e+00> : vector<63x64xf32>
    %51 = tpu.matmul %48, %50, %cst_46 {dimension_numbers = #tpu.dot_dimension_numbers<[1], [0], [0], [1], [0, 0, 1, 1], [], []>} : vector<63x64xbf16>, vector<64x64xbf16>, vector<63x64xf32> -> vector<63x64xf32>
    %52 = arith.addf %46, %51 : vector<63x64xf32>
    %c0_47 = arith.constant 0 : index
    %c0_48 = arith.constant 0 : index
    %53 = vector.load %arg3[%c0_47, %c0_48] : memref<1x64xf32, #tpu.memory_space<vmem>>, vector<1x64xf32>
    %54 = vector.broadcast %53 : vector<1x64xf32> to vector<63x64xf32>
    %55 = arith.addf %52, %54 : vector<63x64xf32>
    %cst_49 = arith.constant 0.000000e+00 : f32
    %56 = vector.broadcast %cst_49 : f32 to vector<63x64xf32>
    %57 = arith.maximumf %55, %56 : vector<63x64xf32>
    %58 = arith.truncf %57 : vector<63x64xf32> to vector<63x64xbf16>
    %c0_50 = arith.constant 0 : index
    %c0_51 = arith.constant 0 : index
    %c0_52 = arith.constant 0 : index
    %59 = vector.load %arg4[%c0_50, %c0_51, %c0_52] : memref<1x63x64xbf16, #tpu.memory_space<vmem>>, vector<1x63x64xbf16>
    %60 = vector.shape_cast %59 : vector<1x63x64xbf16> to vector<63x64xbf16>
    %61 = vector.shape_cast %58 : vector<63x64xbf16> to vector<1x63x64xbf16>
    tpu.vector_store %arg4[%c0_50, %c0_51, %c0_52], %61 {strides = array<i32>} : memref<1x63x64xbf16, #tpu.memory_space<vmem>>, vector<1x63x64xbf16>,
    return
  }
  func.func @transform_0(%arg0: i32) -> (i32, i32, i32) {
    %c0_i32 = arith.constant 0 : i32
    %c0_i32_0 = arith.constant 0 : i32
    %c0_i32_1 = arith.constant 0 : i32
    return %arg0, %c0_i32, %c0_i32_0 : i32, i32, i32
  }
  func.func @transform_1(%arg0: i32) -> (i32, i32, i32) {
    %c0_i32 = arith.constant 0 : i32
    %c0_i32_0 = arith.constant 0 : i32
    %c0_i32_1 = arith.constant 0 : i32
    %c0_i32_2 = arith.constant 0 : i32
    return %c0_i32, %c0_i32_0, %c0_i32_1 : i32, i32, i32
  }
  func.func @transform_2(%arg0: i32) -> (i32, i32) {
    %c0_i32 = arith.constant 0 : i32
    %c0_i32_0 = arith.constant 0 : i32
    %c0_i32_1 = arith.constant 0 : i32
    return %c0_i32, %c0_i32_0 : i32, i32
  }
  func.func @transform_3(%arg0: i32) -> (i32, i32, i32) {
    %c0_i32 = arith.constant 0 : i32
    %c0_i32_0 = arith.constant 0 : i32
    %c0_i32_1 = arith.constant 0 : i32
    return %arg0, %c0_i32, %c0_i32_0 : i32, i32, i32
  }
}

module attributes {stable_mosaic.version = 11 : i64} {
  func.func @_fc_head_kernel(%arg0: i32, %arg1: memref<16x3136xbf16, #tpu.memory_space<vmem>>, %arg2: memref<3136x512xbf16, #tpu.memory_space<vmem>>, %arg3: memref<1x512xf32, #tpu.memory_space<vmem>>, %arg4: memref<512x128xbf16, #tpu.memory_space<vmem>>, %arg5: memref<1x128xf32, #tpu.memory_space<vmem>>, %arg6: memref<16x2xf32, #tpu.memory_space<vmem>>) attributes {dimension_semantics = [#tpu.dimension_semantics<parallel>], iteration_bounds = array<i64: 1>, scalar_prefetch = 0 : i64, scratch_operands = 0 : i64, tpu.core_type = #tpu.core_type<tc>, window_params = [{transform_indices = @transform_0, window_bounds = array<i64: 16, 3136>}, {pipeline_mode = #tpu.pipeline_mode<synchronous>, transform_indices = @transform_1, window_bounds = array<i64: 3136, 512>}, {pipeline_mode = #tpu.pipeline_mode<synchronous>, transform_indices = @transform_2, window_bounds = array<i64: 1, 512>}, {pipeline_mode = #tpu.pipeline_mode<synchronous>, transform_indices = @transform_3, window_bounds = array<i64: 512, 128>}, {pipeline_mode = #tpu.pipeline_mode<synchronous>, transform_indices = @transform_4, window_bounds = array<i64: 1, 128>}, {transform_indices = @transform_5, window_bounds = array<i64: 16, 2>}]} {
    %c0 = arith.constant 0 : index
    %c0_0 = arith.constant 0 : index
    %0 = vector.load %arg1[%c0, %c0_0] : memref<16x3136xbf16, #tpu.memory_space<vmem>>, vector<16x3136xbf16>
    %c0_1 = arith.constant 0 : index
    %c0_2 = arith.constant 0 : index
    %1 = vector.load %arg2[%c0_1, %c0_2] : memref<3136x512xbf16, #tpu.memory_space<vmem>>, vector<3136x512xbf16>
    %cst = arith.constant dense<0.000000e+00> : vector<16x512xf32>
    %2 = tpu.matmul %0, %1, %cst {dimension_numbers = #tpu.dot_dimension_numbers<[1], [0], [0], [1], [0, 0, 1, 1], [], []>} : vector<16x3136xbf16>, vector<3136x512xbf16>, vector<16x512xf32> -> vector<16x512xf32>
    %c0_3 = arith.constant 0 : index
    %c0_4 = arith.constant 0 : index
    %3 = vector.load %arg3[%c0_3, %c0_4] : memref<1x512xf32, #tpu.memory_space<vmem>>, vector<1x512xf32>
    %4 = vector.broadcast %3 : vector<1x512xf32> to vector<16x512xf32>
    %5 = arith.addf %2, %4 : vector<16x512xf32>
    %cst_5 = arith.constant 0.000000e+00 : f32
    %6 = vector.broadcast %cst_5 : f32 to vector<16x512xf32>
    %7 = arith.maximumf %5, %6 : vector<16x512xf32>
    %8 = arith.truncf %7 : vector<16x512xf32> to vector<16x512xbf16>
    %c0_6 = arith.constant 0 : index
    %c0_7 = arith.constant 0 : index
    %9 = vector.load %arg4[%c0_6, %c0_7] : memref<512x128xbf16, #tpu.memory_space<vmem>>, vector<512x128xbf16>
    %cst_8 = arith.constant dense<0.000000e+00> : vector<16x128xf32>
    %10 = tpu.matmul %8, %9, %cst_8 {dimension_numbers = #tpu.dot_dimension_numbers<[1], [0], [0], [1], [0, 0, 1, 1], [], []>} : vector<16x512xbf16>, vector<512x128xbf16>, vector<16x128xf32> -> vector<16x128xf32>
    %c0_9 = arith.constant 0 : index
    %c0_10 = arith.constant 0 : index
    %11 = vector.load %arg5[%c0_9, %c0_10] : memref<1x128xf32, #tpu.memory_space<vmem>>, vector<1x128xf32>
    %12 = vector.broadcast %11 : vector<1x128xf32> to vector<16x128xf32>
    %13 = arith.addf %10, %12 : vector<16x128xf32>
    %14 = vector.extract_strided_slice %13 {offsets = [0, 0], sizes = [16, 2], strides = [1, 1]} : vector<16x128xf32> to vector<16x2xf32>
    %c0_11 = arith.constant 0 : index
    %c0_12 = arith.constant 0 : index
    %15 = vector.load %arg6[%c0_11, %c0_12] : memref<16x2xf32, #tpu.memory_space<vmem>>, vector<16x2xf32>
    tpu.vector_store %arg6[%c0_11, %c0_12], %14 {strides = array<i32>} : memref<16x2xf32, #tpu.memory_space<vmem>>, vector<16x2xf32>,
    return
  }
  func.func @transform_0(%arg0: i32) -> (i32, i32) {
    %c0_i32 = arith.constant 0 : i32
    %c0_i32_0 = arith.constant 0 : i32
    return %arg0, %c0_i32 : i32, i32
  }
  func.func @transform_1(%arg0: i32) -> (i32, i32) {
    %c0_i32 = arith.constant 0 : i32
    %c0_i32_0 = arith.constant 0 : i32
    %c0_i32_1 = arith.constant 0 : i32
    return %c0_i32, %c0_i32_0 : i32, i32
  }
  func.func @transform_2(%arg0: i32) -> (i32, i32) {
    %c0_i32 = arith.constant 0 : i32
    %c0_i32_0 = arith.constant 0 : i32
    %c0_i32_1 = arith.constant 0 : i32
    return %c0_i32, %c0_i32_0 : i32, i32
  }
  func.func @transform_3(%arg0: i32) -> (i32, i32) {
    %c0_i32 = arith.constant 0 : i32
    %c0_i32_0 = arith.constant 0 : i32
    %c0_i32_1 = arith.constant 0 : i32
    return %c0_i32, %c0_i32_0 : i32, i32
  }
  func.func @transform_4(%arg0: i32) -> (i32, i32) {
    %c0_i32 = arith.constant 0 : i32
    %c0_i32_0 = arith.constant 0 : i32
    %c0_i32_1 = arith.constant 0 : i32
    return %c0_i32, %c0_i32_0 : i32, i32
  }
  func.func @transform_5(%arg0: i32) -> (i32, i32) {
    %c0_i32 = arith.constant 0 : i32
    %c0_i32_0 = arith.constant 0 : i32
    return %arg0, %c0_i32 : i32, i32
  }
}

</mosaic_0001>

<llo_original>
// kernel: forward.4
$region0: #{forward.4}
  #allocation0 [shape = 'u32[]', space=smem, size = 0x4, offset = 0x4, fixed_abs, tag = 'smem constant byte address 0x4 - core index']
  #allocation1 [shape = 'u32[144,128]{1,0:T(1,128)}', space=vmem, size = 0x12000, scoped, tag = 'internal scratch']
  %s0 = inlined_call_operand.vmem [shape: bf16[2,442,64], index: 0, kind: input, shape index: {}]
  %s1 = inlined_call_operand.vmem [shape: bf16[4,64,32], index: 1, kind: input, shape index: {}]
  %s2 = inlined_call_operand.vmem [shape: f32[1,32], index: 2, kind: input, shape index: {}]
  %s3 = inlined_call_operand.vmem [shape: bf16[2,420,32], index: 3, kind: output, shape index: {}]
  %s4 = sld [smem:[#allocation0]]
  $region45: #{forward.4} parent=0
    _
  %s6 = ssub.s32 1, %s4
  %s7 = scalar_select 0, %s6, %s4
  loop: start=0, step=1, limit=4
  $region2: #{forward.4} parent=0 // loop_pre_header
    _
  $region3: #{forward.4} parent=0 // loop_header
    %s9 = sphi 0, %s13
    %p10 = scmp.ge.s32.totalorder %s9, 4
    %s19 = sphi 0, %s21
    %s22 = sphi 0, %s19
    %s23 = sphi 0, %s22
    %s39 = sphi 0, %s23
    %s43 = sphi 0, %s43
    %s45 = sphi 0, %s43
    %s46 = sphi 0, %s45
    %s60 = sphi 0, %s46
    %s64 = sphi 0, %s64
    %s66 = sphi 0, %s64
    %s67 = sphi 0, %s66
    %s81 = sphi 0, %s67
    %s87 = sphi 0, %s89
    %s90 = sphi 0, %s87
    %s91 = sphi 0, %s90
    %s107 = sphi 0, %s91
  $region4: #{forward.4} parent=0 // loop_header_branch
    %12 = sbr.rel (%p10) target = $region8
  $region5: #{forward.4} parent=0 // loop_body
    %s14 = ssub.s32 %s9, 1
    %s15 = ssub.s32 %s9, 2
    %s16 = sadd.s32 %s9, 1
    %s17 = ssub.s32 %s9, %s16
    %p18 = scmp.eq.s32.totalorder %s17, 0
    %s20 = sadd.s32 %s19, 1
    %s21 = scalar_select %p18, %s19, %s20
    %p24 = pneg %p18
    %p25 = scmp.eq.s32.totalorder %s9, 1
    %p26 = por %p24, %p25
    %p27 = scmp.ne.s32.totalorder %s19, %s22
    %p28 = scmp.eq.s32.totalorder %s9, 0
    %p29 = por %p27, %p28
    %p30 = scmp.ne.s32.totalorder %s19, %s22
    %p31 = scmp.eq.s32.totalorder %s14, 1
    %p32 = por %p30, %p31
    %p33 = scmp.ne.s32.totalorder %s22, %s23
    %p34 = scmp.eq.s32.totalorder %s14, 0
    %p35 = por %p33, %p34
    %p36 = scmp.ne.s32.totalorder %s22, %s23
    %p37 = scmp.eq.s32.totalorder %s15, 1
    %p38 = por %p36, %p37
    %p40 = scmp.ne.s32.totalorder %s23, %s39
    %p41 = scmp.eq.s32.totalorder %s15, 0
    %p42 = por %p40, %p41
    %s44 = sadd.s32 %s43, 1
    %p47 = scmp.eq.s32.totalorder %s9, 1
    %p48 = scmp.ne.s32.totalorder %s43, %s45
    %p49 = scmp.eq.s32.totalorder %s9, 0
    %p50 = por %p48, %p49
    %p51 = scmp.ne.s32.totalorder %s43, %s45
    %p52 = scmp.eq.s32.totalorder %s14, 1
    %p53 = por %p51, %p52
    %p54 = scmp.ne.s32.totalorder %s45, %s46
    %p55 = scmp.eq.s32.totalorder %s14, 0
    %p56 = por %p54, %p55
    %p57 = scmp.ne.s32.totalorder %s45, %s46
    %p58 = scmp.eq.s32.totalorder %s15, 1
    %p59 = por %p57, %p58
    %p61 = scmp.ne.s32.totalorder %s46, %s60
    %p62 = scmp.eq.s32.totalorder %s15, 0
    %p63 = por %p61, %p62
    %s65 = sadd.s32 %s64, 1
    %p68 = scmp.eq.s32.totalorder %s9, 1
    %p69 = scmp.ne.s32.totalorder %s64, %s66
    %p70 = scmp.eq.s32.totalorder %s9, 0
    %p71 = por %p69, %p70
    %p72 = scmp.ne.s32.totalorder %s64, %s66
    %p73 = scmp.eq.s32.totalorder %s14, 1
    %p74 = por %p72, %p73
    %p75 = scmp.ne.s32.totalorder %s66, %s67
    %p76 = scmp.eq.s32.totalorder %s14, 0
    %p77 = por %p75, %p76
    %p78 = scmp.ne.s32.totalorder %s66, %s67
    %p79 = scmp.eq.s32.totalorder %s15, 1
    %p80 = por %p78, %p79
    %p82 = scmp.ne.s32.totalorder %s67, %s81
    %p83 = scmp.eq.s32.totalorder %s15, 0
    %p84 = por %p82, %p83
    %s85 = ssub.s32 %s9, %s16
    %p86 = scmp.eq.s32.totalorder %s85, 0
    %s88 = sadd.s32 %s87, 1
    %s89 = scalar_select %p86, %s87, %s88
    %p92 = pneg %p86
    %p93 = scmp.eq.s32.totalorder %s9, 1
    %p94 = por %p92, %p93
    %p95 = scmp.ne.s32.totalorder %s87, %s90
    %p96 = scmp.eq.s32.totalorder %s9, 0
    %p97 = por %p95, %p96
    %p98 = scmp.ne.s32.totalorder %s87, %s90
    %p99 = scmp.eq.s32.totalorder %s14, 1
    %p100 = por %p98, %p99
    %p101 = scmp.ne.s32.totalorder %s90, %s91
    %p102 = scmp.eq.s32.totalorder %s14, 0
    %p103 = por %p101, %p102
    %p104 = scmp.ne.s32.totalorder %s90, %s91
    %p105 = scmp.eq.s32.totalorder %s15, 1
    %p106 = por %p104, %p105
    %p108 = scmp.ne.s32.totalorder %s91, %s107
    %p109 = scmp.eq.s32.totalorder %s15, 0
    %p110 = por %p108, %p109
    %p111 = scmp.le.s32.totalorder 1, %s9
    %p112 = scmp.lt.s32.totalorder %s9, 3
    %p113 = pnand %p111, %p112
    %p114 = pneg %p113
    // Predicated region
    $region9: #{forward.4} parent=5 // pred_check
      _
    $region10: #{forward.4} parent=5 // pred_check_branch
      %116 = sbr.rel (%p113) target = $region12
    $region11: #{forward.4} parent=5 // pred_region
      %s117 = ssub.s32 %s9, 1
      // Predicated region
      $region13: #{forward.4} parent=11 // pred_check
        %p118 = pneg %p56
      $region14: #{forward.4} parent=11 // pred_check_branch
        %120 = sbr.rel (%p118) target = $region16
      $region15: #{forward.4} parent=11 // pred_region
        _
      $region16: #{forward.4} parent=11 // pred_fallthru
        _
      // Predicated region
      $region17: #{forward.4} parent=11 // pred_check
        %p121 = pneg %p77
      $region18: #{forward.4} parent=11 // pred_check_branch
        %123 = sbr.rel (%p121) target = $region20
      $region19: #{forward.4} parent=11 // pred_region
        _
      $region20: #{forward.4} parent=11 // pred_fallthru
        _
    $region12: #{forward.4} parent=5 // pred_fallthru
      _
    %p124 = scmp.lt.s32.totalorder %s9, 2
    // Predicated region
    $region21: #{forward.4} parent=5 // pred_check
      %p125 = pneg %p124
    $region22: #{forward.4} parent=5 // pred_check_branch
      %127 = sbr.rel (%p125) target = $region24
    $region23: #{forward.4} parent=5 // pred_region
      // Predicated region
      $region25: #{forward.4} parent=23 // pred_check
        %p128 = pneg %p29
      $region26: #{forward.4} parent=23 // pred_check_branch
        %130 = sbr.rel (%p128) target = $region28
      $region27: #{forward.4} parent=23 // pred_region
        %p131 = scmp.lt.s32.totalorder %s9, 1
        %s132 = scalar_select %p131, %s9, 1
        %s133 = smul.addr %s132, 56
        %s134 = smul.addr %s133, 4
        %s135 = scalar_lea.vmem %s0, %s134
      $region28: #{forward.4} parent=23 // pred_fallthru
        _
    $region24: #{forward.4} parent=5 // pred_fallthru
      _
    %p136 = scmp.le.s32.totalorder 1, %s9
    %p137 = scmp.lt.s32.totalorder %s9, 3
    %p138 = pnand %p136, %p137
    %p139 = pneg %p138
    // Predicated region
    $region29: #{forward.4} parent=5 // pred_check
      _
    $region30: #{forward.4} parent=5 // pred_check_branch
      %141 = sbr.rel (%p138) target = $region32
    $region31: #{forward.4} parent=5 // pred_region
      %s142 = ssub.s32 %s9, 1
      %p143 = scmp.lt.s32.totalorder %s14, 1
      %s144 = scalar_select %p143, %s14, 1
      %s145 = smul.addr %s144, 56
      %s146 = smul.addr %s145, 4
      %s147 = scalar_lea.vmem %s0, %s146
      %p148 = pneg %p35
      %p149 = pneg %p32
      %p150 = pneg %p56
      %p151 = pneg %p53
      %p152 = pneg %p77
      %p153 = pneg %p74
      %p154 = pneg %p103
      %p155 = pneg %p100
      %p156 = scmp.lt.s32.totalorder %s14, 1
      %s157 = scalar_select %p156, %s14, 1
      %s158 = smul.addr %s157, 53
      %s159 = smul.addr %s158, 4
      %s160 = scalar_lea.vmem %s3, %s159
      %p161 = scmp.lt.s32.totalorder %s14, 1
      %s162 = scalar_select %p161, %s14, 1
      %s163 = smul.addr %s162, 56
      %s164 = smul.addr %s163, 4
      %s165 = scalar_lea.vmem %s0, %s164
      %p166 = scmp.lt.s32.totalorder %s14, 1
      %s167 = scalar_select %p166, %s14, 1
      %s168 = smul.addr %s167, 53
      %s169 = smul.addr %s168, 4
      %s170 = scalar_lea.vmem %s3, %s169
      %v172 = vld [vmem:[%s165] sm:$0xf]
      %v173 = vld [vmem:[%s165 + $0x4] sm:$0xf]
      %v174 = vld [vmem:[%s165 + $0x8] sm:$0xf]
      %v175 = vld [vmem:[%s165 + $0xc] sm:$0xf]
      %v176 = vld [vmem:[%s165 + $0x10] sm:$0xf]
      %v177 = vld [vmem:[%s165 + $0x14] sm:$0xf]
      %v178 = vld [vmem:[%s165 + $0x18] sm:$0xf]
      %v179 = vld [vmem:[%s165 + $0x1c] sm:$0xf]
      %v180 = vld [vmem:[%s165 + $0x20] sm:$0xf]
      %v181 = vld [vmem:[%s165 + $0x24] sm:$0xf]
      %v182 = vld [vmem:[%s165 + $0x28] sm:$0xf]
      %v183 = vld [vmem:[%s165 + $0x2c] sm:$0xf]
      %v184 = vld [vmem:[%s165 + $0x30] sm:$0xf]
      %v185 = vld [vmem:[%s165 + $0x34] sm:$0xf]
      %v186 = vld [vmem:[%s165 + $0x38] sm:$0xf]
      %v187 = vld [vmem:[%s165 + $0x3c] sm:$0xf]
      %v188 = vld [vmem:[%s165 + $0x40] sm:$0xf]
      %v189 = vld [vmem:[%s165 + $0x44] sm:$0xf]
      %v190 = vld [vmem:[%s165 + $0x48] sm:$0xf]
      %v191 = vld [vmem:[%s165 + $0x4c] sm:$0xf]
      %v192 = vld [vmem:[%s165 + $0x50] sm:$0xf]
      %v193 = vld [vmem:[%s165 + $0x54] sm:$0xf]
      %v194 = vld [vmem:[%s165 + $0x58] sm:$0xf]
      %v195 = vld [vmem:[%s165 + $0x5c] sm:$0xf]
      %v196 = vld [vmem:[%s165 + $0x60] sm:$0xf]
      %v197 = vld [vmem:[%s165 + $0x64] sm:$0xf]
      %v198 = vld [vmem:[%s165 + $0x68] sm:$0xf]
      %v199 = vld [vmem:[%s165 + $0x6c] sm:$0xf]
      %v200 = vld [vmem:[%s165 + $0x70] sm:$0xf]
      %v201 = vld [vmem:[%s165 + $0x74] sm:$0xf]
      %v202 = vld [vmem:[%s165 + $0x78] sm:$0xf]
      %v203 = vld [vmem:[%s165 + $0x7c] sm:$0xf]
      %v204 = vld [vmem:[%s165 + $0x80] sm:$0xf]
      %v205 = vld [vmem:[%s165 + $0x84] sm:$0xf]
      %v206 = vld [vmem:[%s165 + $0x88] sm:$0xf]
      %v207 = vld [vmem:[%s165 + $0x8c] sm:$0xf]
      %v208 = vld [vmem:[%s165 + $0x90] sm:$0xf]
      %v209 = vld [vmem:[%s165 + $0x94] sm:$0xf]
      %v210 = vld [vmem:[%s165 + $0x98] sm:$0xf]
      %v211 = vld [vmem:[%s165 + $0x9c] sm:$0xf]
      %v212 = vld [vmem:[%s165 + $0xa0] sm:$0xf]
      %v213 = vld [vmem:[%s165 + $0xa4] sm:$0xf]
      %v214 = vld [vmem:[%s165 + $0xa8] sm:$0xf]
      %v215 = vld [vmem:[%s165 + $0xac] sm:$0xf]
      %v216 = vld [vmem:[%s165 + $0xb0] sm:$0xf]
      %v217 = vld [vmem:[%s165 + $0xb4] sm:$0xf]
      %v218 = vld [vmem:[%s165 + $0xb8] sm:$0xf]
      %v219 = vld [vmem:[%s165 + $0xbc] sm:$0xf]
      %v220 = vld [vmem:[%s165 + $0xc0] sm:$0xf]
      %v221 = vld [vmem:[%s165 + $0xc4] sm:$0xf]
      %v222 = vld [vmem:[%s165 + $0xc8] sm:$0xf]
      %v223 = vld [vmem:[%s165 + $0xcc] sm:$0xf]
      %v224 = vld [vmem:[%s165 + $0xd0] sm:$0x3]
      %v225 = vld [vmem:[%s1] sm:$0xf]
      %v226 = vld [vmem:[%s1 + $0x4] sm:$0xf]
      %v227 = vld [vmem:[%s1 + $0x8] sm:$0xf]
      %v228 = vld [vmem:[%s1 + $0xc] sm:$0xf]
      %v229 = vld [vmem:[%s1 + $0x10] sm:$0xf]
      %v230 = vld [vmem:[%s1 + $0x14] sm:$0xf]
      %v231 = vld [vmem:[%s1 + $0x18] sm:$0xf]
      %v232 = vld [vmem:[%s1 + $0x1c] sm:$0xf]
      %v233 = vld [vmem:[%s165 + $0xd0] sm:$0x7]
      %s234 = scalar_lea.vmem %s1, 32
      %v235 = vld [vmem:[%s234] sm:$0xf]
      %v236 = vld [vmem:[%s234 + $0x4] sm:$0xf]
      %v237 = vld [vmem:[%s234 + $0x8] sm:$0xf]
      %v238 = vld [vmem:[%s234 + $0xc] sm:$0xf]
      %v239 = vld [vmem:[%s234 + $0x10] sm:$0xf]
      %v240 = vld [vmem:[%s234 + $0x14] sm:$0xf]
      %v241 = vld [vmem:[%s234 + $0x18] sm:$0xf]
      %v242 = vld [vmem:[%s234 + $0x1c] sm:$0xf]
      %v296 = vunpack.c.l.b16 %v172
      %v297 = vunpack.c.l.b16 %v173
      %v298 = vunpack.c.l.b16 %v174
      %v299 = vunpack.c.l.b16 %v175
      %v300 = vunpack.c.l.b16 %v176
      %v301 = vunpack.c.l.b16 %v177
      %v302 = vunpack.c.l.b16 %v178
      %v303 = vunpack.c.l.b16 %v179
      %v304 = vunpack.c.l.b16 %v180
      %v305 = vunpack.c.l.b16 %v181
      %v306 = vunpack.c.l.b16 %v182
      %v307 = vunpack.c.l.b16 %v183
      %v308 = vunpack.c.l.b16 %v184
      %v309 = vunpack.c.l.b16 %v185
      %v310 = vunpack.c.l.b16 %v186
      %v311 = vunpack.c.l.b16 %v187
      %v312 = vunpack.c.l.b16 %v188
      %v313 = vunpack.c.l.b16 %v189
      %v314 = vunpack.c.l.b16 %v190
      %v315 = vunpack.c.l.b16 %v191
      %v316 = vunpack.c.l.b16 %v192
      %v317 = vunpack.c.l.b16 %v193
      %v318 = vunpack.c.l.b16 %v194
      %v319 = vunpack.c.l.b16 %v195
      %v320 = vunpack.c.l.b16 %v196
      %v321 = vunpack.c.l.b16 %v197
      %v322 = vunpack.c.l.b16 %v198
      %v323 = vunpack.c.l.b16 %v199
      %v324 = vunpack.c.l.b16 %v200
      %v325 = vunpack.c.l.b16 %v201
      %v326 = vunpack.c.l.b16 %v202
      %v327 = vunpack.c.l.b16 %v203
      %v328 = vunpack.c.l.b16 %v204
      %v329 = vunpack.c.l.b16 %v205
      %v330 = vunpack.c.l.b16 %v206
      %v331 = vunpack.c.l.b16 %v207
      %v332 = vunpack.c.l.b16 %v208
      %v333 = vunpack.c.l.b16 %v209
      %v334 = vunpack.c.l.b16 %v210
      %v335 = vunpack.c.l.b16 %v211
      %v336 = vunpack.c.l.b16 %v212
      %v337 = vunpack.c.l.b16 %v213
      %v338 = vunpack.c.l.b16 %v214
      %v339 = vunpack.c.l.b16 %v215
      %v340 = vunpack.c.l.b16 %v216
      %v341 = vunpack.c.l.b16 %v217
      %v342 = vunpack.c.l.b16 %v218
      %v343 = vunpack.c.l.b16 %v219
      %v344 = vunpack.c.l.b16 %v220
      %v345 = vunpack.c.l.b16 %v221
      %v346 = vunpack.c.l.b16 %v222
      %v347 = vunpack.c.l.b16 %v223
      %v348 = vunpack.c.l.b16 %v233
      %v349 = vpack.c.b16 %v297, %v296
      %v350 = vpack.c.b16 %v299, %v298
      %v351 = vpack.c.b16 %v301, %v300
      %v352 = vpack.c.b16 %v303, %v302
      %v353 = vpack.c.b16 %v305, %v304
      %v354 = vpack.c.b16 %v307, %v306
      %v355 = vpack.c.b16 %v309, %v308
      %v356 = vpack.c.b16 %v311, %v310
      %v357 = vpack.c.b16 %v313, %v312
      %v358 = vpack.c.b16 %v315, %v314
      %v359 = vpack.c.b16 %v317, %v316
      %v360 = vpack.c.b16 %v319, %v318
      %v361 = vpack.c.b16 %v321, %v320
      %v362 = vpack.c.b16 %v323, %v322
      %v363 = vpack.c.b16 %v325, %v324
      %v364 = vpack.c.b16 %v327, %v326
      %v365 = vpack.c.b16 %v329, %v328
      %v366 = vpack.c.b16 %v331, %v330
      %v367 = vpack.c.b16 %v333, %v332
      %v368 = vpack.c.b16 %v335, %v334
      %v369 = vpack.c.b16 %v337, %v336
      %v370 = vpack.c.b16 %v339, %v338
      %v371 = vpack.c.b16 %v341, %v340
      %v372 = vpack.c.b16 %v343, %v342
      %v373 = vpack.c.b16 %v345, %v344
      %v374 = vpack.c.b16 %v347, %v346
      %v375 = vpack.c.b16 %v348, %v348
      %vm376 = vsmask.f32 7424
      %v378 = vshrl.u32 %v349, 16
      %v380 = vshll.u32 %v349, 16
      %v382 = vrot.slane %v380, 1
      %v383 = vor.u32 %v378, %v382
      %v385 = vshll.u32 %v350, 16
      %v387 = vrot.slane %v385, 1
      %v388 = vsel %vm376, %v383, %v387
      %v389 = vshrl.u32 %v350, 16
      %v391 = vor.u32 %v389, %v387
      %v393 = vshll.u32 %v351, 16
      %v395 = vrot.slane %v393, 1
      %v396 = vsel %vm376, %v391, %v395
      %v397 = vshrl.u32 %v351, 16
      %v399 = vor.u32 %v397, %v395
      %v401 = vshll.u32 %v352, 16
      %v403 = vrot.slane %v401, 1
      %v404 = vsel %vm376, %v399, %v403
      %v405 = vshrl.u32 %v352, 16
      %v407 = vor.u32 %v405, %v403
      %v409 = vshll.u32 %v353, 16
      %v411 = vrot.slane %v409, 1
      %v412 = vsel %vm376, %v407, %v411
      %v413 = vshrl.u32 %v353, 16
      %v415 = vor.u32 %v413, %v411
      %v417 = vshll.u32 %v354, 16
      %v419 = vrot.slane %v417, 1
      %v420 = vsel %vm376, %v415, %v419
      %v421 = vshrl.u32 %v354, 16
      %v423 = vor.u32 %v421, %v419
      %v425 = vshll.u32 %v355, 16
      %v427 = vrot.slane %v425, 1
      %v428 = vsel %vm376, %v423, %v427
      %v429 = vshrl.u32 %v355, 16
      %v431 = vor.u32 %v429, %v427
      %v433 = vshll.u32 %v356, 16
      %v435 = vrot.slane %v433, 1
      %v436 = vsel %vm376, %v431, %v435
      %v437 = vshrl.u32 %v356, 16
      %v439 = vor.u32 %v437, %v435
      %v441 = vshll.u32 %v357, 16
      %v443 = vrot.slane %v441, 1
      %v444 = vsel %vm376, %v439, %v443
      %v445 = vshrl.u32 %v357, 16
      %v447 = vor.u32 %v445, %v443
      %v449 = vshll.u32 %v358, 16
      %v451 = vrot.slane %v449, 1
      %v452 = vsel %vm376, %v447, %v451
      %v453 = vshrl.u32 %v358, 16
      %v455 = vor.u32 %v453, %v451
      %v457 = vshll.u32 %v359, 16
      %v459 = vrot.slane %v457, 1
      %v460 = vsel %vm376, %v455, %v459
      %v461 = vshrl.u32 %v359, 16
      %v463 = vor.u32 %v461, %v459
      %v465 = vshll.u32 %v360, 16
      %v467 = vrot.slane %v465, 1
      %v468 = vsel %vm376, %v463, %v467
      %v469 = vshrl.u32 %v360, 16
      %v471 = vor.u32 %v469, %v467
      %v473 = vshll.u32 %v361, 16
      %v475 = vrot.slane %v473, 1
      %v476 = vsel %vm376, %v471, %v475
      %v477 = vshrl.u32 %v361, 16
      %v479 = vor.u32 %v477, %v475
      %v481 = vshll.u32 %v362, 16
      %v483 = vrot.slane %v481, 1
      %v484 = vsel %vm376, %v479, %v483
      %v485 = vshrl.u32 %v362, 16
      %v487 = vor.u32 %v485, %v483
      %v489 = vshll.u32 %v363, 16
      %v491 = vrot.slane %v489, 1
      %v492 = vsel %vm376, %v487, %v491
      %v493 = vshrl.u32 %v363, 16
      %v495 = vor.u32 %v493, %v491
      %v497 = vshll.u32 %v364, 16
      %v499 = vrot.slane %v497, 1
      %v500 = vsel %vm376, %v495, %v499
      %v501 = vshrl.u32 %v364, 16
      %v503 = vor.u32 %v501, %v499
      %v505 = vshll.u32 %v365, 16
      %v507 = vrot.slane %v505, 1
      %v508 = vsel %vm376, %v503, %v507
      %v509 = vshrl.u32 %v365, 16
      %v511 = vor.u32 %v509, %v507
      %v513 = vshll.u32 %v366, 16
      %v515 = vrot.slane %v513, 1
      %v516 = vsel %vm376, %v511, %v515
      %v517 = vshrl.u32 %v366, 16
      %v519 = vor.u32 %v517, %v515
      %v521 = vshll.u32 %v367, 16
      %v523 = vrot.slane %v521, 1
      %v524 = vsel %vm376, %v519, %v523
      %v525 = vshrl.u32 %v367, 16
      %v527 = vor.u32 %v525, %v523
      %v529 = vshll.u32 %v368, 16
      %v531 = vrot.slane %v529, 1
      %v532 = vsel %vm376, %v527, %v531
      %v533 = vshrl.u32 %v368, 16
      %v535 = vor.u32 %v533, %v531
      %v537 = vshll.u32 %v369, 16
      %v539 = vrot.slane %v537, 1
      %v540 = vsel %vm376, %v535, %v539
      %v541 = vshrl.u32 %v369, 16
      %v543 = vor.u32 %v541, %v539
      %v545 = vshll.u32 %v370, 16
      %v547 = vrot.slane %v545, 1
      %v548 = vsel %vm376, %v543, %v547
      %v549 = vshrl.u32 %v370, 16
      %v551 = vor.u32 %v549, %v547
      %v553 = vshll.u32 %v371, 16
      %v555 = vrot.slane %v553, 1
      %v556 = vsel %vm376, %v551, %v555
      %v557 = vshrl.u32 %v371, 16
      %v559 = vor.u32 %v557, %v555
      %v561 = vshll.u32 %v372, 16
      %v563 = vrot.slane %v561, 1
      %v564 = vsel %vm376, %v559, %v563
      %v565 = vshrl.u32 %v372, 16
      %v567 = vor.u32 %v565, %v563
      %v569 = vshll.u32 %v373, 16
      %v571 = vrot.slane %v569, 1
      %v572 = vsel %vm376, %v567, %v571
      %v573 = vshrl.u32 %v373, 16
      %v575 = vor.u32 %v573, %v571
      %v577 = vshll.u32 %v374, 16
      %v579 = vrot.slane %v577, 1
      %v580 = vsel %vm376, %v575, %v579
      %v581 = vshrl.u32 %v374, 16
      %v583 = vor.u32 %v581, %v579
      %v585 = vshll.u32 %v375, 16
      %v587 = vrot.slane %v585, 1
      %v588 = vsel %vm376, %v583, %v587
      %v589 = vshrl.u32 %v375, 16
      %v591 = vor.u32 %v589, %v587
      %v600 = vunpack.c.l.b16 %v235
      %v601 = vunpack.c.l.b16 %v236
      %v602 = vunpack.c.l.b16 %v237
      %v603 = vunpack.c.l.b16 %v238
      %v604 = vunpack.c.l.b16 %v239
      %v605 = vunpack.c.l.b16 %v240
      %v606 = vunpack.c.l.b16 %v241
      %v607 = vunpack.c.l.b16 %v242
      %v608 = vpack.c.b16 %v601, %v600
      %v609 = vpack.c.b16 %v603, %v602
      %v610 = vpack.c.b16 %v605, %v604
      %v611 = vpack.c.b16 %v607, %v606
      %vm616 = vcmask 523264
      %v618 = vsel %vm616, %v388, 0
      %v621 = vsel %vm616, %v396, 0
      %v624 = vsel %vm616, %v404, 0
      %v627 = vsel %vm616, %v412, 0
      %v630 = vsel %vm616, %v420, 0
      %v633 = vsel %vm616, %v428, 0
      %v636 = vsel %vm616, %v436, 0
      %v639 = vsel %vm616, %v444, 0
      %v642 = vsel %vm616, %v452, 0
      %v645 = vsel %vm616, %v460, 0
      %v648 = vsel %vm616, %v468, 0
      %v651 = vsel %vm616, %v476, 0
      %v654 = vsel %vm616, %v484, 0
      %v657 = vsel %vm616, %v492, 0
      %v660 = vsel %vm616, %v500, 0
      %v663 = vsel %vm616, %v508, 0
      %v666 = vsel %vm616, %v516, 0
      %v669 = vsel %vm616, %v524, 0
      %v672 = vsel %vm616, %v532, 0
      %v675 = vsel %vm616, %v540, 0
      %v678 = vsel %vm616, %v548, 0
      %v681 = vsel %vm616, %v556, 0
      %v684 = vsel %vm616, %v564, 0
      %v687 = vsel %vm616, %v572, 0
      %v690 = vsel %vm616, %v580, 0
      %v693 = vsel %vm616, %v588, 0
      %v696 = vsel %vm616, %v591, 0
      %698 = vmatprep.subr.bf16.mxu0 0
      %699 = vmatpush1.bf16.msra.mxu0 %v608
      %700 = vmatprep.subr.bf16.mxu0 0
      %701 = vmatpush1.bf16.msra.mxu0 %v609
      %702 = vmatprep.subr.bf16.mxu0 0
      %703 = vmatpush1.bf16.msra.mxu0 %v610
      %704 = vmatprep.subr.bf16.mxu0 0
      %705 = vmatpush1.bf16.msra.mxu0 %v611
      %706 = vmatprep.subr.bf16.mxu0 0
      %707 = vmatpush1.bf16.msra.mxu0 0
      %708 = vmatprep.subr.bf16.mxu0 0
      %709 = vmatpush1.bf16.msra.mxu0 0
      %710 = vmatprep.subr.bf16.mxu0 0
      %711 = vmatpush1.bf16.msra.mxu0 0
      %712 = vmatprep.subr.bf16.mxu0 0
      %713 = vmatpush1.bf16.msra.mxu0 0
      %714 = vmatprep.subr.bf16.mxu0 0
      %715 = vmatpush1.bf16.msra.mxu0 0
      %716 = vmatprep.subr.bf16.mxu0 0
      %717 = vmatpush1.bf16.msra.mxu0 0
      %718 = vmatprep.subr.bf16.mxu0 0
      %719 = vmatpush1.bf16.msra.mxu0 0
      %720 = vmatprep.subr.bf16.mxu0 0
      %721 = vmatpush1.bf16.msra.mxu0 0
      %722 = vmatprep.subr.bf16.mxu0 0
      %723 = vmatpush1.bf16.msra.mxu0 0
      %724 = vmatprep.subr.bf16.mxu0 0
      %725 = vmatpush1.bf16.msra.mxu0 0
      %726 = vmatprep.subr.bf16.mxu0 0
      %727 = vmatpush1.bf16.msra.mxu0 0
      %728 = vmatprep.subr.bf16.mxu0 0
      %729 = vmatpush1.bf16.msra.mxu0 0
      %730 = vmatprep.mubr.bf16.mxu0 0
      %731 = vmatmul.mubr.bf16.gmra.mrb[0].mxu0 %v618
      %v732 = vpop.f32.mrb[0].mxu0
      %v733 = vadd.f32 0.0, %v732
      %v734 = vpop.f32.mrb[0].mxu0
      %v735 = vpop.f32.mrb[0].mxu0
      %v736 = vadd.f32 0.0, %v735
      %v737 = vpop.f32.mrb[0].mxu0
      %738 = vmatprep.mubr.bf16.mxu0 0
      %739 = vmatmul.mubr.bf16.gmra.mrb[0].mxu0 %v621
      %v740 = vpop.f32.mrb[0].mxu0
      %v741 = vadd.f32 0.0, %v740
      %v742 = vpop.f32.mrb[0].mxu0
      %v743 = vpop.f32.mrb[0].mxu0
      %v744 = vadd.f32 0.0, %v743
      %v745 = vpop.f32.mrb[0].mxu0
      %746 = vmatprep.mubr.bf16.mxu0 0
      %747 = vmatmul.mubr.bf16.gmra.mrb[0].mxu0 %v624
      %v748 = vpop.f32.mrb[0].mxu0
      %v749 = vadd.f32 0.0, %v748
      %v750 = vpop.f32.mrb[0].mxu0
      %v751 = vpop.f32.mrb[0].mxu0
      %v752 = vadd.f32 0.0, %v751
      %v753 = vpop.f32.mrb[0].mxu0
      %754 = vmatprep.mubr.bf16.mxu0 0
      %755 = vmatmul.mubr.bf16.gmra.mrb[0].mxu0 %v627
      %v756 = vpop.f32.mrb[0].mxu0
      %v757 = vadd.f32 0.0, %v756
      %v758 = vpop.f32.mrb[0].mxu0
      %v759 = vpop.f32.mrb[0].mxu0
      %v760 = vadd.f32 0.0, %v759
      %v761 = vpop.f32.mrb[0].mxu0
      %762 = vmatprep.mubr.bf16.mxu0 0
      %763 = vmatmul.mubr.bf16.gmra.mrb[0].mxu0 %v630
      %v764 = vpop.f32.mrb[0].mxu0
      %v765 = vadd.f32 0.0, %v764
      %v766 = vpop.f32.mrb[0].mxu0
      %v767 = vpop.f32.mrb[0].mxu0
      %v768 = vadd.f32 0.0, %v767
      %v769 = vpop.f32.mrb[0].mxu0
      %770 = vmatprep.mubr.bf16.mxu0 0
      %771 = vmatmul.mubr.bf16.gmra.mrb[0].mxu0 %v633
      %v772 = vpop.f32.mrb[0].mxu0
      %v773 = vadd.f32 0.0, %v772
      %v774 = vpop.f32.mrb[0].mxu0
      %v775 = vpop.f32.mrb[0].mxu0
      %v776 = vadd.f32 0.0, %v775
      %v777 = vpop.f32.mrb[0].mxu0
      %778 = vmatprep.mubr.bf16.mxu0 0
      %779 = vmatmul.mubr.bf16.gmra.mrb[0].mxu0 %v636
      %v780 = vpop.f32.mrb[0].mxu0
      %v781 = vadd.f32 0.0, %v780
      %v782 = vpop.f32.mrb[0].mxu0
      %v783 = vpop.f32.mrb[0].mxu0
      %v784 = vadd.f32 0.0, %v783
      %v785 = vpop.f32.mrb[0].mxu0
      %786 = vmatprep.mubr.bf16.mxu0 0
      %787 = vmatmul.mubr.bf16.gmra.mrb[0].mxu0 %v639
      %v788 = vpop.f32.mrb[0].mxu0
      %v789 = vadd.f32 0.0, %v788
      %v790 = vpop.f32.mrb[0].mxu0
      %v791 = vpop.f32.mrb[0].mxu0
      %v792 = vadd.f32 0.0, %v791
      %v793 = vpop.f32.mrb[0].mxu0
      %794 = vmatprep.mubr.bf16.mxu0 0
      %795 = vmatmul.mubr.bf16.gmra.mrb[0].mxu0 %v642
      %v796 = vpop.f32.mrb[0].mxu0
      %v797 = vadd.f32 0.0, %v796
      %v798 = vpop.f32.mrb[0].mxu0
      %v799 = vpop.f32.mrb[0].mxu0
      %v800 = vadd.f32 0.0, %v799
      %v801 = vpop.f32.mrb[0].mxu0
      %802 = vmatprep.mubr.bf16.mxu0 0
      %803 = vmatmul.mubr.bf16.gmra.mrb[0].mxu0 %v645
      %v804 = vpop.f32.mrb[0].mxu0
      %v805 = vadd.f32 0.0, %v804
      %v806 = vpop.f32.mrb[0].mxu0
      %v807 = vpop.f32.mrb[0].mxu0
      %v808 = vadd.f32 0.0, %v807
      %v809 = vpop.f32.mrb[0].mxu0
      %810 = vmatprep.mubr.bf16.mxu0 0
      %811 = vmatmul.mubr.bf16.gmra.mrb[0].mxu0 %v648
      %v812 = vpop.f32.mrb[0].mxu0
      %v813 = vadd.f32 0.0, %v812
      %v814 = vpop.f32.mrb[0].mxu0
      %v815 = vpop.f32.mrb[0].mxu0
      %v816 = vadd.f32 0.0, %v815
      %v817 = vpop.f32.mrb[0].mxu0
      %818 = vmatprep.mubr.bf16.mxu0 0
      %819 = vmatmul.mubr.bf16.gmra.mrb[0].mxu0 %v651
      %v820 = vpop.f32.mrb[0].mxu0
      %v821 = vadd.f32 0.0, %v820
      %v822 = vpop.f32.mrb[0].mxu0
      %v823 = vpop.f32.mrb[0].mxu0
      %v824 = vadd.f32 0.0, %v823
      %v825 = vpop.f32.mrb[0].mxu0
      %826 = vmatprep.mubr.bf16.mxu0 0
      %827 = vmatmul.mubr.bf16.gmra.mrb[0].mxu0 %v654
      %v828 = vpop.f32.mrb[0].mxu0
      %v829 = vadd.f32 0.0, %v828
      %v830 = vpop.f32.mrb[0].mxu0
      %v831 = vpop.f32.mrb[0].mxu0
      %v832 = vadd.f32 0.0, %v831
      %v833 = vpop.f32.mrb[0].mxu0
      %834 = vmatprep.mubr.bf16.mxu0 0
      %835 = vmatmul.mubr.bf16.gmra.mrb[0].mxu0 %v657
      %v836 = vpop.f32.mrb[0].mxu0
      %v837 = vadd.f32 0.0, %v836
      %v838 = vpop.f32.mrb[0].mxu0
      %v839 = vpop.f32.mrb[0].mxu0
      %v840 = vadd.f32 0.0, %v839
      %v841 = vpop.f32.mrb[0].mxu0
      %842 = vmatprep.mubr.bf16.mxu0 0
      %843 = vmatmul.mubr.bf16.gmra.mrb[0].mxu0 %v660
      %v844 = vpop.f32.mrb[0].mxu0
      %v845 = vadd.f32 0.0, %v844
      %v846 = vpop.f32.mrb[0].mxu0
      %v847 = vpop.f32.mrb[0].mxu0
      %v848 = vadd.f32 0.0, %v847
      %v849 = vpop.f32.mrb[0].mxu0
      %850 = vmatprep.mubr.bf16.mxu0 0
      %851 = vmatmul.mubr.bf16.gmra.mrb[0].mxu0 %v663
      %v852 = vpop.f32.mrb[0].mxu0
      %v853 = vadd.f32 0.0, %v852
      %v854 = vpop.f32.mrb[0].mxu0
      %v855 = vpop.f32.mrb[0].mxu0
      %v856 = vadd.f32 0.0, %v855
      %v857 = vpop.f32.mrb[0].mxu0
      %858 = vmatprep.mubr.bf16.mxu0 0
      %859 = vmatmul.mubr.bf16.gmra.mrb[0].mxu0 %v666
      %v860 = vpop.f32.mrb[0].mxu0
      %v861 = vadd.f32 0.0, %v860
      %v862 = vpop.f32.mrb[0].mxu0
      %v863 = vpop.f32.mrb[0].mxu0
      %v864 = vadd.f32 0.0, %v863
      %v865 = vpop.f32.mrb[0].mxu0
      %866 = vmatprep.mubr.bf16.mxu0 0
      %867 = vmatmul.mubr.bf16.gmra.mrb[0].mxu0 %v669
      %v868 = vpop.f32.mrb[0].mxu0
      %v869 = vadd.f32 0.0, %v868
      %v870 = vpop.f32.mrb[0].mxu0
      %v871 = vpop.f32.mrb[0].mxu0
      %v872 = vadd.f32 0.0, %v871
      %v873 = vpop.f32.mrb[0].mxu0
      %874 = vmatprep.mubr.bf16.mxu0 0
      %875 = vmatmul.mubr.bf16.gmra.mrb[0].mxu0 %v672
      %v876 = vpop.f32.mrb[0].mxu0
      %v877 = vadd.f32 0.0, %v876
      %v878 = vpop.f32.mrb[0].mxu0
      %v879 = vpop.f32.mrb[0].mxu0
      %v880 = vadd.f32 0.0, %v879
      %v881 = vpop.f32.mrb[0].mxu0
      %882 = vmatprep.mubr.bf16.mxu0 0
      %883 = vmatmul.mubr.bf16.gmra.mrb[0].mxu0 %v675
      %v884 = vpop.f32.mrb[0].mxu0
      %v885 = vadd.f32 0.0, %v884
      %v886 = vpop.f32.mrb[0].mxu0
      %v887 = vpop.f32.mrb[0].mxu0
      %v888 = vadd.f32 0.0, %v887
      %v889 = vpop.f32.mrb[0].mxu0
      %890 = vmatprep.mubr.bf16.mxu0 0
      %891 = vmatmul.mubr.bf16.gmra.mrb[0].mxu0 %v678
      %v892 = vpop.f32.mrb[0].mxu0
      %v893 = vadd.f32 0.0, %v892
      %v894 = vpop.f32.mrb[0].mxu0
      %v895 = vpop.f32.mrb[0].mxu0
      %v896 = vadd.f32 0.0, %v895
      %v897 = vpop.f32.mrb[0].mxu0
      %898 = vmatprep.mubr.bf16.mxu0 0
      %899 = vmatmul.mubr.bf16.gmra.mrb[0].mxu0 %v681
      %v900 = vpop.f32.mrb[0].mxu0
      %v901 = vadd.f32 0.0, %v900
      %v902 = vpop.f32.mrb[0].mxu0
      %v903 = vpop.f32.mrb[0].mxu0
      %v904 = vadd.f32 0.0, %v903
      %v905 = vpop.f32.mrb[0].mxu0
      %906 = vmatprep.mubr.bf16.mxu0 0
      %907 = vmatmul.mubr.bf16.gmra.mrb[0].mxu0 %v684
      %v908 = vpop.f32.mrb[0].mxu0
      %v909 = vadd.f32 0.0, %v908
      %v910 = vpop.f32.mrb[0].mxu0
      %v911 = vpop.f32.mrb[0].mxu0
      %v912 = vadd.f32 0.0, %v911
      %v913 = vpop.f32.mrb[0].mxu0
      %914 = vmatprep.mubr.bf16.mxu0 0
      %915 = vmatmul.mubr.bf16.gmra.mrb[0].mxu0 %v687
      %v916 = vpop.f32.mrb[0].mxu0
      %v917 = vadd.f32 0.0, %v916
      %v918 = vpop.f32.mrb[0].mxu0
      %v919 = vpop.f32.mrb[0].mxu0
      %v920 = vadd.f32 0.0, %v919
      %v921 = vpop.f32.mrb[0].mxu0
      %922 = vmatprep.mubr.bf16.mxu0 0
      %923 = vmatmul.mubr.bf16.gmra.mrb[0].mxu0 %v690
      %v924 = vpop.f32.mrb[0].mxu0
      %v925 = vadd.f32 0.0, %v924
      %v926 = vpop.f32.mrb[0].mxu0
      %v927 = vpop.f32.mrb[0].mxu0
      %v928 = vadd.f32 0.0, %v927
      %v929 = vpop.f32.mrb[0].mxu0
      %930 = vmatprep.mubr.bf16.mxu0 0
      %931 = vmatmul.mubr.bf16.gmra.mrb[0].mxu0 %v693
      %v932 = vpop.f32.mrb[0].mxu0
      %v933 = vadd.f32 0.0, %v932
      %v934 = vpop.f32.mrb[0].mxu0
      %v935 = vpop.f32.mrb[0].mxu0
      %v936 = vadd.f32 0.0, %v935
      %v937 = vpop.f32.mrb[0].mxu0
      %938 = vmatprep.mubr.bf16.mxu0 0
      %939 = vmatmul.mubr.bf16.gmra.mrb[0].mxu0 %v696
      %v940 = vpop.f32.mrb[0].mxu0
      %v941 = vadd.f32 0.0, %v940
      %v942 = vpop.f32.mrb[0].mxu0
      %v943 = vpop.f32.mrb[0].mxu0
      %v944 = vpop.f32.mrb[0].mxu0
      %945 = vdwg.mxu0
      %v947 = vunpack.c.l.b16 %v224
      %v948 = vpack.c.b16 %v947, %v947
      %v957 = vunpack.c.l.b16 %v225
      %v958 = vunpack.c.l.b16 %v226
      %v959 = vunpack.c.l.b16 %v227
      %v960 = vunpack.c.l.b16 %v228
      %v961 = vunpack.c.l.b16 %v229
      %v962 = vunpack.c.l.b16 %v230
      %v963 = vunpack.c.l.b16 %v231
      %v964 = vunpack.c.l.b16 %v232
      %v965 = vpack.c.b16 %v958, %v957
      %v966 = vpack.c.b16 %v960, %v959
      %v967 = vpack.c.b16 %v962, %v961
      %v968 = vpack.c.b16 %v964, %v963
      %v973 = vsel %vm616, %v349, 0
      %v975 = vsel %vm616, %v350, 0
      %v977 = vsel %vm616, %v351, 0
      %v979 = vsel %vm616, %v352, 0
      %v981 = vsel %vm616, %v353, 0
      %v983 = vsel %vm616, %v354, 0
      %v985 = vsel %vm616, %v355, 0
      %v987 = vsel %vm616, %v356, 0
      %v989 = vsel %vm616, %v357, 0
      %v991 = vsel %vm616, %v358, 0
      %v993 = vsel %vm616, %v359, 0
      %v995 = vsel %vm616, %v360, 0
      %v997 = vsel %vm616, %v361, 0
      %v999 = vsel %vm616, %v362, 0
      %v1001 = vsel %vm616, %v363, 0
      %v1003 = vsel %vm616, %v364, 0
      %v1005 = vsel %vm616, %v365, 0
      %v1007 = vsel %vm616, %v366, 0
      %v1009 = vsel %vm616, %v367, 0
      %v1011 = vsel %vm616, %v368, 0
      %v1013 = vsel %vm616, %v369, 0
      %v1015 = vsel %vm616, %v370, 0
      %v1017 = vsel %vm616, %v371, 0
      %v1019 = vsel %vm616, %v372, 0
      %v1021 = vsel %vm616, %v373, 0
      %v1023 = vsel %vm616, %v374, 0
      %v1026 = vsel %vm616, %v948, 0
      %1028 = vmatprep.subr.bf16.mxu0 0
      %1029 = vmatpush1.bf16.msra.mxu0 %v965
      %1030 = vmatprep.subr.bf16.mxu0 0
      %1031 = vmatpush1.bf16.msra.mxu0 %v966
      %1032 = vmatprep.subr.bf16.mxu0 0
      %1033 = vmatpush1.bf16.msra.mxu0 %v967
      %1034 = vmatprep.subr.bf16.mxu0 0
      %1035 = vmatpush1.bf16.msra.mxu0 %v968
      %1036 = vmatprep.subr.bf16.mxu0 0
      %1037 = vmatpush1.bf16.msra.mxu0 0
      %1038 = vmatprep.subr.bf16.mxu0 0
      %1039 = vmatpush1.bf16.msra.mxu0 0
      %1040 = vmatprep.subr.bf16.mxu0 0
      %1041 = vmatpush1.bf16.msra.mxu0 0
      %1042 = vmatprep.subr.bf16.mxu0 0
      %1043 = vmatpush1.bf16.msra.mxu0 0
      %1044 = vmatprep.subr.bf16.mxu0 0
      %1045 = vmatpush1.bf16.msra.mxu0 0
      %1046 = vmatprep.subr.bf16.mxu0 0
      %1047 = vmatpush1.bf16.msra.mxu0 0
      %1048 = vmatprep.subr.bf16.mxu0 0
      %1049 = vmatpush1.bf16.msra.mxu0 0
      %1050 = vmatprep.subr.bf16.mxu0 0
      %1051 = vmatpush1.bf16.msra.mxu0 0
      %1052 = vmatprep.subr.bf16.mxu0 0
      %1053 = vmatpush1.bf16.msra.mxu0 0
      %1054 = vmatprep.subr.bf16.mxu0 0
      %1055 = vmatpush1.bf16.msra.mxu0 0
      %1056 = vmatprep.subr.bf16.mxu0 0
      %1057 = vmatpush1.bf16.msra.mxu0 0
      %1058 = vmatprep.subr.bf16.mxu0 0
      %1059 = vmatpush1.bf16.msra.mxu0 0
      %1060 = vmatprep.mubr.bf16.mxu0 0
      %1061 = vmatmul.mubr.bf16.gmra.mrb[0].mxu0 %v973
      %v1062 = vpop.f32.mrb[0].mxu0
      %v1063 = vadd.f32 %v733, %v1062
      %v1064 = vpop.f32.mrb[0].mxu0
      %v1065 = vpop.f32.mrb[0].mxu0
      %v1066 = vadd.f32 %v736, %v1065
      %v1067 = vpop.f32.mrb[0].mxu0
      %1068 = vmatprep.mubr.bf16.mxu0 0
      %1069 = vmatmul.mubr.bf16.gmra.mrb[0].mxu0 %v975
      %v1070 = vpop.f32.mrb[0].mxu0
      %v1071 = vadd.f32 %v741, %v1070
      %v1072 = vpop.f32.mrb[0].mxu0
      %v1073 = vpop.f32.mrb[0].mxu0
      %v1074 = vadd.f32 %v744, %v1073
      %v1075 = vpop.f32.mrb[0].mxu0
      %1076 = vmatprep.mubr.bf16.mxu0 0
      %1077 = vmatmul.mubr.bf16.gmra.mrb[0].mxu0 %v977
      %v1078 = vpop.f32.mrb[0].mxu0
      %v1079 = vadd.f32 %v749, %v1078
      %v1080 = vpop.f32.mrb[0].mxu0
      %v1081 = vpop.f32.mrb[0].mxu0
      %v1082 = vadd.f32 %v752, %v1081
      %v1083 = vpop.f32.mrb[0].mxu0
      %1084 = vmatprep.mubr.bf16.mxu0 0
      %1085 = vmatmul.mubr.bf16.gmra.mrb[0].mxu0 %v979
      %v1086 = vpop.f32.mrb[0].mxu0
      %v1087 = vadd.f32 %v757, %v1086
      %v1088 = vpop.f32.mrb[0].mxu0
      %v1089 = vpop.f32.mrb[0].mxu0
      %v1090 = vadd.f32 %v760, %v1089
      %v1091 = vpop.f32.mrb[0].mxu0
      %1092 = vmatprep.mubr.bf16.mxu0 0
      %1093 = vmatmul.mubr.bf16.gmra.mrb[0].mxu0 %v981
      %v1094 = vpop.f32.mrb[0].mxu0
      %v1095 = vadd.f32 %v765, %v1094
      %v1096 = vpop.f32.mrb[0].mxu0
      %v1097 = vpop.f32.mrb[0].mxu0
      %v1098 = vadd.f32 %v768, %v1097
      %v1099 = vpop.f32.mrb[0].mxu0
      %1100 = vmatprep.mubr.bf16.mxu0 0
      %1101 = vmatmul.mubr.bf16.gmra.mrb[0].mxu0 %v983
      %v1102 = vpop.f32.mrb[0].mxu0
      %v1103 = vadd.f32 %v773, %v1102
      %v1104 = vpop.f32.mrb[0].mxu0
      %v1105 = vpop.f32.mrb[0].mxu0
      %v1106 = vadd.f32 %v776, %v1105
      %v1107 = vpop.f32.mrb[0].mxu0
      %1108 = vmatprep.mubr.bf16.mxu0 0
      %1109 = vmatmul.mubr.bf16.gmra.mrb[0].mxu0 %v985
      %v1110 = vpop.f32.mrb[0].mxu0
      %v1111 = vadd.f32 %v781, %v1110
      %v1112 = vpop.f32.mrb[0].mxu0
      %v1113 = vpop.f32.mrb[0].mxu0
      %v1114 = vadd.f32 %v784, %v1113
      %v1115 = vpop.f32.mrb[0].mxu0
      %1116 = vmatprep.mubr.bf16.mxu0 0
      %1117 = vmatmul.mubr.bf16.gmra.mrb[0].mxu0 %v987
      %v1118 = vpop.f32.mrb[0].mxu0
      %v1119 = vadd.f32 %v789, %v1118
      %v1120 = vpop.f32.mrb[0].mxu0
      %v1121 = vpop.f32.mrb[0].mxu0
      %v1122 = vadd.f32 %v792, %v1121
      %v1123 = vpop.f32.mrb[0].mxu0
      %1124 = vmatprep.mubr.bf16.mxu0 0
      %1125 = vmatmul.mubr.bf16.gmra.mrb[0].mxu0 %v989
      %v1126 = vpop.f32.mrb[0].mxu0
      %v1127 = vadd.f32 %v797, %v1126
      %v1128 = vpop.f32.mrb[0].mxu0
      %v1129 = vpop.f32.mrb[0].mxu0
      %v1130 = vadd.f32 %v800, %v1129
      %v1131 = vpop.f32.mrb[0].mxu0
      %1132 = vmatprep.mubr.bf16.mxu0 0
      %1133 = vmatmul.mubr.bf16.gmra.mrb[0].mxu0 %v991
      %v1134 = vpop.f32.mrb[0].mxu0
      %v1135 = vadd.f32 %v805, %v1134
      %v1136 = vpop.f32.mrb[0].mxu0
      %v1137 = vpop.f32.mrb[0].mxu0
      %v1138 = vadd.f32 %v808, %v1137
      %v1139 = vpop.f32.mrb[0].mxu0
      %1140 = vmatprep.mubr.bf16.mxu0 0
      %1141 = vmatmul.mubr.bf16.gmra.mrb[0].mxu0 %v993
      %v1142 = vpop.f32.mrb[0].mxu0
      %v1143 = vadd.f32 %v813, %v1142
      %v1144 = vpop.f32.mrb[0].mxu0
      %v1145 = vpop.f32.mrb[0].mxu0
      %v1146 = vadd.f32 %v816, %v1145
      %v1147 = vpop.f32.mrb[0].mxu0
      %1148 = vmatprep.mubr.bf16.mxu0 0
      %1149 = vmatmul.mubr.bf16.gmra.mrb[0].mxu0 %v995
      %v1150 = vpop.f32.mrb[0].mxu0
      %v1151 = vadd.f32 %v821, %v1150
      %v1152 = vpop.f32.mrb[0].mxu0
      %v1153 = vpop.f32.mrb[0].mxu0
      %v1154 = vadd.f32 %v824, %v1153
      %v1155 = vpop.f32.mrb[0].mxu0
      %1156 = vmatprep.mubr.bf16.mxu0 0
      %1157 = vmatmul.mubr.bf16.gmra.mrb[0].mxu0 %v997
      %v1158 = vpop.f32.mrb[0].mxu0
      %v1159 = vadd.f32 %v829, %v1158
      %v1160 = vpop.f32.mrb[0].mxu0
      %v1161 = vpop.f32.mrb[0].mxu0
      %v1162 = vadd.f32 %v832, %v1161
      %v1163 = vpop.f32.mrb[0].mxu0
      %1164 = vmatprep.mubr.bf16.mxu0 0
      %1165 = vmatmul.mubr.bf16.gmra.mrb[0].mxu0 %v999
      %v1166 = vpop.f32.mrb[0].mxu0
      %v1167 = vadd.f32 %v837, %v1166
      %v1168 = vpop.f32.mrb[0].mxu0
      %v1169 = vpop.f32.mrb[0].mxu0
      %v1170 = vadd.f32 %v840, %v1169
      %v1171 = vpop.f32.mrb[0].mxu0
      %1172 = vmatprep.mubr.bf16.mxu0 0
      %1173 = vmatmul.mubr.bf16.gmra.mrb[0].mxu0 %v1001
      %v1174 = vpop.f32.mrb[0].mxu0
      %v1175 = vadd.f32 %v845, %v1174
      %v1176 = vpop.f32.mrb[0].mxu0
      %v1177 = vpop.f32.mrb[0].mxu0
      %v1178 = vadd.f32 %v848, %v1177
      %v1179 = vpop.f32.mrb[0].mxu0
      %1180 = vmatprep.mubr.bf16.mxu0 0
      %1181 = vmatmul.mubr.bf16.gmra.mrb[0].mxu0 %v1003
      %v1182 = vpop.f32.mrb[0].mxu0
      %v1183 = vadd.f32 %v853, %v1182
      %v1184 = vpop.f32.mrb[0].mxu0
      %v1185 = vpop.f32.mrb[0].mxu0
      %v1186 = vadd.f32 %v856, %v1185
      %v1187 = vpop.f32.mrb[0].mxu0
      %1188 = vmatprep.mubr.bf16.mxu0 0
      %1189 = vmatmul.mubr.bf16.gmra.mrb[0].mxu0 %v1005
      %v1190 = vpop.f32.mrb[0].mxu0
      %v1191 = vadd.f32 %v861, %v1190
      %v1192 = vpop.f32.mrb[0].mxu0
      %v1193 = vpop.f32.mrb[0].mxu0
      %v1194 = vadd.f32 %v864, %v1193
      %v1195 = vpop.f32.mrb[0].mxu0
      %1196 = vmatprep.mubr.bf16.mxu0 0
      %1197 = vmatmul.mubr.bf16.gmra.mrb[0].mxu0 %v1007
      %v1198 = vpop.f32.mrb[0].mxu0
      %v1199 = vadd.f32 %v869, %v1198
      %v1200 = vpop.f32.mrb[0].mxu0
      %v1201 = vpop.f32.mrb[0].mxu0
      %v1202 = vadd.f32 %v872, %v1201
      %v1203 = vpop.f32.mrb[0].mxu0
      %1204 = vmatprep.mubr.bf16.mxu0 0
      %1205 = vmatmul.mubr.bf16.gmra.mrb[0].mxu0 %v1009
      %v1206 = vpop.f32.mrb[0].mxu0
      %v1207 = vadd.f32 %v877, %v1206
      %v1208 = vpop.f32.mrb[0].mxu0
      %v1209 = vpop.f32.mrb[0].mxu0
      %v1210 = vadd.f32 %v880, %v1209
      %v1211 = vpop.f32.mrb[0].mxu0
      %1212 = vmatprep.mubr.bf16.mxu0 0
      %1213 = vmatmul.mubr.bf16.gmra.mrb[0].mxu0 %v1011
      %v1214 = vpop.f32.mrb[0].mxu0
      %v1215 = vadd.f32 %v885, %v1214
      %v1216 = vpop.f32.mrb[0].mxu0
      %v1217 = vpop.f32.mrb[0].mxu0
      %v1218 = vadd.f32 %v888, %v1217
      %v1219 = vpop.f32.mrb[0].mxu0
      %1220 = vmatprep.mubr.bf16.mxu0 0
      %1221 = vmatmul.mubr.bf16.gmra.mrb[0].mxu0 %v1013
      %v1222 = vpop.f32.mrb[0].mxu0
      %v1223 = vadd.f32 %v893, %v1222
      %v1224 = vpop.f32.mrb[0].mxu0
      %v1225 = vpop.f32.mrb[0].mxu0
      %v1226 = vadd.f32 %v896, %v1225
      %v1227 = vpop.f32.mrb[0].mxu0
      %1228 = vmatprep.mubr.bf16.mxu0 0
      %1229 = vmatmul.mubr.bf16.gmra.mrb[0].mxu0 %v1015
      %v1230 = vpop.f32.mrb[0].mxu0
      %v1231 = vadd.f32 %v901, %v1230
      %v1232 = vpop.f32.mrb[0].mxu0
      %v1233 = vpop.f32.mrb[0].mxu0
      %v1234 = vadd.f32 %v904, %v1233
      %v1235 = vpop.f32.mrb[0].mxu0
      %1236 = vmatprep.mubr.bf16.mxu0 0
      %1237 = vmatmul.mubr.bf16.gmra.mrb[0].mxu0 %v1017
      %v1238 = vpop.f32.mrb[0].mxu0
      %v1239 = vadd.f32 %v909, %v1238
      %v1240 = vpop.f32.mrb[0].mxu0
      %v1241 = vpop.f32.mrb[0].mxu0
      %v1242 = vadd.f32 %v912, %v1241
      %v1243 = vpop.f32.mrb[0].mxu0
      %1244 = vmatprep.mubr.bf16.mxu0 0
      %1245 = vmatmul.mubr.bf16.gmra.mrb[0].mxu0 %v1019
      %v1246 = vpop.f32.mrb[0].mxu0
      %v1247 = vadd.f32 %v917, %v1246
      %v1248 = vpop.f32.mrb[0].mxu0
      %v1249 = vpop.f32.mrb[0].mxu0
      %v1250 = vadd.f32 %v920, %v1249
      %v1251 = vpop.f32.mrb[0].mxu0
      %1252 = vmatprep.mubr.bf16.mxu0 0
      %1253 = vmatmul.mubr.bf16.gmra.mrb[0].mxu0 %v1021
      %v1254 = vpop.f32.mrb[0].mxu0
      %v1255 = vadd.f32 %v925, %v1254
      %v1256 = vpop.f32.mrb[0].mxu0
      %v1257 = vpop.f32.mrb[0].mxu0
      %v1258 = vadd.f32 %v928, %v1257
      %v1259 = vpop.f32.mrb[0].mxu0
      %1260 = vmatprep.mubr.bf16.mxu0 0
      %1261 = vmatmul.mubr.bf16.gmra.mrb[0].mxu0 %v1023
      %v1262 = vpop.f32.mrb[0].mxu0
      %v1263 = vadd.f32 %v933, %v1262
      %v1264 = vpop.f32.mrb[0].mxu0
      %v1265 = vpop.f32.mrb[0].mxu0
      %v1266 = vadd.f32 %v936, %v1265
      %v1267 = vpop.f32.mrb[0].mxu0
      %1268 = vmatprep.mubr.bf16.mxu0 0
      %1269 = vmatmul.mubr.bf16.gmra.mrb[0].mxu0 %v1026
      %v1270 = vpop.f32.mrb[0].mxu0
      %v1271 = vadd.f32 %v941, %v1270
      %v1272 = vpop.f32.mrb[0].mxu0
      %v1273 = vpop.f32.mrb[0].mxu0
      %v1274 = vpop.f32.mrb[0].mxu0
      %1275 = vdwg.mxu0
      %v1276 = vld [vmem:[%s165 + $0x8] sm:$0xc]
      %v1277 = vld [vmem:[%s165 + $0xc] sm:$0xf]
      %v1278 = vld [vmem:[%s165 + $0x10] sm:$0xf]
      %v1279 = vld [vmem:[%s165 + $0x14] sm:$0xf]
      %v1280 = vld [vmem:[%s165 + $0x18] sm:$0xf]
      %v1281 = vld [vmem:[%s165 + $0x1c] sm:$0xf]
      %v1282 = vld [vmem:[%s165 + $0x20] sm:$0xf]
      %v1283 = vld [vmem:[%s165 + $0x24] sm:$0xf]
      %v1284 = vld [vmem:[%s165 + $0x28] sm:$0xf]
      %v1285 = vld [vmem:[%s165 + $0x2c] sm:$0xf]
      %v1286 = vld [vmem:[%s165 + $0x30] sm:$0xf]
      %v1287 = vld [vmem:[%s165 + $0x34] sm:$0xf]
      %v1288 = vld [vmem:[%s165 + $0x38] sm:$0xf]
      %v1289 = vld [vmem:[%s165 + $0x3c] sm:$0xf]
      %v1290 = vld [vmem:[%s165 + $0x40] sm:$0xf]
      %v1291 = vld [vmem:[%s165 + $0x44] sm:$0xf]
      %v1292 = vld [vmem:[%s165 + $0x48] sm:$0xf]
      %v1293 = vld [vmem:[%s165 + $0x4c] sm:$0xf]
      %v1294 = vld [vmem:[%s165 + $0x50] sm:$0xf]
      %v1295 = vld [vmem:[%s165 + $0x54] sm:$0xf]
      %v1296 = vld [vmem:[%s165 + $0x58] sm:$0xf]
      %v1297 = vld [vmem:[%s165 + $0x5c] sm:$0xf]
      %v1298 = vld [vmem:[%s165 + $0x60] sm:$0xf]
      %v1299 = vld [vmem:[%s165 + $0x64] sm:$0xf]
      %v1300 = vld [vmem:[%s165 + $0x68] sm:$0xf]
      %v1301 = vld [vmem:[%s165 + $0x6c] sm:$0xf]
      %v1302 = vld [vmem:[%s165 + $0x70] sm:$0xf]
      %v1303 = vld [vmem:[%s165 + $0x74] sm:$0xf]
      %v1304 = vld [vmem:[%s165 + $0x78] sm:$0xf]
      %v1305 = vld [vmem:[%s165 + $0x7c] sm:$0xf]
      %v1306 = vld [vmem:[%s165 + $0x80] sm:$0xf]
      %v1307 = vld [vmem:[%s165 + $0x84] sm:$0xf]
      %v1308 = vld [vmem:[%s165 + $0x88] sm:$0xf]
      %v1309 = vld [vmem:[%s165 + $0x8c] sm:$0xf]
      %v1310 = vld [vmem:[%s165 + $0x90] sm:$0xf]
      %v1311 = vld [vmem:[%s165 + $0x94] sm:$0xf]
      %v1312 = vld [vmem:[%s165 + $0x98] sm:$0xf]
      %v1313 = vld [vmem:[%s165 + $0x9c] sm:$0xf]
      %v1314 = vld [vmem:[%s165 + $0xa0] sm:$0xf]
      %v1315 = vld [vmem:[%s165 + $0xa4] sm:$0xf]
      %v1316 = vld [vmem:[%s165 + $0xa8] sm:$0xf]
      %v1317 = vld [vmem:[%s165 + $0xac] sm:$0xf]
      %v1318 = vld [vmem:[%s165 + $0xb0] sm:$0xf]
      %v1319 = vld [vmem:[%s165 + $0xb4] sm:$0xf]
      %v1320 = vld [vmem:[%s165 + $0xb8] sm:$0xf]
      %v1321 = vld [vmem:[%s165 + $0xbc] sm:$0xf]
      %v1322 = vld [vmem:[%s165 + $0xc0] sm:$0xf]
      %v1323 = vld [vmem:[%s165 + $0xc4] sm:$0xf]
      %v1324 = vld [vmem:[%s165 + $0xc8] sm:$0xf]
      %v1325 = vld [vmem:[%s165 + $0xcc] sm:$0xf]
      %v1326 = vld [vmem:[%s165 + $0xd0] sm:$0xf]
      %v1327 = vld [vmem:[%s165 + $0xd4] sm:$0xf]
      %v1328 = vld [vmem:[%s165 + $0xd8] sm:$0xf]
      %v1329 = vld [vmem:[%s165 + $0xdc] sm:$0x1]
      %s1330 = scalar_lea.vmem %s1, 64
      %v1331 = vld [vmem:[%s1330] sm:$0xf]
      %v1332 = vld [vmem:[%s1330 + $0x4] sm:$0xf]
      %v1333 = vld [vmem:[%s1330 + $0x8] sm:$0xf]
      %v1334 = vld [vmem:[%s1330 + $0xc] sm:$0xf]
      %v1335 = vld [vmem:[%s1330 + $0x10] sm:$0xf]
      %v1336 = vld [vmem:[%s1330 + $0x14] sm:$0xf]
      %v1337 = vld [vmem:[%s1330 + $0x18] sm:$0xf]
      %v1338 = vld [vmem:[%s1330 + $0x1c] sm:$0xf]
      %v1393 = vunpack.c.l.b16 %v1276
      %v1394 = vunpack.c.l.b16 %v1277
      %v1395 = vunpack.c.l.b16 %v1278
      %v1396 = vunpack.c.l.b16 %v1279
      %v1397 = vunpack.c.l.b16 %v1280
      %v1398 = vunpack.c.l.b16 %v1281
      %v1399 = vunpack.c.l.b16 %v1282
      %v1400 = vunpack.c.l.b16 %v1283
      %v1401 = vunpack.c.l.b16 %v1284
      %v1402 = vunpack.c.l.b16 %v1285
      %v1403 = vunpack.c.l.b16 %v1286
      %v1404 = vunpack.c.l.b16 %v1287
      %v1405 = vunpack.c.l.b16 %v1288
      %v1406 = vunpack.c.l.b16 %v1289
      %v1407 = vunpack.c.l.b16 %v1290
      %v1408 = vunpack.c.l.b16 %v1291
      %v1409 = vunpack.c.l.b16 %v1292
      %v1410 = vunpack.c.l.b16 %v1293
      %v1411 = vunpack.c.l.b16 %v1294
      %v1412 = vunpack.c.l.b16 %v1295
      %v1413 = vunpack.c.l.b16 %v1296
      %v1414 = vunpack.c.l.b16 %v1297
      %v1415 = vunpack.c.l.b16 %v1298
      %v1416 = vunpack.c.l.b16 %v1299
      %v1417 = vunpack.c.l.b16 %v1300
      %v1418 = vunpack.c.l.b16 %v1301
      %v1419 = vunpack.c.l.b16 %v1302
      %v1420 = vunpack.c.l.b16 %v1303
      %v1421 = vunpack.c.l.b16 %v1304
      %v1422 = vunpack.c.l.b16 %v1305
      %v1423 = vunpack.c.l.b16 %v1306
      %v1424 = vunpack.c.l.b16 %v1307
      %v1425 = vunpack.c.l.b16 %v1308
      %v1426 = vunpack.c.l.b16 %v1309
      %v1427 = vunpack.c.l.b16 %v1310
      %v1428 = vunpack.c.l.b16 %v1311
      %v1429 = vunpack.c.l.b16 %v1312
      %v1430 = vunpack.c.l.b16 %v1313
      %v1431 = vunpack.c.l.b16 %v1314
      %v1432 = vunpack.c.l.b16 %v1315
      %v1433 = vunpack.c.l.b16 %v1316
      %v1434 = vunpack.c.l.b16 %v1317
      %v1435 = vunpack.c.l.b16 %v1318
      %v1436 = vunpack.c.l.b16 %v1319
      %v1437 = vunpack.c.l.b16 %v1320
      %v1438 = vunpack.c.l.b16 %v1321
      %v1439 = vunpack.c.l.b16 %v1322
      %v1440 = vunpack.c.l.b16 %v1323
      %v1441 = vunpack.c.l.b16 %v1324
      %v1442 = vunpack.c.l.b16 %v1325
      %v1443 = vunpack.c.l.b16 %v1326
      %v1444 = vunpack.c.l.b16 %v1327
      %v1445 = vunpack.c.l.b16 %v1328
      %v1446 = vunpack.c.l.b16 %v1329
      %v1447 = vpack.c.b16 %v1394, %v1393
      %v1448 = vpack.c.b16 %v1396, %v1395
      %v1449 = vpack.c.b16 %v1398, %v1397
      %v1450 = vpack.c.b16 %v1400, %v1399
      %v1451 = vpack.c.b16 %v1402, %v1401
      %v1452 = vpack.c.b16 %v1404, %v1403
      %v1453 = vpack.c.b16 %v1406, %v1405
      %v1454 = vpack.c.b16 %v1408, %v1407
      %v1455 = vpack.c.b16 %v1410, %v1409
      %v1456 = vpack.c.b16 %v1412, %v1411
      %v1457 = vpack.c.b16 %v1414, %v1413
      %v1458 = vpack.c.b16 %v1416, %v1415
      %v1459 = vpack.c.b16 %v1418, %v1417
      %v1460 = vpack.c.b16 %v1420, %v1419
      %v1461 = vpack.c.b16 %v1422, %v1421
      %v1462 = vpack.c.b16 %v1424, %v1423
      %v1463 = vpack.c.b16 %v1426, %v1425
      %v1464 = vpack.c.b16 %v1428, %v1427
      %v1465 = vpack.c.b16 %v1430, %v1429
      %v1466 = vpack.c.b16 %v1432, %v1431
      %v1467 = vpack.c.b16 %v1434, %v1433
      %v1468 = vpack.c.b16 %v1436, %v1435
      %v1469 = vpack.c.b16 %v1438, %v1437
      %v1470 = vpack.c.b16 %v1440, %v1439
      %v1471 = vpack.c.b16 %v1442, %v1441
      %v1472 = vpack.c.b16 %v1444, %v1443
      %v1473 = vpack.c.b16 %v1446, %v1445
      %vm1474 = vsmask.f32 5376
      %v1476 = vshrl.u32 %v1447, 16
      %v1478 = vrot.slane %v1476, 2
      %v1479 = vshll.u32 %v1447, 16
      %v1481 = vrot.slane %v1479, 3
      %v1482 = vor.u32 %v1478, %v1481
      %v1484 = vshrl.u32 %v1448, 16
      %v1486 = vrot.slane %v1484, 2
      %v1487 = vshll.u32 %v1448, 16
      %v1489 = vrot.slane %v1487, 3
      %v1490 = vor.u32 %v1486, %v1489
      %v1491 = vsel %vm1474, %v1482, %v1490
      %v1493 = vshrl.u32 %v1449, 16
      %v1495 = vrot.slane %v1493, 2
      %v1496 = vshll.u32 %v1449, 16
      %v1498 = vrot.slane %v1496, 3
      %v1499 = vor.u32 %v1495, %v1498
      %v1500 = vsel %vm1474, %v1490, %v1499
      %v1502 = vshrl.u32 %v1450, 16
      %v1504 = vrot.slane %v1502, 2
      %v1505 = vshll.u32 %v1450, 16
      %v1507 = vrot.slane %v1505, 3
      %v1508 = vor.u32 %v1504, %v1507
      %v1509 = vsel %vm1474, %v1499, %v1508
      %v1511 = vshrl.u32 %v1451, 16
      %v1513 = vrot.slane %v1511, 2
      %v1514 = vshll.u32 %v1451, 16
      %v1516 = vrot.slane %v1514, 3
      %v1517 = vor.u32 %v1513, %v1516
      %v1518 = vsel %vm1474, %v1508, %v1517
      %v1520 = vshrl.u32 %v1452, 16
      %v1522 = vrot.slane %v1520, 2
      %v1523 = vshll.u32 %v1452, 16
      %v1525 = vrot.slane %v1523, 3
      %v1526 = vor.u32 %v1522, %v1525
      %v1527 = vsel %vm1474, %v1517, %v1526
      %v1529 = vshrl.u32 %v1453, 16
      %v1531 = vrot.slane %v1529, 2
      %v1532 = vshll.u32 %v1453, 16
      %v1534 = vrot.slane %v1532, 3
      %v1535 = vor.u32 %v1531, %v1534
      %v1536 = vsel %vm1474, %v1526, %v1535
      %v1538 = vshrl.u32 %v1454, 16
      %v1540 = vrot.slane %v1538, 2
      %v1541 = vshll.u32 %v1454, 16
      %v1543 = vrot.slane %v1541, 3
      %v1544 = vor.u32 %v1540, %v1543
      %v1545 = vsel %vm1474, %v1535, %v1544
      %v1547 = vshrl.u32 %v1455, 16
      %v1549 = vrot.slane %v1547, 2
      %v1550 = vshll.u32 %v1455, 16
      %v1552 = vrot.slane %v1550, 3
      %v1553 = vor.u32 %v1549, %v1552
      %v1554 = vsel %vm1474, %v1544, %v1553
      %v1556 = vshrl.u32 %v1456, 16
      %v1558 = vrot.slane %v1556, 2
      %v1559 = vshll.u32 %v1456, 16
      %v1561 = vrot.slane %v1559, 3
      %v1562 = vor.u32 %v1558, %v1561
      %v1563 = vsel %vm1474, %v1553, %v1562
      %v1565 = vshrl.u32 %v1457, 16
      %v1567 = vrot.slane %v1565, 2
      %v1568 = vshll.u32 %v1457, 16
      %v1570 = vrot.slane %v1568, 3
      %v1571 = vor.u32 %v1567, %v1570
      %v1572 = vsel %vm1474, %v1562, %v1571
      %v1574 = vshrl.u32 %v1458, 16
      %v1576 = vrot.slane %v1574, 2
      %v1577 = vshll.u32 %v1458, 16
      %v1579 = vrot.slane %v1577, 3
      %v1580 = vor.u32 %v1576, %v1579
      %v1581 = vsel %vm1474, %v1571, %v1580
      %v1583 = vshrl.u32 %v1459, 16
      %v1585 = vrot.slane %v1583, 2
      %v1586 = vshll.u32 %v1459, 16
      %v1588 = vrot.slane %v1586, 3
      %v1589 = vor.u32 %v1585, %v1588
      %v1590 = vsel %vm1474, %v1580, %v1589
      %v1592 = vshrl.u32 %v1460, 16
      %v1594 = vrot.slane %v1592, 2
      %v1595 = vshll.u32 %v1460, 16
      %v1597 = vrot.slane %v1595, 3
      %v1598 = vor.u32 %v1594, %v1597
      %v1599 = vsel %vm1474, %v1589, %v1598
      %v1601 = vshrl.u32 %v1461, 16
      %v1603 = vrot.slane %v1601, 2
      %v1604 = vshll.u32 %v1461, 16
      %v1606 = vrot.slane %v1604, 3
      %v1607 = vor.u32 %v1603, %v1606
      %v1608 = vsel %vm1474, %v1598, %v1607
      %v1610 = vshrl.u32 %v1462, 16
      %v1612 = vrot.slane %v1610, 2
      %v1613 = vshll.u32 %v1462, 16
      %v1615 = vrot.slane %v1613, 3
      %v1616 = vor.u32 %v1612, %v1615
      %v1617 = vsel %vm1474, %v1607, %v1616
      %v1619 = vshrl.u32 %v1463, 16
      %v1621 = vrot.slane %v1619, 2
      %v1622 = vshll.u32 %v1463, 16
      %v1624 = vrot.slane %v1622, 3
      %v1625 = vor.u32 %v1621, %v1624
      %v1626 = vsel %vm1474, %v1616, %v1625
      %v1628 = vshrl.u32 %v1464, 16
      %v1630 = vrot.slane %v1628, 2
      %v1631 = vshll.u32 %v1464, 16
      %v1633 = vrot.slane %v1631, 3
      %v1634 = vor.u32 %v1630, %v1633
      %v1635 = vsel %vm1474, %v1625, %v1634
      %v1637 = vshrl.u32 %v1465, 16
      %v1639 = vrot.slane %v1637, 2
      %v1640 = vshll.u32 %v1465, 16
      %v1642 = vrot.slane %v1640, 3
      %v1643 = vor.u32 %v1639, %v1642
      %v1644 = vsel %vm1474, %v1634, %v1643
      %v1646 = vshrl.u32 %v1466, 16
      %v1648 = vrot.slane %v1646, 2
      %v1649 = vshll.u32 %v1466, 16
      %v1651 = vrot.slane %v1649, 3
      %v1652 = vor.u32 %v1648, %v1651
      %v1653 = vsel %vm1474, %v1643, %v1652
      %v1655 = vshrl.u32 %v1467, 16
      %v1657 = vrot.slane %v1655, 2
      %v1658 = vshll.u32 %v1467, 16
      %v1660 = vrot.slane %v1658, 3
      %v1661 = vor.u32 %v1657, %v1660
      %v1662 = vsel %vm1474, %v1652, %v1661
      %v1664 = vshrl.u32 %v1468, 16
      %v1666 = vrot.slane %v1664, 2
      %v1667 = vshll.u32 %v1468, 16
      %v1669 = vrot.slane %v1667, 3
      %v1670 = vor.u32 %v1666, %v1669
      %v1671 = vsel %vm1474, %v1661, %v1670
      %v1673 = vshrl.u32 %v1469, 16
      %v1675 = vrot.slane %v1673, 2
      %v1676 = vshll.u32 %v1469, 16
      %v1678 = vrot.slane %v1676, 3
      %v1679 = vor.u32 %v1675, %v1678
      %v1680 = vsel %vm1474, %v1670, %v1679
      %v1682 = vshrl.u32 %v1470, 16
      %v1684 = vrot.slane %v1682, 2
      %v1685 = vshll.u32 %v1470, 16
      %v1687 = vrot.slane %v1685, 3
      %v1688 = vor.u32 %v1684, %v1687
      %v1689 = vsel %vm1474, %v1679, %v1688
      %v1691 = vshrl.u32 %v1471, 16
      %v1693 = vrot.slane %v1691, 2
      %v1694 = vshll.u32 %v1471, 16
      %v1696 = vrot.slane %v1694, 3
      %v1697 = vor.u32 %v1693, %v1696
      %v1698 = vsel %vm1474, %v1688, %v1697
      %v1700 = vshrl.u32 %v1472, 16
      %v1702 = vrot.slane %v1700, 2
      %v1703 = vshll.u32 %v1472, 16
      %v1705 = vrot.slane %v1703, 3
      %v1706 = vor.u32 %v1702, %v1705
      %v1707 = vsel %vm1474, %v1697, %v1706
      %v1709 = vshrl.u32 %v1473, 16
      %v1711 = vrot.slane %v1709, 2
      %v1712 = vshll.u32 %v1473, 16
      %v1714 = vrot.slane %v1712, 3
      %v1715 = vor.u32 %v1711, %v1714
      %v1716 = vsel %vm1474, %v1706, %v1715
      %v1725 = vunpack.c.l.b16 %v1331
      %v1726 = vunpack.c.l.b16 %v1332
      %v1727 = vunpack.c.l.b16 %v1333
      %v1728 = vunpack.c.l.b16 %v1334
      %v1729 = vunpack.c.l.b16 %v1335
      %v1730 = vunpack.c.l.b16 %v1336
      %v1731 = vunpack.c.l.b16 %v1337
      %v1732 = vunpack.c.l.b16 %v1338
      %v1733 = vpack.c.b16 %v1726, %v1725
      %v1734 = vpack.c.b16 %v1728, %v1727
      %v1735 = vpack.c.b16 %v1730, %v1729
      %v1736 = vpack.c.b16 %v1732, %v1731
      %v1742 = vsel %vm616, %v1491, 0
      %v1745 = vsel %vm616, %v1500, 0
      %v1748 = vsel %vm616, %v1509, 0
      %v1751 = vsel %vm616, %v1518, 0
      %v1754 = vsel %vm616, %v1527, 0
      %v1757 = vsel %vm616, %v1536, 0
      %v1760 = vsel %vm616, %v1545, 0
      %v1763 = vsel %vm616, %v1554, 0
      %v1766 = vsel %vm616, %v1563, 0
      %v1769 = vsel %vm616, %v1572, 0
      %v1772 = vsel %vm616, %v1581, 0
      %v1775 = vsel %vm616, %v1590, 0
      %v1778 = vsel %vm616, %v1599, 0
      %v1781 = vsel %vm616, %v1608, 0
      %v1784 = vsel %vm616, %v1617, 0
      %v1787 = vsel %vm616, %v1626, 0
      %v1790 = vsel %vm616, %v1635, 0
      %v1793 = vsel %vm616, %v1644, 0
      %v1796 = vsel %vm616, %v1653, 0
      %v1799 = vsel %vm616, %v1662, 0
      %v1802 = vsel %vm616, %v1671, 0
      %v1805 = vsel %vm616, %v1680, 0
      %v1808 = vsel %vm616, %v1689, 0
      %v1811 = vsel %vm616, %v1698, 0
      %v1814 = vsel %vm616, %v1707, 0
      %v1817 = vsel %vm616, %v1716, 0
      %v1820 = vsel %vm616, %v1715, 0
      %1822 = vmatprep.subr.bf16.mxu0 0
      %1823 = vmatpush1.bf16.msra.mxu0 %v1733
      %1824 = vmatprep.subr.bf16.mxu0 0
      %1825 = vmatpush1.bf16.msra.mxu0 %v1734
      %1826 = vmatprep.subr.bf16.mxu0 0
      %1827 = vmatpush1.bf16.msra.mxu0 %v1735
      %1828 = vmatprep.subr.bf16.mxu0 0
      %1829 = vmatpush1.bf16.msra.mxu0 %v1736
      %1830 = vmatprep.subr.bf16.mxu0 0
      %1831 = vmatpush1.bf16.msra.mxu0 0
      %1832 = vmatprep.subr.bf16.mxu0 0
      %1833 = vmatpush1.bf16.msra.mxu0 0
      %1834 = vmatprep.subr.bf16.mxu0 0
      %1835 = vmatpush1.bf16.msra.mxu0 0
      %1836 = vmatprep.subr.bf16.mxu0 0
      %1837 = vmatpush1.bf16.msra.mxu0 0
      %1838 = vmatprep.subr.bf16.mxu0 0
      %1839 = vmatpush1.bf16.msra.mxu0 0
      %1840 = vmatprep.subr.bf16.mxu0 0
      %1841 = vmatpush1.bf16.msra.mxu0 0
      %1842 = vmatprep.subr.bf16.mxu0 0
      %1843 = vmatpush1.bf16.msra.mxu0 0
      %1844 = vmatprep.subr.bf16.mxu0 0
      %1845 = vmatpush1.bf16.msra.mxu0 0
      %1846 = vmatprep.subr.bf16.mxu0 0
      %1847 = vmatpush1.bf16.msra.mxu0 0
      %1848 = vmatprep.subr.bf16.mxu0 0
      %1849 = vmatpush1.bf16.msra.mxu0 0
      %1850 = vmatprep.subr.bf16.mxu0 0
      %1851 = vmatpush1.bf16.msra.mxu0 0
      %1852 = vmatprep.subr.bf16.mxu0 0
      %1853 = vmatpush1.bf16.msra.mxu0 0
      %1854 = vmatprep.mubr.bf16.mxu0 0
      %1855 = vmatmul.mubr.bf16.gmra.mrb[0].mxu0 %v1742
      %v1856 = vpop.f32.mrb[0].mxu0
      %v1857 = vadd.f32 0.0, %v1856
      %v1858 = vpop.f32.mrb[0].mxu0
      %v1859 = vpop.f32.mrb[0].mxu0
      %v1860 = vadd.f32 0.0, %v1859
      %v1861 = vpop.f32.mrb[0].mxu0
      %1862 = vmatprep.mubr.bf16.mxu0 0
      %1863 = vmatmul.mubr.bf16.gmra.mrb[0].mxu0 %v1745
      %v1864 = vpop.f32.mrb[0].mxu0
      %v1865 = vadd.f32 0.0, %v1864
      %v1866 = vpop.f32.mrb[0].mxu0
      %v1867 = vpop.f32.mrb[0].mxu0
      %v1868 = vadd.f32 0.0, %v1867
      %v1869 = vpop.f32.mrb[0].mxu0
      %1870 = vmatprep.mubr.bf16.mxu0 0
      %1871 = vmatmul.mubr.bf16.gmra.mrb[0].mxu0 %v1748
      %v1872 = vpop.f32.mrb[0].mxu0
      %v1873 = vadd.f32 0.0, %v1872
      %v1874 = vpop.f32.mrb[0].mxu0
      %v1875 = vpop.f32.mrb[0].mxu0
      %v1876 = vadd.f32 0.0, %v1875
      %v1877 = vpop.f32.mrb[0].mxu0
      %1878 = vmatprep.mubr.bf16.mxu0 0
      %1879 = vmatmul.mubr.bf16.gmra.mrb[0].mxu0 %v1751
      %v1880 = vpop.f32.mrb[0].mxu0
      %v1881 = vadd.f32 0.0, %v1880
      %v1882 = vpop.f32.mrb[0].mxu0
      %v1883 = vpop.f32.mrb[0].mxu0
      %v1884 = vadd.f32 0.0, %v1883
      %v1885 = vpop.f32.mrb[0].mxu0
      %1886 = vmatprep.mubr.bf16.mxu0 0
      %1887 = vmatmul.mubr.bf16.gmra.mrb[0].mxu0 %v1754
      %v1888 = vpop.f32.mrb[0].mxu0
      %v1889 = vadd.f32 0.0, %v1888
      %v1890 = vpop.f32.mrb[0].mxu0
      %v1891 = vpop.f32.mrb[0].mxu0
      %v1892 = vadd.f32 0.0, %v1891
      %v1893 = vpop.f32.mrb[0].mxu0
      %1894 = vmatprep.mubr.bf16.mxu0 0
      %1895 = vmatmul.mubr.bf16.gmra.mrb[0].mxu0 %v1757
      %v1896 = vpop.f32.mrb[0].mxu0
      %v1897 = vadd.f32 0.0, %v1896
      %v1898 = vpop.f32.mrb[0].mxu0
      %v1899 = vpop.f32.mrb[0].mxu0
      %v1900 = vadd.f32 0.0, %v1899
      %v1901 = vpop.f32.mrb[0].mxu0
      %1902 = vmatprep.mubr.bf16.mxu0 0
      %1903 = vmatmul.mubr.bf16.gmra.mrb[0].mxu0 %v1760
      %v1904 = vpop.f32.mrb[0].mxu0
      %v1905 = vadd.f32 0.0, %v1904
      %v1906 = vpop.f32.mrb[0].mxu0
      %v1907 = vpop.f32.mrb[0].mxu0
      %v1908 = vadd.f32 0.0, %v1907
      %v1909 = vpop.f32.mrb[0].mxu0
      %1910 = vmatprep.mubr.bf16.mxu0 0
      %1911 = vmatmul.mubr.bf16.gmra.mrb[0].mxu0 %v1763
      %v1912 = vpop.f32.mrb[0].mxu0
      %v1913 = vadd.f32 0.0, %v1912
      %v1914 = vpop.f32.mrb[0].mxu0
      %v1915 = vpop.f32.mrb[0].mxu0
      %v1916 = vadd.f32 0.0, %v1915
      %v1917 = vpop.f32.mrb[0].mxu0
      %1918 = vmatprep.mubr.bf16.mxu0 0
      %1919 = vmatmul.mubr.bf16.gmra.mrb[0].mxu0 %v1766
      %v1920 = vpop.f32.mrb[0].mxu0
      %v1921 = vadd.f32 0.0, %v1920
      %v1922 = vpop.f32.mrb[0].mxu0
      %v1923 = vpop.f32.mrb[0].mxu0
      %v1924 = vadd.f32 0.0, %v1923
      %v1925 = vpop.f32.mrb[0].mxu0
      %1926 = vmatprep.mubr.bf16.mxu0 0
      %1927 = vmatmul.mubr.bf16.gmra.mrb[0].mxu0 %v1769
      %v1928 = vpop.f32.mrb[0].mxu0
      %v1929 = vadd.f32 0.0, %v1928
      %v1930 = vpop.f32.mrb[0].mxu0
      %v1931 = vpop.f32.mrb[0].mxu0
      %v1932 = vadd.f32 0.0, %v1931
      %v1933 = vpop.f32.mrb[0].mxu0
      %1934 = vmatprep.mubr.bf16.mxu0 0
      %1935 = vmatmul.mubr.bf16.gmra.mrb[0].mxu0 %v1772
      %v1936 = vpop.f32.mrb[0].mxu0
      %v1937 = vadd.f32 0.0, %v1936
      %v1938 = vpop.f32.mrb[0].mxu0
      %v1939 = vpop.f32.mrb[0].mxu0
      %v1940 = vadd.f32 0.0, %v1939
      %v1941 = vpop.f32.mrb[0].mxu0
      %1942 = vmatprep.mubr.bf16.mxu0 0
      %1943 = vmatmul.mubr.bf16.gmra.mrb[0].mxu0 %v1775
      %v1944 = vpop.f32.mrb[0].mxu0
      %v1945 = vadd.f32 0.0, %v1944
      %v1946 = vpop.f32.mrb[0].mxu0
      %v1947 = vpop.f32.mrb[0].mxu0
      %v1948 = vadd.f32 0.0, %v1947
      %v1949 = vpop.f32.mrb[0].mxu0
      %1950 = vmatprep.mubr.bf16.mxu0 0
      %1951 = vmatmul.mubr.bf16.gmra.mrb[0].mxu0 %v1778
      %v1952 = vpop.f32.mrb[0].mxu0
      %v1953 = vadd.f32 0.0, %v1952
      %v1954 = vpop.f32.mrb[0].mxu0
      %v1955 = vpop.f32.mrb[0].mxu0
      %v1956 = vadd.f32 0.0, %v1955
      %v1957 = vpop.f32.mrb[0].mxu0
      %1958 = vmatprep.mubr.bf16.mxu0 0
      %1959 = vmatmul.mubr.bf16.gmra.mrb[0].mxu0 %v1781
      %v1960 = vpop.f32.mrb[0].mxu0
      %v1961 = vadd.f32 0.0, %v1960
      %v1962 = vpop.f32.mrb[0].mxu0
      %v1963 = vpop.f32.mrb[0].mxu0
      %v1964 = vadd.f32 0.0, %v1963
      %v1965 = vpop.f32.mrb[0].mxu0
      %1966 = vmatprep.mubr.bf16.mxu0 0
      %1967 = vmatmul.mubr.bf16.gmra.mrb[0].mxu0 %v1784
      %v1968 = vpop.f32.mrb[0].mxu0
      %v1969 = vadd.f32 0.0, %v1968
      %v1970 = vpop.f32.mrb[0].mxu0
      %v1971 = vpop.f32.mrb[0].mxu0
      %v1972 = vadd.f32 0.0, %v1971
      %v1973 = vpop.f32.mrb[0].mxu0
      %1974 = vmatprep.mubr.bf16.mxu0 0
      %1975 = vmatmul.mubr.bf16.gmra.mrb[0].mxu0 %v1787
      %v1976 = vpop.f32.mrb[0].mxu0
      %v1977 = vadd.f32 0.0, %v1976
      %v1978 = vpop.f32.mrb[0].mxu0
      %v1979 = vpop.f32.mrb[0].mxu0
      %v1980 = vadd.f32 0.0, %v1979
      %v1981 = vpop.f32.mrb[0].mxu0
      %1982 = vmatprep.mubr.bf16.mxu0 0
      %1983 = vmatmul.mubr.bf16.gmra.mrb[0].mxu0 %v1790
      %v1984 = vpop.f32.mrb[0].mxu0
      %v1985 = vadd.f32 0.0, %v1984
      %v1986 = vpop.f32.mrb[0].mxu0
      %v1987 = vpop.f32.mrb[0].mxu0
      %v1988 = vadd.f32 0.0, %v1987
      %v1989 = vpop.f32.mrb[0].mxu0
      %1990 = vmatprep.mubr.bf16.mxu0 0
      %1991 = vmatmul.mubr.bf16.gmra.mrb[0].mxu0 %v1793
      %v1992 = vpop.f32.mrb[0].mxu0
      %v1993 = vadd.f32 0.0, %v1992
      %v1994 = vpop.f32.mrb[0].mxu0
      %v1995 = vpop.f32.mrb[0].mxu0
      %v1996 = vadd.f32 0.0, %v1995
      %v1997 = vpop.f32.mrb[0].mxu0
      %1998 = vmatprep.mubr.bf16.mxu0 0
      %1999 = vmatmul.mubr.bf16.gmra.mrb[0].mxu0 %v1796
      %v2000 = vpop.f32.mrb[0].mxu0
      %v2001 = vadd.f32 0.0, %v2000
      %v2002 = vpop.f32.mrb[0].mxu0
      %v2003 = vpop.f32.mrb[0].mxu0
      %v2004 = vadd.f32 0.0, %v2003
      %v2005 = vpop.f32.mrb[0].mxu0
      %2006 = vmatprep.mubr.bf16.mxu0 0
      %2007 = vmatmul.mubr.bf16.gmra.mrb[0].mxu0 %v1799
      %v2008 = vpop.f32.mrb[0].mxu0
      %v2009 = vadd.f32 0.0, %v2008
      %v2010 = vpop.f32.mrb[0].mxu0
      %v2011 = vpop.f32.mrb[0].mxu0
      %v2012 = vadd.f32 0.0, %v2011
      %v2013 = vpop.f32.mrb[0].mxu0
      %2014 = vmatprep.mubr.bf16.mxu0 0
      %2015 = vmatmul.mubr.bf16.gmra.mrb[0].mxu0 %v1802
      %v2016 = vpop.f32.mrb[0].mxu0
      %v2017 = vadd.f32 0.0, %v2016
      %v2018 = vpop.f32.mrb[0].mxu0
      %v2019 = vpop.f32.mrb[0].mxu0
      %v2020 = vadd.f32 0.0, %v2019
      %v2021 = vpop.f32.mrb[0].mxu0
      %2022 = vmatprep.mubr.bf16.mxu0 0
      %2023 = vmatmul.mubr.bf16.gmra.mrb[0].mxu0 %v1805
      %v2024 = vpop.f32.mrb[0].mxu0
      %v2025 = vadd.f32 0.0, %v2024
      %v2026 = vpop.f32.mrb[0].mxu0
      %v2027 = vpop.f32.mrb[0].mxu0
      %v2028 = vadd.f32 0.0, %v2027
      %v2029 = vpop.f32.mrb[0].mxu0
      %2030 = vmatprep.mubr.bf16.mxu0 0
      %2031 = vmatmul.mubr.bf16.gmra.mrb[0].mxu0 %v1808
      %v2032 = vpop.f32.mrb[0].mxu0
      %v2033 = vadd.f32 0.0, %v2032
      %v2034 = vpop.f32.mrb[0].mxu0
      %v2035 = vpop.f32.mrb[0].mxu0
      %v2036 = vadd.f32 0.0, %v2035
      %v2037 = vpop.f32.mrb[0].mxu0
      %2038 = vmatprep.mubr.bf16.mxu0 0
      %2039 = vmatmul.mubr.bf16.gmra.mrb[0].mxu0 %v1811
      %v2040 = vpop.f32.mrb[0].mxu0
      %v2041 = vadd.f32 0.0, %v2040
      %v2042 = vpop.f32.mrb[0].mxu0
      %v2043 = vpop.f32.mrb[0].mxu0
      %v2044 = vadd.f32 0.0, %v2043
      %v2045 = vpop.f32.mrb[0].mxu0
      %2046 = vmatprep.mubr.bf16.mxu0 0
      %2047 = vmatmul.mubr.bf16.gmra.mrb[0].mxu0 %v1814
      %v2048 = vpop.f32.mrb[0].mxu0
      %v2049 = vadd.f32 0.0, %v2048
      %v2050 = vpop.f32.mrb[0].mxu0
      %v2051 = vpop.f32.mrb[0].mxu0
      %v2052 = vadd.f32 0.0, %v2051
      %v2053 = vpop.f32.mrb[0].mxu0
      %2054 = vmatprep.mubr.bf16.mxu0 0
      %2055 = vmatmul.mubr.bf16.gmra.mrb[0].mxu0 %v1817
      %v2056 = vpop.f32.mrb[0].mxu0
      %v2057 = vadd.f32 0.0, %v2056
      %v2058 = vpop.f32.mrb[0].mxu0
      %v2059 = vpop.f32.mrb[0].mxu0
      %v2060 = vadd.f32 0.0, %v2059
      %v2061 = vpop.f32.mrb[0].mxu0
      %2062 = vmatprep.mubr.bf16.mxu0 0
      %2063 = vmatmul.mubr.bf16.gmra.mrb[0].mxu0 %v1820
      %v2064 = vpop.f32.mrb[0].mxu0
      %v2065 = vadd.f32 0.0, %v2064
      %v2066 = vpop.f32.mrb[0].mxu0
      %v2067 = vpop.f32.mrb[0].mxu0
      %v2068 = vpop.f32.mrb[0].mxu0
      %2069 = vdwg.mxu0
      %v2070 = vadd.f32 %v1063, %v1857
      %v2071 = vadd.f32 %v1066, %v1860
      %v2072 = vadd.f32 %v1071, %v1865
      %v2073 = vadd.f32 %v1074, %v1868
      %v2074 = vadd.f32 %v1079, %v1873
      %v2075 = vadd.f32 %v1082, %v1876
      %v2076 = vadd.f32 %v1087, %v1881
      %v2077 = vadd.f32 %v1090, %v1884
      %v2078 = vadd.f32 %v1095, %v1889
      %v2079 = vadd.f32 %v1098, %v1892
      %v2080 = vadd.f32 %v1103, %v1897
      %v2081 = vadd.f32 %v1106, %v1900
      %v2082 = vadd.f32 %v1111, %v1905
      %v2083 = vadd.f32 %v1114, %v1908
      %v2084 = vadd.f32 %v1119, %v1913
      %v2085 = vadd.f32 %v1122, %v1916
      %v2086 = vadd.f32 %v1127, %v1921
      %v2087 = vadd.f32 %v1130, %v1924
      %v2088 = vadd.f32 %v1135, %v1929
      %v2089 = vadd.f32 %v1138, %v1932
      %v2090 = vadd.f32 %v1143, %v1937
      %v2091 = vadd.f32 %v1146, %v1940
      %v2092 = vadd.f32 %v1151, %v1945
      %v2093 = vadd.f32 %v1154, %v1948
      %v2094 = vadd.f32 %v1159, %v1953
      %v2095 = vadd.f32 %v1162, %v1956
      %v2096 = vadd.f32 %v1167, %v1961
      %v2097 = vadd.f32 %v1170, %v1964
      %v2098 = vadd.f32 %v1175, %v1969
      %v2099 = vadd.f32 %v1178, %v1972
      %v2100 = vadd.f32 %v1183, %v1977
      %v2101 = vadd.f32 %v1186, %v1980
      %v2102 = vadd.f32 %v1191, %v1985
      %v2103 = vadd.f32 %v1194, %v1988
      %v2104 = vadd.f32 %v1199, %v1993
      %v2105 = vadd.f32 %v1202, %v1996
      %v2106 = vadd.f32 %v1207, %v2001
      %v2107 = vadd.f32 %v1210, %v2004
      %v2108 = vadd.f32 %v1215, %v2009
      %v2109 = vadd.f32 %v1218, %v2012
      %v2110 = vadd.f32 %v1223, %v2017
      %v2111 = vadd.f32 %v1226, %v2020
      %v2112 = vadd.f32 %v1231, %v2025
      %v2113 = vadd.f32 %v1234, %v2028
      %v2114 = vadd.f32 %v1239, %v2033
      %v2115 = vadd.f32 %v1242, %v2036
      %v2116 = vadd.f32 %v1247, %v2041
      %v2117 = vadd.f32 %v1250, %v2044
      %v2118 = vadd.f32 %v1255, %v2049
      %v2119 = vadd.f32 %v1258, %v2052
      %v2120 = vadd.f32 %v1263, %v2057
      %v2121 = vadd.f32 %v1266, %v2060
      %v2122 = vadd.f32 %v1271, %v2065
      %v2123 = vld [vmem:[%s165 + $0x8] sm:$0x8]
      %s2124 = scalar_lea.vmem %s1, 96
      %v2125 = vld [vmem:[%s2124] sm:$0xf]
      %v2126 = vld [vmem:[%s2124 + $0x4] sm:$0xf]
      %v2127 = vld [vmem:[%s2124 + $0x8] sm:$0xf]
      %v2128 = vld [vmem:[%s2124 + $0xc] sm:$0xf]
      %v2129 = vld [vmem:[%s2124 + $0x10] sm:$0xf]
      %v2130 = vld [vmem:[%s2124 + $0x14] sm:$0xf]
      %v2131 = vld [vmem:[%s2124 + $0x18] sm:$0xf]
      %v2132 = vld [vmem:[%s2124 + $0x1c] sm:$0xf]
      %v2134 = vunpack.c.l.b16 %v2123
      %v2135 = vpack.c.b16 %v1394, %v2134
      %vm2136 = vcmask 1044480
      %v2137 = vrot.slane %v2135, 3
      %v2138 = vrot.slane %v1448, 3
      %v2139 = vsel %vm2136, %v2137, %v2138
      %v2140 = vrot.slane %v1449, 3
      %v2141 = vsel %vm2136, %v2138, %v2140
      %v2142 = vrot.slane %v1450, 3
      %v2143 = vsel %vm2136, %v2140, %v2142
      %v2144 = vrot.slane %v1451, 3
      %v2145 = vsel %vm2136, %v2142, %v2144
      %v2146 = vrot.slane %v1452, 3
      %v2147 = vsel %vm2136, %v2144, %v2146
      %v2148 = vrot.slane %v1453, 3
      %v2149 = vsel %vm2136, %v2146, %v2148
      %v2150 = vrot.slane %v1454, 3
      %v2151 = vsel %vm2136, %v2148, %v2150
      %v2152 = vrot.slane %v1455, 3
      %v2153 = vsel %vm2136, %v2150, %v2152
      %v2154 = vrot.slane %v1456, 3
      %v2155 = vsel %vm2136, %v2152, %v2154
      %v2156 = vrot.slane %v1457, 3
      %v2157 = vsel %vm2136, %v2154, %v2156
      %v2158 = vrot.slane %v1458, 3
      %v2159 = vsel %vm2136, %v2156, %v2158
      %v2160 = vrot.slane %v1459, 3
      %v2161 = vsel %vm2136, %v2158, %v2160
      %v2162 = vrot.slane %v1460, 3
      %v2163 = vsel %vm2136, %v2160, %v2162
      %v2164 = vrot.slane %v1461, 3
      %v2165 = vsel %vm2136, %v2162, %v2164
      %v2166 = vrot.slane %v1462, 3
      %v2167 = vsel %vm2136, %v2164, %v2166
      %v2168 = vrot.slane %v1463, 3
      %v2169 = vsel %vm2136, %v2166, %v2168
      %v2170 = vrot.slane %v1464, 3
      %v2171 = vsel %vm2136, %v2168, %v2170
      %v2172 = vrot.slane %v1465, 3
      %v2173 = vsel %vm2136, %v2170, %v2172
      %v2174 = vrot.slane %v1466, 3
      %v2175 = vsel %vm2136, %v2172, %v2174
      %v2176 = vrot.slane %v1467, 3
      %v2177 = vsel %vm2136, %v2174, %v2176
      %v2178 = vrot.slane %v1468, 3
      %v2179 = vsel %vm2136, %v2176, %v2178
      %v2180 = vrot.slane %v1469, 3
      %v2181 = vsel %vm2136, %v2178, %v2180
      %v2182 = vrot.slane %v1470, 3
      %v2183 = vsel %vm2136, %v2180, %v2182
      %v2184 = vrot.slane %v1471, 3
      %v2185 = vsel %vm2136, %v2182, %v2184
      %v2186 = vrot.slane %v1472, 3
      %v2187 = vsel %vm2136, %v2184, %v2186
      %v2188 = vrot.slane %v1473, 3
      %v2189 = vsel %vm2136, %v2186, %v2188
      %v2198 = vunpack.c.l.b16 %v2125
      %v2199 = vunpack.c.l.b16 %v2126
      %v2200 = vunpack.c.l.b16 %v2127
      %v2201 = vunpack.c.l.b16 %v2128
      %v2202 = vunpack.c.l.b16 %v2129
      %v2203 = vunpack.c.l.b16 %v2130
      %v2204 = vunpack.c.l.b16 %v2131
      %v2205 = vunpack.c.l.b16 %v2132
      %v2206 = vpack.c.b16 %v2199, %v2198
      %v2207 = vpack.c.b16 %v2201, %v2200
      %v2208 = vpack.c.b16 %v2203, %v2202
      %v2209 = vpack.c.b16 %v2205, %v2204
      %v2215 = vsel %vm616, %v2139, 0
      %v2218 = vsel %vm616, %v2141, 0
      %v2221 = vsel %vm616, %v2143, 0
      %v2224 = vsel %vm616, %v2145, 0
      %v2227 = vsel %vm616, %v2147, 0
      %v2230 = vsel %vm616, %v2149, 0
      %v2233 = vsel %vm616, %v2151, 0
      %v2236 = vsel %vm616, %v2153, 0
      %v2239 = vsel %vm616, %v2155, 0
      %v2242 = vsel %vm616, %v2157, 0
      %v2245 = vsel %vm616, %v2159, 0
      %v2248 = vsel %vm616, %v2161, 0
      %v2251 = vsel %vm616, %v2163, 0
      %v2254 = vsel %vm616, %v2165, 0
      %v2257 = vsel %vm616, %v2167, 0
      %v2260 = vsel %vm616, %v2169, 0
      %v2263 = vsel %vm616, %v2171, 0
      %v2266 = vsel %vm616, %v2173, 0
      %v2269 = vsel %vm616, %v2175, 0
      %v2272 = vsel %vm616, %v2177, 0
      %v2275 = vsel %vm616, %v2179, 0
      %v2278 = vsel %vm616, %v2181, 0
      %v2281 = vsel %vm616, %v2183, 0
      %v2284 = vsel %vm616, %v2185, 0
      %v2287 = vsel %vm616, %v2187, 0
      %v2290 = vsel %vm616, %v2189, 0
      %v2293 = vsel %vm616, %v2188, 0
      %2295 = vmatprep.subr.bf16.mxu0 0
      %2296 = vmatpush1.bf16.msra.mxu0 %v2206
      %2297 = vmatprep.subr.bf16.mxu0 0
      %2298 = vmatpush1.bf16.msra.mxu0 %v2207
      %2299 = vmatprep.subr.bf16.mxu0 0
      %2300 = vmatpush1.bf16.msra.mxu0 %v2208
      %2301 = vmatprep.subr.bf16.mxu0 0
      %2302 = vmatpush1.bf16.msra.mxu0 %v2209
      %2303 = vmatprep.subr.bf16.mxu0 0
      %2304 = vmatpush1.bf16.msra.mxu0 0
      %2305 = vmatprep.subr.bf16.mxu0 0
      %2306 = vmatpush1.bf16.msra.mxu0 0
      %2307 = vmatprep.subr.bf16.mxu0 0
      %2308 = vmatpush1.bf16.msra.mxu0 0
      %2309 = vmatprep.subr.bf16.mxu0 0
      %2310 = vmatpush1.bf16.msra.mxu0 0
      %2311 = vmatprep.subr.bf16.mxu0 0
      %2312 = vmatpush1.bf16.msra.mxu0 0
      %2313 = vmatprep.subr.bf16.mxu0 0
      %2314 = vmatpush1.bf16.msra.mxu0 0
      %2315 = vmatprep.subr.bf16.mxu0 0
      %2316 = vmatpush1.bf16.msra.mxu0 0
      %2317 = vmatprep.subr.bf16.mxu0 0
      %2318 = vmatpush1.bf16.msra.mxu0 0
      %2319 = vmatprep.subr.bf16.mxu0 0
      %2320 = vmatpush1.bf16.msra.mxu0 0
      %2321 = vmatprep.subr.bf16.mxu0 0
      %2322 = vmatpush1.bf16.msra.mxu0 0
      %2323 = vmatprep.subr.bf16.mxu0 0
      %2324 = vmatpush1.bf16.msra.mxu0 0
      %2325 = vmatprep.subr.bf16.mxu0 0
      %2326 = vmatpush1.bf16.msra.mxu0 0
      %2327 = vmatprep.mubr.bf16.mxu0 0
      %2328 = vmatmul.mubr.bf16.gmra.mrb[0].mxu0 %v2215
      %v2329 = vpop.f32.mrb[0].mxu0
      %v2330 = vadd.f32 0.0, %v2329
      %v2331 = vpop.f32.mrb[0].mxu0
      %v2332 = vpop.f32.mrb[0].mxu0
      %v2333 = vadd.f32 0.0, %v2332
      %v2334 = vpop.f32.mrb[0].mxu0
      %2335 = vmatprep.mubr.bf16.mxu0 0
      %2336 = vmatmul.mubr.bf16.gmra.mrb[0].mxu0 %v2218
      %v2337 = vpop.f32.mrb[0].mxu0
      %v2338 = vadd.f32 0.0, %v2337
      %v2339 = vpop.f32.mrb[0].mxu0
      %v2340 = vpop.f32.mrb[0].mxu0
      %v2341 = vadd.f32 0.0, %v2340
      %v2342 = vpop.f32.mrb[0].mxu0
      %2343 = vmatprep.mubr.bf16.mxu0 0
      %2344 = vmatmul.mubr.bf16.gmra.mrb[0].mxu0 %v2221
      %v2345 = vpop.f32.mrb[0].mxu0
      %v2346 = vadd.f32 0.0, %v2345
      %v2347 = vpop.f32.mrb[0].mxu0
      %v2348 = vpop.f32.mrb[0].mxu0
      %v2349 = vadd.f32 0.0, %v2348
      %v2350 = vpop.f32.mrb[0].mxu0
      %2351 = vmatprep.mubr.bf16.mxu0 0
      %2352 = vmatmul.mubr.bf16.gmra.mrb[0].mxu0 %v2224
      %v2353 = vpop.f32.mrb[0].mxu0
      %v2354 = vadd.f32 0.0, %v2353
      %v2355 = vpop.f32.mrb[0].mxu0
      %v2356 = vpop.f32.mrb[0].mxu0
      %v2357 = vadd.f32 0.0, %v2356
      %v2358 = vpop.f32.mrb[0].mxu0
      %2359 = vmatprep.mubr.bf16.mxu0 0
      %2360 = vmatmul.mubr.bf16.gmra.mrb[0].mxu0 %v2227
      %v2361 = vpop.f32.mrb[0].mxu0
      %v2362 = vadd.f32 0.0, %v2361
      %v2363 = vpop.f32.mrb[0].mxu0
      %v2364 = vpop.f32.mrb[0].mxu0
      %v2365 = vadd.f32 0.0, %v2364
      %v2366 = vpop.f32.mrb[0].mxu0
      %2367 = vmatprep.mubr.bf16.mxu0 0
      %2368 = vmatmul.mubr.bf16.gmra.mrb[0].mxu0 %v2230
      %v2369 = vpop.f32.mrb[0].mxu0
      %v2370 = vadd.f32 0.0, %v2369
      %v2371 = vpop.f32.mrb[0].mxu0
      %v2372 = vpop.f32.mrb[0].mxu0
      %v2373 = vadd.f32 0.0, %v2372
      %v2374 = vpop.f32.mrb[0].mxu0
      %2375 = vmatprep.mubr.bf16.mxu0 0
      %2376 = vmatmul.mubr.bf16.gmra.mrb[0].mxu0 %v2233
      %v2377 = vpop.f32.mrb[0].mxu0
      %v2378 = vadd.f32 0.0, %v2377
      %v2379 = vpop.f32.mrb[0].mxu0
      %v2380 = vpop.f32.mrb[0].mxu0
      %v2381 = vadd.f32 0.0, %v2380
      %v2382 = vpop.f32.mrb[0].mxu0
      %2383 = vmatprep.mubr.bf16.mxu0 0
      %2384 = vmatmul.mubr.bf16.gmra.mrb[0].mxu0 %v2236
      %v2385 = vpop.f32.mrb[0].mxu0
      %v2386 = vadd.f32 0.0, %v2385
      %v2387 = vpop.f32.mrb[0].mxu0
      %v2388 = vpop.f32.mrb[0].mxu0
      %v2389 = vadd.f32 0.0, %v2388
      %v2390 = vpop.f32.mrb[0].mxu0
      %2391 = vmatprep.mubr.bf16.mxu0 0
      %2392 = vmatmul.mubr.bf16.gmra.mrb[0].mxu0 %v2239
      %v2393 = vpop.f32.mrb[0].mxu0
      %v2394 = vadd.f32 0.0, %v2393
      %v2395 = vpop.f32.mrb[0].mxu0
      %v2396 = vpop.f32.mrb[0].mxu0
      %v2397 = vadd.f32 0.0, %v2396
      %v2398 = vpop.f32.mrb[0].mxu0
      %2399 = vmatprep.mubr.bf16.mxu0 0
      %2400 = vmatmul.mubr.bf16.gmra.mrb[0].mxu0 %v2242
      %v2401 = vpop.f32.mrb[0].mxu0
      %v2402 = vadd.f32 0.0, %v2401
      %v2403 = vpop.f32.mrb[0].mxu0
      %v2404 = vpop.f32.mrb[0].mxu0
      %v2405 = vadd.f32 0.0, %v2404
      %v2406 = vpop.f32.mrb[0].mxu0
      %2407 = vmatprep.mubr.bf16.mxu0 0
      %2408 = vmatmul.mubr.bf16.gmra.mrb[0].mxu0 %v2245
      %v2409 = vpop.f32.mrb[0].mxu0
      %v2410 = vadd.f32 0.0, %v2409
      %v2411 = vpop.f32.mrb[0].mxu0
      %v2412 = vpop.f32.mrb[0].mxu0
      %v2413 = vadd.f32 0.0, %v2412
      %v2414 = vpop.f32.mrb[0].mxu0
      %2415 = vmatprep.mubr.bf16.mxu0 0
      %2416 = vmatmul.mubr.bf16.gmra.mrb[0].mxu0 %v2248
      %v2417 = vpop.f32.mrb[0].mxu0
      %v2418 = vadd.f32 0.0, %v2417
      %v2419 = vpop.f32.mrb[0].mxu0
      %v2420 = vpop.f32.mrb[0].mxu0
      %v2421 = vadd.f32 0.0, %v2420
      %v2422 = vpop.f32.mrb[0].mxu0
      %2423 = vmatprep.mubr.bf16.mxu0 0
      %2424 = vmatmul.mubr.bf16.gmra.mrb[0].mxu0 %v2251
      %v2425 = vpop.f32.mrb[0].mxu0
      %v2426 = vadd.f32 0.0, %v2425
      %v2427 = vpop.f32.mrb[0].mxu0
      %v2428 = vpop.f32.mrb[0].mxu0
      %v2429 = vadd.f32 0.0, %v2428
      %v2430 = vpop.f32.mrb[0].mxu0
      %2431 = vmatprep.mubr.bf16.mxu0 0
      %2432 = vmatmul.mubr.bf16.gmra.mrb[0].mxu0 %v2254
      %v2433 = vpop.f32.mrb[0].mxu0
      %v2434 = vadd.f32 0.0, %v2433
      %v2435 = vpop.f32.mrb[0].mxu0
      %v2436 = vpop.f32.mrb[0].mxu0
      %v2437 = vadd.f32 0.0, %v2436
      %v2438 = vpop.f32.mrb[0].mxu0
      %2439 = vmatprep.mubr.bf16.mxu0 0
      %2440 = vmatmul.mubr.bf16.gmra.mrb[0].mxu0 %v2257
      %v2441 = vpop.f32.mrb[0].mxu0
      %v2442 = vadd.f32 0.0, %v2441
      %v2443 = vpop.f32.mrb[0].mxu0
      %v2444 = vpop.f32.mrb[0].mxu0
      %v2445 = vadd.f32 0.0, %v2444
      %v2446 = vpop.f32.mrb[0].mxu0
      %2447 = vmatprep.mubr.bf16.mxu0 0
      %2448 = vmatmul.mubr.bf16.gmra.mrb[0].mxu0 %v2260
      %v2449 = vpop.f32.mrb[0].mxu0
      %v2450 = vadd.f32 0.0, %v2449
      %v2451 = vpop.f32.mrb[0].mxu0
      %v2452 = vpop.f32.mrb[0].mxu0
      %v2453 = vadd.f32 0.0, %v2452
      %v2454 = vpop.f32.mrb[0].mxu0
      %2455 = vmatprep.mubr.bf16.mxu0 0
      %2456 = vmatmul.mubr.bf16.gmra.mrb[0].mxu0 %v2263
      %v2457 = vpop.f32.mrb[0].mxu0
      %v2458 = vadd.f32 0.0, %v2457
      %v2459 = vpop.f32.mrb[0].mxu0
      %v2460 = vpop.f32.mrb[0].mxu0
      %v2461 = vadd.f32 0.0, %v2460
      %v2462 = vpop.f32.mrb[0].mxu0
      %2463 = vmatprep.mubr.bf16.mxu0 0
      %2464 = vmatmul.mubr.bf16.gmra.mrb[0].mxu0 %v2266
      %v2465 = vpop.f32.mrb[0].mxu0
      %v2466 = vadd.f32 0.0, %v2465
      %v2467 = vpop.f32.mrb[0].mxu0
      %v2468 = vpop.f32.mrb[0].mxu0
      %v2469 = vadd.f32 0.0, %v2468
      %v2470 = vpop.f32.mrb[0].mxu0
      %2471 = vmatprep.mubr.bf16.mxu0 0
      %2472 = vmatmul.mubr.bf16.gmra.mrb[0].mxu0 %v2269
      %v2473 = vpop.f32.mrb[0].mxu0
      %v2474 = vadd.f32 0.0, %v2473
      %v2475 = vpop.f32.mrb[0].mxu0
      %v2476 = vpop.f32.mrb[0].mxu0
      %v2477 = vadd.f32 0.0, %v2476
      %v2478 = vpop.f32.mrb[0].mxu0
      %2479 = vmatprep.mubr.bf16.mxu0 0
      %2480 = vmatmul.mubr.bf16.gmra.mrb[0].mxu0 %v2272
      %v2481 = vpop.f32.mrb[0].mxu0
      %v2482 = vadd.f32 0.0, %v2481
      %v2483 = vpop.f32.mrb[0].mxu0
      %v2484 = vpop.f32.mrb[0].mxu0
      %v2485 = vadd.f32 0.0, %v2484
      %v2486 = vpop.f32.mrb[0].mxu0
      %2487 = vmatprep.mubr.bf16.mxu0 0
      %2488 = vmatmul.mubr.bf16.gmra.mrb[0].mxu0 %v2275
      %v2489 = vpop.f32.mrb[0].mxu0
      %v2490 = vadd.f32 0.0, %v2489
      %v2491 = vpop.f32.mrb[0].mxu0
      %v2492 = vpop.f32.mrb[0].mxu0
      %v2493 = vadd.f32 0.0, %v2492
      %v2494 = vpop.f32.mrb[0].mxu0
      %2495 = vmatprep.mubr.bf16.mxu0 0
      %2496 = vmatmul.mubr.bf16.gmra.mrb[0].mxu0 %v2278
      %v2497 = vpop.f32.mrb[0].mxu0
      %v2498 = vadd.f32 0.0, %v2497
      %v2499 = vpop.f32.mrb[0].mxu0
      %v2500 = vpop.f32.mrb[0].mxu0
      %v2501 = vadd.f32 0.0, %v2500
      %v2502 = vpop.f32.mrb[0].mxu0
      %2503 = vmatprep.mubr.bf16.mxu0 0
      %2504 = vmatmul.mubr.bf16.gmra.mrb[0].mxu0 %v2281
      %v2505 = vpop.f32.mrb[0].mxu0
      %v2506 = vadd.f32 0.0, %v2505
      %v2507 = vpop.f32.mrb[0].mxu0
      %v2508 = vpop.f32.mrb[0].mxu0
      %v2509 = vadd.f32 0.0, %v2508
      %v2510 = vpop.f32.mrb[0].mxu0
      %2511 = vmatprep.mubr.bf16.mxu0 0
      %2512 = vmatmul.mubr.bf16.gmra.mrb[0].mxu0 %v2284
      %v2513 = vpop.f32.mrb[0].mxu0
      %v2514 = vadd.f32 0.0, %v2513
      %v2515 = vpop.f32.mrb[0].mxu0
      %v2516 = vpop.f32.mrb[0].mxu0
      %v2517 = vadd.f32 0.0, %v2516
      %v2518 = vpop.f32.mrb[0].mxu0
      %2519 = vmatprep.mubr.bf16.mxu0 0
      %2520 = vmatmul.mubr.bf16.gmra.mrb[0].mxu0 %v2287
      %v2521 = vpop.f32.mrb[0].mxu0
      %v2522 = vadd.f32 0.0, %v2521
      %v2523 = vpop.f32.mrb[0].mxu0
      %v2524 = vpop.f32.mrb[0].mxu0
      %v2525 = vadd.f32 0.0, %v2524
      %v2526 = vpop.f32.mrb[0].mxu0
      %2527 = vmatprep.mubr.bf16.mxu0 0
      %2528 = vmatmul.mubr.bf16.gmra.mrb[0].mxu0 %v2290
      %v2529 = vpop.f32.mrb[0].mxu0
      %v2530 = vadd.f32 0.0, %v2529
      %v2531 = vpop.f32.mrb[0].mxu0
      %v2532 = vpop.f32.mrb[0].mxu0
      %v2533 = vadd.f32 0.0, %v2532
      %v2534 = vpop.f32.mrb[0].mxu0
      %2535 = vmatprep.mubr.bf16.mxu0 0
      %2536 = vmatmul.mubr.bf16.gmra.mrb[0].mxu0 %v2293
      %v2537 = vpop.f32.mrb[0].mxu0
      %v2538 = vadd.f32 0.0, %v2537
      %v2539 = vpop.f32.mrb[0].mxu0
      %v2540 = vpop.f32.mrb[0].mxu0
      %v2541 = vpop.f32.mrb[0].mxu0
      %2542 = vdwg.mxu0
      %v2543 = vadd.f32 %v2070, %v2330
      %v2544 = vadd.f32 %v2071, %v2333
      %v2545 = vadd.f32 %v2072, %v2338
      %v2546 = vadd.f32 %v2073, %v2341
      %v2547 = vadd.f32 %v2074, %v2346
      %v2548 = vadd.f32 %v2075, %v2349
      %v2549 = vadd.f32 %v2076, %v2354
      %v2550 = vadd.f32 %v2077, %v2357
      %v2551 = vadd.f32 %v2078, %v2362
      %v2552 = vadd.f32 %v2079, %v2365
      %v2553 = vadd.f32 %v2080, %v2370
      %v2554 = vadd.f32 %v2081, %v2373
      %v2555 = vadd.f32 %v2082, %v2378
      %v2556 = vadd.f32 %v2083, %v2381
      %v2557 = vadd.f32 %v2084, %v2386
      %v2558 = vadd.f32 %v2085, %v2389
      %v2559 = vadd.f32 %v2086, %v2394
      %v2560 = vadd.f32 %v2087, %v2397
      %v2561 = vadd.f32 %v2088, %v2402
      %v2562 = vadd.f32 %v2089, %v2405
      %v2563 = vadd.f32 %v2090, %v2410
      %v2564 = vadd.f32 %v2091, %v2413
      %v2565 = vadd.f32 %v2092, %v2418
      %v2566 = vadd.f32 %v2093, %v2421
      %v2567 = vadd.f32 %v2094, %v2426
      %v2568 = vadd.f32 %v2095, %v2429
      %v2569 = vadd.f32 %v2096, %v2434
      %v2570 = vadd.f32 %v2097, %v2437
      %v2571 = vadd.f32 %v2098, %v2442
      %v2572 = vadd.f32 %v2099, %v2445
      %v2573 = vadd.f32 %v2100, %v2450
      %v2574 = vadd.f32 %v2101, %v2453
      %v2575 = vadd.f32 %v2102, %v2458
      %v2576 = vadd.f32 %v2103, %v2461
      %v2577 = vadd.f32 %v2104, %v2466
      %v2578 = vadd.f32 %v2105, %v2469
      %v2579 = vadd.f32 %v2106, %v2474
      %v2580 = vadd.f32 %v2107, %v2477
      %v2581 = vadd.f32 %v2108, %v2482
      %v2582 = vadd.f32 %v2109, %v2485
      %v2583 = vadd.f32 %v2110, %v2490
      %v2584 = vadd.f32 %v2111, %v2493
      %v2585 = vadd.f32 %v2112, %v2498
      %v2586 = vadd.f32 %v2113, %v2501
      %v2587 = vadd.f32 %v2114, %v2506
      %v2588 = vadd.f32 %v2115, %v2509
      %v2589 = vadd.f32 %v2116, %v2514
      %v2590 = vadd.f32 %v2117, %v2517
      %v2591 = vadd.f32 %v2118, %v2522
      %v2592 = vadd.f32 %v2119, %v2525
      %v2593 = vadd.f32 %v2120, %v2530
      %v2594 = vadd.f32 %v2121, %v2533
      %v2595 = vadd.f32 %v2122, %v2538
      %v2596 = vld [vmem:[%s2] sm:$0x1]
      %v2598 = vlaneseq
      %v2599 = vshrl.u32 %v2598, 7
      %v2600 = vsub.s32 0, %v2599
      %v2601 = vrot.slane %v2596, %v2600
      %v2603 = vadd.f32 %v2543, %v2601
      %v2604 = vadd.f32 %v2544, %v2601
      %v2605 = vadd.f32 %v2545, %v2601
      %v2606 = vadd.f32 %v2546, %v2601
      %v2607 = vadd.f32 %v2547, %v2601
      %v2608 = vadd.f32 %v2548, %v2601
      %v2609 = vadd.f32 %v2549, %v2601
      %v2610 = vadd.f32 %v2550, %v2601
      %v2611 = vadd.f32 %v2551, %v2601
      %v2612 = vadd.f32 %v2552, %v2601
      %v2613 = vadd.f32 %v2553, %v2601
      %v2614 = vadd.f32 %v2554, %v2601
      %v2615 = vadd.f32 %v2555, %v2601
      %v2616 = vadd.f32 %v2556, %v2601
      %v2617 = vadd.f32 %v2557, %v2601
      %v2618 = vadd.f32 %v2558, %v2601
      %v2619 = vadd.f32 %v2559, %v2601
      %v2620 = vadd.f32 %v2560, %v2601
      %v2621 = vadd.f32 %v2561, %v2601
      %v2622 = vadd.f32 %v2562, %v2601
      %v2623 = vadd.f32 %v2563, %v2601
      %v2624 = vadd.f32 %v2564, %v2601
      %v2625 = vadd.f32 %v2565, %v2601
      %v2626 = vadd.f32 %v2566, %v2601
      %v2627 = vadd.f32 %v2567, %v2601
      %v2628 = vadd.f32 %v2568, %v2601
      %v2629 = vadd.f32 %v2569, %v2601
      %v2630 = vadd.f32 %v2570, %v2601
      %v2631 = vadd.f32 %v2571, %v2601
      %v2632 = vadd.f32 %v2572, %v2601
      %v2633 = vadd.f32 %v2573, %v2601
      %v2634 = vadd.f32 %v2574, %v2601
      %v2635 = vadd.f32 %v2575, %v2601
      %v2636 = vadd.f32 %v2576, %v2601
      %v2637 = vadd.f32 %v2577, %v2601
      %v2638 = vadd.f32 %v2578, %v2601
      %v2639 = vadd.f32 %v2579, %v2601
      %v2640 = vadd.f32 %v2580, %v2601
      %v2641 = vadd.f32 %v2581, %v2601
      %v2642 = vadd.f32 %v2582, %v2601
      %v2643 = vadd.f32 %v2583, %v2601
      %v2644 = vadd.f32 %v2584, %v2601
      %v2645 = vadd.f32 %v2585, %v2601
      %v2646 = vadd.f32 %v2586, %v2601
      %v2647 = vadd.f32 %v2587, %v2601
      %v2648 = vadd.f32 %v2588, %v2601
      %v2649 = vadd.f32 %v2589, %v2601
      %v2650 = vadd.f32 %v2590, %v2601
      %v2651 = vadd.f32 %v2591, %v2601
      %v2652 = vadd.f32 %v2592, %v2601
      %v2653 = vadd.f32 %v2593, %v2601
      %v2654 = vadd.f32 %v2594, %v2601
      %v2655 = vadd.f32 %v2595, %v2601
      %v2656 = vmax.f32 %v2603, 0.0
      %v2657 = vmax.f32 %v2604, 0.0
      %v2658 = vmax.f32 %v2605, 0.0
      %v2659 = vmax.f32 %v2606, 0.0
      %v2660 = vmax.f32 %v2607, 0.0
      %v2661 = vmax.f32 %v2608, 0.0
      %v2662 = vmax.f32 %v2609, 0.0
      %v2663 = vmax.f32 %v2610, 0.0
      %v2664 = vmax.f32 %v2611, 0.0
      %v2665 = vmax.f32 %v2612, 0.0
      %v2666 = vmax.f32 %v2613, 0.0
      %v2667 = vmax.f32 %v2614, 0.0
      %v2668 = vmax.f32 %v2615, 0.0
      %v2669 = vmax.f32 %v2616, 0.0
      %v2670 = vmax.f32 %v2617, 0.0
      %v2671 = vmax.f32 %v2618, 0.0
      %v2672 = vmax.f32 %v2619, 0.0
      %v2673 = vmax.f32 %v2620, 0.0
      %v2674 = vmax.f32 %v2621, 0.0
      %v2675 = vmax.f32 %v2622, 0.0
      %v2676 = vmax.f32 %v2623, 0.0
      %v2677 = vmax.f32 %v2624, 0.0
      %v2678 = vmax.f32 %v2625, 0.0
      %v2679 = vmax.f32 %v2626, 0.0
      %v2680 = vmax.f32 %v2627, 0.0
      %v2681 = vmax.f32 %v2628, 0.0
      %v2682 = vmax.f32 %v2629, 0.0
      %v2683 = vmax.f32 %v2630, 0.0
      %v2684 = vmax.f32 %v2631, 0.0
      %v2685 = vmax.f32 %v2632, 0.0
      %v2686 = vmax.f32 %v2633, 0.0
      %v2687 = vmax.f32 %v2634, 0.0
      %v2688 = vmax.f32 %v2635, 0.0
      %v2689 = vmax.f32 %v2636, 0.0
      %v2690 = vmax.f32 %v2637, 0.0
      %v2691 = vmax.f32 %v2638, 0.0
      %v2692 = vmax.f32 %v2639, 0.0
      %v2693 = vmax.f32 %v2640, 0.0
      %v2694 = vmax.f32 %v2641, 0.0
      %v2695 = vmax.f32 %v2642, 0.0
      %v2696 = vmax.f32 %v2643, 0.0
      %v2697 = vmax.f32 %v2644, 0.0
      %v2698 = vmax.f32 %v2645, 0.0
      %v2699 = vmax.f32 %v2646, 0.0
      %v2700 = vmax.f32 %v2647, 0.0
      %v2701 = vmax.f32 %v2648, 0.0
      %v2702 = vmax.f32 %v2649, 0.0
      %v2703 = vmax.f32 %v2650, 0.0
      %v2704 = vmax.f32 %v2651, 0.0
      %v2705 = vmax.f32 %v2652, 0.0
      %v2706 = vmax.f32 %v2653, 0.0
      %v2707 = vmax.f32 %v2654, 0.0
      %v2708 = vmax.f32 %v2655, 0.0
      %v2709 = vpack.c.bf16 %v2657, %v2656
      %v2710 = vpack.c.bf16 %v2659, %v2658
      %v2711 = vpack.c.bf16 %v2661, %v2660
      %v2712 = vpack.c.bf16 %v2663, %v2662
      %v2713 = vpack.c.bf16 %v2665, %v2664
      %v2714 = vpack.c.bf16 %v2667, %v2666
      %v2715 = vpack.c.bf16 %v2669, %v2668
      %v2716 = vpack.c.bf16 %v2671, %v2670
      %v2717 = vpack.c.bf16 %v2673, %v2672
      %v2718 = vpack.c.bf16 %v2675, %v2674
      %v2719 = vpack.c.bf16 %v2677, %v2676
      %v2720 = vpack.c.bf16 %v2679, %v2678
      %v2721 = vpack.c.bf16 %v2681, %v2680
      %v2722 = vpack.c.bf16 %v2683, %v2682
      %v2723 = vpack.c.bf16 %v2685, %v2684
      %v2724 = vpack.c.bf16 %v2687, %v2686
      %v2725 = vpack.c.bf16 %v2689, %v2688
      %v2726 = vpack.c.bf16 %v2691, %v2690
      %v2727 = vpack.c.bf16 %v2693, %v2692
      %v2728 = vpack.c.bf16 %v2695, %v2694
      %v2729 = vpack.c.bf16 %v2697, %v2696
      %v2730 = vpack.c.bf16 %v2699, %v2698
      %v2731 = vpack.c.bf16 %v2701, %v2700
      %v2732 = vpack.c.bf16 %v2703, %v2702
      %v2733 = vpack.c.bf16 %v2705, %v2704
      %v2734 = vpack.c.bf16 %v2707, %v2706
      %v2735 = vpack.c.bf16 %v2708, %v2708
      %v2763 = vunpack.c.l.b16 %v2709
      %v2764 = vunpack.c.h.b16 %v2709
      %v2765 = vunpack.c.l.b16 %v2710
      %v2766 = vunpack.c.h.b16 %v2710
      %v2767 = vunpack.c.l.b16 %v2711
      %v2768 = vunpack.c.h.b16 %v2711
      %v2769 = vunpack.c.l.b16 %v2712
      %v2770 = vunpack.c.h.b16 %v2712
      %v2771 = vunpack.c.l.b16 %v2713
      %v2772 = vunpack.c.h.b16 %v2713
      %v2773 = vunpack.c.l.b16 %v2714
      %v2774 = vunpack.c.h.b16 %v2714
      %v2775 = vunpack.c.l.b16 %v2715
      %v2776 = vunpack.c.h.b16 %v2715
      %v2777 = vunpack.c.l.b16 %v2716
      %v2778 = vunpack.c.h.b16 %v2716
      %v2779 = vunpack.c.l.b16 %v2717
      %v2780 = vunpack.c.h.b16 %v2717
      %v2781 = vunpack.c.l.b16 %v2718
      %v2782 = vunpack.c.h.b16 %v2718
      %v2783 = vunpack.c.l.b16 %v2719
      %v2784 = vunpack.c.h.b16 %v2719
      %v2785 = vunpack.c.l.b16 %v2720
      %v2786 = vunpack.c.h.b16 %v2720
      %v2787 = vunpack.c.l.b16 %v2721
      %v2788 = vunpack.c.h.b16 %v2721
      %v2789 = vunpack.c.l.b16 %v2722
      %v2790 = vunpack.c.h.b16 %v2722
      %v2791 = vunpack.c.l.b16 %v2723
      %v2792 = vunpack.c.h.b16 %v2723
      %v2793 = vunpack.c.l.b16 %v2724
      %v2794 = vunpack.c.h.b16 %v2724
      %v2795 = vunpack.c.l.b16 %v2725
      %v2796 = vunpack.c.h.b16 %v2725
      %v2797 = vunpack.c.l.b16 %v2726
      %v2798 = vunpack.c.h.b16 %v2726
      %v2799 = vunpack.c.l.b16 %v2727
      %v2800 = vunpack.c.h.b16 %v2727
      %v2801 = vunpack.c.l.b16 %v2728
      %v2802 = vunpack.c.h.b16 %v2728
      %v2803 = vunpack.c.l.b16 %v2729
      %v2804 = vunpack.c.h.b16 %v2729
      %v2805 = vunpack.c.l.b16 %v2730
      %v2806 = vunpack.c.h.b16 %v2730
      %v2807 = vunpack.c.l.b16 %v2731
      %v2808 = vunpack.c.h.b16 %v2731
      %v2809 = vunpack.c.l.b16 %v2732
      %v2810 = vunpack.c.h.b16 %v2732
      %v2811 = vunpack.c.l.b16 %v2733
      %v2812 = vunpack.c.h.b16 %v2733
      %v2813 = vunpack.c.l.b16 %v2734
      %v2814 = vunpack.c.h.b16 %v2734
      %v2815 = vunpack.c.l.b16 %v2735
      %v2816 = vpack.c.b16 %v2763, %v2763
      %v2817 = vpack.c.b16 %v2764, %v2764
      %v2818 = vpack.c.b16 %v2765, %v2765
      %v2819 = vpack.c.b16 %v2766, %v2766
      %v2820 = vpack.c.b16 %v2767, %v2767
      %v2821 = vpack.c.b16 %v2768, %v2768
      %v2822 = vpack.c.b16 %v2769, %v2769
      %v2823 = vpack.c.b16 %v2770, %v2770
      %v2824 = vpack.c.b16 %v2771, %v2771
      %v2825 = vpack.c.b16 %v2772, %v2772
      %v2826 = vpack.c.b16 %v2773, %v2773
      %v2827 = vpack.c.b16 %v2774, %v2774
      %v2828 = vpack.c.b16 %v2775, %v2775
      %v2829 = vpack.c.b16 %v2776, %v2776
      %v2830 = vpack.c.b16 %v2777, %v2777
      %v2831 = vpack.c.b16 %v2778, %v2778
      %v2832 = vpack.c.b16 %v2779, %v2779
      %v2833 = vpack.c.b16 %v2780, %v2780
      %v2834 = vpack.c.b16 %v2781, %v2781
      %v2835 = vpack.c.b16 %v2782, %v2782
      %v2836 = vpack.c.b16 %v2783, %v2783
      %v2837 = vpack.c.b16 %v2784, %v2784
      %v2838 = vpack.c.b16 %v2785, %v2785
      %v2839 = vpack.c.b16 %v2786, %v2786
      %v2840 = vpack.c.b16 %v2787, %v2787
      %v2841 = vpack.c.b16 %v2788, %v2788
      %v2842 = vpack.c.b16 %v2789, %v2789
      %v2843 = vpack.c.b16 %v2790, %v2790
      %v2844 = vpack.c.b16 %v2791, %v2791
      %v2845 = vpack.c.b16 %v2792, %v2792
      %v2846 = vpack.c.b16 %v2793, %v2793
      %v2847 = vpack.c.b16 %v2794, %v2794
      %v2848 = vpack.c.b16 %v2795, %v2795
      %v2849 = vpack.c.b16 %v2796, %v2796
      %v2850 = vpack.c.b16 %v2797, %v2797
      %v2851 = vpack.c.b16 %v2798, %v2798
      %v2852 = vpack.c.b16 %v2799, %v2799
      %v2853 = vpack.c.b16 %v2800, %v2800
      %v2854 = vpack.c.b16 %v2801, %v2801
      %v2855 = vpack.c.b16 %v2802, %v2802
      %v2856 = vpack.c.b16 %v2803, %v2803
      %v2857 = vpack.c.b16 %v2804, %v2804
      %v2858 = vpack.c.b16 %v2805, %v2805
      %v2859 = vpack.c.b16 %v2806, %v2806
      %v2860 = vpack.c.b16 %v2807, %v2807
      %v2861 = vpack.c.b16 %v2808, %v2808
      %v2862 = vpack.c.b16 %v2809, %v2809
      %v2863 = vpack.c.b16 %v2810, %v2810
      %v2864 = vpack.c.b16 %v2811, %v2811
      %v2865 = vpack.c.b16 %v2812, %v2812
      %v2866 = vpack.c.b16 %v2813, %v2813
      %v2867 = vpack.c.b16 %v2814, %v2814
      %v2868 = vpack.c.b16 %v2815, %v2815
      %vm2922 = vcmask 257024
      %2923 = vst.msk [vmem:[%s170] sm:$0xf] %vm2922, %v2816
      %2924 = vst.msk [vmem:[%s170 + $0x4] sm:$0xf] %vm2922, %v2817
      %2925 = vst.msk [vmem:[%s170 + $0x8] sm:$0xf] %vm2922, %v2818
      %2926 = vst.msk [vmem:[%s170 + $0xc] sm:$0xf] %vm2922, %v2819
      %2927 = vst.msk [vmem:[%s170 + $0x10] sm:$0xf] %vm2922, %v2820
      %2928 = vst.msk [vmem:[%s170 + $0x14] sm:$0xf] %vm2922, %v2821
      %2929 = vst.msk [vmem:[%s170 + $0x18] sm:$0xf] %vm2922, %v2822
      %2930 = vst.msk [vmem:[%s170 + $0x1c] sm:$0xf] %vm2922, %v2823
      %2931 = vst.msk [vmem:[%s170 + $0x20] sm:$0xf] %vm2922, %v2824
      %2932 = vst.msk [vmem:[%s170 + $0x24] sm:$0xf] %vm2922, %v2825
      %2933 = vst.msk [vmem:[%s170 + $0x28] sm:$0xf] %vm2922, %v2826
      %2934 = vst.msk [vmem:[%s170 + $0x2c] sm:$0xf] %vm2922, %v2827
      %2935 = vst.msk [vmem:[%s170 + $0x30] sm:$0xf] %vm2922, %v2828
      %2936 = vst.msk [vmem:[%s170 + $0x34] sm:$0xf] %vm2922, %v2829
      %2937 = vst.msk [vmem:[%s170 + $0x38] sm:$0xf] %vm2922, %v2830
      %2938 = vst.msk [vmem:[%s170 + $0x3c] sm:$0xf] %vm2922, %v2831
      %2939 = vst.msk [vmem:[%s170 + $0x40] sm:$0xf] %vm2922, %v2832
      %2940 = vst.msk [vmem:[%s170 + $0x44] sm:$0xf] %vm2922, %v2833
      %2941 = vst.msk [vmem:[%s170 + $0x48] sm:$0xf] %vm2922, %v2834
      %2942 = vst.msk [vmem:[%s170 + $0x4c] sm:$0xf] %vm2922, %v2835
      %2943 = vst.msk [vmem:[%s170 + $0x50] sm:$0xf] %vm2922, %v2836
      %2944 = vst.msk [vmem:[%s170 + $0x54] sm:$0xf] %vm2922, %v2837
      %2945 = vst.msk [vmem:[%s170 + $0x58] sm:$0xf] %vm2922, %v2838
      %2946 = vst.msk [vmem:[%s170 + $0x5c] sm:$0xf] %vm2922, %v2839
      %2947 = vst.msk [vmem:[%s170 + $0x60] sm:$0xf] %vm2922, %v2840
      %2948 = vst.msk [vmem:[%s170 + $0x64] sm:$0xf] %vm2922, %v2841
      %2949 = vst.msk [vmem:[%s170 + $0x68] sm:$0xf] %vm2922, %v2842
      %2950 = vst.msk [vmem:[%s170 + $0x6c] sm:$0xf] %vm2922, %v2843
      %2951 = vst.msk [vmem:[%s170 + $0x70] sm:$0xf] %vm2922, %v2844
      %2952 = vst.msk [vmem:[%s170 + $0x74] sm:$0xf] %vm2922, %v2845
      %2953 = vst.msk [vmem:[%s170 + $0x78] sm:$0xf] %vm2922, %v2846
      %2954 = vst.msk [vmem:[%s170 + $0x7c] sm:$0xf] %vm2922, %v2847
      %2955 = vst.msk [vmem:[%s170 + $0x80] sm:$0xf] %vm2922, %v2848
      %2956 = vst.msk [vmem:[%s170 + $0x84] sm:$0xf] %vm2922, %v2849
      %2957 = vst.msk [vmem:[%s170 + $0x88] sm:$0xf] %vm2922, %v2850
      %2958 = vst.msk [vmem:[%s170 + $0x8c] sm:$0xf] %vm2922, %v2851
      %2959 = vst.msk [vmem:[%s170 + $0x90] sm:$0xf] %vm2922, %v2852
      %2960 = vst.msk [vmem:[%s170 + $0x94] sm:$0xf] %vm2922, %v2853
      %2961 = vst.msk [vmem:[%s170 + $0x98] sm:$0xf] %vm2922, %v2854
      %2962 = vst.msk [vmem:[%s170 + $0x9c] sm:$0xf] %vm2922, %v2855
      %2963 = vst.msk [vmem:[%s170 + $0xa0] sm:$0xf] %vm2922, %v2856
      %2964 = vst.msk [vmem:[%s170 + $0xa4] sm:$0xf] %vm2922, %v2857
      %2965 = vst.msk [vmem:[%s170 + $0xa8] sm:$0xf] %vm2922, %v2858
      %2966 = vst.msk [vmem:[%s170 + $0xac] sm:$0xf] %vm2922, %v2859
      %2967 = vst.msk [vmem:[%s170 + $0xb0] sm:$0xf] %vm2922, %v2860
      %2968 = vst.msk [vmem:[%s170 + $0xb4] sm:$0xf] %vm2922, %v2861
      %2969 = vst.msk [vmem:[%s170 + $0xb8] sm:$0xf] %vm2922, %v2862
      %2970 = vst.msk [vmem:[%s170 + $0xbc] sm:$0xf] %vm2922, %v2863
      %2971 = vst.msk [vmem:[%s170 + $0xc0] sm:$0xf] %vm2922, %v2864
      %2972 = vst.msk [vmem:[%s170 + $0xc4] sm:$0xf] %vm2922, %v2865
      %2973 = vst.msk [vmem:[%s170 + $0xc8] sm:$0xf] %vm2922, %v2866
      %2974 = vst.msk [vmem:[%s170 + $0xcc] sm:$0xf] %vm2922, %v2867
      %vm2975 = vcmask 254976
      %2976 = vst.msk [vmem:[%s170 + $0xd0] sm:$0x3] %vm2975, %v2868
      %p2977 = scmp.lt.s32.totalorder %s14, 1
      %s2978 = scalar_select %p2977, %s14, 1
      %s2979 = smul.addr %s2978, 53
      %s2980 = smul.addr %s2979, 4
      %s2981 = scalar_lea.vmem %s3, %s2980
      // Predicated region
      $region33: #{forward.4} parent=31 // pred_check
        %p2982 = pneg %p100
      $region34: #{forward.4} parent=31 // pred_check_branch
        %2984 = sbr.rel (%p2982) target = $region36
      $region35: #{forward.4} parent=31 // pred_region
        _
      $region36: #{forward.4} parent=31 // pred_fallthru
        _
    $region32: #{forward.4} parent=5 // pred_fallthru
      _
    %p2985 = scmp.le.s32.totalorder 2, %s9
    // Predicated region
    $region37: #{forward.4} parent=5 // pred_check
      %p2986 = pneg %p2985
    $region38: #{forward.4} parent=5 // pred_check_branch
      %2988 = sbr.rel (%p2986) target = $region40
    $region39: #{forward.4} parent=5 // pred_region
      %s2989 = ssub.s32 %s9, 2
      // Predicated region
      $region41: #{forward.4} parent=39 // pred_check
        %p2990 = pneg %p106
      $region42: #{forward.4} parent=39 // pred_check_branch
        %2992 = sbr.rel (%p2990) target = $region44
      $region43: #{forward.4} parent=39 // pred_region
        %p2993 = scmp.lt.s32.totalorder %s15, 1
        %s2994 = scalar_select %p2993, %s15, 1
        %s2995 = smul.addr %s2994, 53
        %s2996 = smul.addr %s2995, 4
        %s2997 = scalar_lea.vmem %s3, %s2996
      $region44: #{forward.4} parent=39 // pred_fallthru
        _
    $region40: #{forward.4} parent=5 // pred_fallthru
      _
  $region6: #{forward.4} parent=0 // loop_footer
    %s13 = sadd.s32 1, %s9
  $region7: #{forward.4} parent=0 // loop_footer_branch
    %8 = sbr.rel target = $region3
  $region8: #{forward.4} parent=0 // loop_exit
    _

// kernel: forward.5
$region0: #{forward.5}
  #allocation0 [shape = 'u32[]', space=smem, size = 0x4, offset = 0x4, fixed_abs, tag = 'smem constant byte address 0x4 - core index']
  #allocation1 [shape = 'u32[144,128]{1,0:T(1,128)}', space=vmem, size = 0x12000, scoped, tag = 'internal scratch']
  %s0 = inlined_call_operand.vmem [shape: bf16[2,101,128], index: 0, kind: input, shape index: {}]
  %s1 = inlined_call_operand.vmem [shape: bf16[4,128,64], index: 1, kind: input, shape index: {}]
  %s2 = inlined_call_operand.vmem [shape: f32[1,64], index: 2, kind: input, shape index: {}]
  %s3 = inlined_call_operand.vmem [shape: bf16[2,90,64], index: 3, kind: output, shape index: {}]
  %s4 = sld [smem:[#allocation0]]
  $region45: #{forward.5} parent=0
    _
  %s6 = ssub.s32 1, %s4
  %s7 = scalar_select 0, %s6, %s4
  loop: start=0, step=1, limit=4
  $region2: #{forward.5} parent=0 // loop_pre_header
    _
  $region3: #{forward.5} parent=0 // loop_header
    %s9 = sphi 0, %s13
    %p10 = scmp.ge.s32.totalorder %s9, 4
    %s19 = sphi 0, %s21
    %s22 = sphi 0, %s19
    %s23 = sphi 0, %s22
    %s39 = sphi 0, %s23
    %s43 = sphi 0, %s43
    %s45 = sphi 0, %s43
    %s46 = sphi 0, %s45
    %s60 = sphi 0, %s46
    %s64 = sphi 0, %s64
    %s66 = sphi 0, %s64
    %s67 = sphi 0, %s66
    %s81 = sphi 0, %s67
    %s87 = sphi 0, %s89
    %s90 = sphi 0, %s87
    %s91 = sphi 0, %s90
    %s107 = sphi 0, %s91
  $region4: #{forward.5} parent=0 // loop_header_branch
    %12 = sbr.rel (%p10) target = $region8
  $region5: #{forward.5} parent=0 // loop_body
    %s14 = ssub.s32 %s9, 1
    %s15 = ssub.s32 %s9, 2
    %s16 = sadd.s32 %s9, 1
    %s17 = ssub.s32 %s9, %s16
    %p18 = scmp.eq.s32.totalorder %s17, 0
    %s20 = sadd.s32 %s19, 1
    %s21 = scalar_select %p18, %s19, %s20
    %p24 = pneg %p18
    %p25 = scmp.eq.s32.totalorder %s9, 1
    %p26 = por %p24, %p25
    %p27 = scmp.ne.s32.totalorder %s19, %s22
    %p28 = scmp.eq.s32.totalorder %s9, 0
    %p29 = por %p27, %p28
    %p30 = scmp.ne.s32.totalorder %s19, %s22
    %p31 = scmp.eq.s32.totalorder %s14, 1
    %p32 = por %p30, %p31
    %p33 = scmp.ne.s32.totalorder %s22, %s23
    %p34 = scmp.eq.s32.totalorder %s14, 0
    %p35 = por %p33, %p34
    %p36 = scmp.ne.s32.totalorder %s22, %s23
    %p37 = scmp.eq.s32.totalorder %s15, 1
    %p38 = por %p36, %p37
    %p40 = scmp.ne.s32.totalorder %s23, %s39
    %p41 = scmp.eq.s32.totalorder %s15, 0
    %p42 = por %p40, %p41
    %s44 = sadd.s32 %s43, 1
    %p47 = scmp.eq.s32.totalorder %s9, 1
    %p48 = scmp.ne.s32.totalorder %s43, %s45
    %p49 = scmp.eq.s32.totalorder %s9, 0
    %p50 = por %p48, %p49
    %p51 = scmp.ne.s32.totalorder %s43, %s45
    %p52 = scmp.eq.s32.totalorder %s14, 1
    %p53 = por %p51, %p52
    %p54 = scmp.ne.s32.totalorder %s45, %s46
    %p55 = scmp.eq.s32.totalorder %s14, 0
    %p56 = por %p54, %p55
    %p57 = scmp.ne.s32.totalorder %s45, %s46
    %p58 = scmp.eq.s32.totalorder %s15, 1
    %p59 = por %p57, %p58
    %p61 = scmp.ne.s32.totalorder %s46, %s60
    %p62 = scmp.eq.s32.totalorder %s15, 0
    %p63 = por %p61, %p62
    %s65 = sadd.s32 %s64, 1
    %p68 = scmp.eq.s32.totalorder %s9, 1
    %p69 = scmp.ne.s32.totalorder %s64, %s66
    %p70 = scmp.eq.s32.totalorder %s9, 0
    %p71 = por %p69, %p70
    %p72 = scmp.ne.s32.totalorder %s64, %s66
    %p73 = scmp.eq.s32.totalorder %s14, 1
    %p74 = por %p72, %p73
    %p75 = scmp.ne.s32.totalorder %s66, %s67
    %p76 = scmp.eq.s32.totalorder %s14, 0
    %p77 = por %p75, %p76
    %p78 = scmp.ne.s32.totalorder %s66, %s67
    %p79 = scmp.eq.s32.totalorder %s15, 1
    %p80 = por %p78, %p79
    %p82 = scmp.ne.s32.totalorder %s67, %s81
    %p83 = scmp.eq.s32.totalorder %s15, 0
    %p84 = por %p82, %p83
    %s85 = ssub.s32 %s9, %s16
    %p86 = scmp.eq.s32.totalorder %s85, 0
    %s88 = sadd.s32 %s87, 1
    %s89 = scalar_select %p86, %s87, %s88
    %p92 = pneg %p86
    %p93 = scmp.eq.s32.totalorder %s9, 1
    %p94 = por %p92, %p93
    %p95 = scmp.ne.s32.totalorder %s87, %s90
    %p96 = scmp.eq.s32.totalorder %s9, 0
    %p97 = por %p95, %p96
    %p98 = scmp.ne.s32.totalorder %s87, %s90
    %p99 = scmp.eq.s32.totalorder %s14, 1
    %p100 = por %p98, %p99
    %p101 = scmp.ne.s32.totalorder %s90, %s91
    %p102 = scmp.eq.s32.totalorder %s14, 0
    %p103 = por %p101, %p102
    %p104 = scmp.ne.s32.totalorder %s90, %s91
    %p105 = scmp.eq.s32.totalorder %s15, 1
    %p106 = por %p104, %p105
    %p108 = scmp.ne.s32.totalorder %s91, %s107
    %p109 = scmp.eq.s32.totalorder %s15, 0
    %p110 = por %p108, %p109
    %p111 = scmp.le.s32.totalorder 1, %s9
    %p112 = scmp.lt.s32.totalorder %s9, 3
    %p113 = pnand %p111, %p112
    %p114 = pneg %p113
    // Predicated region
    $region9: #{forward.5} parent=5 // pred_check
      _
    $region10: #{forward.5} parent=5 // pred_check_branch
      %116 = sbr.rel (%p113) target = $region12
    $region11: #{forward.5} parent=5 // pred_region
      %s117 = ssub.s32 %s9, 1
      // Predicated region
      $region13: #{forward.5} parent=11 // pred_check
        %p118 = pneg %p56
      $region14: #{forward.5} parent=11 // pred_check_branch
        %120 = sbr.rel (%p118) target = $region16
      $region15: #{forward.5} parent=11 // pred_region
        _
      $region16: #{forward.5} parent=11 // pred_fallthru
        _
      // Predicated region
      $region17: #{forward.5} parent=11 // pred_check
        %p121 = pneg %p77
      $region18: #{forward.5} parent=11 // pred_check_branch
        %123 = sbr.rel (%p121) target = $region20
      $region19: #{forward.5} parent=11 // pred_region
        _
      $region20: #{forward.5} parent=11 // pred_fallthru
        _
    $region12: #{forward.5} parent=5 // pred_fallthru
      _
    %p124 = scmp.lt.s32.totalorder %s9, 2
    // Predicated region
    $region21: #{forward.5} parent=5 // pred_check
      %p125 = pneg %p124
    $region22: #{forward.5} parent=5 // pred_check_branch
      %127 = sbr.rel (%p125) target = $region24
    $region23: #{forward.5} parent=5 // pred_region
      // Predicated region
      $region25: #{forward.5} parent=23 // pred_check
        %p128 = pneg %p29
      $region26: #{forward.5} parent=23 // pred_check_branch
        %130 = sbr.rel (%p128) target = $region28
      $region27: #{forward.5} parent=23 // pred_region
        %p131 = scmp.lt.s32.totalorder %s9, 1
        %s132 = scalar_select %p131, %s9, 1
        %s133 = smul.addr %s132, 13
        %s134 = smul.addr %s133, 4
        %s135 = scalar_lea.vmem %s0, %s134
      $region28: #{forward.5} parent=23 // pred_fallthru
        _
    $region24: #{forward.5} parent=5 // pred_fallthru
      _
    %p136 = scmp.le.s32.totalorder 1, %s9
    %p137 = scmp.lt.s32.totalorder %s9, 3
    %p138 = pnand %p136, %p137
    %p139 = pneg %p138
    // Predicated region
    $region29: #{forward.5} parent=5 // pred_check
      _
    $region30: #{forward.5} parent=5 // pred_check_branch
      %141 = sbr.rel (%p138) target = $region32
    $region31: #{forward.5} parent=5 // pred_region
      %s142 = ssub.s32 %s9, 1
      %p143 = scmp.lt.s32.totalorder %s14, 1
      %s144 = scalar_select %p143, %s14, 1
      %s145 = smul.addr %s144, 13
      %s146 = smul.addr %s145, 4
      %s147 = scalar_lea.vmem %s0, %s146
      %p148 = pneg %p35
      %p149 = pneg %p32
      %p150 = pneg %p56
      %p151 = pneg %p53
      %p152 = pneg %p77
      %p153 = pneg %p74
      %p154 = pneg %p103
      %p155 = pneg %p100
      %p156 = scmp.lt.s32.totalorder %s14, 1
      %s157 = scalar_select %p156, %s14, 1
      %s158 = smul.addr %s157, 12
      %s159 = smul.addr %s158, 4
      %s160 = scalar_lea.vmem %s3, %s159
      %p161 = scmp.lt.s32.totalorder %s14, 1
      %s162 = scalar_select %p161, %s14, 1
      %s163 = smul.addr %s162, 13
      %s164 = smul.addr %s163, 4
      %s165 = scalar_lea.vmem %s0, %s164
      %p166 = scmp.lt.s32.totalorder %s14, 1
      %s167 = scalar_select %p166, %s14, 1
      %s168 = smul.addr %s167, 12
      %s169 = smul.addr %s168, 4
      %s170 = scalar_lea.vmem %s3, %s169
      %v172 = vld [vmem:[%s165] sm:$0xf]
      %v173 = vld [vmem:[%s165 + $0x4] sm:$0xf]
      %v174 = vld [vmem:[%s165 + $0x8] sm:$0xf]
      %v175 = vld [vmem:[%s165 + $0xc] sm:$0xf]
      %v176 = vld [vmem:[%s165 + $0x10] sm:$0xf]
      %v177 = vld [vmem:[%s165 + $0x14] sm:$0xf]
      %v178 = vld [vmem:[%s165 + $0x18] sm:$0xf]
      %v179 = vld [vmem:[%s165 + $0x1c] sm:$0xf]
      %v180 = vld [vmem:[%s165 + $0x20] sm:$0xf]
      %v181 = vld [vmem:[%s165 + $0x24] sm:$0xf]
      %v182 = vld [vmem:[%s165 + $0x28] sm:$0xf]
      %v183 = vld [vmem:[%s165 + $0x2c] sm:$0x1]
      %v184 = vld [vmem:[%s1] sm:$0xf]
      %v185 = vld [vmem:[%s1 + $0x4] sm:$0xf]
      %v186 = vld [vmem:[%s1 + $0x8] sm:$0xf]
      %v187 = vld [vmem:[%s1 + $0xc] sm:$0xf]
      %v188 = vld [vmem:[%s1 + $0x10] sm:$0xf]
      %v189 = vld [vmem:[%s1 + $0x14] sm:$0xf]
      %v190 = vld [vmem:[%s1 + $0x18] sm:$0xf]
      %v191 = vld [vmem:[%s1 + $0x1c] sm:$0xf]
      %v192 = vld [vmem:[%s1 + $0x20] sm:$0xf]
      %v193 = vld [vmem:[%s1 + $0x24] sm:$0xf]
      %v194 = vld [vmem:[%s1 + $0x28] sm:$0xf]
      %v195 = vld [vmem:[%s1 + $0x2c] sm:$0xf]
      %v196 = vld [vmem:[%s1 + $0x30] sm:$0xf]
      %v197 = vld [vmem:[%s1 + $0x34] sm:$0xf]
      %v198 = vld [vmem:[%s1 + $0x38] sm:$0xf]
      %v199 = vld [vmem:[%s1 + $0x3c] sm:$0xf]
      %v200 = vld [vmem:[%s165 + $0x2c] sm:$0x3]
      %s201 = scalar_lea.vmem %s1, 64
      %v202 = vld [vmem:[%s201] sm:$0xf]
      %v203 = vld [vmem:[%s201 + $0x4] sm:$0xf]
      %v204 = vld [vmem:[%s201 + $0x8] sm:$0xf]
      %v205 = vld [vmem:[%s201 + $0xc] sm:$0xf]
      %v206 = vld [vmem:[%s201 + $0x10] sm:$0xf]
      %v207 = vld [vmem:[%s201 + $0x14] sm:$0xf]
      %v208 = vld [vmem:[%s201 + $0x18] sm:$0xf]
      %v209 = vld [vmem:[%s201 + $0x1c] sm:$0xf]
      %v210 = vld [vmem:[%s201 + $0x20] sm:$0xf]
      %v211 = vld [vmem:[%s201 + $0x24] sm:$0xf]
      %v212 = vld [vmem:[%s201 + $0x28] sm:$0xf]
      %v213 = vld [vmem:[%s201 + $0x2c] sm:$0xf]
      %v214 = vld [vmem:[%s201 + $0x30] sm:$0xf]
      %v215 = vld [vmem:[%s201 + $0x34] sm:$0xf]
      %v216 = vld [vmem:[%s201 + $0x38] sm:$0xf]
      %v217 = vld [vmem:[%s201 + $0x3c] sm:$0xf]
      %v230 = vunpack.c.l.b16 %v172
      %v231 = vunpack.c.l.b16 %v173
      %v232 = vunpack.c.l.b16 %v174
      %v233 = vunpack.c.l.b16 %v175
      %v234 = vunpack.c.l.b16 %v176
      %v235 = vunpack.c.l.b16 %v177
      %v236 = vunpack.c.l.b16 %v178
      %v237 = vunpack.c.l.b16 %v179
      %v238 = vunpack.c.l.b16 %v180
      %v239 = vunpack.c.l.b16 %v181
      %v240 = vunpack.c.l.b16 %v182
      %v241 = vunpack.c.l.b16 %v200
      %v242 = vpack.c.b16 %v231, %v230
      %v243 = vpack.c.b16 %v233, %v232
      %v244 = vpack.c.b16 %v235, %v234
      %v245 = vpack.c.b16 %v237, %v236
      %v246 = vpack.c.b16 %v239, %v238
      %v247 = vpack.c.b16 %v241, %v240
      %vm248 = vsmask.f32 7424
      %v250 = vshrl.u32 %v242, 16
      %v252 = vshll.u32 %v242, 16
      %v254 = vrot.slane %v252, 1
      %v255 = vor.u32 %v250, %v254
      %v257 = vshll.u32 %v243, 16
      %v259 = vrot.slane %v257, 1
      %v260 = vsel %vm248, %v255, %v259
      %v261 = vshrl.u32 %v243, 16
      %v263 = vor.u32 %v261, %v259
      %v265 = vshll.u32 %v244, 16
      %v267 = vrot.slane %v265, 1
      %v268 = vsel %vm248, %v263, %v267
      %v269 = vshrl.u32 %v244, 16
      %v271 = vor.u32 %v269, %v267
      %v273 = vshll.u32 %v245, 16
      %v275 = vrot.slane %v273, 1
      %v276 = vsel %vm248, %v271, %v275
      %v277 = vshrl.u32 %v245, 16
      %v279 = vor.u32 %v277, %v275
      %v281 = vshll.u32 %v246, 16
      %v283 = vrot.slane %v281, 1
      %v284 = vsel %vm248, %v279, %v283
      %v285 = vshrl.u32 %v246, 16
      %v287 = vor.u32 %v285, %v283
      %v289 = vshll.u32 %v247, 16
      %v291 = vrot.slane %v289, 1
      %v292 = vsel %vm248, %v287, %v291
      %v293 = vshrl.u32 %v247, 16
      %v295 = vor.u32 %v293, %v291
      %v318 = vunpack.c.l.b16 %v202
      %v319 = vunpack.c.l.b16 %v203
      %v320 = vunpack.c.l.b16 %v204
      %v321 = vunpack.c.l.b16 %v205
      %v322 = vunpack.c.l.b16 %v206
      %v323 = vunpack.c.l.b16 %v207
      %v324 = vunpack.c.l.b16 %v208
      %v325 = vunpack.c.l.b16 %v209
      %v326 = vunpack.c.l.b16 %v210
      %v327 = vunpack.c.l.b16 %v211
      %v328 = vunpack.c.l.b16 %v212
      %v329 = vunpack.c.l.b16 %v213
      %v330 = vunpack.c.l.b16 %v214
      %v331 = vunpack.c.l.b16 %v215
      %v332 = vunpack.c.l.b16 %v216
      %v333 = vunpack.c.l.b16 %v217
      %v334 = vpack.c.b16 %v319, %v318
      %v335 = vpack.c.b16 %v321, %v320
      %v336 = vpack.c.b16 %v323, %v322
      %v337 = vpack.c.b16 %v325, %v324
      %v338 = vpack.c.b16 %v327, %v326
      %v339 = vpack.c.b16 %v329, %v328
      %v340 = vpack.c.b16 %v331, %v330
      %v341 = vpack.c.b16 %v333, %v332
      %350 = vmatprep.subr.bf16.mxu0 0
      %351 = vmatpush1.bf16.msra.mxu0 %v334
      %352 = vmatprep.subr.bf16.mxu0 0
      %353 = vmatpush1.bf16.msra.mxu0 %v335
      %354 = vmatprep.subr.bf16.mxu0 0
      %355 = vmatpush1.bf16.msra.mxu0 %v336
      %356 = vmatprep.subr.bf16.mxu0 0
      %357 = vmatpush1.bf16.msra.mxu0 %v337
      %358 = vmatprep.subr.bf16.mxu0 0
      %359 = vmatpush1.bf16.msra.mxu0 %v338
      %360 = vmatprep.subr.bf16.mxu0 0
      %361 = vmatpush1.bf16.msra.mxu0 %v339
      %362 = vmatprep.subr.bf16.mxu0 0
      %363 = vmatpush1.bf16.msra.mxu0 %v340
      %364 = vmatprep.subr.bf16.mxu0 0
      %365 = vmatpush1.bf16.msra.mxu0 %v341
      %366 = vmatprep.subr.bf16.mxu0 0
      %367 = vmatpush1.bf16.msra.mxu0 0
      %368 = vmatprep.subr.bf16.mxu0 0
      %369 = vmatpush1.bf16.msra.mxu0 0
      %370 = vmatprep.subr.bf16.mxu0 0
      %371 = vmatpush1.bf16.msra.mxu0 0
      %372 = vmatprep.subr.bf16.mxu0 0
      %373 = vmatpush1.bf16.msra.mxu0 0
      %374 = vmatprep.subr.bf16.mxu0 0
      %375 = vmatpush1.bf16.msra.mxu0 0
      %376 = vmatprep.subr.bf16.mxu0 0
      %377 = vmatpush1.bf16.msra.mxu0 0
      %378 = vmatprep.subr.bf16.mxu0 0
      %379 = vmatpush1.bf16.msra.mxu0 0
      %380 = vmatprep.subr.bf16.mxu0 0
      %381 = vmatpush1.bf16.msra.mxu0 0
      %382 = vmatprep.mubr.bf16.mxu0 0
      %383 = vmatmul.mubr.bf16.gmra.mrb[0].mxu0 %v260
      %v384 = vpop.f32.mrb[0].mxu0
      %v385 = vadd.f32 0.0, %v384
      %v386 = vpop.f32.mrb[0].mxu0
      %v387 = vpop.f32.mrb[0].mxu0
      %v388 = vadd.f32 0.0, %v387
      %v389 = vpop.f32.mrb[0].mxu0
      %390 = vmatprep.mubr.bf16.mxu0 0
      %391 = vmatmul.mubr.bf16.gmra.mrb[0].mxu0 %v268
      %v392 = vpop.f32.mrb[0].mxu0
      %v393 = vadd.f32 0.0, %v392
      %v394 = vpop.f32.mrb[0].mxu0
      %v395 = vpop.f32.mrb[0].mxu0
      %v396 = vadd.f32 0.0, %v395
      %v397 = vpop.f32.mrb[0].mxu0
      %398 = vmatprep.mubr.bf16.mxu0 0
      %399 = vmatmul.mubr.bf16.gmra.mrb[0].mxu0 %v276
      %v400 = vpop.f32.mrb[0].mxu0
      %v401 = vadd.f32 0.0, %v400
      %v402 = vpop.f32.mrb[0].mxu0
      %v403 = vpop.f32.mrb[0].mxu0
      %v404 = vadd.f32 0.0, %v403
      %v405 = vpop.f32.mrb[0].mxu0
      %406 = vmatprep.mubr.bf16.mxu0 0
      %407 = vmatmul.mubr.bf16.gmra.mrb[0].mxu0 %v284
      %v408 = vpop.f32.mrb[0].mxu0
      %v409 = vadd.f32 0.0, %v408
      %v410 = vpop.f32.mrb[0].mxu0
      %v411 = vpop.f32.mrb[0].mxu0
      %v412 = vadd.f32 0.0, %v411
      %v413 = vpop.f32.mrb[0].mxu0
      %414 = vmatprep.mubr.bf16.mxu0 0
      %415 = vmatmul.mubr.bf16.gmra.mrb[0].mxu0 %v292
      %v416 = vpop.f32.mrb[0].mxu0
      %v417 = vadd.f32 0.0, %v416
      %v418 = vpop.f32.mrb[0].mxu0
      %v419 = vpop.f32.mrb[0].mxu0
      %v420 = vadd.f32 0.0, %v419
      %v421 = vpop.f32.mrb[0].mxu0
      %422 = vmatprep.mubr.bf16.mxu0 0
      %423 = vmatmul.mubr.bf16.gmra.mrb[0].mxu0 %v295
      %v424 = vpop.f32.mrb[0].mxu0
      %v425 = vadd.f32 0.0, %v424
      %v426 = vpop.f32.mrb[0].mxu0
      %v427 = vpop.f32.mrb[0].mxu0
      %v428 = vadd.f32 0.0, %v427
      %v429 = vpop.f32.mrb[0].mxu0
      %430 = vdwg.mxu0
      %v432 = vunpack.c.l.b16 %v183
      %v433 = vpack.c.b16 %v432, %v240
      %v456 = vunpack.c.l.b16 %v184
      %v457 = vunpack.c.l.b16 %v185
      %v458 = vunpack.c.l.b16 %v186
      %v459 = vunpack.c.l.b16 %v187
      %v460 = vunpack.c.l.b16 %v188
      %v461 = vunpack.c.l.b16 %v189
      %v462 = vunpack.c.l.b16 %v190
      %v463 = vunpack.c.l.b16 %v191
      %v464 = vunpack.c.l.b16 %v192
      %v465 = vunpack.c.l.b16 %v193
      %v466 = vunpack.c.l.b16 %v194
      %v467 = vunpack.c.l.b16 %v195
      %v468 = vunpack.c.l.b16 %v196
      %v469 = vunpack.c.l.b16 %v197
      %v470 = vunpack.c.l.b16 %v198
      %v471 = vunpack.c.l.b16 %v199
      %v472 = vpack.c.b16 %v457, %v456
      %v473 = vpack.c.b16 %v459, %v458
      %v474 = vpack.c.b16 %v461, %v460
      %v475 = vpack.c.b16 %v463, %v462
      %v476 = vpack.c.b16 %v465, %v464
      %v477 = vpack.c.b16 %v467, %v466
      %v478 = vpack.c.b16 %v469, %v468
      %v479 = vpack.c.b16 %v471, %v470
      %488 = vmatprep.subr.bf16.mxu0 0
      %489 = vmatpush1.bf16.msra.mxu0 %v472
      %490 = vmatprep.subr.bf16.mxu0 0
      %491 = vmatpush1.bf16.msra.mxu0 %v473
      %492 = vmatprep.subr.bf16.mxu0 0
      %493 = vmatpush1.bf16.msra.mxu0 %v474
      %494 = vmatprep.subr.bf16.mxu0 0
      %495 = vmatpush1.bf16.msra.mxu0 %v475
      %496 = vmatprep.subr.bf16.mxu0 0
      %497 = vmatpush1.bf16.msra.mxu0 %v476
      %498 = vmatprep.subr.bf16.mxu0 0
      %499 = vmatpush1.bf16.msra.mxu0 %v477
      %500 = vmatprep.subr.bf16.mxu0 0
      %501 = vmatpush1.bf16.msra.mxu0 %v478
      %502 = vmatprep.subr.bf16.mxu0 0
      %503 = vmatpush1.bf16.msra.mxu0 %v479
      %504 = vmatprep.subr.bf16.mxu0 0
      %505 = vmatpush1.bf16.msra.mxu0 0
      %506 = vmatprep.subr.bf16.mxu0 0
      %507 = vmatpush1.bf16.msra.mxu0 0
      %508 = vmatprep.subr.bf16.mxu0 0
      %509 = vmatpush1.bf16.msra.mxu0 0
      %510 = vmatprep.subr.bf16.mxu0 0
      %511 = vmatpush1.bf16.msra.mxu0 0
      %512 = vmatprep.subr.bf16.mxu0 0
      %513 = vmatpush1.bf16.msra.mxu0 0
      %514 = vmatprep.subr.bf16.mxu0 0
      %515 = vmatpush1.bf16.msra.mxu0 0
      %516 = vmatprep.subr.bf16.mxu0 0
      %517 = vmatpush1.bf16.msra.mxu0 0
      %518 = vmatprep.subr.bf16.mxu0 0
      %519 = vmatpush1.bf16.msra.mxu0 0
      %520 = vmatprep.mubr.bf16.mxu0 0
      %521 = vmatmul.mubr.bf16.gmra.mrb[0].mxu0 %v242
      %v522 = vpop.f32.mrb[0].mxu0
      %v523 = vadd.f32 %v385, %v522
      %v524 = vpop.f32.mrb[0].mxu0
      %v525 = vpop.f32.mrb[0].mxu0
      %v526 = vadd.f32 %v388, %v525
      %v527 = vpop.f32.mrb[0].mxu0
      %528 = vmatprep.mubr.bf16.mxu0 0
      %529 = vmatmul.mubr.bf16.gmra.mrb[0].mxu0 %v243
      %v530 = vpop.f32.mrb[0].mxu0
      %v531 = vadd.f32 %v393, %v530
      %v532 = vpop.f32.mrb[0].mxu0
      %v533 = vpop.f32.mrb[0].mxu0
      %v534 = vadd.f32 %v396, %v533
      %v535 = vpop.f32.mrb[0].mxu0
      %536 = vmatprep.mubr.bf16.mxu0 0
      %537 = vmatmul.mubr.bf16.gmra.mrb[0].mxu0 %v244
      %v538 = vpop.f32.mrb[0].mxu0
      %v539 = vadd.f32 %v401, %v538
      %v540 = vpop.f32.mrb[0].mxu0
      %v541 = vpop.f32.mrb[0].mxu0
      %v542 = vadd.f32 %v404, %v541
      %v543 = vpop.f32.mrb[0].mxu0
      %544 = vmatprep.mubr.bf16.mxu0 0
      %545 = vmatmul.mubr.bf16.gmra.mrb[0].mxu0 %v245
      %v546 = vpop.f32.mrb[0].mxu0
      %v547 = vadd.f32 %v409, %v546
      %v548 = vpop.f32.mrb[0].mxu0
      %v549 = vpop.f32.mrb[0].mxu0
      %v550 = vadd.f32 %v412, %v549
      %v551 = vpop.f32.mrb[0].mxu0
      %552 = vmatprep.mubr.bf16.mxu0 0
      %553 = vmatmul.mubr.bf16.gmra.mrb[0].mxu0 %v246
      %v554 = vpop.f32.mrb[0].mxu0
      %v555 = vadd.f32 %v417, %v554
      %v556 = vpop.f32.mrb[0].mxu0
      %v557 = vpop.f32.mrb[0].mxu0
      %v558 = vadd.f32 %v420, %v557
      %v559 = vpop.f32.mrb[0].mxu0
      %560 = vmatprep.mubr.bf16.mxu0 0
      %561 = vmatmul.mubr.bf16.gmra.mrb[0].mxu0 %v433
      %v562 = vpop.f32.mrb[0].mxu0
      %v563 = vadd.f32 %v425, %v562
      %v564 = vpop.f32.mrb[0].mxu0
      %v565 = vpop.f32.mrb[0].mxu0
      %v566 = vadd.f32 %v428, %v565
      %v567 = vpop.f32.mrb[0].mxu0
      %568 = vdwg.mxu0
      %v569 = vld [vmem:[%s165 + $0x4] sm:$0xe]
      %v570 = vld [vmem:[%s165 + $0x8] sm:$0xf]
      %v571 = vld [vmem:[%s165 + $0xc] sm:$0xf]
      %v572 = vld [vmem:[%s165 + $0x10] sm:$0xf]
      %v573 = vld [vmem:[%s165 + $0x14] sm:$0xf]
      %v574 = vld [vmem:[%s165 + $0x18] sm:$0xf]
      %v575 = vld [vmem:[%s165 + $0x1c] sm:$0xf]
      %v576 = vld [vmem:[%s165 + $0x20] sm:$0xf]
      %v577 = vld [vmem:[%s165 + $0x24] sm:$0xf]
      %v578 = vld [vmem:[%s165 + $0x28] sm:$0xf]
      %v579 = vld [vmem:[%s165 + $0x2c] sm:$0xf]
      %v580 = vld [vmem:[%s165 + $0x30] sm:$0x3]
      %s581 = scalar_lea.vmem %s1, 128
      %v582 = vld [vmem:[%s581] sm:$0xf]
      %v583 = vld [vmem:[%s581 + $0x4] sm:$0xf]
      %v584 = vld [vmem:[%s581 + $0x8] sm:$0xf]
      %v585 = vld [vmem:[%s581 + $0xc] sm:$0xf]
      %v586 = vld [vmem:[%s581 + $0x10] sm:$0xf]
      %v587 = vld [vmem:[%s581 + $0x14] sm:$0xf]
      %v588 = vld [vmem:[%s581 + $0x18] sm:$0xf]
      %v589 = vld [vmem:[%s581 + $0x1c] sm:$0xf]
      %v590 = vld [vmem:[%s581 + $0x20] sm:$0xf]
      %v591 = vld [vmem:[%s581 + $0x24] sm:$0xf]
      %v592 = vld [vmem:[%s581 + $0x28] sm:$0xf]
      %v593 = vld [vmem:[%s581 + $0x2c] sm:$0xf]
      %v594 = vld [vmem:[%s581 + $0x30] sm:$0xf]
      %v595 = vld [vmem:[%s581 + $0x34] sm:$0xf]
      %v596 = vld [vmem:[%s581 + $0x38] sm:$0xf]
      %v597 = vld [vmem:[%s581 + $0x3c] sm:$0xf]
      %v610 = vunpack.c.l.b16 %v569
      %v611 = vunpack.c.l.b16 %v570
      %v612 = vunpack.c.l.b16 %v571
      %v613 = vunpack.c.l.b16 %v572
      %v614 = vunpack.c.l.b16 %v573
      %v615 = vunpack.c.l.b16 %v574
      %v616 = vunpack.c.l.b16 %v575
      %v617 = vunpack.c.l.b16 %v576
      %v618 = vunpack.c.l.b16 %v577
      %v619 = vunpack.c.l.b16 %v578
      %v620 = vunpack.c.l.b16 %v579
      %v621 = vunpack.c.l.b16 %v580
      %v622 = vpack.c.b16 %v611, %v610
      %v623 = vpack.c.b16 %v613, %v612
      %v624 = vpack.c.b16 %v615, %v614
      %v625 = vpack.c.b16 %v617, %v616
      %v626 = vpack.c.b16 %v619, %v618
      %v627 = vpack.c.b16 %v621, %v620
      %vm628 = vcmask 1046528
      %v629 = vrot.slane %v622, 1
      %v630 = vrot.slane %v623, 1
      %v631 = vsel %vm628, %v629, %v630
      %v632 = vrot.slane %v624, 1
      %v633 = vsel %vm628, %v630, %v632
      %v634 = vrot.slane %v625, 1
      %v635 = vsel %vm628, %v632, %v634
      %v636 = vrot.slane %v626, 1
      %v637 = vsel %vm628, %v634, %v636
      %v638 = vrot.slane %v627, 1
      %v639 = vsel %vm628, %v636, %v638
      %v662 = vunpack.c.l.b16 %v582
      %v663 = vunpack.c.l.b16 %v583
      %v664 = vunpack.c.l.b16 %v584
      %v665 = vunpack.c.l.b16 %v585
      %v666 = vunpack.c.l.b16 %v586
      %v667 = vunpack.c.l.b16 %v587
      %v668 = vunpack.c.l.b16 %v588
      %v669 = vunpack.c.l.b16 %v589
      %v670 = vunpack.c.l.b16 %v590
      %v671 = vunpack.c.l.b16 %v591
      %v672 = vunpack.c.l.b16 %v592
      %v673 = vunpack.c.l.b16 %v593
      %v674 = vunpack.c.l.b16 %v594
      %v675 = vunpack.c.l.b16 %v595
      %v676 = vunpack.c.l.b16 %v596
      %v677 = vunpack.c.l.b16 %v597
      %v678 = vpack.c.b16 %v663, %v662
      %v679 = vpack.c.b16 %v665, %v664
      %v680 = vpack.c.b16 %v667, %v666
      %v681 = vpack.c.b16 %v669, %v668
      %v682 = vpack.c.b16 %v671, %v670
      %v683 = vpack.c.b16 %v673, %v672
      %v684 = vpack.c.b16 %v675, %v674
      %v685 = vpack.c.b16 %v677, %v676
      %694 = vmatprep.subr.bf16.mxu0 0
      %695 = vmatpush1.bf16.msra.mxu0 %v678
      %696 = vmatprep.subr.bf16.mxu0 0
      %697 = vmatpush1.bf16.msra.mxu0 %v679
      %698 = vmatprep.subr.bf16.mxu0 0
      %699 = vmatpush1.bf16.msra.mxu0 %v680
      %700 = vmatprep.subr.bf16.mxu0 0
      %701 = vmatpush1.bf16.msra.mxu0 %v681
      %702 = vmatprep.subr.bf16.mxu0 0
      %703 = vmatpush1.bf16.msra.mxu0 %v682
      %704 = vmatprep.subr.bf16.mxu0 0
      %705 = vmatpush1.bf16.msra.mxu0 %v683
      %706 = vmatprep.subr.bf16.mxu0 0
      %707 = vmatpush1.bf16.msra.mxu0 %v684
      %708 = vmatprep.subr.bf16.mxu0 0
      %709 = vmatpush1.bf16.msra.mxu0 %v685
      %710 = vmatprep.subr.bf16.mxu0 0
      %711 = vmatpush1.bf16.msra.mxu0 0
      %712 = vmatprep.subr.bf16.mxu0 0
      %713 = vmatpush1.bf16.msra.mxu0 0
      %714 = vmatprep.subr.bf16.mxu0 0
      %715 = vmatpush1.bf16.msra.mxu0 0
      %716 = vmatprep.subr.bf16.mxu0 0
      %717 = vmatpush1.bf16.msra.mxu0 0
      %718 = vmatprep.subr.bf16.mxu0 0
      %719 = vmatpush1.bf16.msra.mxu0 0
      %720 = vmatprep.subr.bf16.mxu0 0
      %721 = vmatpush1.bf16.msra.mxu0 0
      %722 = vmatprep.subr.bf16.mxu0 0
      %723 = vmatpush1.bf16.msra.mxu0 0
      %724 = vmatprep.subr.bf16.mxu0 0
      %725 = vmatpush1.bf16.msra.mxu0 0
      %726 = vmatprep.mubr.bf16.mxu0 0
      %727 = vmatmul.mubr.bf16.gmra.mrb[0].mxu0 %v631
      %v728 = vpop.f32.mrb[0].mxu0
      %v729 = vadd.f32 0.0, %v728
      %v730 = vpop.f32.mrb[0].mxu0
      %v731 = vpop.f32.mrb[0].mxu0
      %v732 = vadd.f32 0.0, %v731
      %v733 = vpop.f32.mrb[0].mxu0
      %734 = vmatprep.mubr.bf16.mxu0 0
      %735 = vmatmul.mubr.bf16.gmra.mrb[0].mxu0 %v633
      %v736 = vpop.f32.mrb[0].mxu0
      %v737 = vadd.f32 0.0, %v736
      %v738 = vpop.f32.mrb[0].mxu0
      %v739 = vpop.f32.mrb[0].mxu0
      %v740 = vadd.f32 0.0, %v739
      %v741 = vpop.f32.mrb[0].mxu0
      %742 = vmatprep.mubr.bf16.mxu0 0
      %743 = vmatmul.mubr.bf16.gmra.mrb[0].mxu0 %v635
      %v744 = vpop.f32.mrb[0].mxu0
      %v745 = vadd.f32 0.0, %v744
      %v746 = vpop.f32.mrb[0].mxu0
      %v747 = vpop.f32.mrb[0].mxu0
      %v748 = vadd.f32 0.0, %v747
      %v749 = vpop.f32.mrb[0].mxu0
      %750 = vmatprep.mubr.bf16.mxu0 0
      %751 = vmatmul.mubr.bf16.gmra.mrb[0].mxu0 %v637
      %v752 = vpop.f32.mrb[0].mxu0
      %v753 = vadd.f32 0.0, %v752
      %v754 = vpop.f32.mrb[0].mxu0
      %v755 = vpop.f32.mrb[0].mxu0
      %v756 = vadd.f32 0.0, %v755
      %v757 = vpop.f32.mrb[0].mxu0
      %758 = vmatprep.mubr.bf16.mxu0 0
      %759 = vmatmul.mubr.bf16.gmra.mrb[0].mxu0 %v639
      %v760 = vpop.f32.mrb[0].mxu0
      %v761 = vadd.f32 0.0, %v760
      %v762 = vpop.f32.mrb[0].mxu0
      %v763 = vpop.f32.mrb[0].mxu0
      %v764 = vadd.f32 0.0, %v763
      %v765 = vpop.f32.mrb[0].mxu0
      %766 = vmatprep.mubr.bf16.mxu0 0
      %767 = vmatmul.mubr.bf16.gmra.mrb[0].mxu0 %v638
      %v768 = vpop.f32.mrb[0].mxu0
      %v769 = vadd.f32 0.0, %v768
      %v770 = vpop.f32.mrb[0].mxu0
      %v771 = vpop.f32.mrb[0].mxu0
      %v772 = vadd.f32 0.0, %v771
      %v773 = vpop.f32.mrb[0].mxu0
      %774 = vdwg.mxu0
      %v775 = vadd.f32 %v523, %v729
      %v776 = vadd.f32 %v526, %v732
      %v777 = vadd.f32 %v531, %v737
      %v778 = vadd.f32 %v534, %v740
      %v779 = vadd.f32 %v539, %v745
      %v780 = vadd.f32 %v542, %v748
      %v781 = vadd.f32 %v547, %v753
      %v782 = vadd.f32 %v550, %v756
      %v783 = vadd.f32 %v555, %v761
      %v784 = vadd.f32 %v558, %v764
      %v785 = vadd.f32 %v563, %v769
      %v786 = vadd.f32 %v566, %v772
      %v787 = vld [vmem:[%s165 + $0x30] sm:$0x7]
      %s788 = scalar_lea.vmem %s1, 192
      %v789 = vld [vmem:[%s788] sm:$0xf]
      %v790 = vld [vmem:[%s788 + $0x4] sm:$0xf]
      %v791 = vld [vmem:[%s788 + $0x8] sm:$0xf]
      %v792 = vld [vmem:[%s788 + $0xc] sm:$0xf]
      %v793 = vld [vmem:[%s788 + $0x10] sm:$0xf]
      %v794 = vld [vmem:[%s788 + $0x14] sm:$0xf]
      %v795 = vld [vmem:[%s788 + $0x18] sm:$0xf]
      %v796 = vld [vmem:[%s788 + $0x1c] sm:$0xf]
      %v797 = vld [vmem:[%s788 + $0x20] sm:$0xf]
      %v798 = vld [vmem:[%s788 + $0x24] sm:$0xf]
      %v799 = vld [vmem:[%s788 + $0x28] sm:$0xf]
      %v800 = vld [vmem:[%s788 + $0x2c] sm:$0xf]
      %v801 = vld [vmem:[%s788 + $0x30] sm:$0xf]
      %v802 = vld [vmem:[%s788 + $0x34] sm:$0xf]
      %v803 = vld [vmem:[%s788 + $0x38] sm:$0xf]
      %v804 = vld [vmem:[%s788 + $0x3c] sm:$0xf]
      %v806 = vunpack.c.l.b16 %v787
      %v807 = vpack.c.b16 %v806, %v620
      %vm808 = vsmask.f32 6400
      %v810 = vshrl.u32 %v622, 16
      %v812 = vrot.slane %v810, 1
      %v813 = vshll.u32 %v622, 16
      %v815 = vrot.slane %v813, 2
      %v816 = vor.u32 %v812, %v815
      %v818 = vshrl.u32 %v623, 16
      %v820 = vrot.slane %v818, 1
      %v821 = vshll.u32 %v623, 16
      %v823 = vrot.slane %v821, 2
      %v824 = vor.u32 %v820, %v823
      %v825 = vsel %vm808, %v816, %v824
      %v827 = vshrl.u32 %v624, 16
      %v829 = vrot.slane %v827, 1
      %v830 = vshll.u32 %v624, 16
      %v832 = vrot.slane %v830, 2
      %v833 = vor.u32 %v829, %v832
      %v834 = vsel %vm808, %v824, %v833
      %v836 = vshrl.u32 %v625, 16
      %v838 = vrot.slane %v836, 1
      %v839 = vshll.u32 %v625, 16
      %v841 = vrot.slane %v839, 2
      %v842 = vor.u32 %v838, %v841
      %v843 = vsel %vm808, %v833, %v842
      %v845 = vshrl.u32 %v626, 16
      %v847 = vrot.slane %v845, 1
      %v848 = vshll.u32 %v626, 16
      %v850 = vrot.slane %v848, 2
      %v851 = vor.u32 %v847, %v850
      %v852 = vsel %vm808, %v842, %v851
      %v854 = vshrl.u32 %v807, 16
      %v856 = vrot.slane %v854, 1
      %v857 = vshll.u32 %v807, 16
      %v859 = vrot.slane %v857, 2
      %v860 = vor.u32 %v856, %v859
      %v861 = vsel %vm808, %v851, %v860
      %v884 = vunpack.c.l.b16 %v789
      %v885 = vunpack.c.l.b16 %v790
      %v886 = vunpack.c.l.b16 %v791
      %v887 = vunpack.c.l.b16 %v792
      %v888 = vunpack.c.l.b16 %v793
      %v889 = vunpack.c.l.b16 %v794
      %v890 = vunpack.c.l.b16 %v795
      %v891 = vunpack.c.l.b16 %v796
      %v892 = vunpack.c.l.b16 %v797
      %v893 = vunpack.c.l.b16 %v798
      %v894 = vunpack.c.l.b16 %v799
      %v895 = vunpack.c.l.b16 %v800
      %v896 = vunpack.c.l.b16 %v801
      %v897 = vunpack.c.l.b16 %v802
      %v898 = vunpack.c.l.b16 %v803
      %v899 = vunpack.c.l.b16 %v804
      %v900 = vpack.c.b16 %v885, %v884
      %v901 = vpack.c.b16 %v887, %v886
      %v902 = vpack.c.b16 %v889, %v888
      %v903 = vpack.c.b16 %v891, %v890
      %v904 = vpack.c.b16 %v893, %v892
      %v905 = vpack.c.b16 %v895, %v894
      %v906 = vpack.c.b16 %v897, %v896
      %v907 = vpack.c.b16 %v899, %v898
      %916 = vmatprep.subr.bf16.mxu0 0
      %917 = vmatpush1.bf16.msra.mxu0 %v900
      %918 = vmatprep.subr.bf16.mxu0 0
      %919 = vmatpush1.bf16.msra.mxu0 %v901
      %920 = vmatprep.subr.bf16.mxu0 0
      %921 = vmatpush1.bf16.msra.mxu0 %v902
      %922 = vmatprep.subr.bf16.mxu0 0
      %923 = vmatpush1.bf16.msra.mxu0 %v903
      %924 = vmatprep.subr.bf16.mxu0 0
      %925 = vmatpush1.bf16.msra.mxu0 %v904
      %926 = vmatprep.subr.bf16.mxu0 0
      %927 = vmatpush1.bf16.msra.mxu0 %v905
      %928 = vmatprep.subr.bf16.mxu0 0
      %929 = vmatpush1.bf16.msra.mxu0 %v906
      %930 = vmatprep.subr.bf16.mxu0 0
      %931 = vmatpush1.bf16.msra.mxu0 %v907
      %932 = vmatprep.subr.bf16.mxu0 0
      %933 = vmatpush1.bf16.msra.mxu0 0
      %934 = vmatprep.subr.bf16.mxu0 0
      %935 = vmatpush1.bf16.msra.mxu0 0
      %936 = vmatprep.subr.bf16.mxu0 0
      %937 = vmatpush1.bf16.msra.mxu0 0
      %938 = vmatprep.subr.bf16.mxu0 0
      %939 = vmatpush1.bf16.msra.mxu0 0
      %940 = vmatprep.subr.bf16.mxu0 0
      %941 = vmatpush1.bf16.msra.mxu0 0
      %942 = vmatprep.subr.bf16.mxu0 0
      %943 = vmatpush1.bf16.msra.mxu0 0
      %944 = vmatprep.subr.bf16.mxu0 0
      %945 = vmatpush1.bf16.msra.mxu0 0
      %946 = vmatprep.subr.bf16.mxu0 0
      %947 = vmatpush1.bf16.msra.mxu0 0
      %948 = vmatprep.mubr.bf16.mxu0 0
      %949 = vmatmul.mubr.bf16.gmra.mrb[0].mxu0 %v825
      %v950 = vpop.f32.mrb[0].mxu0
      %v951 = vadd.f32 0.0, %v950
      %v952 = vpop.f32.mrb[0].mxu0
      %v953 = vpop.f32.mrb[0].mxu0
      %v954 = vadd.f32 0.0, %v953
      %v955 = vpop.f32.mrb[0].mxu0
      %956 = vmatprep.mubr.bf16.mxu0 0
      %957 = vmatmul.mubr.bf16.gmra.mrb[0].mxu0 %v834
      %v958 = vpop.f32.mrb[0].mxu0
      %v959 = vadd.f32 0.0, %v958
      %v960 = vpop.f32.mrb[0].mxu0
      %v961 = vpop.f32.mrb[0].mxu0
      %v962 = vadd.f32 0.0, %v961
      %v963 = vpop.f32.mrb[0].mxu0
      %964 = vmatprep.mubr.bf16.mxu0 0
      %965 = vmatmul.mubr.bf16.gmra.mrb[0].mxu0 %v843
      %v966 = vpop.f32.mrb[0].mxu0
      %v967 = vadd.f32 0.0, %v966
      %v968 = vpop.f32.mrb[0].mxu0
      %v969 = vpop.f32.mrb[0].mxu0
      %v970 = vadd.f32 0.0, %v969
      %v971 = vpop.f32.mrb[0].mxu0
      %972 = vmatprep.mubr.bf16.mxu0 0
      %973 = vmatmul.mubr.bf16.gmra.mrb[0].mxu0 %v852
      %v974 = vpop.f32.mrb[0].mxu0
      %v975 = vadd.f32 0.0, %v974
      %v976 = vpop.f32.mrb[0].mxu0
      %v977 = vpop.f32.mrb[0].mxu0
      %v978 = vadd.f32 0.0, %v977
      %v979 = vpop.f32.mrb[0].mxu0
      %980 = vmatprep.mubr.bf16.mxu0 0
      %981 = vmatmul.mubr.bf16.gmra.mrb[0].mxu0 %v861
      %v982 = vpop.f32.mrb[0].mxu0
      %v983 = vadd.f32 0.0, %v982
      %v984 = vpop.f32.mrb[0].mxu0
      %v985 = vpop.f32.mrb[0].mxu0
      %v986 = vadd.f32 0.0, %v985
      %v987 = vpop.f32.mrb[0].mxu0
      %988 = vmatprep.mubr.bf16.mxu0 0
      %989 = vmatmul.mubr.bf16.gmra.mrb[0].mxu0 %v860
      %v990 = vpop.f32.mrb[0].mxu0
      %v991 = vadd.f32 0.0, %v990
      %v992 = vpop.f32.mrb[0].mxu0
      %v993 = vpop.f32.mrb[0].mxu0
      %v994 = vadd.f32 0.0, %v993
      %v995 = vpop.f32.mrb[0].mxu0
      %996 = vdwg.mxu0
      %v997 = vadd.f32 %v775, %v951
      %v998 = vadd.f32 %v776, %v954
      %v999 = vadd.f32 %v777, %v959
      %v1000 = vadd.f32 %v778, %v962
      %v1001 = vadd.f32 %v779, %v967
      %v1002 = vadd.f32 %v780, %v970
      %v1003 = vadd.f32 %v781, %v975
      %v1004 = vadd.f32 %v782, %v978
      %v1005 = vadd.f32 %v783, %v983
      %v1006 = vadd.f32 %v784, %v986
      %v1007 = vadd.f32 %v785, %v991
      %v1008 = vadd.f32 %v786, %v994
      %v1009 = vld [vmem:[%s2] sm:$0x1]
      %v1011 = vlaneseq
      %v1012 = vshrl.u32 %v1011, 7
      %v1013 = vsub.s32 0, %v1012
      %v1014 = vrot.slane %v1009, %v1013
      %v1016 = vadd.f32 %v997, %v1014
      %v1017 = vadd.f32 %v998, %v1014
      %v1018 = vadd.f32 %v999, %v1014
      %v1019 = vadd.f32 %v1000, %v1014
      %v1020 = vadd.f32 %v1001, %v1014
      %v1021 = vadd.f32 %v1002, %v1014
      %v1022 = vadd.f32 %v1003, %v1014
      %v1023 = vadd.f32 %v1004, %v1014
      %v1024 = vadd.f32 %v1005, %v1014
      %v1025 = vadd.f32 %v1006, %v1014
      %v1026 = vadd.f32 %v1007, %v1014
      %v1027 = vadd.f32 %v1008, %v1014
      %v1028 = vmax.f32 %v1016, 0.0
      %v1029 = vmax.f32 %v1017, 0.0
      %v1030 = vmax.f32 %v1018, 0.0
      %v1031 = vmax.f32 %v1019, 0.0
      %v1032 = vmax.f32 %v1020, 0.0
      %v1033 = vmax.f32 %v1021, 0.0
      %v1034 = vmax.f32 %v1022, 0.0
      %v1035 = vmax.f32 %v1023, 0.0
      %v1036 = vmax.f32 %v1024, 0.0
      %v1037 = vmax.f32 %v1025, 0.0
      %v1038 = vmax.f32 %v1026, 0.0
      %v1039 = vmax.f32 %v1027, 0.0
      %v1040 = vpack.c.bf16 %v1029, %v1028
      %v1041 = vpack.c.bf16 %v1031, %v1030
      %v1042 = vpack.c.bf16 %v1033, %v1032
      %v1043 = vpack.c.bf16 %v1035, %v1034
      %v1044 = vpack.c.bf16 %v1037, %v1036
      %v1045 = vpack.c.bf16 %v1039, %v1038
      %v1052 = vunpack.c.l.b16 %v1040
      %v1053 = vunpack.c.h.b16 %v1040
      %v1054 = vunpack.c.l.b16 %v1041
      %v1055 = vunpack.c.h.b16 %v1041
      %v1056 = vunpack.c.l.b16 %v1042
      %v1057 = vunpack.c.h.b16 %v1042
      %v1058 = vunpack.c.l.b16 %v1043
      %v1059 = vunpack.c.h.b16 %v1043
      %v1060 = vunpack.c.l.b16 %v1044
      %v1061 = vunpack.c.h.b16 %v1044
      %v1062 = vunpack.c.l.b16 %v1045
      %v1063 = vunpack.c.h.b16 %v1045
      %v1064 = vpack.c.b16 %v1052, %v1052
      %v1065 = vpack.c.b16 %v1053, %v1053
      %v1066 = vpack.c.b16 %v1054, %v1054
      %v1067 = vpack.c.b16 %v1055, %v1055
      %v1068 = vpack.c.b16 %v1056, %v1056
      %v1069 = vpack.c.b16 %v1057, %v1057
      %v1070 = vpack.c.b16 %v1058, %v1058
      %v1071 = vpack.c.b16 %v1059, %v1059
      %v1072 = vpack.c.b16 %v1060, %v1060
      %v1073 = vpack.c.b16 %v1061, %v1061
      %v1074 = vpack.c.b16 %v1062, %v1062
      %v1075 = vpack.c.b16 %v1063, %v1063
      %vm1088 = vcmask 519168
      %1089 = vst.msk [vmem:[%s170] sm:$0xf] %vm1088, %v1064
      %1090 = vst.msk [vmem:[%s170 + $0x4] sm:$0xf] %vm1088, %v1065
      %1091 = vst.msk [vmem:[%s170 + $0x8] sm:$0xf] %vm1088, %v1066
      %1092 = vst.msk [vmem:[%s170 + $0xc] sm:$0xf] %vm1088, %v1067
      %1093 = vst.msk [vmem:[%s170 + $0x10] sm:$0xf] %vm1088, %v1068
      %1094 = vst.msk [vmem:[%s170 + $0x14] sm:$0xf] %vm1088, %v1069
      %1095 = vst.msk [vmem:[%s170 + $0x18] sm:$0xf] %vm1088, %v1070
      %1096 = vst.msk [vmem:[%s170 + $0x1c] sm:$0xf] %vm1088, %v1071
      %1097 = vst.msk [vmem:[%s170 + $0x20] sm:$0xf] %vm1088, %v1072
      %1098 = vst.msk [vmem:[%s170 + $0x24] sm:$0xf] %vm1088, %v1073
      %1099 = vst.msk [vmem:[%s170 + $0x28] sm:$0xf] %vm1088, %v1074
      %vm1100 = vcmask 516096
      %1101 = vst.msk [vmem:[%s170 + $0x2c] sm:$0x1] %vm1100, %v1075
      %p1102 = scmp.lt.s32.totalorder %s14, 1
      %s1103 = scalar_select %p1102, %s14, 1
      %s1104 = smul.addr %s1103, 12
      %s1105 = smul.addr %s1104, 4
      %s1106 = scalar_lea.vmem %s3, %s1105
      // Predicated region
      $region33: #{forward.5} parent=31 // pred_check
        %p1107 = pneg %p100
      $region34: #{forward.5} parent=31 // pred_check_branch
        %1109 = sbr.rel (%p1107) target = $region36
      $region35: #{forward.5} parent=31 // pred_region
        _
      $region36: #{forward.5} parent=31 // pred_fallthru
        _
    $region32: #{forward.5} parent=5 // pred_fallthru
      _
    %p1110 = scmp.le.s32.totalorder 2, %s9
    // Predicated region
    $region37: #{forward.5} parent=5 // pred_check
      %p1111 = pneg %p1110
    $region38: #{forward.5} parent=5 // pred_check_branch
      %1113 = sbr.rel (%p1111) target = $region40
    $region39: #{forward.5} parent=5 // pred_region
      %s1114 = ssub.s32 %s9, 2
      // Predicated region
      $region41: #{forward.5} parent=39 // pred_check
        %p1115 = pneg %p106
      $region42: #{forward.5} parent=39 // pred_check_branch
        %1117 = sbr.rel (%p1115) target = $region44
      $region43: #{forward.5} parent=39 // pred_region
        %p1118 = scmp.lt.s32.totalorder %s15, 1
        %s1119 = scalar_select %p1118, %s15, 1
        %s1120 = smul.addr %s1119, 12
        %s1121 = smul.addr %s1120, 4
        %s1122 = scalar_lea.vmem %s3, %s1121
      $region44: #{forward.5} parent=39 // pred_fallthru
        _
    $region40: #{forward.5} parent=5 // pred_fallthru
      _
  $region6: #{forward.5} parent=0 // loop_footer
    %s13 = sadd.s32 1, %s9
  $region7: #{forward.5} parent=0 // loop_footer_branch
    %8 = sbr.rel target = $region3
  $region8: #{forward.5} parent=0 // loop_exit
    _

// kernel: forward.6
$region0: #{forward.6}
  #allocation0 [shape = 'u32[]', space=smem, size = 0x4, offset = 0x4, fixed_abs, tag = 'smem constant byte address 0x4 - core index']
  #allocation1 [shape = 'u32[144,128]{1,0:T(1,128)}', space=vmem, size = 0x12000, scoped, tag = 'internal scratch']
  %s0 = inlined_call_operand.vmem [shape: bf16[2,83,64], index: 0, kind: input, shape index: {}]
  %s1 = inlined_call_operand.vmem [shape: bf16[9,64,64], index: 1, kind: input, shape index: {}]
  %s2 = inlined_call_operand.vmem [shape: f32[1,64], index: 2, kind: input, shape index: {}]
  %s3 = inlined_call_operand.vmem [shape: bf16[2,63,64], index: 3, kind: output, shape index: {}]
  %s4 = sld [smem:[#allocation0]]
  $region45: #{forward.6} parent=0
    _
  %s6 = ssub.s32 1, %s4
  %s7 = scalar_select 0, %s6, %s4
  loop: start=0, step=1, limit=4
  $region2: #{forward.6} parent=0 // loop_pre_header
    _
  $region3: #{forward.6} parent=0 // loop_header
    %s9 = sphi 0, %s13
    %p10 = scmp.ge.s32.totalorder %s9, 4
    %s19 = sphi 0, %s21
    %s22 = sphi 0, %s19
    %s23 = sphi 0, %s22
    %s39 = sphi 0, %s23
    %s43 = sphi 0, %s43
    %s45 = sphi 0, %s43
    %s46 = sphi 0, %s45
    %s60 = sphi 0, %s46
    %s64 = sphi 0, %s64
    %s66 = sphi 0, %s64
    %s67 = sphi 0, %s66
    %s81 = sphi 0, %s67
    %s87 = sphi 0, %s89
    %s90 = sphi 0, %s87
    %s91 = sphi 0, %s90
    %s107 = sphi 0, %s91
  $region4: #{forward.6} parent=0 // loop_header_branch
    %12 = sbr.rel (%p10) target = $region8
  $region5: #{forward.6} parent=0 // loop_body
    %s14 = ssub.s32 %s9, 1
    %s15 = ssub.s32 %s9, 2
    %s16 = sadd.s32 %s9, 1
    %s17 = ssub.s32 %s9, %s16
    %p18 = scmp.eq.s32.totalorder %s17, 0
    %s20 = sadd.s32 %s19, 1
    %s21 = scalar_select %p18, %s19, %s20
    %p24 = pneg %p18
    %p25 = scmp.eq.s32.totalorder %s9, 1
    %p26 = por %p24, %p25
    %p27 = scmp.ne.s32.totalorder %s19, %s22
    %p28 = scmp.eq.s32.totalorder %s9, 0
    %p29 = por %p27, %p28
    %p30 = scmp.ne.s32.totalorder %s19, %s22
    %p31 = scmp.eq.s32.totalorder %s14, 1
    %p32 = por %p30, %p31
    %p33 = scmp.ne.s32.totalorder %s22, %s23
    %p34 = scmp.eq.s32.totalorder %s14, 0
    %p35 = por %p33, %p34
    %p36 = scmp.ne.s32.totalorder %s22, %s23
    %p37 = scmp.eq.s32.totalorder %s15, 1
    %p38 = por %p36, %p37
    %p40 = scmp.ne.s32.totalorder %s23, %s39
    %p41 = scmp.eq.s32.totalorder %s15, 0
    %p42 = por %p40, %p41
    %s44 = sadd.s32 %s43, 1
    %p47 = scmp.eq.s32.totalorder %s9, 1
    %p48 = scmp.ne.s32.totalorder %s43, %s45
    %p49 = scmp.eq.s32.totalorder %s9, 0
    %p50 = por %p48, %p49
    %p51 = scmp.ne.s32.totalorder %s43, %s45
    %p52 = scmp.eq.s32.totalorder %s14, 1
    %p53 = por %p51, %p52
    %p54 = scmp.ne.s32.totalorder %s45, %s46
    %p55 = scmp.eq.s32.totalorder %s14, 0
    %p56 = por %p54, %p55
    %p57 = scmp.ne.s32.totalorder %s45, %s46
    %p58 = scmp.eq.s32.totalorder %s15, 1
    %p59 = por %p57, %p58
    %p61 = scmp.ne.s32.totalorder %s46, %s60
    %p62 = scmp.eq.s32.totalorder %s15, 0
    %p63 = por %p61, %p62
    %s65 = sadd.s32 %s64, 1
    %p68 = scmp.eq.s32.totalorder %s9, 1
    %p69 = scmp.ne.s32.totalorder %s64, %s66
    %p70 = scmp.eq.s32.totalorder %s9, 0
    %p71 = por %p69, %p70
    %p72 = scmp.ne.s32.totalorder %s64, %s66
    %p73 = scmp.eq.s32.totalorder %s14, 1
    %p74 = por %p72, %p73
    %p75 = scmp.ne.s32.totalorder %s66, %s67
    %p76 = scmp.eq.s32.totalorder %s14, 0
    %p77 = por %p75, %p76
    %p78 = scmp.ne.s32.totalorder %s66, %s67
    %p79 = scmp.eq.s32.totalorder %s15, 1
    %p80 = por %p78, %p79
    %p82 = scmp.ne.s32.totalorder %s67, %s81
    %p83 = scmp.eq.s32.totalorder %s15, 0
    %p84 = por %p82, %p83
    %s85 = ssub.s32 %s9, %s16
    %p86 = scmp.eq.s32.totalorder %s85, 0
    %s88 = sadd.s32 %s87, 1
    %s89 = scalar_select %p86, %s87, %s88
    %p92 = pneg %p86
    %p93 = scmp.eq.s32.totalorder %s9, 1
    %p94 = por %p92, %p93
    %p95 = scmp.ne.s32.totalorder %s87, %s90
    %p96 = scmp.eq.s32.totalorder %s9, 0
    %p97 = por %p95, %p96
    %p98 = scmp.ne.s32.totalorder %s87, %s90
    %p99 = scmp.eq.s32.totalorder %s14, 1
    %p100 = por %p98, %p99
    %p101 = scmp.ne.s32.totalorder %s90, %s91
    %p102 = scmp.eq.s32.totalorder %s14, 0
    %p103 = por %p101, %p102
    %p104 = scmp.ne.s32.totalorder %s90, %s91
    %p105 = scmp.eq.s32.totalorder %s15, 1
    %p106 = por %p104, %p105
    %p108 = scmp.ne.s32.totalorder %s91, %s107
    %p109 = scmp.eq.s32.totalorder %s15, 0
    %p110 = por %p108, %p109
    %p111 = scmp.le.s32.totalorder 1, %s9
    %p112 = scmp.lt.s32.totalorder %s9, 3
    %p113 = pnand %p111, %p112
    %p114 = pneg %p113
    // Predicated region
    $region9: #{forward.6} parent=5 // pred_check
      _
    $region10: #{forward.6} parent=5 // pred_check_branch
      %116 = sbr.rel (%p113) target = $region12
    $region11: #{forward.6} parent=5 // pred_region
      %s117 = ssub.s32 %s9, 1
      // Predicated region
      $region13: #{forward.6} parent=11 // pred_check
        %p118 = pneg %p56
      $region14: #{forward.6} parent=11 // pred_check_branch
        %120 = sbr.rel (%p118) target = $region16
      $region15: #{forward.6} parent=11 // pred_region
        _
      $region16: #{forward.6} parent=11 // pred_fallthru
        _
      // Predicated region
      $region17: #{forward.6} parent=11 // pred_check
        %p121 = pneg %p77
      $region18: #{forward.6} parent=11 // pred_check_branch
        %123 = sbr.rel (%p121) target = $region20
      $region19: #{forward.6} parent=11 // pred_region
        _
      $region20: #{forward.6} parent=11 // pred_fallthru
        _
    $region12: #{forward.6} parent=5 // pred_fallthru
      _
    %p124 = scmp.lt.s32.totalorder %s9, 2
    // Predicated region
    $region21: #{forward.6} parent=5 // pred_check
      %p125 = pneg %p124
    $region22: #{forward.6} parent=5 // pred_check_branch
      %127 = sbr.rel (%p125) target = $region24
    $region23: #{forward.6} parent=5 // pred_region
      // Predicated region
      $region25: #{forward.6} parent=23 // pred_check
        %p128 = pneg %p29
      $region26: #{forward.6} parent=23 // pred_check_branch
        %130 = sbr.rel (%p128) target = $region28
      $region27: #{forward.6} parent=23 // pred_region
        %p131 = scmp.lt.s32.totalorder %s9, 1
        %s132 = scalar_select %p131, %s9, 1
        %s133 = smul.addr %s132, 11
        %s134 = smul.addr %s133, 4
        %s135 = scalar_lea.vmem %s0, %s134
      $region28: #{forward.6} parent=23 // pred_fallthru
        _
    $region24: #{forward.6} parent=5 // pred_fallthru
      _
    %p136 = scmp.le.s32.totalorder 1, %s9
    %p137 = scmp.lt.s32.totalorder %s9, 3
    %p138 = pnand %p136, %p137
    %p139 = pneg %p138
    // Predicated region
    $region29: #{forward.6} parent=5 // pred_check
      _
    $region30: #{forward.6} parent=5 // pred_check_branch
      %141 = sbr.rel (%p138) target = $region32
    $region31: #{forward.6} parent=5 // pred_region
      %s142 = ssub.s32 %s9, 1
      %p143 = scmp.lt.s32.totalorder %s14, 1
      %s144 = scalar_select %p143, %s14, 1
      %s145 = smul.addr %s144, 11
      %s146 = smul.addr %s145, 4
      %s147 = scalar_lea.vmem %s0, %s146
      %p148 = pneg %p35
      %p149 = pneg %p32
      %p150 = pneg %p56
      %p151 = pneg %p53
      %p152 = pneg %p77
      %p153 = pneg %p74
      %p154 = pneg %p103
      %p155 = pneg %p100
      %p156 = scmp.lt.s32.totalorder %s14, 1
      %s157 = scalar_select %p156, %s14, 1
      %s158 = smul.addr %s157, 8
      %s159 = smul.addr %s158, 4
      %s160 = scalar_lea.vmem %s3, %s159
      %p161 = scmp.lt.s32.totalorder %s14, 1
      %s162 = scalar_select %p161, %s14, 1
      %s163 = smul.addr %s162, 11
      %s164 = smul.addr %s163, 4
      %s165 = scalar_lea.vmem %s0, %s164
      %p166 = scmp.lt.s32.totalorder %s14, 1
      %s167 = scalar_select %p166, %s14, 1
      %s168 = smul.addr %s167, 8
      %s169 = smul.addr %s168, 4
      %s170 = scalar_lea.vmem %s3, %s169
      %v172 = vld [vmem:[%s165] sm:$0xf]
      %v173 = vld [vmem:[%s165 + $0x4] sm:$0xf]
      %v174 = vld [vmem:[%s165 + $0x8] sm:$0xf]
      %v175 = vld [vmem:[%s165 + $0xc] sm:$0xf]
      %v176 = vld [vmem:[%s165 + $0x10] sm:$0xf]
      %v177 = vld [vmem:[%s165 + $0x14] sm:$0xf]
      %v178 = vld [vmem:[%s165 + $0x18] sm:$0xf]
      %v179 = vld [vmem:[%s165 + $0x1c] sm:$0xf]
      %v180 = vld [vmem:[%s1] sm:$0xf]
      %v181 = vld [vmem:[%s1 + $0x4] sm:$0xf]
      %v182 = vld [vmem:[%s1 + $0x8] sm:$0xf]
      %v183 = vld [vmem:[%s1 + $0xc] sm:$0xf]
      %v184 = vld [vmem:[%s1 + $0x10] sm:$0xf]
      %v185 = vld [vmem:[%s1 + $0x14] sm:$0xf]
      %v186 = vld [vmem:[%s1 + $0x18] sm:$0xf]
      %v187 = vld [vmem:[%s1 + $0x1c] sm:$0xf]
      %s188 = scalar_lea.vmem %s1, 32
      %v189 = vld [vmem:[%s188] sm:$0xf]
      %v190 = vld [vmem:[%s188 + $0x4] sm:$0xf]
      %v191 = vld [vmem:[%s188 + $0x8] sm:$0xf]
      %v192 = vld [vmem:[%s188 + $0xc] sm:$0xf]
      %v193 = vld [vmem:[%s188 + $0x10] sm:$0xf]
      %v194 = vld [vmem:[%s188 + $0x14] sm:$0xf]
      %v195 = vld [vmem:[%s188 + $0x18] sm:$0xf]
      %v196 = vld [vmem:[%s188 + $0x1c] sm:$0xf]
      %v205 = vunpack.c.l.b16 %v172
      %v206 = vunpack.c.l.b16 %v173
      %v207 = vunpack.c.l.b16 %v174
      %v208 = vunpack.c.l.b16 %v175
      %v209 = vunpack.c.l.b16 %v176
      %v210 = vunpack.c.l.b16 %v177
      %v211 = vunpack.c.l.b16 %v178
      %v212 = vunpack.c.l.b16 %v179
      %v213 = vpack.c.b16 %v206, %v205
      %v214 = vpack.c.b16 %v208, %v207
      %v215 = vpack.c.b16 %v210, %v209
      %v216 = vpack.c.b16 %v212, %v211
      %vm217 = vsmask.f32 7424
      %v219 = vshrl.u32 %v213, 16
      %v221 = vshll.u32 %v213, 16
      %v223 = vrot.slane %v221, 1
      %v224 = vor.u32 %v219, %v223
      %v226 = vshll.u32 %v214, 16
      %v228 = vrot.slane %v226, 1
      %v229 = vsel %vm217, %v224, %v228
      %v230 = vshrl.u32 %v214, 16
      %v232 = vor.u32 %v230, %v228
      %v234 = vshll.u32 %v215, 16
      %v236 = vrot.slane %v234, 1
      %v237 = vsel %vm217, %v232, %v236
      %v238 = vshrl.u32 %v215, 16
      %v240 = vor.u32 %v238, %v236
      %v242 = vshll.u32 %v216, 16
      %v244 = vrot.slane %v242, 1
      %v245 = vsel %vm217, %v240, %v244
      %v246 = vshrl.u32 %v216, 16
      %v248 = vor.u32 %v246, %v244
      %v257 = vunpack.c.l.b16 %v189
      %v258 = vunpack.c.l.b16 %v190
      %v259 = vunpack.c.l.b16 %v191
      %v260 = vunpack.c.l.b16 %v192
      %v261 = vunpack.c.l.b16 %v193
      %v262 = vunpack.c.l.b16 %v194
      %v263 = vunpack.c.l.b16 %v195
      %v264 = vunpack.c.l.b16 %v196
      %v265 = vpack.c.b16 %v258, %v257
      %v266 = vpack.c.b16 %v260, %v259
      %v267 = vpack.c.b16 %v262, %v261
      %v268 = vpack.c.b16 %v264, %v263
      %vm273 = vcmask 523264
      %v275 = vsel %vm273, %v229, 0
      %v278 = vsel %vm273, %v237, 0
      %v281 = vsel %vm273, %v245, 0
      %v284 = vsel %vm273, %v248, 0
      %286 = vmatprep.subr.bf16.mxu0 0
      %287 = vmatpush1.bf16.msra.mxu0 %v265
      %288 = vmatprep.subr.bf16.mxu0 0
      %289 = vmatpush1.bf16.msra.mxu0 %v266
      %290 = vmatprep.subr.bf16.mxu0 0
      %291 = vmatpush1.bf16.msra.mxu0 %v267
      %292 = vmatprep.subr.bf16.mxu0 0
      %293 = vmatpush1.bf16.msra.mxu0 %v268
      %294 = vmatprep.subr.bf16.mxu0 0
      %295 = vmatpush1.bf16.msra.mxu0 0
      %296 = vmatprep.subr.bf16.mxu0 0
      %297 = vmatpush1.bf16.msra.mxu0 0
      %298 = vmatprep.subr.bf16.mxu0 0
      %299 = vmatpush1.bf16.msra.mxu0 0
      %300 = vmatprep.subr.bf16.mxu0 0
      %301 = vmatpush1.bf16.msra.mxu0 0
      %302 = vmatprep.subr.bf16.mxu0 0
      %303 = vmatpush1.bf16.msra.mxu0 0
      %304 = vmatprep.subr.bf16.mxu0 0
      %305 = vmatpush1.bf16.msra.mxu0 0
      %306 = vmatprep.subr.bf16.mxu0 0
      %307 = vmatpush1.bf16.msra.mxu0 0
      %308 = vmatprep.subr.bf16.mxu0 0
      %309 = vmatpush1.bf16.msra.mxu0 0
      %310 = vmatprep.subr.bf16.mxu0 0
      %311 = vmatpush1.bf16.msra.mxu0 0
      %312 = vmatprep.subr.bf16.mxu0 0
      %313 = vmatpush1.bf16.msra.mxu0 0
      %314 = vmatprep.subr.bf16.mxu0 0
      %315 = vmatpush1.bf16.msra.mxu0 0
      %316 = vmatprep.subr.bf16.mxu0 0
      %317 = vmatpush1.bf16.msra.mxu0 0
      %318 = vmatprep.mubr.bf16.mxu0 0
      %319 = vmatmul.mubr.bf16.gmra.mrb[0].mxu0 %v275
      %v320 = vpop.f32.mrb[0].mxu0
      %v321 = vadd.f32 0.0, %v320
      %v322 = vpop.f32.mrb[0].mxu0
      %v323 = vpop.f32.mrb[0].mxu0
      %v324 = vadd.f32 0.0, %v323
      %v325 = vpop.f32.mrb[0].mxu0
      %326 = vmatprep.mubr.bf16.mxu0 0
      %327 = vmatmul.mubr.bf16.gmra.mrb[0].mxu0 %v278
      %v328 = vpop.f32.mrb[0].mxu0
      %v329 = vadd.f32 0.0, %v328
      %v330 = vpop.f32.mrb[0].mxu0
      %v331 = vpop.f32.mrb[0].mxu0
      %v332 = vadd.f32 0.0, %v331
      %v333 = vpop.f32.mrb[0].mxu0
      %334 = vmatprep.mubr.bf16.mxu0 0
      %335 = vmatmul.mubr.bf16.gmra.mrb[0].mxu0 %v281
      %v336 = vpop.f32.mrb[0].mxu0
      %v337 = vadd.f32 0.0, %v336
      %v338 = vpop.f32.mrb[0].mxu0
      %v339 = vpop.f32.mrb[0].mxu0
      %v340 = vadd.f32 0.0, %v339
      %v341 = vpop.f32.mrb[0].mxu0
      %342 = vmatprep.mubr.bf16.mxu0 0
      %343 = vmatmul.mubr.bf16.gmra.mrb[0].mxu0 %v284
      %v344 = vpop.f32.mrb[0].mxu0
      %v345 = vadd.f32 0.0, %v344
      %v346 = vpop.f32.mrb[0].mxu0
      %v347 = vpop.f32.mrb[0].mxu0
      %v348 = vadd.f32 0.0, %v347
      %v349 = vpop.f32.mrb[0].mxu0
      %350 = vdwg.mxu0
      %v359 = vunpack.c.l.b16 %v180
      %v360 = vunpack.c.l.b16 %v181
      %v361 = vunpack.c.l.b16 %v182
      %v362 = vunpack.c.l.b16 %v183
      %v363 = vunpack.c.l.b16 %v184
      %v364 = vunpack.c.l.b16 %v185
      %v365 = vunpack.c.l.b16 %v186
      %v366 = vunpack.c.l.b16 %v187
      %v367 = vpack.c.b16 %v360, %v359
      %v368 = vpack.c.b16 %v362, %v361
      %v369 = vpack.c.b16 %v364, %v363
      %v370 = vpack.c.b16 %v366, %v365
      %v375 = vsel %vm273, %v213, 0
      %v377 = vsel %vm273, %v214, 0
      %v379 = vsel %vm273, %v215, 0
      %v381 = vsel %vm273, %v216, 0
      %383 = vmatprep.subr.bf16.mxu0 0
      %384 = vmatpush1.bf16.msra.mxu0 %v367
      %385 = vmatprep.subr.bf16.mxu0 0
      %386 = vmatpush1.bf16.msra.mxu0 %v368
      %387 = vmatprep.subr.bf16.mxu0 0
      %388 = vmatpush1.bf16.msra.mxu0 %v369
      %389 = vmatprep.subr.bf16.mxu0 0
      %390 = vmatpush1.bf16.msra.mxu0 %v370
      %391 = vmatprep.subr.bf16.mxu0 0
      %392 = vmatpush1.bf16.msra.mxu0 0
      %393 = vmatprep.subr.bf16.mxu0 0
      %394 = vmatpush1.bf16.msra.mxu0 0
      %395 = vmatprep.subr.bf16.mxu0 0
      %396 = vmatpush1.bf16.msra.mxu0 0
      %397 = vmatprep.subr.bf16.mxu0 0
      %398 = vmatpush1.bf16.msra.mxu0 0
      %399 = vmatprep.subr.bf16.mxu0 0
      %400 = vmatpush1.bf16.msra.mxu0 0
      %401 = vmatprep.subr.bf16.mxu0 0
      %402 = vmatpush1.bf16.msra.mxu0 0
      %403 = vmatprep.subr.bf16.mxu0 0
      %404 = vmatpush1.bf16.msra.mxu0 0
      %405 = vmatprep.subr.bf16.mxu0 0
      %406 = vmatpush1.bf16.msra.mxu0 0
      %407 = vmatprep.subr.bf16.mxu0 0
      %408 = vmatpush1.bf16.msra.mxu0 0
      %409 = vmatprep.subr.bf16.mxu0 0
      %410 = vmatpush1.bf16.msra.mxu0 0
      %411 = vmatprep.subr.bf16.mxu0 0
      %412 = vmatpush1.bf16.msra.mxu0 0
      %413 = vmatprep.subr.bf16.mxu0 0
      %414 = vmatpush1.bf16.msra.mxu0 0
      %415 = vmatprep.mubr.bf16.mxu0 0
      %416 = vmatmul.mubr.bf16.gmra.mrb[0].mxu0 %v375
      %v417 = vpop.f32.mrb[0].mxu0
      %v418 = vadd.f32 %v321, %v417
      %v419 = vpop.f32.mrb[0].mxu0
      %v420 = vpop.f32.mrb[0].mxu0
      %v421 = vadd.f32 %v324, %v420
      %v422 = vpop.f32.mrb[0].mxu0
      %423 = vmatprep.mubr.bf16.mxu0 0
      %424 = vmatmul.mubr.bf16.gmra.mrb[0].mxu0 %v377
      %v425 = vpop.f32.mrb[0].mxu0
      %v426 = vadd.f32 %v329, %v425
      %v427 = vpop.f32.mrb[0].mxu0
      %v428 = vpop.f32.mrb[0].mxu0
      %v429 = vadd.f32 %v332, %v428
      %v430 = vpop.f32.mrb[0].mxu0
      %431 = vmatprep.mubr.bf16.mxu0 0
      %432 = vmatmul.mubr.bf16.gmra.mrb[0].mxu0 %v379
      %v433 = vpop.f32.mrb[0].mxu0
      %v434 = vadd.f32 %v337, %v433
      %v435 = vpop.f32.mrb[0].mxu0
      %v436 = vpop.f32.mrb[0].mxu0
      %v437 = vadd.f32 %v340, %v436
      %v438 = vpop.f32.mrb[0].mxu0
      %439 = vmatprep.mubr.bf16.mxu0 0
      %440 = vmatmul.mubr.bf16.gmra.mrb[0].mxu0 %v381
      %v441 = vpop.f32.mrb[0].mxu0
      %v442 = vadd.f32 %v345, %v441
      %v443 = vpop.f32.mrb[0].mxu0
      %v444 = vpop.f32.mrb[0].mxu0
      %v445 = vadd.f32 %v348, %v444
      %v446 = vpop.f32.mrb[0].mxu0
      %447 = vdwg.mxu0
      %v448 = vld [vmem:[%s165] sm:$0xe]
      %v449 = vld [vmem:[%s165 + $0x4] sm:$0xf]
      %v450 = vld [vmem:[%s165 + $0x8] sm:$0xf]
      %v451 = vld [vmem:[%s165 + $0xc] sm:$0xf]
      %v452 = vld [vmem:[%s165 + $0x10] sm:$0xf]
      %v453 = vld [vmem:[%s165 + $0x14] sm:$0xf]
      %v454 = vld [vmem:[%s165 + $0x18] sm:$0xf]
      %v455 = vld [vmem:[%s165 + $0x1c] sm:$0xf]
      %v456 = vld [vmem:[%s165 + $0x20] sm:$0x1]
      %s457 = scalar_lea.vmem %s1, 64
      %v458 = vld [vmem:[%s457] sm:$0xf]
      %v459 = vld [vmem:[%s457 + $0x4] sm:$0xf]
      %v460 = vld [vmem:[%s457 + $0x8] sm:$0xf]
      %v461 = vld [vmem:[%s457 + $0xc] sm:$0xf]
      %v462 = vld [vmem:[%s457 + $0x10] sm:$0xf]
      %v463 = vld [vmem:[%s457 + $0x14] sm:$0xf]
      %v464 = vld [vmem:[%s457 + $0x18] sm:$0xf]
      %v465 = vld [vmem:[%s457 + $0x1c] sm:$0xf]
      %v475 = vunpack.c.l.b16 %v448
      %v476 = vunpack.c.l.b16 %v449
      %v477 = vunpack.c.l.b16 %v450
      %v478 = vunpack.c.l.b16 %v451
      %v479 = vunpack.c.l.b16 %v452
      %v480 = vunpack.c.l.b16 %v453
      %v481 = vunpack.c.l.b16 %v454
      %v482 = vunpack.c.l.b16 %v455
      %v483 = vunpack.c.l.b16 %v456
      %v484 = vpack.c.b16 %v476, %v475
      %v485 = vpack.c.b16 %v478, %v477
      %v486 = vpack.c.b16 %v480, %v479
      %v487 = vpack.c.b16 %v482, %v481
      %v488 = vpack.c.b16 %v483, %v483
      %vm489 = vcmask 1046528
      %v490 = vrot.slane %v484, 1
      %v491 = vrot.slane %v485, 1
      %v492 = vsel %vm489, %v490, %v491
      %v493 = vrot.slane %v486, 1
      %v494 = vsel %vm489, %v491, %v493
      %v495 = vrot.slane %v487, 1
      %v496 = vsel %vm489, %v493, %v495
      %v497 = vrot.slane %v488, 1
      %v498 = vsel %vm489, %v495, %v497
      %v507 = vunpack.c.l.b16 %v458
      %v508 = vunpack.c.l.b16 %v459
      %v509 = vunpack.c.l.b16 %v460
      %v510 = vunpack.c.l.b16 %v461
      %v511 = vunpack.c.l.b16 %v462
      %v512 = vunpack.c.l.b16 %v463
      %v513 = vunpack.c.l.b16 %v464
      %v514 = vunpack.c.l.b16 %v465
      %v515 = vpack.c.b16 %v508, %v507
      %v516 = vpack.c.b16 %v510, %v509
      %v517 = vpack.c.b16 %v512, %v511
      %v518 = vpack.c.b16 %v514, %v513
      %v524 = vsel %vm273, %v492, 0
      %v527 = vsel %vm273, %v494, 0
      %v530 = vsel %vm273, %v496, 0
      %v533 = vsel %vm273, %v498, 0
      %535 = vmatprep.subr.bf16.mxu0 0
      %536 = vmatpush1.bf16.msra.mxu0 %v515
      %537 = vmatprep.subr.bf16.mxu0 0
      %538 = vmatpush1.bf16.msra.mxu0 %v516
      %539 = vmatprep.subr.bf16.mxu0 0
      %540 = vmatpush1.bf16.msra.mxu0 %v517
      %541 = vmatprep.subr.bf16.mxu0 0
      %542 = vmatpush1.bf16.msra.mxu0 %v518
      %543 = vmatprep.subr.bf16.mxu0 0
      %544 = vmatpush1.bf16.msra.mxu0 0
      %545 = vmatprep.subr.bf16.mxu0 0
      %546 = vmatpush1.bf16.msra.mxu0 0
      %547 = vmatprep.subr.bf16.mxu0 0
      %548 = vmatpush1.bf16.msra.mxu0 0
      %549 = vmatprep.subr.bf16.mxu0 0
      %550 = vmatpush1.bf16.msra.mxu0 0
      %551 = vmatprep.subr.bf16.mxu0 0
      %552 = vmatpush1.bf16.msra.mxu0 0
      %553 = vmatprep.subr.bf16.mxu0 0
      %554 = vmatpush1.bf16.msra.mxu0 0
      %555 = vmatprep.subr.bf16.mxu0 0
      %556 = vmatpush1.bf16.msra.mxu0 0
      %557 = vmatprep.subr.bf16.mxu0 0
      %558 = vmatpush1.bf16.msra.mxu0 0
      %559 = vmatprep.subr.bf16.mxu0 0
      %560 = vmatpush1.bf16.msra.mxu0 0
      %561 = vmatprep.subr.bf16.mxu0 0
      %562 = vmatpush1.bf16.msra.mxu0 0
      %563 = vmatprep.subr.bf16.mxu0 0
      %564 = vmatpush1.bf16.msra.mxu0 0
      %565 = vmatprep.subr.bf16.mxu0 0
      %566 = vmatpush1.bf16.msra.mxu0 0
      %567 = vmatprep.mubr.bf16.mxu0 0
      %568 = vmatmul.mubr.bf16.gmra.mrb[0].mxu0 %v524
      %v569 = vpop.f32.mrb[0].mxu0
      %v570 = vadd.f32 0.0, %v569
      %v571 = vpop.f32.mrb[0].mxu0
      %v572 = vpop.f32.mrb[0].mxu0
      %v573 = vadd.f32 0.0, %v572
      %v574 = vpop.f32.mrb[0].mxu0
      %575 = vmatprep.mubr.bf16.mxu0 0
      %576 = vmatmul.mubr.bf16.gmra.mrb[0].mxu0 %v527
      %v577 = vpop.f32.mrb[0].mxu0
      %v578 = vadd.f32 0.0, %v577
      %v579 = vpop.f32.mrb[0].mxu0
      %v580 = vpop.f32.mrb[0].mxu0
      %v581 = vadd.f32 0.0, %v580
      %v582 = vpop.f32.mrb[0].mxu0
      %583 = vmatprep.mubr.bf16.mxu0 0
      %584 = vmatmul.mubr.bf16.gmra.mrb[0].mxu0 %v530
      %v585 = vpop.f32.mrb[0].mxu0
      %v586 = vadd.f32 0.0, %v585
      %v587 = vpop.f32.mrb[0].mxu0
      %v588 = vpop.f32.mrb[0].mxu0
      %v589 = vadd.f32 0.0, %v588
      %v590 = vpop.f32.mrb[0].mxu0
      %591 = vmatprep.mubr.bf16.mxu0 0
      %592 = vmatmul.mubr.bf16.gmra.mrb[0].mxu0 %v533
      %v593 = vpop.f32.mrb[0].mxu0
      %v594 = vadd.f32 0.0, %v593
      %v595 = vpop.f32.mrb[0].mxu0
      %v596 = vpop.f32.mrb[0].mxu0
      %v597 = vadd.f32 0.0, %v596
      %v598 = vpop.f32.mrb[0].mxu0
      %599 = vdwg.mxu0
      %v600 = vadd.f32 %v418, %v570
      %v601 = vadd.f32 %v421, %v573
      %v602 = vadd.f32 %v426, %v578
      %v603 = vadd.f32 %v429, %v581
      %v604 = vadd.f32 %v434, %v586
      %v605 = vadd.f32 %v437, %v589
      %v606 = vadd.f32 %v442, %v594
      %v607 = vadd.f32 %v445, %v597
      %v608 = vld [vmem:[%s165 + $0x20] sm:$0xf]
      %s609 = scalar_lea.vmem %s1, 96
      %v610 = vld [vmem:[%s609] sm:$0xf]
      %v611 = vld [vmem:[%s609 + $0x4] sm:$0xf]
      %v612 = vld [vmem:[%s609 + $0x8] sm:$0xf]
      %v613 = vld [vmem:[%s609 + $0xc] sm:$0xf]
      %v614 = vld [vmem:[%s609 + $0x10] sm:$0xf]
      %v615 = vld [vmem:[%s609 + $0x14] sm:$0xf]
      %v616 = vld [vmem:[%s609 + $0x18] sm:$0xf]
      %v617 = vld [vmem:[%s609 + $0x1c] sm:$0xf]
      %v619 = vunpack.c.l.b16 %v608
      %v620 = vpack.c.b16 %v477, %v476
      %v621 = vpack.c.b16 %v479, %v478
      %v622 = vpack.c.b16 %v481, %v480
      %v623 = vpack.c.b16 %v619, %v482
      %v625 = vshrl.u32 %v620, 16
      %v627 = vshll.u32 %v620, 16
      %v629 = vrot.slane %v627, 1
      %v630 = vor.u32 %v625, %v629
      %v632 = vshll.u32 %v621, 16
      %v634 = vrot.slane %v632, 1
      %v635 = vsel %vm217, %v630, %v634
      %v636 = vshrl.u32 %v621, 16
      %v638 = vor.u32 %v636, %v634
      %v640 = vshll.u32 %v622, 16
      %v642 = vrot.slane %v640, 1
      %v643 = vsel %vm217, %v638, %v642
      %v644 = vshrl.u32 %v622, 16
      %v646 = vor.u32 %v644, %v642
      %v648 = vshll.u32 %v623, 16
      %v650 = vrot.slane %v648, 1
      %v651 = vsel %vm217, %v646, %v650
      %v652 = vshrl.u32 %v623, 16
      %v654 = vor.u32 %v652, %v650
      %v663 = vunpack.c.l.b16 %v610
      %v664 = vunpack.c.l.b16 %v611
      %v665 = vunpack.c.l.b16 %v612
      %v666 = vunpack.c.l.b16 %v613
      %v667 = vunpack.c.l.b16 %v614
      %v668 = vunpack.c.l.b16 %v615
      %v669 = vunpack.c.l.b16 %v616
      %v670 = vunpack.c.l.b16 %v617
      %v671 = vpack.c.b16 %v664, %v663
      %v672 = vpack.c.b16 %v666, %v665
      %v673 = vpack.c.b16 %v668, %v667
      %v674 = vpack.c.b16 %v670, %v669
      %v680 = vsel %vm273, %v635, 0
      %v683 = vsel %vm273, %v643, 0
      %v686 = vsel %vm273, %v651, 0
      %v689 = vsel %vm273, %v654, 0
      %691 = vmatprep.subr.bf16.mxu0 0
      %692 = vmatpush1.bf16.msra.mxu0 %v671
      %693 = vmatprep.subr.bf16.mxu0 0
      %694 = vmatpush1.bf16.msra.mxu0 %v672
      %695 = vmatprep.subr.bf16.mxu0 0
      %696 = vmatpush1.bf16.msra.mxu0 %v673
      %697 = vmatprep.subr.bf16.mxu0 0
      %698 = vmatpush1.bf16.msra.mxu0 %v674
      %699 = vmatprep.subr.bf16.mxu0 0
      %700 = vmatpush1.bf16.msra.mxu0 0
      %701 = vmatprep.subr.bf16.mxu0 0
      %702 = vmatpush1.bf16.msra.mxu0 0
      %703 = vmatprep.subr.bf16.mxu0 0
      %704 = vmatpush1.bf16.msra.mxu0 0
      %705 = vmatprep.subr.bf16.mxu0 0
      %706 = vmatpush1.bf16.msra.mxu0 0
      %707 = vmatprep.subr.bf16.mxu0 0
      %708 = vmatpush1.bf16.msra.mxu0 0
      %709 = vmatprep.subr.bf16.mxu0 0
      %710 = vmatpush1.bf16.msra.mxu0 0
      %711 = vmatprep.subr.bf16.mxu0 0
      %712 = vmatpush1.bf16.msra.mxu0 0
      %713 = vmatprep.subr.bf16.mxu0 0
      %714 = vmatpush1.bf16.msra.mxu0 0
      %715 = vmatprep.subr.bf16.mxu0 0
      %716 = vmatpush1.bf16.msra.mxu0 0
      %717 = vmatprep.subr.bf16.mxu0 0
      %718 = vmatpush1.bf16.msra.mxu0 0
      %719 = vmatprep.subr.bf16.mxu0 0
      %720 = vmatpush1.bf16.msra.mxu0 0
      %721 = vmatprep.subr.bf16.mxu0 0
      %722 = vmatpush1.bf16.msra.mxu0 0
      %723 = vmatprep.mubr.bf16.mxu0 0
      %724 = vmatmul.mubr.bf16.gmra.mrb[0].mxu0 %v680
      %v725 = vpop.f32.mrb[0].mxu0
      %v726 = vadd.f32 0.0, %v725
      %v727 = vpop.f32.mrb[0].mxu0
      %v728 = vpop.f32.mrb[0].mxu0
      %v729 = vadd.f32 0.0, %v728
      %v730 = vpop.f32.mrb[0].mxu0
      %731 = vmatprep.mubr.bf16.mxu0 0
      %732 = vmatmul.mubr.bf16.gmra.mrb[0].mxu0 %v683
      %v733 = vpop.f32.mrb[0].mxu0
      %v734 = vadd.f32 0.0, %v733
      %v735 = vpop.f32.mrb[0].mxu0
      %v736 = vpop.f32.mrb[0].mxu0
      %v737 = vadd.f32 0.0, %v736
      %v738 = vpop.f32.mrb[0].mxu0
      %739 = vmatprep.mubr.bf16.mxu0 0
      %740 = vmatmul.mubr.bf16.gmra.mrb[0].mxu0 %v686
      %v741 = vpop.f32.mrb[0].mxu0
      %v742 = vadd.f32 0.0, %v741
      %v743 = vpop.f32.mrb[0].mxu0
      %v744 = vpop.f32.mrb[0].mxu0
      %v745 = vadd.f32 0.0, %v744
      %v746 = vpop.f32.mrb[0].mxu0
      %747 = vmatprep.mubr.bf16.mxu0 0
      %748 = vmatmul.mubr.bf16.gmra.mrb[0].mxu0 %v689
      %v749 = vpop.f32.mrb[0].mxu0
      %v750 = vadd.f32 0.0, %v749
      %v751 = vpop.f32.mrb[0].mxu0
      %v752 = vpop.f32.mrb[0].mxu0
      %v753 = vadd.f32 0.0, %v752
      %v754 = vpop.f32.mrb[0].mxu0
      %755 = vdwg.mxu0
      %v756 = vadd.f32 %v600, %v726
      %v757 = vadd.f32 %v601, %v729
      %v758 = vadd.f32 %v602, %v734
      %v759 = vadd.f32 %v603, %v737
      %v760 = vadd.f32 %v604, %v742
      %v761 = vadd.f32 %v605, %v745
      %v762 = vadd.f32 %v606, %v750
      %v763 = vadd.f32 %v607, %v753
      %v764 = vld [vmem:[%s165 + $0x4] sm:$0xe]
      %v765 = vld [vmem:[%s165 + $0x8] sm:$0xf]
      %v766 = vld [vmem:[%s165 + $0xc] sm:$0xf]
      %v767 = vld [vmem:[%s165 + $0x10] sm:$0xf]
      %v768 = vld [vmem:[%s165 + $0x14] sm:$0xf]
      %v769 = vld [vmem:[%s165 + $0x18] sm:$0xf]
      %v770 = vld [vmem:[%s165 + $0x1c] sm:$0xf]
      %v771 = vld [vmem:[%s165 + $0x20] sm:$0xf]
      %v772 = vld [vmem:[%s165 + $0x24] sm:$0x1]
      %s773 = scalar_lea.vmem %s1, 128
      %v774 = vld [vmem:[%s773] sm:$0xf]
      %v775 = vld [vmem:[%s773 + $0x4] sm:$0xf]
      %v776 = vld [vmem:[%s773 + $0x8] sm:$0xf]
      %v777 = vld [vmem:[%s773 + $0xc] sm:$0xf]
      %v778 = vld [vmem:[%s773 + $0x10] sm:$0xf]
      %v779 = vld [vmem:[%s773 + $0x14] sm:$0xf]
      %v780 = vld [vmem:[%s773 + $0x18] sm:$0xf]
      %v781 = vld [vmem:[%s773 + $0x1c] sm:$0xf]
      %v791 = vunpack.c.l.b16 %v764
      %v792 = vunpack.c.l.b16 %v765
      %v793 = vunpack.c.l.b16 %v766
      %v794 = vunpack.c.l.b16 %v767
      %v795 = vunpack.c.l.b16 %v768
      %v796 = vunpack.c.l.b16 %v769
      %v797 = vunpack.c.l.b16 %v770
      %v798 = vunpack.c.l.b16 %v771
      %v799 = vunpack.c.l.b16 %v772
      %v800 = vpack.c.b16 %v792, %v791
      %v801 = vpack.c.b16 %v794, %v793
      %v802 = vpack.c.b16 %v796, %v795
      %v803 = vpack.c.b16 %v798, %v797
      %v804 = vpack.c.b16 %v799, %v799
      %v805 = vrot.slane %v800, 1
      %v806 = vrot.slane %v801, 1
      %v807 = vsel %vm489, %v805, %v806
      %v808 = vrot.slane %v802, 1
      %v809 = vsel %vm489, %v806, %v808
      %v810 = vrot.slane %v803, 1
      %v811 = vsel %vm489, %v808, %v810
      %v812 = vrot.slane %v804, 1
      %v813 = vsel %vm489, %v810, %v812
      %v822 = vunpack.c.l.b16 %v774
      %v823 = vunpack.c.l.b16 %v775
      %v824 = vunpack.c.l.b16 %v776
      %v825 = vunpack.c.l.b16 %v777
      %v826 = vunpack.c.l.b16 %v778
      %v827 = vunpack.c.l.b16 %v779
      %v828 = vunpack.c.l.b16 %v780
      %v829 = vunpack.c.l.b16 %v781
      %v830 = vpack.c.b16 %v823, %v822
      %v831 = vpack.c.b16 %v825, %v824
      %v832 = vpack.c.b16 %v827, %v826
      %v833 = vpack.c.b16 %v829, %v828
      %v839 = vsel %vm273, %v807, 0
      %v842 = vsel %vm273, %v809, 0
      %v845 = vsel %vm273, %v811, 0
      %v848 = vsel %vm273, %v813, 0
      %850 = vmatprep.subr.bf16.mxu0 0
      %851 = vmatpush1.bf16.msra.mxu0 %v830
      %852 = vmatprep.subr.bf16.mxu0 0
      %853 = vmatpush1.bf16.msra.mxu0 %v831
      %854 = vmatprep.subr.bf16.mxu0 0
      %855 = vmatpush1.bf16.msra.mxu0 %v832
      %856 = vmatprep.subr.bf16.mxu0 0
      %857 = vmatpush1.bf16.msra.mxu0 %v833
      %858 = vmatprep.subr.bf16.mxu0 0
      %859 = vmatpush1.bf16.msra.mxu0 0
      %860 = vmatprep.subr.bf16.mxu0 0
      %861 = vmatpush1.bf16.msra.mxu0 0
      %862 = vmatprep.subr.bf16.mxu0 0
      %863 = vmatpush1.bf16.msra.mxu0 0
      %864 = vmatprep.subr.bf16.mxu0 0
      %865 = vmatpush1.bf16.msra.mxu0 0
      %866 = vmatprep.subr.bf16.mxu0 0
      %867 = vmatpush1.bf16.msra.mxu0 0
      %868 = vmatprep.subr.bf16.mxu0 0
      %869 = vmatpush1.bf16.msra.mxu0 0
      %870 = vmatprep.subr.bf16.mxu0 0
      %871 = vmatpush1.bf16.msra.mxu0 0
      %872 = vmatprep.subr.bf16.mxu0 0
      %873 = vmatpush1.bf16.msra.mxu0 0
      %874 = vmatprep.subr.bf16.mxu0 0
      %875 = vmatpush1.bf16.msra.mxu0 0
      %876 = vmatprep.subr.bf16.mxu0 0
      %877 = vmatpush1.bf16.msra.mxu0 0
      %878 = vmatprep.subr.bf16.mxu0 0
      %879 = vmatpush1.bf16.msra.mxu0 0
      %880 = vmatprep.subr.bf16.mxu0 0
      %881 = vmatpush1.bf16.msra.mxu0 0
      %882 = vmatprep.mubr.bf16.mxu0 0
      %883 = vmatmul.mubr.bf16.gmra.mrb[0].mxu0 %v839
      %v884 = vpop.f32.mrb[0].mxu0
      %v885 = vadd.f32 0.0, %v884
      %v886 = vpop.f32.mrb[0].mxu0
      %v887 = vpop.f32.mrb[0].mxu0
      %v888 = vadd.f32 0.0, %v887
      %v889 = vpop.f32.mrb[0].mxu0
      %890 = vmatprep.mubr.bf16.mxu0 0
      %891 = vmatmul.mubr.bf16.gmra.mrb[0].mxu0 %v842
      %v892 = vpop.f32.mrb[0].mxu0
      %v893 = vadd.f32 0.0, %v892
      %v894 = vpop.f32.mrb[0].mxu0
      %v895 = vpop.f32.mrb[0].mxu0
      %v896 = vadd.f32 0.0, %v895
      %v897 = vpop.f32.mrb[0].mxu0
      %898 = vmatprep.mubr.bf16.mxu0 0
      %899 = vmatmul.mubr.bf16.gmra.mrb[0].mxu0 %v845
      %v900 = vpop.f32.mrb[0].mxu0
      %v901 = vadd.f32 0.0, %v900
      %v902 = vpop.f32.mrb[0].mxu0
      %v903 = vpop.f32.mrb[0].mxu0
      %v904 = vadd.f32 0.0, %v903
      %v905 = vpop.f32.mrb[0].mxu0
      %906 = vmatprep.mubr.bf16.mxu0 0
      %907 = vmatmul.mubr.bf16.gmra.mrb[0].mxu0 %v848
      %v908 = vpop.f32.mrb[0].mxu0
      %v909 = vadd.f32 0.0, %v908
      %v910 = vpop.f32.mrb[0].mxu0
      %v911 = vpop.f32.mrb[0].mxu0
      %v912 = vadd.f32 0.0, %v911
      %v913 = vpop.f32.mrb[0].mxu0
      %914 = vdwg.mxu0
      %v915 = vadd.f32 %v756, %v885
      %v916 = vadd.f32 %v757, %v888
      %v917 = vadd.f32 %v758, %v893
      %v918 = vadd.f32 %v759, %v896
      %v919 = vadd.f32 %v760, %v901
      %v920 = vadd.f32 %v761, %v904
      %v921 = vadd.f32 %v762, %v909
      %v922 = vadd.f32 %v763, %v912
      %s923 = scalar_lea.vmem %s1, 160
      %v924 = vld [vmem:[%s923] sm:$0xf]
      %v925 = vld [vmem:[%s923 + $0x4] sm:$0xf]
      %v926 = vld [vmem:[%s923 + $0x8] sm:$0xf]
      %v927 = vld [vmem:[%s923 + $0xc] sm:$0xf]
      %v928 = vld [vmem:[%s923 + $0x10] sm:$0xf]
      %v929 = vld [vmem:[%s923 + $0x14] sm:$0xf]
      %v930 = vld [vmem:[%s923 + $0x18] sm:$0xf]
      %v931 = vld [vmem:[%s923 + $0x1c] sm:$0xf]
      %vm932 = vsmask.f32 6400
      %v934 = vshrl.u32 %v800, 16
      %v936 = vrot.slane %v934, 1
      %v937 = vshll.u32 %v800, 16
      %v939 = vrot.slane %v937, 2
      %v940 = vor.u32 %v936, %v939
      %v942 = vshrl.u32 %v801, 16
      %v944 = vrot.slane %v942, 1
      %v945 = vshll.u32 %v801, 16
      %v947 = vrot.slane %v945, 2
      %v948 = vor.u32 %v944, %v947
      %v949 = vsel %vm932, %v940, %v948
      %v951 = vshrl.u32 %v802, 16
      %v953 = vrot.slane %v951, 1
      %v954 = vshll.u32 %v802, 16
      %v956 = vrot.slane %v954, 2
      %v957 = vor.u32 %v953, %v956
      %v958 = vsel %vm932, %v948, %v957
      %v960 = vshrl.u32 %v803, 16
      %v962 = vrot.slane %v960, 1
      %v963 = vshll.u32 %v803, 16
      %v965 = vrot.slane %v963, 2
      %v966 = vor.u32 %v962, %v965
      %v967 = vsel %vm932, %v957, %v966
      %v969 = vshrl.u32 %v804, 16
      %v971 = vrot.slane %v969, 1
      %v972 = vshll.u32 %v804, 16
      %v974 = vrot.slane %v972, 2
      %v975 = vor.u32 %v971, %v974
      %v976 = vsel %vm932, %v966, %v975
      %v985 = vunpack.c.l.b16 %v924
      %v986 = vunpack.c.l.b16 %v925
      %v987 = vunpack.c.l.b16 %v926
      %v988 = vunpack.c.l.b16 %v927
      %v989 = vunpack.c.l.b16 %v928
      %v990 = vunpack.c.l.b16 %v929
      %v991 = vunpack.c.l.b16 %v930
      %v992 = vunpack.c.l.b16 %v931
      %v993 = vpack.c.b16 %v986, %v985
      %v994 = vpack.c.b16 %v988, %v987
      %v995 = vpack.c.b16 %v990, %v989
      %v996 = vpack.c.b16 %v992, %v991
      %v1002 = vsel %vm273, %v949, 0
      %v1005 = vsel %vm273, %v958, 0
      %v1008 = vsel %vm273, %v967, 0
      %v1011 = vsel %vm273, %v976, 0
      %1013 = vmatprep.subr.bf16.mxu0 0
      %1014 = vmatpush1.bf16.msra.mxu0 %v993
      %1015 = vmatprep.subr.bf16.mxu0 0
      %1016 = vmatpush1.bf16.msra.mxu0 %v994
      %1017 = vmatprep.subr.bf16.mxu0 0
      %1018 = vmatpush1.bf16.msra.mxu0 %v995
      %1019 = vmatprep.subr.bf16.mxu0 0
      %1020 = vmatpush1.bf16.msra.mxu0 %v996
      %1021 = vmatprep.subr.bf16.mxu0 0
      %1022 = vmatpush1.bf16.msra.mxu0 0
      %1023 = vmatprep.subr.bf16.mxu0 0
      %1024 = vmatpush1.bf16.msra.mxu0 0
      %1025 = vmatprep.subr.bf16.mxu0 0
      %1026 = vmatpush1.bf16.msra.mxu0 0
      %1027 = vmatprep.subr.bf16.mxu0 0
      %1028 = vmatpush1.bf16.msra.mxu0 0
      %1029 = vmatprep.subr.bf16.mxu0 0
      %1030 = vmatpush1.bf16.msra.mxu0 0
      %1031 = vmatprep.subr.bf16.mxu0 0
      %1032 = vmatpush1.bf16.msra.mxu0 0
      %1033 = vmatprep.subr.bf16.mxu0 0
      %1034 = vmatpush1.bf16.msra.mxu0 0
      %1035 = vmatprep.subr.bf16.mxu0 0
      %1036 = vmatpush1.bf16.msra.mxu0 0
      %1037 = vmatprep.subr.bf16.mxu0 0
      %1038 = vmatpush1.bf16.msra.mxu0 0
      %1039 = vmatprep.subr.bf16.mxu0 0
      %1040 = vmatpush1.bf16.msra.mxu0 0
      %1041 = vmatprep.subr.bf16.mxu0 0
      %1042 = vmatpush1.bf16.msra.mxu0 0
      %1043 = vmatprep.subr.bf16.mxu0 0
      %1044 = vmatpush1.bf16.msra.mxu0 0
      %1045 = vmatprep.mubr.bf16.mxu0 0
      %1046 = vmatmul.mubr.bf16.gmra.mrb[0].mxu0 %v1002
      %v1047 = vpop.f32.mrb[0].mxu0
      %v1048 = vadd.f32 0.0, %v1047
      %v1049 = vpop.f32.mrb[0].mxu0
      %v1050 = vpop.f32.mrb[0].mxu0
      %v1051 = vadd.f32 0.0, %v1050
      %v1052 = vpop.f32.mrb[0].mxu0
      %1053 = vmatprep.mubr.bf16.mxu0 0
      %1054 = vmatmul.mubr.bf16.gmra.mrb[0].mxu0 %v1005
      %v1055 = vpop.f32.mrb[0].mxu0
      %v1056 = vadd.f32 0.0, %v1055
      %v1057 = vpop.f32.mrb[0].mxu0
      %v1058 = vpop.f32.mrb[0].mxu0
      %v1059 = vadd.f32 0.0, %v1058
      %v1060 = vpop.f32.mrb[0].mxu0
      %1061 = vmatprep.mubr.bf16.mxu0 0
      %1062 = vmatmul.mubr.bf16.gmra.mrb[0].mxu0 %v1008
      %v1063 = vpop.f32.mrb[0].mxu0
      %v1064 = vadd.f32 0.0, %v1063
      %v1065 = vpop.f32.mrb[0].mxu0
      %v1066 = vpop.f32.mrb[0].mxu0
      %v1067 = vadd.f32 0.0, %v1066
      %v1068 = vpop.f32.mrb[0].mxu0
      %1069 = vmatprep.mubr.bf16.mxu0 0
      %1070 = vmatmul.mubr.bf16.gmra.mrb[0].mxu0 %v1011
      %v1071 = vpop.f32.mrb[0].mxu0
      %v1072 = vadd.f32 0.0, %v1071
      %v1073 = vpop.f32.mrb[0].mxu0
      %v1074 = vpop.f32.mrb[0].mxu0
      %v1075 = vadd.f32 0.0, %v1074
      %v1076 = vpop.f32.mrb[0].mxu0
      %1077 = vdwg.mxu0
      %v1078 = vadd.f32 %v915, %v1048
      %v1079 = vadd.f32 %v916, %v1051
      %v1080 = vadd.f32 %v917, %v1056
      %v1081 = vadd.f32 %v918, %v1059
      %v1082 = vadd.f32 %v919, %v1064
      %v1083 = vadd.f32 %v920, %v1067
      %v1084 = vadd.f32 %v921, %v1072
      %v1085 = vadd.f32 %v922, %v1075
      %v1086 = vld [vmem:[%s165 + $0x8] sm:$0xe]
      %v1087 = vld [vmem:[%s165 + $0xc] sm:$0xf]
      %v1088 = vld [vmem:[%s165 + $0x10] sm:$0xf]
      %v1089 = vld [vmem:[%s165 + $0x14] sm:$0xf]
      %v1090 = vld [vmem:[%s165 + $0x18] sm:$0xf]
      %v1091 = vld [vmem:[%s165 + $0x1c] sm:$0xf]
      %v1092 = vld [vmem:[%s165 + $0x20] sm:$0xf]
      %v1093 = vld [vmem:[%s165 + $0x24] sm:$0xf]
      %v1094 = vld [vmem:[%s165 + $0x28] sm:$0x1]
      %s1095 = scalar_lea.vmem %s1, 192
      %v1096 = vld [vmem:[%s1095] sm:$0xf]
      %v1097 = vld [vmem:[%s1095 + $0x4] sm:$0xf]
      %v1098 = vld [vmem:[%s1095 + $0x8] sm:$0xf]
      %v1099 = vld [vmem:[%s1095 + $0xc] sm:$0xf]
      %v1100 = vld [vmem:[%s1095 + $0x10] sm:$0xf]
      %v1101 = vld [vmem:[%s1095 + $0x14] sm:$0xf]
      %v1102 = vld [vmem:[%s1095 + $0x18] sm:$0xf]
      %v1103 = vld [vmem:[%s1095 + $0x1c] sm:$0xf]
      %v1113 = vunpack.c.l.b16 %v1086
      %v1114 = vunpack.c.l.b16 %v1087
      %v1115 = vunpack.c.l.b16 %v1088
      %v1116 = vunpack.c.l.b16 %v1089
      %v1117 = vunpack.c.l.b16 %v1090
      %v1118 = vunpack.c.l.b16 %v1091
      %v1119 = vunpack.c.l.b16 %v1092
      %v1120 = vunpack.c.l.b16 %v1093
      %v1121 = vunpack.c.l.b16 %v1094
      %v1122 = vpack.c.b16 %v1114, %v1113
      %v1123 = vpack.c.b16 %v1116, %v1115
      %v1124 = vpack.c.b16 %v1118, %v1117
      %v1125 = vpack.c.b16 %v1120, %v1119
      %v1126 = vpack.c.b16 %v1121, %v1121
      %v1127 = vrot.slane %v1122, 1
      %v1128 = vrot.slane %v1123, 1
      %v1129 = vsel %vm489, %v1127, %v1128
      %v1130 = vrot.slane %v1124, 1
      %v1131 = vsel %vm489, %v1128, %v1130
      %v1132 = vrot.slane %v1125, 1
      %v1133 = vsel %vm489, %v1130, %v1132
      %v1134 = vrot.slane %v1126, 1
      %v1135 = vsel %vm489, %v1132, %v1134
      %v1144 = vunpack.c.l.b16 %v1096
      %v1145 = vunpack.c.l.b16 %v1097
      %v1146 = vunpack.c.l.b16 %v1098
      %v1147 = vunpack.c.l.b16 %v1099
      %v1148 = vunpack.c.l.b16 %v1100
      %v1149 = vunpack.c.l.b16 %v1101
      %v1150 = vunpack.c.l.b16 %v1102
      %v1151 = vunpack.c.l.b16 %v1103
      %v1152 = vpack.c.b16 %v1145, %v1144
      %v1153 = vpack.c.b16 %v1147, %v1146
      %v1154 = vpack.c.b16 %v1149, %v1148
      %v1155 = vpack.c.b16 %v1151, %v1150
      %v1161 = vsel %vm273, %v1129, 0
      %v1164 = vsel %vm273, %v1131, 0
      %v1167 = vsel %vm273, %v1133, 0
      %v1170 = vsel %vm273, %v1135, 0
      %1172 = vmatprep.subr.bf16.mxu0 0
      %1173 = vmatpush1.bf16.msra.mxu0 %v1152
      %1174 = vmatprep.subr.bf16.mxu0 0
      %1175 = vmatpush1.bf16.msra.mxu0 %v1153
      %1176 = vmatprep.subr.bf16.mxu0 0
      %1177 = vmatpush1.bf16.msra.mxu0 %v1154
      %1178 = vmatprep.subr.bf16.mxu0 0
      %1179 = vmatpush1.bf16.msra.mxu0 %v1155
      %1180 = vmatprep.subr.bf16.mxu0 0
      %1181 = vmatpush1.bf16.msra.mxu0 0
      %1182 = vmatprep.subr.bf16.mxu0 0
      %1183 = vmatpush1.bf16.msra.mxu0 0
      %1184 = vmatprep.subr.bf16.mxu0 0
      %1185 = vmatpush1.bf16.msra.mxu0 0
      %1186 = vmatprep.subr.bf16.mxu0 0
      %1187 = vmatpush1.bf16.msra.mxu0 0
      %1188 = vmatprep.subr.bf16.mxu0 0
      %1189 = vmatpush1.bf16.msra.mxu0 0
      %1190 = vmatprep.subr.bf16.mxu0 0
      %1191 = vmatpush1.bf16.msra.mxu0 0
      %1192 = vmatprep.subr.bf16.mxu0 0
      %1193 = vmatpush1.bf16.msra.mxu0 0
      %1194 = vmatprep.subr.bf16.mxu0 0
      %1195 = vmatpush1.bf16.msra.mxu0 0
      %1196 = vmatprep.subr.bf16.mxu0 0
      %1197 = vmatpush1.bf16.msra.mxu0 0
      %1198 = vmatprep.subr.bf16.mxu0 0
      %1199 = vmatpush1.bf16.msra.mxu0 0
      %1200 = vmatprep.subr.bf16.mxu0 0
      %1201 = vmatpush1.bf16.msra.mxu0 0
      %1202 = vmatprep.subr.bf16.mxu0 0
      %1203 = vmatpush1.bf16.msra.mxu0 0
      %1204 = vmatprep.mubr.bf16.mxu0 0
      %1205 = vmatmul.mubr.bf16.gmra.mrb[0].mxu0 %v1161
      %v1206 = vpop.f32.mrb[0].mxu0
      %v1207 = vadd.f32 0.0, %v1206
      %v1208 = vpop.f32.mrb[0].mxu0
      %v1209 = vpop.f32.mrb[0].mxu0
      %v1210 = vadd.f32 0.0, %v1209
      %v1211 = vpop.f32.mrb[0].mxu0
      %1212 = vmatprep.mubr.bf16.mxu0 0
      %1213 = vmatmul.mubr.bf16.gmra.mrb[0].mxu0 %v1164
      %v1214 = vpop.f32.mrb[0].mxu0
      %v1215 = vadd.f32 0.0, %v1214
      %v1216 = vpop.f32.mrb[0].mxu0
      %v1217 = vpop.f32.mrb[0].mxu0
      %v1218 = vadd.f32 0.0, %v1217
      %v1219 = vpop.f32.mrb[0].mxu0
      %1220 = vmatprep.mubr.bf16.mxu0 0
      %1221 = vmatmul.mubr.bf16.gmra.mrb[0].mxu0 %v1167
      %v1222 = vpop.f32.mrb[0].mxu0
      %v1223 = vadd.f32 0.0, %v1222
      %v1224 = vpop.f32.mrb[0].mxu0
      %v1225 = vpop.f32.mrb[0].mxu0
      %v1226 = vadd.f32 0.0, %v1225
      %v1227 = vpop.f32.mrb[0].mxu0
      %1228 = vmatprep.mubr.bf16.mxu0 0
      %1229 = vmatmul.mubr.bf16.gmra.mrb[0].mxu0 %v1170
      %v1230 = vpop.f32.mrb[0].mxu0
      %v1231 = vadd.f32 0.0, %v1230
      %v1232 = vpop.f32.mrb[0].mxu0
      %v1233 = vpop.f32.mrb[0].mxu0
      %v1234 = vadd.f32 0.0, %v1233
      %v1235 = vpop.f32.mrb[0].mxu0
      %1236 = vdwg.mxu0
      %v1237 = vadd.f32 %v1078, %v1207
      %v1238 = vadd.f32 %v1079, %v1210
      %v1239 = vadd.f32 %v1080, %v1215
      %v1240 = vadd.f32 %v1081, %v1218
      %v1241 = vadd.f32 %v1082, %v1223
      %v1242 = vadd.f32 %v1083, %v1226
      %v1243 = vadd.f32 %v1084, %v1231
      %v1244 = vadd.f32 %v1085, %v1234
      %s1245 = scalar_lea.vmem %s1, 224
      %v1246 = vld [vmem:[%s1245] sm:$0xf]
      %v1247 = vld [vmem:[%s1245 + $0x4] sm:$0xf]
      %v1248 = vld [vmem:[%s1245 + $0x8] sm:$0xf]
      %v1249 = vld [vmem:[%s1245 + $0xc] sm:$0xf]
      %v1250 = vld [vmem:[%s1245 + $0x10] sm:$0xf]
      %v1251 = vld [vmem:[%s1245 + $0x14] sm:$0xf]
      %v1252 = vld [vmem:[%s1245 + $0x18] sm:$0xf]
      %v1253 = vld [vmem:[%s1245 + $0x1c] sm:$0xf]
      %v1255 = vshrl.u32 %v1122, 16
      %v1257 = vrot.slane %v1255, 1
      %v1258 = vshll.u32 %v1122, 16
      %v1260 = vrot.slane %v1258, 2
      %v1261 = vor.u32 %v1257, %v1260
      %v1263 = vshrl.u32 %v1123, 16
      %v1265 = vrot.slane %v1263, 1
      %v1266 = vshll.u32 %v1123, 16
      %v1268 = vrot.slane %v1266, 2
      %v1269 = vor.u32 %v1265, %v1268
      %v1270 = vsel %vm932, %v1261, %v1269
      %v1272 = vshrl.u32 %v1124, 16
      %v1274 = vrot.slane %v1272, 1
      %v1275 = vshll.u32 %v1124, 16
      %v1277 = vrot.slane %v1275, 2
      %v1278 = vor.u32 %v1274, %v1277
      %v1279 = vsel %vm932, %v1269, %v1278
      %v1281 = vshrl.u32 %v1125, 16
      %v1283 = vrot.slane %v1281, 1
      %v1284 = vshll.u32 %v1125, 16
      %v1286 = vrot.slane %v1284, 2
      %v1287 = vor.u32 %v1283, %v1286
      %v1288 = vsel %vm932, %v1278, %v1287
      %v1290 = vshrl.u32 %v1126, 16
      %v1292 = vrot.slane %v1290, 1
      %v1293 = vshll.u32 %v1126, 16
      %v1295 = vrot.slane %v1293, 2
      %v1296 = vor.u32 %v1292, %v1295
      %v1297 = vsel %vm932, %v1287, %v1296
      %v1306 = vunpack.c.l.b16 %v1246
      %v1307 = vunpack.c.l.b16 %v1247
      %v1308 = vunpack.c.l.b16 %v1248
      %v1309 = vunpack.c.l.b16 %v1249
      %v1310 = vunpack.c.l.b16 %v1250
      %v1311 = vunpack.c.l.b16 %v1251
      %v1312 = vunpack.c.l.b16 %v1252
      %v1313 = vunpack.c.l.b16 %v1253
      %v1314 = vpack.c.b16 %v1307, %v1306
      %v1315 = vpack.c.b16 %v1309, %v1308
      %v1316 = vpack.c.b16 %v1311, %v1310
      %v1317 = vpack.c.b16 %v1313, %v1312
      %v1323 = vsel %vm273, %v1270, 0
      %v1326 = vsel %vm273, %v1279, 0
      %v1329 = vsel %vm273, %v1288, 0
      %v1332 = vsel %vm273, %v1297, 0
      %1334 = vmatprep.subr.bf16.mxu0 0
      %1335 = vmatpush1.bf16.msra.mxu0 %v1314
      %1336 = vmatprep.subr.bf16.mxu0 0
      %1337 = vmatpush1.bf16.msra.mxu0 %v1315
      %1338 = vmatprep.subr.bf16.mxu0 0
      %1339 = vmatpush1.bf16.msra.mxu0 %v1316
      %1340 = vmatprep.subr.bf16.mxu0 0
      %1341 = vmatpush1.bf16.msra.mxu0 %v1317
      %1342 = vmatprep.subr.bf16.mxu0 0
      %1343 = vmatpush1.bf16.msra.mxu0 0
      %1344 = vmatprep.subr.bf16.mxu0 0
      %1345 = vmatpush1.bf16.msra.mxu0 0
      %1346 = vmatprep.subr.bf16.mxu0 0
      %1347 = vmatpush1.bf16.msra.mxu0 0
      %1348 = vmatprep.subr.bf16.mxu0 0
      %1349 = vmatpush1.bf16.msra.mxu0 0
      %1350 = vmatprep.subr.bf16.mxu0 0
      %1351 = vmatpush1.bf16.msra.mxu0 0
      %1352 = vmatprep.subr.bf16.mxu0 0
      %1353 = vmatpush1.bf16.msra.mxu0 0
      %1354 = vmatprep.subr.bf16.mxu0 0
      %1355 = vmatpush1.bf16.msra.mxu0 0
      %1356 = vmatprep.subr.bf16.mxu0 0
      %1357 = vmatpush1.bf16.msra.mxu0 0
      %1358 = vmatprep.subr.bf16.mxu0 0
      %1359 = vmatpush1.bf16.msra.mxu0 0
      %1360 = vmatprep.subr.bf16.mxu0 0
      %1361 = vmatpush1.bf16.msra.mxu0 0
      %1362 = vmatprep.subr.bf16.mxu0 0
      %1363 = vmatpush1.bf16.msra.mxu0 0
      %1364 = vmatprep.subr.bf16.mxu0 0
      %1365 = vmatpush1.bf16.msra.mxu0 0
      %1366 = vmatprep.mubr.bf16.mxu0 0
      %1367 = vmatmul.mubr.bf16.gmra.mrb[0].mxu0 %v1323
      %v1368 = vpop.f32.mrb[0].mxu0
      %v1369 = vadd.f32 0.0, %v1368
      %v1370 = vpop.f32.mrb[0].mxu0
      %v1371 = vpop.f32.mrb[0].mxu0
      %v1372 = vadd.f32 0.0, %v1371
      %v1373 = vpop.f32.mrb[0].mxu0
      %1374 = vmatprep.mubr.bf16.mxu0 0
      %1375 = vmatmul.mubr.bf16.gmra.mrb[0].mxu0 %v1326
      %v1376 = vpop.f32.mrb[0].mxu0
      %v1377 = vadd.f32 0.0, %v1376
      %v1378 = vpop.f32.mrb[0].mxu0
      %v1379 = vpop.f32.mrb[0].mxu0
      %v1380 = vadd.f32 0.0, %v1379
      %v1381 = vpop.f32.mrb[0].mxu0
      %1382 = vmatprep.mubr.bf16.mxu0 0
      %1383 = vmatmul.mubr.bf16.gmra.mrb[0].mxu0 %v1329
      %v1384 = vpop.f32.mrb[0].mxu0
      %v1385 = vadd.f32 0.0, %v1384
      %v1386 = vpop.f32.mrb[0].mxu0
      %v1387 = vpop.f32.mrb[0].mxu0
      %v1388 = vadd.f32 0.0, %v1387
      %v1389 = vpop.f32.mrb[0].mxu0
      %1390 = vmatprep.mubr.bf16.mxu0 0
      %1391 = vmatmul.mubr.bf16.gmra.mrb[0].mxu0 %v1332
      %v1392 = vpop.f32.mrb[0].mxu0
      %v1393 = vadd.f32 0.0, %v1392
      %v1394 = vpop.f32.mrb[0].mxu0
      %v1395 = vpop.f32.mrb[0].mxu0
      %v1396 = vadd.f32 0.0, %v1395
      %v1397 = vpop.f32.mrb[0].mxu0
      %1398 = vdwg.mxu0
      %v1399 = vadd.f32 %v1237, %v1369
      %v1400 = vadd.f32 %v1238, %v1372
      %v1401 = vadd.f32 %v1239, %v1377
      %v1402 = vadd.f32 %v1240, %v1380
      %v1403 = vadd.f32 %v1241, %v1385
      %v1404 = vadd.f32 %v1242, %v1388
      %v1405 = vadd.f32 %v1243, %v1393
      %v1406 = vadd.f32 %v1244, %v1396
      %v1407 = vld [vmem:[%s165 + $0x8] sm:$0xc]
      %v1408 = vld [vmem:[%s165 + $0x28] sm:$0x3]
      %s1409 = scalar_lea.vmem %s1, 256
      %v1410 = vld [vmem:[%s1409] sm:$0xf]
      %v1411 = vld [vmem:[%s1409 + $0x4] sm:$0xf]
      %v1412 = vld [vmem:[%s1409 + $0x8] sm:$0xf]
      %v1413 = vld [vmem:[%s1409 + $0xc] sm:$0xf]
      %v1414 = vld [vmem:[%s1409 + $0x10] sm:$0xf]
      %v1415 = vld [vmem:[%s1409 + $0x14] sm:$0xf]
      %v1416 = vld [vmem:[%s1409 + $0x18] sm:$0xf]
      %v1417 = vld [vmem:[%s1409 + $0x1c] sm:$0xf]
      %v1420 = vunpack.c.l.b16 %v1407
      %v1421 = vunpack.c.l.b16 %v1408
      %v1422 = vpack.c.b16 %v1114, %v1420
      %v1423 = vpack.c.b16 %v1421, %v1421
      %vm1424 = vcmask 1045504
      %v1425 = vrot.slane %v1422, 2
      %v1426 = vrot.slane %v1123, 2
      %v1427 = vsel %vm1424, %v1425, %v1426
      %v1428 = vrot.slane %v1124, 2
      %v1429 = vsel %vm1424, %v1426, %v1428
      %v1430 = vrot.slane %v1125, 2
      %v1431 = vsel %vm1424, %v1428, %v1430
      %v1432 = vrot.slane %v1423, 2
      %v1433 = vsel %vm1424, %v1430, %v1432
      %v1442 = vunpack.c.l.b16 %v1410
      %v1443 = vunpack.c.l.b16 %v1411
      %v1444 = vunpack.c.l.b16 %v1412
      %v1445 = vunpack.c.l.b16 %v1413
      %v1446 = vunpack.c.l.b16 %v1414
      %v1447 = vunpack.c.l.b16 %v1415
      %v1448 = vunpack.c.l.b16 %v1416
      %v1449 = vunpack.c.l.b16 %v1417
      %v1450 = vpack.c.b16 %v1443, %v1442
      %v1451 = vpack.c.b16 %v1445, %v1444
      %v1452 = vpack.c.b16 %v1447, %v1446
      %v1453 = vpack.c.b16 %v1449, %v1448
      %v1459 = vsel %vm273, %v1427, 0
      %v1462 = vsel %vm273, %v1429, 0
      %v1465 = vsel %vm273, %v1431, 0
      %v1468 = vsel %vm273, %v1433, 0
      %1470 = vmatprep.subr.bf16.mxu0 0
      %1471 = vmatpush1.bf16.msra.mxu0 %v1450
      %1472 = vmatprep.subr.bf16.mxu0 0
      %1473 = vmatpush1.bf16.msra.mxu0 %v1451
      %1474 = vmatprep.subr.bf16.mxu0 0
      %1475 = vmatpush1.bf16.msra.mxu0 %v1452
      %1476 = vmatprep.subr.bf16.mxu0 0
      %1477 = vmatpush1.bf16.msra.mxu0 %v1453
      %1478 = vmatprep.subr.bf16.mxu0 0
      %1479 = vmatpush1.bf16.msra.mxu0 0
      %1480 = vmatprep.subr.bf16.mxu0 0
      %1481 = vmatpush1.bf16.msra.mxu0 0
      %1482 = vmatprep.subr.bf16.mxu0 0
      %1483 = vmatpush1.bf16.msra.mxu0 0
      %1484 = vmatprep.subr.bf16.mxu0 0
      %1485 = vmatpush1.bf16.msra.mxu0 0
      %1486 = vmatprep.subr.bf16.mxu0 0
      %1487 = vmatpush1.bf16.msra.mxu0 0
      %1488 = vmatprep.subr.bf16.mxu0 0
      %1489 = vmatpush1.bf16.msra.mxu0 0
      %1490 = vmatprep.subr.bf16.mxu0 0
      %1491 = vmatpush1.bf16.msra.mxu0 0
      %1492 = vmatprep.subr.bf16.mxu0 0
      %1493 = vmatpush1.bf16.msra.mxu0 0
      %1494 = vmatprep.subr.bf16.mxu0 0
      %1495 = vmatpush1.bf16.msra.mxu0 0
      %1496 = vmatprep.subr.bf16.mxu0 0
      %1497 = vmatpush1.bf16.msra.mxu0 0
      %1498 = vmatprep.subr.bf16.mxu0 0
      %1499 = vmatpush1.bf16.msra.mxu0 0
      %1500 = vmatprep.subr.bf16.mxu0 0
      %1501 = vmatpush1.bf16.msra.mxu0 0
      %1502 = vmatprep.mubr.bf16.mxu0 0
      %1503 = vmatmul.mubr.bf16.gmra.mrb[0].mxu0 %v1459
      %v1504 = vpop.f32.mrb[0].mxu0
      %v1505 = vadd.f32 0.0, %v1504
      %v1506 = vpop.f32.mrb[0].mxu0
      %v1507 = vpop.f32.mrb[0].mxu0
      %v1508 = vadd.f32 0.0, %v1507
      %v1509 = vpop.f32.mrb[0].mxu0
      %1510 = vmatprep.mubr.bf16.mxu0 0
      %1511 = vmatmul.mubr.bf16.gmra.mrb[0].mxu0 %v1462
      %v1512 = vpop.f32.mrb[0].mxu0
      %v1513 = vadd.f32 0.0, %v1512
      %v1514 = vpop.f32.mrb[0].mxu0
      %v1515 = vpop.f32.mrb[0].mxu0
      %v1516 = vadd.f32 0.0, %v1515
      %v1517 = vpop.f32.mrb[0].mxu0
      %1518 = vmatprep.mubr.bf16.mxu0 0
      %1519 = vmatmul.mubr.bf16.gmra.mrb[0].mxu0 %v1465
      %v1520 = vpop.f32.mrb[0].mxu0
      %v1521 = vadd.f32 0.0, %v1520
      %v1522 = vpop.f32.mrb[0].mxu0
      %v1523 = vpop.f32.mrb[0].mxu0
      %v1524 = vadd.f32 0.0, %v1523
      %v1525 = vpop.f32.mrb[0].mxu0
      %1526 = vmatprep.mubr.bf16.mxu0 0
      %1527 = vmatmul.mubr.bf16.gmra.mrb[0].mxu0 %v1468
      %v1528 = vpop.f32.mrb[0].mxu0
      %v1529 = vadd.f32 0.0, %v1528
      %v1530 = vpop.f32.mrb[0].mxu0
      %v1531 = vpop.f32.mrb[0].mxu0
      %v1532 = vadd.f32 0.0, %v1531
      %v1533 = vpop.f32.mrb[0].mxu0
      %1534 = vdwg.mxu0
      %v1535 = vadd.f32 %v1399, %v1505
      %v1536 = vadd.f32 %v1400, %v1508
      %v1537 = vadd.f32 %v1401, %v1513
      %v1538 = vadd.f32 %v1402, %v1516
      %v1539 = vadd.f32 %v1403, %v1521
      %v1540 = vadd.f32 %v1404, %v1524
      %v1541 = vadd.f32 %v1405, %v1529
      %v1542 = vadd.f32 %v1406, %v1532
      %v1543 = vld [vmem:[%s2] sm:$0x1]
      %v1545 = vlaneseq
      %v1546 = vshrl.u32 %v1545, 7
      %v1547 = vsub.s32 0, %v1546
      %v1548 = vrot.slane %v1543, %v1547
      %v1550 = vadd.f32 %v1535, %v1548
      %v1551 = vadd.f32 %v1536, %v1548
      %v1552 = vadd.f32 %v1537, %v1548
      %v1553 = vadd.f32 %v1538, %v1548
      %v1554 = vadd.f32 %v1539, %v1548
      %v1555 = vadd.f32 %v1540, %v1548
      %v1556 = vadd.f32 %v1541, %v1548
      %v1557 = vadd.f32 %v1542, %v1548
      %v1558 = vmax.f32 %v1550, 0.0
      %v1559 = vmax.f32 %v1551, 0.0
      %v1560 = vmax.f32 %v1552, 0.0
      %v1561 = vmax.f32 %v1553, 0.0
      %v1562 = vmax.f32 %v1554, 0.0
      %v1563 = vmax.f32 %v1555, 0.0
      %v1564 = vmax.f32 %v1556, 0.0
      %v1565 = vmax.f32 %v1557, 0.0
      %v1566 = vpack.c.bf16 %v1559, %v1558
      %v1567 = vpack.c.bf16 %v1561, %v1560
      %v1568 = vpack.c.bf16 %v1563, %v1562
      %v1569 = vpack.c.bf16 %v1565, %v1564
      %v1574 = vunpack.c.l.b16 %v1566
      %v1575 = vunpack.c.h.b16 %v1566
      %v1576 = vunpack.c.l.b16 %v1567
      %v1577 = vunpack.c.h.b16 %v1567
      %v1578 = vunpack.c.l.b16 %v1568
      %v1579 = vunpack.c.h.b16 %v1568
      %v1580 = vunpack.c.l.b16 %v1569
      %v1581 = vunpack.c.h.b16 %v1569
      %v1582 = vpack.c.b16 %v1574, %v1574
      %v1583 = vpack.c.b16 %v1575, %v1575
      %v1584 = vpack.c.b16 %v1576, %v1576
      %v1585 = vpack.c.b16 %v1577, %v1577
      %v1586 = vpack.c.b16 %v1578, %v1578
      %v1587 = vpack.c.b16 %v1579, %v1579
      %v1588 = vpack.c.b16 %v1580, %v1580
      %v1589 = vpack.c.b16 %v1581, %v1581
      %vm1598 = vcmask 519168
      %1599 = vst.msk [vmem:[%s170] sm:$0xf] %vm1598, %v1582
      %1600 = vst.msk [vmem:[%s170 + $0x4] sm:$0xf] %vm1598, %v1583
      %1601 = vst.msk [vmem:[%s170 + $0x8] sm:$0xf] %vm1598, %v1584
      %1602 = vst.msk [vmem:[%s170 + $0xc] sm:$0xf] %vm1598, %v1585
      %1603 = vst.msk [vmem:[%s170 + $0x10] sm:$0xf] %vm1598, %v1586
      %1604 = vst.msk [vmem:[%s170 + $0x14] sm:$0xf] %vm1598, %v1587
      %1605 = vst.msk [vmem:[%s170 + $0x18] sm:$0xf] %vm1598, %v1588
      %vm1606 = vcmask 519168
      %vm1607 = vsmask.f32 3328
      %vm1608 = vmand %vm1606, %vm1607
      %v1609 = vld [vmem:[%s170 + $0x1c] sm:$0xf]
      %v1610 = vsel %vm1608, %v1589, %v1609
      %1611 = vst [vmem:[%s170 + $0x1c] sm:$0xf] %v1610
      %p1612 = scmp.lt.s32.totalorder %s14, 1
      %s1613 = scalar_select %p1612, %s14, 1
      %s1614 = smul.addr %s1613, 8
      %s1615 = smul.addr %s1614, 4
      %s1616 = scalar_lea.vmem %s3, %s1615
      // Predicated region
      $region33: #{forward.6} parent=31 // pred_check
        %p1617 = pneg %p100
      $region34: #{forward.6} parent=31 // pred_check_branch
        %1619 = sbr.rel (%p1617) target = $region36
      $region35: #{forward.6} parent=31 // pred_region
        _
      $region36: #{forward.6} parent=31 // pred_fallthru
        _
    $region32: #{forward.6} parent=5 // pred_fallthru
      _
    %p1620 = scmp.le.s32.totalorder 2, %s9
    // Predicated region
    $region37: #{forward.6} parent=5 // pred_check
      %p1621 = pneg %p1620
    $region38: #{forward.6} parent=5 // pred_check_branch
      %1623 = sbr.rel (%p1621) target = $region40
    $region39: #{forward.6} parent=5 // pred_region
      %s1624 = ssub.s32 %s9, 2
      // Predicated region
      $region41: #{forward.6} parent=39 // pred_check
        %p1625 = pneg %p106
      $region42: #{forward.6} parent=39 // pred_check_branch
        %1627 = sbr.rel (%p1625) target = $region44
      $region43: #{forward.6} parent=39 // pred_region
        %p1628 = scmp.lt.s32.totalorder %s15, 1
        %s1629 = scalar_select %p1628, %s15, 1
        %s1630 = smul.addr %s1629, 8
        %s1631 = smul.addr %s1630, 4
        %s1632 = scalar_lea.vmem %s3, %s1631
      $region44: #{forward.6} parent=39 // pred_fallthru
        _
    $region40: #{forward.6} parent=5 // pred_fallthru
      _
  $region6: #{forward.6} parent=0 // loop_footer
    %s13 = sadd.s32 1, %s9
  $region7: #{forward.6} parent=0 // loop_footer_branch
    %8 = sbr.rel target = $region3
  $region8: #{forward.6} parent=0 // loop_exit
    _

// kernel: forward.7
$region0: #{forward.7}
  #allocation0 [shape = 'u32[]', space=smem, size = 0x4, offset = 0x4, fixed_abs, tag = 'smem constant byte address 0x4 - core index']
  #allocation1 [shape = 'u32[144,128]{1,0:T(1,128)}', space=vmem, size = 0x12000, scoped, tag = 'internal scratch']
  %s0 = inlined_call_operand.vmem [shape: bf16[16,3136], index: 0, kind: input, shape index: {}]
  %s1 = inlined_call_operand.vmem [shape: bf16[3136,512], index: 1, kind: input, shape index: {}]
  %s2 = inlined_call_operand.vmem [shape: f32[1,512], index: 2, kind: input, shape index: {}]
  %s3 = inlined_call_operand.vmem [shape: bf16[512,128], index: 3, kind: input, shape index: {}]
  %s4 = inlined_call_operand.vmem [shape: f32[1,128], index: 4, kind: input, shape index: {}]
  %s5 = inlined_call_operand.vmem [shape: f32[16,2], index: 5, kind: output, shape index: {}]
  %s6 = sld [smem:[#allocation0]]
  $region30: #{forward.7} parent=0
    _
  %s8 = ssub.s32 1, %s6
  %s9 = scalar_select 0, %s8, %s6
  // Predicated region
  $region2: #{forward.7} parent=0 // pred_check
    _
  $region3: #{forward.7} parent=0 // pred_check_branch
    %11 = sbr.rel (0) target = $region5
  $region4: #{forward.7} parent=0 // pred_region
    _
  $region5: #{forward.7} parent=0 // pred_fallthru
    _
  // Predicated region
  $region6: #{forward.7} parent=0 // pred_check
    _
  $region7: #{forward.7} parent=0 // pred_check_branch
    %13 = sbr.rel (0) target = $region9
  $region8: #{forward.7} parent=0 // pred_region
    _
  $region9: #{forward.7} parent=0 // pred_fallthru
    _
  // Predicated region
  $region10: #{forward.7} parent=0 // pred_check
    _
  $region11: #{forward.7} parent=0 // pred_check_branch
    %15 = sbr.rel (0) target = $region13
  $region12: #{forward.7} parent=0 // pred_region
    _
  $region13: #{forward.7} parent=0 // pred_fallthru
    _
  // Predicated region
  $region14: #{forward.7} parent=0 // pred_check
    _
  $region15: #{forward.7} parent=0 // pred_check_branch
    %17 = sbr.rel (0) target = $region17
  $region16: #{forward.7} parent=0 // pred_region
    _
  $region17: #{forward.7} parent=0 // pred_fallthru
    _
  // Predicated region
  $region18: #{forward.7} parent=0 // pred_check
    _
  $region19: #{forward.7} parent=0 // pred_check_branch
    %19 = sbr.rel (0) target = $region21
  $region20: #{forward.7} parent=0 // pred_region
    _
  $region21: #{forward.7} parent=0 // pred_fallthru
    _
  %v21 = vld [vmem:[%s0] sm:$0xff]
  %v22 = vld [vmem:[%s0 + $0x8] sm:$0xff]
  %v23 = vld [vmem:[%s0 + $0x10] sm:$0xff]
  %v24 = vld [vmem:[%s0 + $0x18] sm:$0xff]
  %v25 = vld [vmem:[%s0 + $0x20] sm:$0xff]
  %v26 = vld [vmem:[%s0 + $0x28] sm:$0xff]
  %v27 = vld [vmem:[%s0 + $0x30] sm:$0xff]
  %v28 = vld [vmem:[%s0 + $0x38] sm:$0xff]
  %v29 = vld [vmem:[%s0 + $0x40] sm:$0xff]
  %v30 = vld [vmem:[%s0 + $0x48] sm:$0xff]
  %v31 = vld [vmem:[%s0 + $0x50] sm:$0xff]
  %v32 = vld [vmem:[%s0 + $0x58] sm:$0xff]
  %v33 = vld [vmem:[%s0 + $0x60] sm:$0xf]
  %v34 = vld [vmem:[%s0 + $0x64] sm:$0xff]
  %v35 = vld [vmem:[%s0 + $0x6c] sm:$0xff]
  %v36 = vld [vmem:[%s0 + $0x74] sm:$0xff]
  %v37 = vld [vmem:[%s0 + $0x7c] sm:$0xff]
  %v38 = vld [vmem:[%s0 + $0x84] sm:$0xff]
  %v39 = vld [vmem:[%s0 + $0x8c] sm:$0xff]
  %v40 = vld [vmem:[%s0 + $0x94] sm:$0xff]
  %v41 = vld [vmem:[%s0 + $0x9c] sm:$0xff]
  %v42 = vld [vmem:[%s0 + $0xa4] sm:$0xff]
  %v43 = vld [vmem:[%s0 + $0xac] sm:$0xff]
  %v44 = vld [vmem:[%s0 + $0xb4] sm:$0xff]
  %v45 = vld [vmem:[%s0 + $0xbc] sm:$0xff]
  %v46 = vld [vmem:[%s0 + $0xc4] sm:$0xf]
  %v47 = vld [vmem:[%s1] sm:$0xff]
  %v48 = vld [vmem:[%s1 + $0x8] sm:$0xff]
  %v49 = vld [vmem:[%s1 + $0x10] sm:$0xff]
  %v50 = vld [vmem:[%s1 + $0x18] sm:$0xff]
  %v51 = vld [vmem:[%s1 + $0x20] sm:$0xff]
  %v52 = vld [vmem:[%s1 + $0x28] sm:$0xff]
  %v53 = vld [vmem:[%s1 + $0x30] sm:$0xff]
  %v54 = vld [vmem:[%s1 + $0x38] sm:$0xff]
  %v55 = vld [vmem:[%s1 + $0x40] sm:$0xff]
  %v56 = vld [vmem:[%s1 + $0x48] sm:$0xff]
  %v57 = vld [vmem:[%s1 + $0x50] sm:$0xff]
  %v58 = vld [vmem:[%s1 + $0x58] sm:$0xff]
  %v59 = vld [vmem:[%s1 + $0x60] sm:$0xff]
  %v60 = vld [vmem:[%s1 + $0x68] sm:$0xff]
  %v61 = vld [vmem:[%s1 + $0x70] sm:$0xff]
  %v62 = vld [vmem:[%s1 + $0x78] sm:$0xff]
  %v63 = vld [vmem:[%s1 + $0x80] sm:$0xff]
  %v64 = vld [vmem:[%s1 + $0x88] sm:$0xff]
  %v65 = vld [vmem:[%s1 + $0x90] sm:$0xff]
  %v66 = vld [vmem:[%s1 + $0x98] sm:$0xff]
  %v67 = vld [vmem:[%s1 + $0xa0] sm:$0xff]
  %v68 = vld [vmem:[%s1 + $0xa8] sm:$0xff]
  %v69 = vld [vmem:[%s1 + $0xb0] sm:$0xff]
  %v70 = vld [vmem:[%s1 + $0xb8] sm:$0xff]
  %v71 = vld [vmem:[%s1 + $0xc0] sm:$0xff]
  %v72 = vld [vmem:[%s1 + $0xc8] sm:$0xff]
  %v73 = vld [vmem:[%s1 + $0xd0] sm:$0xff]
  %v74 = vld [vmem:[%s1 + $0xd8] sm:$0xff]
  %v75 = vld [vmem:[%s1 + $0xe0] sm:$0xff]
  %v76 = vld [vmem:[%s1 + $0xe8] sm:$0xff]
  %v77 = vld [vmem:[%s1 + $0xf0] sm:$0xff]
  %v78 = vld [vmem:[%s1 + $0xf8] sm:$0xff]
  %v79 = vld [vmem:[%s1 + $0x100] sm:$0xff]
  %v80 = vld [vmem:[%s1 + $0x108] sm:$0xff]
  %v81 = vld [vmem:[%s1 + $0x110] sm:$0xff]
  %v82 = vld [vmem:[%s1 + $0x118] sm:$0xff]
  %v83 = vld [vmem:[%s1 + $0x120] sm:$0xff]
  %v84 = vld [vmem:[%s1 + $0x128] sm:$0xff]
  %v85 = vld [vmem:[%s1 + $0x130] sm:$0xff]
  %v86 = vld [vmem:[%s1 + $0x138] sm:$0xff]
  %v87 = vld [vmem:[%s1 + $0x140] sm:$0xff]
  %v88 = vld [vmem:[%s1 + $0x148] sm:$0xff]
  %v89 = vld [vmem:[%s1 + $0x150] sm:$0xff]
  %v90 = vld [vmem:[%s1 + $0x158] sm:$0xff]
  %v91 = vld [vmem:[%s1 + $0x160] sm:$0xff]
  %v92 = vld [vmem:[%s1 + $0x168] sm:$0xff]
  %v93 = vld [vmem:[%s1 + $0x170] sm:$0xff]
  %v94 = vld [vmem:[%s1 + $0x178] sm:$0xff]
  %v95 = vld [vmem:[%s1 + $0x180] sm:$0xff]
  %v96 = vld [vmem:[%s1 + $0x188] sm:$0xff]
  %v97 = vld [vmem:[%s1 + $0x190] sm:$0xff]
  %v98 = vld [vmem:[%s1 + $0x198] sm:$0xff]
  %v99 = vld [vmem:[%s1 + $0x1a0] sm:$0xff]
  %v100 = vld [vmem:[%s1 + $0x1a8] sm:$0xff]
  %v101 = vld [vmem:[%s1 + $0x1b0] sm:$0xff]
  %v102 = vld [vmem:[%s1 + $0x1b8] sm:$0xff]
  %v103 = vld [vmem:[%s1 + $0x1c0] sm:$0xff]
  %v104 = vld [vmem:[%s1 + $0x1c8] sm:$0xff]
  %v105 = vld [vmem:[%s1 + $0x1d0] sm:$0xff]
  %v106 = vld [vmem:[%s1 + $0x1d8] sm:$0xff]
  %v107 = vld [vmem:[%s1 + $0x1e0] sm:$0xff]
  %v108 = vld [vmem:[%s1 + $0x1e8] sm:$0xff]
  %v109 = vld [vmem:[%s1 + $0x1f0] sm:$0xff]
  %v110 = vld [vmem:[%s1 + $0x1f8] sm:$0xff]
  %v111 = vld [vmem:[%s1 + $0x200] sm:$0xff]
  %v112 = vld [vmem:[%s1 + $0x208] sm:$0xff]
  %v113 = vld [vmem:[%s1 + $0x210] sm:$0xff]
  %v114 = vld [vmem:[%s1 + $0x218] sm:$0xff]
  %v115 = vld [vmem:[%s1 + $0x220] sm:$0xff]
  %v116 = vld [vmem:[%s1 + $0x228] sm:$0xff]
  %v117 = vld [vmem:[%s1 + $0x230] sm:$0xff]
  %v118 = vld [vmem:[%s1 + $0x238] sm:$0xff]
  %v119 = vld [vmem:[%s1 + $0x240] sm:$0xff]
  %v120 = vld [vmem:[%s1 + $0x248] sm:$0xff]
  %v121 = vld [vmem:[%s1 + $0x250] sm:$0xff]
  %v122 = vld [vmem:[%s1 + $0x258] sm:$0xff]
  %v123 = vld [vmem:[%s1 + $0x260] sm:$0xff]
  %v124 = vld [vmem:[%s1 + $0x268] sm:$0xff]
  %v125 = vld [vmem:[%s1 + $0x270] sm:$0xff]
  %v126 = vld [vmem:[%s1 + $0x278] sm:$0xff]
  %v127 = vld [vmem:[%s1 + $0x280] sm:$0xff]
  %v128 = vld [vmem:[%s1 + $0x288] sm:$0xff]
  %v129 = vld [vmem:[%s1 + $0x290] sm:$0xff]
  %v130 = vld [vmem:[%s1 + $0x298] sm:$0xff]
  %v131 = vld [vmem:[%s1 + $0x2a0] sm:$0xff]
  %v132 = vld [vmem:[%s1 + $0x2a8] sm:$0xff]
  %v133 = vld [vmem:[%s1 + $0x2b0] sm:$0xff]
  %v134 = vld [vmem:[%s1 + $0x2b8] sm:$0xff]
  %v135 = vld [vmem:[%s1 + $0x2c0] sm:$0xff]
  %v136 = vld [vmem:[%s1 + $0x2c8] sm:$0xff]
  %v137 = vld [vmem:[%s1 + $0x2d0] sm:$0xff]
  %v138 = vld [vmem:[%s1 + $0x2d8] sm:$0xff]
  %v139 = vld [vmem:[%s1 + $0x2e0] sm:$0xff]
  %v140 = vld [vmem:[%s1 + $0x2e8] sm:$0xff]
  %v141 = vld [vmem:[%s1 + $0x2f0] sm:$0xff]
  %v142 = vld [vmem:[%s1 + $0x2f8] sm:$0xff]
  %v143 = vld [vmem:[%s1 + $0x300] sm:$0xff]
  %v144 = vld [vmem:[%s1 + $0x308] sm:$0xff]
  %v145 = vld [vmem:[%s1 + $0x310] sm:$0xff]
  %v146 = vld [vmem:[%s1 + $0x318] sm:$0xff]
  %v147 = vld [vmem:[%s1 + $0x320] sm:$0xff]
  %v148 = vld [vmem:[%s1 + $0x328] sm:$0xff]
  %v149 = vld [vmem:[%s1 + $0x330] sm:$0xff]
  %v150 = vld [vmem:[%s1 + $0x338] sm:$0xff]
  %v151 = vld [vmem:[%s1 + $0x340] sm:$0xff]
  %v152 = vld [vmem:[%s1 + $0x348] sm:$0xff]
  %v153 = vld [vmem:[%s1 + $0x350] sm:$0xff]
  %v154 = vld [vmem:[%s1 + $0x358] sm:$0xff]
  %v155 = vld [vmem:[%s1 + $0x360] sm:$0xff]
  %v156 = vld [vmem:[%s1 + $0x368] sm:$0xff]
  %v157 = vld [vmem:[%s1 + $0x370] sm:$0xff]
  %v158 = vld [vmem:[%s1 + $0x378] sm:$0xff]
  %v159 = vld [vmem:[%s1 + $0x380] sm:$0xff]
  %v160 = vld [vmem:[%s1 + $0x388] sm:$0xff]
  %v161 = vld [vmem:[%s1 + $0x390] sm:$0xff]
  %v162 = vld [vmem:[%s1 + $0x398] sm:$0xff]
  %v163 = vld [vmem:[%s1 + $0x3a0] sm:$0xff]
  %v164 = vld [vmem:[%s1 + $0x3a8] sm:$0xff]
  %v165 = vld [vmem:[%s1 + $0x3b0] sm:$0xff]
  %v166 = vld [vmem:[%s1 + $0x3b8] sm:$0xff]
  %v167 = vld [vmem:[%s1 + $0x3c0] sm:$0xff]
  %v168 = vld [vmem:[%s1 + $0x3c8] sm:$0xff]
  %v169 = vld [vmem:[%s1 + $0x3d0] sm:$0xff]
  %v170 = vld [vmem:[%s1 + $0x3d8] sm:$0xff]
  %v171 = vld [vmem:[%s1 + $0x3e0] sm:$0xff]
  %v172 = vld [vmem:[%s1 + $0x3e8] sm:$0xff]
  %v173 = vld [vmem:[%s1 + $0x3f0] sm:$0xff]
  %v174 = vld [vmem:[%s1 + $0x3f8] sm:$0xff]
  %v175 = vld [vmem:[%s1 + $0x400] sm:$0xff]
  %v176 = vld [vmem:[%s1 + $0x408] sm:$0xff]
  %v177 = vld [vmem:[%s1 + $0x410] sm:$0xff]
  %v178 = vld [vmem:[%s1 + $0x418] sm:$0xff]
  %v179 = vld [vmem:[%s1 + $0x420] sm:$0xff]
  %v180 = vld [vmem:[%s1 + $0x428] sm:$0xff]
  %v181 = vld [vmem:[%s1 + $0x430] sm:$0xff]
  %v182 = vld [vmem:[%s1 + $0x438] sm:$0xff]
  %v183 = vld [vmem:[%s1 + $0x440] sm:$0xff]
  %v184 = vld [vmem:[%s1 + $0x448] sm:$0xff]
  %v185 = vld [vmem:[%s1 + $0x450] sm:$0xff]
  %v186 = vld [vmem:[%s1 + $0x458] sm:$0xff]
  %v187 = vld [vmem:[%s1 + $0x460] sm:$0xff]
  %v188 = vld [vmem:[%s1 + $0x468] sm:$0xff]
  %v189 = vld [vmem:[%s1 + $0x470] sm:$0xff]
  %v190 = vld [vmem:[%s1 + $0x478] sm:$0xff]
  %v191 = vld [vmem:[%s1 + $0x480] sm:$0xff]
  %v192 = vld [vmem:[%s1 + $0x488] sm:$0xff]
  %v193 = vld [vmem:[%s1 + $0x490] sm:$0xff]
  %v194 = vld [vmem:[%s1 + $0x498] sm:$0xff]
  %v195 = vld [vmem:[%s1 + $0x4a0] sm:$0xff]
  %v196 = vld [vmem:[%s1 + $0x4a8] sm:$0xff]
  %v197 = vld [vmem:[%s1 + $0x4b0] sm:$0xff]
  %v198 = vld [vmem:[%s1 + $0x4b8] sm:$0xff]
  %v199 = vld [vmem:[%s1 + $0x4c0] sm:$0xff]
  %v200 = vld [vmem:[%s1 + $0x4c8] sm:$0xff]
  %v201 = vld [vmem:[%s1 + $0x4d0] sm:$0xff]
  %v202 = vld [vmem:[%s1 + $0x4d8] sm:$0xff]
  %v203 = vld [vmem:[%s1 + $0x4e0] sm:$0xff]
  %v204 = vld [vmem:[%s1 + $0x4e8] sm:$0xff]
  %v205 = vld [vmem:[%s1 + $0x4f0] sm:$0xff]
  %v206 = vld [vmem:[%s1 + $0x4f8] sm:$0xff]
  %v207 = vld [vmem:[%s1 + $0x500] sm:$0xff]
  %v208 = vld [vmem:[%s1 + $0x508] sm:$0xff]
  %v209 = vld [vmem:[%s1 + $0x510] sm:$0xff]
  %v210 = vld [vmem:[%s1 + $0x518] sm:$0xff]
  %v211 = vld [vmem:[%s1 + $0x520] sm:$0xff]
  %v212 = vld [vmem:[%s1 + $0x528] sm:$0xff]
  %v213 = vld [vmem:[%s1 + $0x530] sm:$0xff]
  %v214 = vld [vmem:[%s1 + $0x538] sm:$0xff]
  %v215 = vld [vmem:[%s1 + $0x540] sm:$0xff]
  %v216 = vld [vmem:[%s1 + $0x548] sm:$0xff]
  %v217 = vld [vmem:[%s1 + $0x550] sm:$0xff]
  %v218 = vld [vmem:[%s1 + $0x558] sm:$0xff]
  %v219 = vld [vmem:[%s1 + $0x560] sm:$0xff]
  %v220 = vld [vmem:[%s1 + $0x568] sm:$0xff]
  %v221 = vld [vmem:[%s1 + $0x570] sm:$0xff]
  %v222 = vld [vmem:[%s1 + $0x578] sm:$0xff]
  %v223 = vld [vmem:[%s1 + $0x580] sm:$0xff]
  %v224 = vld [vmem:[%s1 + $0x588] sm:$0xff]
  %v225 = vld [vmem:[%s1 + $0x590] sm:$0xff]
  %v226 = vld [vmem:[%s1 + $0x598] sm:$0xff]
  %v227 = vld [vmem:[%s1 + $0x5a0] sm:$0xff]
  %v228 = vld [vmem:[%s1 + $0x5a8] sm:$0xff]
  %v229 = vld [vmem:[%s1 + $0x5b0] sm:$0xff]
  %v230 = vld [vmem:[%s1 + $0x5b8] sm:$0xff]
  %v231 = vld [vmem:[%s1 + $0x5c0] sm:$0xff]
  %v232 = vld [vmem:[%s1 + $0x5c8] sm:$0xff]
  %v233 = vld [vmem:[%s1 + $0x5d0] sm:$0xff]
  %v234 = vld [vmem:[%s1 + $0x5d8] sm:$0xff]
  %v235 = vld [vmem:[%s1 + $0x5e0] sm:$0xff]
  %v236 = vld [vmem:[%s1 + $0x5e8] sm:$0xff]
  %v237 = vld [vmem:[%s1 + $0x5f0] sm:$0xff]
  %v238 = vld [vmem:[%s1 + $0x5f8] sm:$0xff]
  %v239 = vld [vmem:[%s1 + $0x600] sm:$0xff]
  %v240 = vld [vmem:[%s1 + $0x608] sm:$0xff]
  %v241 = vld [vmem:[%s1 + $0x610] sm:$0xff]
  %v242 = vld [vmem:[%s1 + $0x618] sm:$0xff]
  %v243 = vld [vmem:[%s1 + $0x620] sm:$0xff]
  %v244 = vld [vmem:[%s1 + $0x628] sm:$0xff]
  %v245 = vld [vmem:[%s1 + $0x630] sm:$0xff]
  %v246 = vld [vmem:[%s1 + $0x638] sm:$0xff]
  %v247 = vld [vmem:[%s1 + $0x640] sm:$0xff]
  %v248 = vld [vmem:[%s1 + $0x648] sm:$0xff]
  %v249 = vld [vmem:[%s1 + $0x650] sm:$0xff]
  %v250 = vld [vmem:[%s1 + $0x658] sm:$0xff]
  %v251 = vld [vmem:[%s1 + $0x660] sm:$0xff]
  %v252 = vld [vmem:[%s1 + $0x668] sm:$0xff]
  %v253 = vld [vmem:[%s1 + $0x670] sm:$0xff]
  %v254 = vld [vmem:[%s1 + $0x678] sm:$0xff]
  %v255 = vld [vmem:[%s1 + $0x680] sm:$0xff]
  %v256 = vld [vmem:[%s1 + $0x688] sm:$0xff]
  %v257 = vld [vmem:[%s1 + $0x690] sm:$0xff]
  %v258 = vld [vmem:[%s1 + $0x698] sm:$0xff]
  %v259 = vld [vmem:[%s1 + $0x6a0] sm:$0xff]
  %v260 = vld [vmem:[%s1 + $0x6a8] sm:$0xff]
  %v261 = vld [vmem:[%s1 + $0x6b0] sm:$0xff]
  %v262 = vld [vmem:[%s1 + $0x6b8] sm:$0xff]
  %v263 = vld [vmem:[%s1 + $0x6c0] sm:$0xff]
  %v264 = vld [vmem:[%s1 + $0x6c8] sm:$0xff]
  %v265 = vld [vmem:[%s1 + $0x6d0] sm:$0xff]
  %v266 = vld [vmem:[%s1 + $0x6d8] sm:$0xff]
  %v267 = vld [vmem:[%s1 + $0x6e0] sm:$0xff]
  %v268 = vld [vmem:[%s1 + $0x6e8] sm:$0xff]
  %v269 = vld [vmem:[%s1 + $0x6f0] sm:$0xff]
  %v270 = vld [vmem:[%s1 + $0x6f8] sm:$0xff]
  %v271 = vld [vmem:[%s1 + $0x700] sm:$0xff]
  %v272 = vld [vmem:[%s1 + $0x708] sm:$0xff]
  %v273 = vld [vmem:[%s1 + $0x710] sm:$0xff]
  %v274 = vld [vmem:[%s1 + $0x718] sm:$0xff]
  %v275 = vld [vmem:[%s1 + $0x720] sm:$0xff]
  %v276 = vld [vmem:[%s1 + $0x728] sm:$0xff]
  %v277 = vld [vmem:[%s1 + $0x730] sm:$0xff]
  %v278 = vld [vmem:[%s1 + $0x738] sm:$0xff]
  %v279 = vld [vmem:[%s1 + $0x740] sm:$0xff]
  %v280 = vld [vmem:[%s1 + $0x748] sm:$0xff]
  %v281 = vld [vmem:[%s1 + $0x750] sm:$0xff]
  %v282 = vld [vmem:[%s1 + $0x758] sm:$0xff]
  %v283 = vld [vmem:[%s1 + $0x760] sm:$0xff]
  %v284 = vld [vmem:[%s1 + $0x768] sm:$0xff]
  %v285 = vld [vmem:[%s1 + $0x770] sm:$0xff]
  %v286 = vld [vmem:[%s1 + $0x778] sm:$0xff]
  %v287 = vld [vmem:[%s1 + $0x780] sm:$0xff]
  %v288 = vld [vmem:[%s1 + $0x788] sm:$0xff]
  %v289 = vld [vmem:[%s1 + $0x790] sm:$0xff]
  %v290 = vld [vmem:[%s1 + $0x798] sm:$0xff]
  %v291 = vld [vmem:[%s1 + $0x7a0] sm:$0xff]
  %v292 = vld [vmem:[%s1 + $0x7a8] sm:$0xff]
  %v293 = vld [vmem:[%s1 + $0x7b0] sm:$0xff]
  %v294 = vld [vmem:[%s1 + $0x7b8] sm:$0xff]
  %v295 = vld [vmem:[%s1 + $0x7c0] sm:$0xff]
  %v296 = vld [vmem:[%s1 + $0x7c8] sm:$0xff]
  %v297 = vld [vmem:[%s1 + $0x7d0] sm:$0xff]
  %v298 = vld [vmem:[%s1 + $0x7d8] sm:$0xff]
  %v299 = vld [vmem:[%s1 + $0x7e0] sm:$0xff]
  %v300 = vld [vmem:[%s1 + $0x7e8] sm:$0xff]
  %v301 = vld [vmem:[%s1 + $0x7f0] sm:$0xff]
  %v302 = vld [vmem:[%s1 + $0x7f8] sm:$0xff]
  %v303 = vld [vmem:[%s1 + $0x800] sm:$0xff]
  %v304 = vld [vmem:[%s1 + $0x808] sm:$0xff]
  %v305 = vld [vmem:[%s1 + $0x810] sm:$0xff]
  %v306 = vld [vmem:[%s1 + $0x818] sm:$0xff]
  %v307 = vld [vmem:[%s1 + $0x820] sm:$0xff]
  %v308 = vld [vmem:[%s1 + $0x828] sm:$0xff]
  %v309 = vld [vmem:[%s1 + $0x830] sm:$0xff]
  %v310 = vld [vmem:[%s1 + $0x838] sm:$0xff]
  %v311 = vld [vmem:[%s1 + $0x840] sm:$0xff]
  %v312 = vld [vmem:[%s1 + $0x848] sm:$0xff]
  %v313 = vld [vmem:[%s1 + $0x850] sm:$0xff]
  %v314 = vld [vmem:[%s1 + $0x858] sm:$0xff]
  %v315 = vld [vmem:[%s1 + $0x860] sm:$0xff]
  %v316 = vld [vmem:[%s1 + $0x868] sm:$0xff]
  %v317 = vld [vmem:[%s1 + $0x870] sm:$0xff]
  %v318 = vld [vmem:[%s1 + $0x878] sm:$0xff]
  %v319 = vld [vmem:[%s1 + $0x880] sm:$0xff]
  %v320 = vld [vmem:[%s1 + $0x888] sm:$0xff]
  %v321 = vld [vmem:[%s1 + $0x890] sm:$0xff]
  %v322 = vld [vmem:[%s1 + $0x898] sm:$0xff]
  %v323 = vld [vmem:[%s1 + $0x8a0] sm:$0xff]
  %v324 = vld [vmem:[%s1 + $0x8a8] sm:$0xff]
  %v325 = vld [vmem:[%s1 + $0x8b0] sm:$0xff]
  %v326 = vld [vmem:[%s1 + $0x8b8] sm:$0xff]
  %v327 = vld [vmem:[%s1 + $0x8c0] sm:$0xff]
  %v328 = vld [vmem:[%s1 + $0x8c8] sm:$0xff]
  %v329 = vld [vmem:[%s1 + $0x8d0] sm:$0xff]
  %v330 = vld [vmem:[%s1 + $0x8d8] sm:$0xff]
  %v331 = vld [vmem:[%s1 + $0x8e0] sm:$0xff]
  %v332 = vld [vmem:[%s1 + $0x8e8] sm:$0xff]
  %v333 = vld [vmem:[%s1 + $0x8f0] sm:$0xff]
  %v334 = vld [vmem:[%s1 + $0x8f8] sm:$0xff]
  %v335 = vld [vmem:[%s1 + $0x900] sm:$0xff]
  %v336 = vld [vmem:[%s1 + $0x908] sm:$0xff]
  %v337 = vld [vmem:[%s1 + $0x910] sm:$0xff]
  %v338 = vld [vmem:[%s1 + $0x918] sm:$0xff]
  %v339 = vld [vmem:[%s1 + $0x920] sm:$0xff]
  %v340 = vld [vmem:[%s1 + $0x928] sm:$0xff]
  %v341 = vld [vmem:[%s1 + $0x930] sm:$0xff]
  %v342 = vld [vmem:[%s1 + $0x938] sm:$0xff]
  %v343 = vld [vmem:[%s1 + $0x940] sm:$0xff]
  %v344 = vld [vmem:[%s1 + $0x948] sm:$0xff]
  %v345 = vld [vmem:[%s1 + $0x950] sm:$0xff]
  %v346 = vld [vmem:[%s1 + $0x958] sm:$0xff]
  %v347 = vld [vmem:[%s1 + $0x960] sm:$0xff]
  %v348 = vld [vmem:[%s1 + $0x968] sm:$0xff]
  %v349 = vld [vmem:[%s1 + $0x970] sm:$0xff]
  %v350 = vld [vmem:[%s1 + $0x978] sm:$0xff]
  %v351 = vld [vmem:[%s1 + $0x980] sm:$0xff]
  %v352 = vld [vmem:[%s1 + $0x988] sm:$0xff]
  %v353 = vld [vmem:[%s1 + $0x990] sm:$0xff]
  %v354 = vld [vmem:[%s1 + $0x998] sm:$0xff]
  %v355 = vld [vmem:[%s1 + $0x9a0] sm:$0xff]
  %v356 = vld [vmem:[%s1 + $0x9a8] sm:$0xff]
  %v357 = vld [vmem:[%s1 + $0x9b0] sm:$0xff]
  %v358 = vld [vmem:[%s1 + $0x9b8] sm:$0xff]
  %v359 = vld [vmem:[%s1 + $0x9c0] sm:$0xff]
  %v360 = vld [vmem:[%s1 + $0x9c8] sm:$0xff]
  %v361 = vld [vmem:[%s1 + $0x9d0] sm:$0xff]
  %v362 = vld [vmem:[%s1 + $0x9d8] sm:$0xff]
  %v363 = vld [vmem:[%s1 + $0x9e0] sm:$0xff]
  %v364 = vld [vmem:[%s1 + $0x9e8] sm:$0xff]
  %v365 = vld [vmem:[%s1 + $0x9f0] sm:$0xff]
  %v366 = vld [vmem:[%s1 + $0x9f8] sm:$0xff]
  %v367 = vld [vmem:[%s1 + $0xa00] sm:$0xff]
  %v368 = vld [vmem:[%s1 + $0xa08] sm:$0xff]
  %v369 = vld [vmem:[%s1 + $0xa10] sm:$0xff]
  %v370 = vld [vmem:[%s1 + $0xa18] sm:$0xff]
  %v371 = vld [vmem:[%s1 + $0xa20] sm:$0xff]
  %v372 = vld [vmem:[%s1 + $0xa28] sm:$0xff]
  %v373 = vld [vmem:[%s1 + $0xa30] sm:$0xff]
  %v374 = vld [vmem:[%s1 + $0xa38] sm:$0xff]
  %v375 = vld [vmem:[%s1 + $0xa40] sm:$0xff]
  %v376 = vld [vmem:[%s1 + $0xa48] sm:$0xff]
  %v377 = vld [vmem:[%s1 + $0xa50] sm:$0xff]
  %v378 = vld [vmem:[%s1 + $0xa58] sm:$0xff]
  %v379 = vld [vmem:[%s1 + $0xa60] sm:$0xff]
  %v380 = vld [vmem:[%s1 + $0xa68] sm:$0xff]
  %v381 = vld [vmem:[%s1 + $0xa70] sm:$0xff]
  %v382 = vld [vmem:[%s1 + $0xa78] sm:$0xff]
  %v383 = vld [vmem:[%s1 + $0xa80] sm:$0xff]
  %v384 = vld [vmem:[%s1 + $0xa88] sm:$0xff]
  %v385 = vld [vmem:[%s1 + $0xa90] sm:$0xff]
  %v386 = vld [vmem:[%s1 + $0xa98] sm:$0xff]
  %v387 = vld [vmem:[%s1 + $0xaa0] sm:$0xff]
  %v388 = vld [vmem:[%s1 + $0xaa8] sm:$0xff]
  %v389 = vld [vmem:[%s1 + $0xab0] sm:$0xff]
  %v390 = vld [vmem:[%s1 + $0xab8] sm:$0xff]
  %v391 = vld [vmem:[%s1 + $0xac0] sm:$0xff]
  %v392 = vld [vmem:[%s1 + $0xac8] sm:$0xff]
  %v393 = vld [vmem:[%s1 + $0xad0] sm:$0xff]
  %v394 = vld [vmem:[%s1 + $0xad8] sm:$0xff]
  %v395 = vld [vmem:[%s1 + $0xae0] sm:$0xff]
  %v396 = vld [vmem:[%s1 + $0xae8] sm:$0xff]
  %v397 = vld [vmem:[%s1 + $0xaf0] sm:$0xff]
  %v398 = vld [vmem:[%s1 + $0xaf8] sm:$0xff]
  %v399 = vld [vmem:[%s1 + $0xb00] sm:$0xff]
  %v400 = vld [vmem:[%s1 + $0xb08] sm:$0xff]
  %v401 = vld [vmem:[%s1 + $0xb10] sm:$0xff]
  %v402 = vld [vmem:[%s1 + $0xb18] sm:$0xff]
  %v403 = vld [vmem:[%s1 + $0xb20] sm:$0xff]
  %v404 = vld [vmem:[%s1 + $0xb28] sm:$0xff]
  %v405 = vld [vmem:[%s1 + $0xb30] sm:$0xff]
  %v406 = vld [vmem:[%s1 + $0xb38] sm:$0xff]
  %v407 = vld [vmem:[%s1 + $0xb40] sm:$0xff]
  %v408 = vld [vmem:[%s1 + $0xb48] sm:$0xff]
  %v409 = vld [vmem:[%s1 + $0xb50] sm:$0xff]
  %v410 = vld [vmem:[%s1 + $0xb58] sm:$0xff]
  %v411 = vld [vmem:[%s1 + $0xb60] sm:$0xff]
  %v412 = vld [vmem:[%s1 + $0xb68] sm:$0xff]
  %v413 = vld [vmem:[%s1 + $0xb70] sm:$0xff]
  %v414 = vld [vmem:[%s1 + $0xb78] sm:$0xff]
  %v415 = vld [vmem:[%s1 + $0xb80] sm:$0xff]
  %v416 = vld [vmem:[%s1 + $0xb88] sm:$0xff]
  %v417 = vld [vmem:[%s1 + $0xb90] sm:$0xff]
  %v418 = vld [vmem:[%s1 + $0xb98] sm:$0xff]
  %v419 = vld [vmem:[%s1 + $0xba0] sm:$0xff]
  %v420 = vld [vmem:[%s1 + $0xba8] sm:$0xff]
  %v421 = vld [vmem:[%s1 + $0xbb0] sm:$0xff]
  %v422 = vld [vmem:[%s1 + $0xbb8] sm:$0xff]
  %v423 = vld [vmem:[%s1 + $0xbc0] sm:$0xff]
  %v424 = vld [vmem:[%s1 + $0xbc8] sm:$0xff]
  %v425 = vld [vmem:[%s1 + $0xbd0] sm:$0xff]
  %v426 = vld [vmem:[%s1 + $0xbd8] sm:$0xff]
  %v427 = vld [vmem:[%s1 + $0xbe0] sm:$0xff]
  %v428 = vld [vmem:[%s1 + $0xbe8] sm:$0xff]
  %v429 = vld [vmem:[%s1 + $0xbf0] sm:$0xff]
  %v430 = vld [vmem:[%s1 + $0xbf8] sm:$0xff]
  %v431 = vld [vmem:[%s1 + $0xc00] sm:$0xff]
  %v432 = vld [vmem:[%s1 + $0xc08] sm:$0xff]
  %v433 = vld [vmem:[%s1 + $0xc10] sm:$0xff]
  %v434 = vld [vmem:[%s1 + $0xc18] sm:$0xff]
  %v435 = vld [vmem:[%s1 + $0xc20] sm:$0xff]
  %v436 = vld [vmem:[%s1 + $0xc28] sm:$0xff]
  %v437 = vld [vmem:[%s1 + $0xc30] sm:$0xff]
  %v438 = vld [vmem:[%s1 + $0xc38] sm:$0xff]
  %v439 = vld [vmem:[%s1 + $0xc40] sm:$0xff]
  %v440 = vld [vmem:[%s1 + $0xc48] sm:$0xff]
  %v441 = vld [vmem:[%s1 + $0xc50] sm:$0xff]
  %v442 = vld [vmem:[%s1 + $0xc58] sm:$0xff]
  %v443 = vld [vmem:[%s1 + $0xc60] sm:$0xff]
  %v444 = vld [vmem:[%s1 + $0xc68] sm:$0xff]
  %v445 = vld [vmem:[%s1 + $0xc70] sm:$0xff]
  %v446 = vld [vmem:[%s1 + $0xc78] sm:$0xff]
  %v447 = vld [vmem:[%s1 + $0xc80] sm:$0xff]
  %v448 = vld [vmem:[%s1 + $0xc88] sm:$0xff]
  %v449 = vld [vmem:[%s1 + $0xc90] sm:$0xff]
  %v450 = vld [vmem:[%s1 + $0xc98] sm:$0xff]
  %v451 = vld [vmem:[%s1 + $0xca0] sm:$0xff]
  %v452 = vld [vmem:[%s1 + $0xca8] sm:$0xff]
  %v453 = vld [vmem:[%s1 + $0xcb0] sm:$0xff]
  %v454 = vld [vmem:[%s1 + $0xcb8] sm:$0xff]
  %v455 = vld [vmem:[%s1 + $0xcc0] sm:$0xff]
  %v456 = vld [vmem:[%s1 + $0xcc8] sm:$0xff]
  %v457 = vld [vmem:[%s1 + $0xcd0] sm:$0xff]
  %v458 = vld [vmem:[%s1 + $0xcd8] sm:$0xff]
  %v459 = vld [vmem:[%s1 + $0xce0] sm:$0xff]
  %v460 = vld [vmem:[%s1 + $0xce8] sm:$0xff]
  %v461 = vld [vmem:[%s1 + $0xcf0] sm:$0xff]
  %v462 = vld [vmem:[%s1 + $0xcf8] sm:$0xff]
  %v463 = vld [vmem:[%s1 + $0xd00] sm:$0xff]
  %v464 = vld [vmem:[%s1 + $0xd08] sm:$0xff]
  %v465 = vld [vmem:[%s1 + $0xd10] sm:$0xff]
  %v466 = vld [vmem:[%s1 + $0xd18] sm:$0xff]
  %v467 = vld [vmem:[%s1 + $0xd20] sm:$0xff]
  %v468 = vld [vmem:[%s1 + $0xd28] sm:$0xff]
  %v469 = vld [vmem:[%s1 + $0xd30] sm:$0xff]
  %v470 = vld [vmem:[%s1 + $0xd38] sm:$0xff]
  %v471 = vld [vmem:[%s1 + $0xd40] sm:$0xff]
  %v472 = vld [vmem:[%s1 + $0xd48] sm:$0xff]
  %v473 = vld [vmem:[%s1 + $0xd50] sm:$0xff]
  %v474 = vld [vmem:[%s1 + $0xd58] sm:$0xff]
  %v475 = vld [vmem:[%s1 + $0xd60] sm:$0xff]
  %v476 = vld [vmem:[%s1 + $0xd68] sm:$0xff]
  %v477 = vld [vmem:[%s1 + $0xd70] sm:$0xff]
  %v478 = vld [vmem:[%s1 + $0xd78] sm:$0xff]
  %v479 = vld [vmem:[%s1 + $0xd80] sm:$0xff]
  %v480 = vld [vmem:[%s1 + $0xd88] sm:$0xff]
  %v481 = vld [vmem:[%s1 + $0xd90] sm:$0xff]
  %v482 = vld [vmem:[%s1 + $0xd98] sm:$0xff]
  %v483 = vld [vmem:[%s1 + $0xda0] sm:$0xff]
  %v484 = vld [vmem:[%s1 + $0xda8] sm:$0xff]
  %v485 = vld [vmem:[%s1 + $0xdb0] sm:$0xff]
  %v486 = vld [vmem:[%s1 + $0xdb8] sm:$0xff]
  %v487 = vld [vmem:[%s1 + $0xdc0] sm:$0xff]
  %v488 = vld [vmem:[%s1 + $0xdc8] sm:$0xff]
  %v489 = vld [vmem:[%s1 + $0xdd0] sm:$0xff]
  %v490 = vld [vmem:[%s1 + $0xdd8] sm:$0xff]
  %v491 = vld [vmem:[%s1 + $0xde0] sm:$0xff]
  %v492 = vld [vmem:[%s1 + $0xde8] sm:$0xff]
  %v493 = vld [vmem:[%s1 + $0xdf0] sm:$0xff]
  %v494 = vld [vmem:[%s1 + $0xdf8] sm:$0xff]
  %v495 = vld [vmem:[%s1 + $0xe00] sm:$0xff]
  %v496 = vld [vmem:[%s1 + $0xe08] sm:$0xff]
  %v497 = vld [vmem:[%s1 + $0xe10] sm:$0xff]
  %v498 = vld [vmem:[%s1 + $0xe18] sm:$0xff]
  %v499 = vld [vmem:[%s1 + $0xe20] sm:$0xff]
  %v500 = vld [vmem:[%s1 + $0xe28] sm:$0xff]
  %v501 = vld [vmem:[%s1 + $0xe30] sm:$0xff]
  %v502 = vld [vmem:[%s1 + $0xe38] sm:$0xff]
  %v503 = vld [vmem:[%s1 + $0xe40] sm:$0xff]
  %v504 = vld [vmem:[%s1 + $0xe48] sm:$0xff]
  %v505 = vld [vmem:[%s1 + $0xe50] sm:$0xff]
  %v506 = vld [vmem:[%s1 + $0xe58] sm:$0xff]
  %v507 = vld [vmem:[%s1 + $0xe60] sm:$0xff]
  %v508 = vld [vmem:[%s1 + $0xe68] sm:$0xff]
  %v509 = vld [vmem:[%s1 + $0xe70] sm:$0xff]
  %v510 = vld [vmem:[%s1 + $0xe78] sm:$0xff]
  %v511 = vld [vmem:[%s1 + $0xe80] sm:$0xff]
  %v512 = vld [vmem:[%s1 + $0xe88] sm:$0xff]
  %v513 = vld [vmem:[%s1 + $0xe90] sm:$0xff]
  %v514 = vld [vmem:[%s1 + $0xe98] sm:$0xff]
  %v515 = vld [vmem:[%s1 + $0xea0] sm:$0xff]
  %v516 = vld [vmem:[%s1 + $0xea8] sm:$0xff]
  %v517 = vld [vmem:[%s1 + $0xeb0] sm:$0xff]
  %v518 = vld [vmem:[%s1 + $0xeb8] sm:$0xff]
  %v519 = vld [vmem:[%s1 + $0xec0] sm:$0xff]
  %v520 = vld [vmem:[%s1 + $0xec8] sm:$0xff]
  %v521 = vld [vmem:[%s1 + $0xed0] sm:$0xff]
  %v522 = vld [vmem:[%s1 + $0xed8] sm:$0xff]
  %v523 = vld [vmem:[%s1 + $0xee0] sm:$0xff]
  %v524 = vld [vmem:[%s1 + $0xee8] sm:$0xff]
  %v525 = vld [vmem:[%s1 + $0xef0] sm:$0xff]
  %v526 = vld [vmem:[%s1 + $0xef8] sm:$0xff]
  %v527 = vld [vmem:[%s1 + $0xf00] sm:$0xff]
  %v528 = vld [vmem:[%s1 + $0xf08] sm:$0xff]
  %v529 = vld [vmem:[%s1 + $0xf10] sm:$0xff]
  %v530 = vld [vmem:[%s1 + $0xf18] sm:$0xff]
  %v531 = vld [vmem:[%s1 + $0xf20] sm:$0xff]
  %v532 = vld [vmem:[%s1 + $0xf28] sm:$0xff]
  %v533 = vld [vmem:[%s1 + $0xf30] sm:$0xff]
  %v534 = vld [vmem:[%s1 + $0xf38] sm:$0xff]
  %v535 = vld [vmem:[%s1 + $0xf40] sm:$0xff]
  %v536 = vld [vmem:[%s1 + $0xf48] sm:$0xff]
  %v537 = vld [vmem:[%s1 + $0xf50] sm:$0xff]
  %v538 = vld [vmem:[%s1 + $0xf58] sm:$0xff]
  %v539 = vld [vmem:[%s1 + $0xf60] sm:$0xff]
  %v540 = vld [vmem:[%s1 + $0xf68] sm:$0xff]
  %v541 = vld [vmem:[%s1 + $0xf70] sm:$0xff]
  %v542 = vld [vmem:[%s1 + $0xf78] sm:$0xff]
  %v543 = vld [vmem:[%s1 + $0xf80] sm:$0xff]
  %v544 = vld [vmem:[%s1 + $0xf88] sm:$0xff]
  %v545 = vld [vmem:[%s1 + $0xf90] sm:$0xff]
  %v546 = vld [vmem:[%s1 + $0xf98] sm:$0xff]
  %v547 = vld [vmem:[%s1 + $0xfa0] sm:$0xff]
  %v548 = vld [vmem:[%s1 + $0xfa8] sm:$0xff]
  %v549 = vld [vmem:[%s1 + $0xfb0] sm:$0xff]
  %v550 = vld [vmem:[%s1 + $0xfb8] sm:$0xff]
  %v551 = vld [vmem:[%s1 + $0xfc0] sm:$0xff]
  %v552 = vld [vmem:[%s1 + $0xfc8] sm:$0xff]
  %v553 = vld [vmem:[%s1 + $0xfd0] sm:$0xff]
  %v554 = vld [vmem:[%s1 + $0xfd8] sm:$0xff]
  %v555 = vld [vmem:[%s1 + $0xfe0] sm:$0xff]
  %v556 = vld [vmem:[%s1 + $0xfe8] sm:$0xff]
  %v557 = vld [vmem:[%s1 + $0xff0] sm:$0xff]
  %v558 = vld [vmem:[%s1 + $0xff8] sm:$0xff]
  %v559 = vld [vmem:[%s1 + $0x1000] sm:$0xff]
  %v560 = vld [vmem:[%s1 + $0x1008] sm:$0xff]
  %v561 = vld [vmem:[%s1 + $0x1010] sm:$0xff]
  %v562 = vld [vmem:[%s1 + $0x1018] sm:$0xff]
  %v563 = vld [vmem:[%s1 + $0x1020] sm:$0xff]
  %v564 = vld [vmem:[%s1 + $0x1028] sm:$0xff]
  %v565 = vld [vmem:[%s1 + $0x1030] sm:$0xff]
  %v566 = vld [vmem:[%s1 + $0x1038] sm:$0xff]
  %v567 = vld [vmem:[%s1 + $0x1040] sm:$0xff]
  %v568 = vld [vmem:[%s1 + $0x1048] sm:$0xff]
  %v569 = vld [vmem:[%s1 + $0x1050] sm:$0xff]
  %v570 = vld [vmem:[%s1 + $0x1058] sm:$0xff]
  %v571 = vld [vmem:[%s1 + $0x1060] sm:$0xff]
  %v572 = vld [vmem:[%s1 + $0x1068] sm:$0xff]
  %v573 = vld [vmem:[%s1 + $0x1070] sm:$0xff]
  %v574 = vld [vmem:[%s1 + $0x1078] sm:$0xff]
  %v575 = vld [vmem:[%s1 + $0x1080] sm:$0xff]
  %v576 = vld [vmem:[%s1 + $0x1088] sm:$0xff]
  %v577 = vld [vmem:[%s1 + $0x1090] sm:$0xff]
  %v578 = vld [vmem:[%s1 + $0x1098] sm:$0xff]
  %v579 = vld [vmem:[%s1 + $0x10a0] sm:$0xff]
  %v580 = vld [vmem:[%s1 + $0x10a8] sm:$0xff]
  %v581 = vld [vmem:[%s1 + $0x10b0] sm:$0xff]
  %v582 = vld [vmem:[%s1 + $0x10b8] sm:$0xff]
  %v583 = vld [vmem:[%s1 + $0x10c0] sm:$0xff]
  %v584 = vld [vmem:[%s1 + $0x10c8] sm:$0xff]
  %v585 = vld [vmem:[%s1 + $0x10d0] sm:$0xff]
  %v586 = vld [vmem:[%s1 + $0x10d8] sm:$0xff]
  %v587 = vld [vmem:[%s1 + $0x10e0] sm:$0xff]
  %v588 = vld [vmem:[%s1 + $0x10e8] sm:$0xff]
  %v589 = vld [vmem:[%s1 + $0x10f0] sm:$0xff]
  %v590 = vld [vmem:[%s1 + $0x10f8] sm:$0xff]
  %v591 = vld [vmem:[%s1 + $0x1100] sm:$0xff]
  %v592 = vld [vmem:[%s1 + $0x1108] sm:$0xff]
  %v593 = vld [vmem:[%s1 + $0x1110] sm:$0xff]
  %v594 = vld [vmem:[%s1 + $0x1118] sm:$0xff]
  %v595 = vld [vmem:[%s1 + $0x1120] sm:$0xff]
  %v596 = vld [vmem:[%s1 + $0x1128] sm:$0xff]
  %v597 = vld [vmem:[%s1 + $0x1130] sm:$0xff]
  %v598 = vld [vmem:[%s1 + $0x1138] sm:$0xff]
  %v599 = vld [vmem:[%s1 + $0x1140] sm:$0xff]
  %v600 = vld [vmem:[%s1 + $0x1148] sm:$0xff]
  %v601 = vld [vmem:[%s1 + $0x1150] sm:$0xff]
  %v602 = vld [vmem:[%s1 + $0x1158] sm:$0xff]
  %v603 = vld [vmem:[%s1 + $0x1160] sm:$0xff]
  %v604 = vld [vmem:[%s1 + $0x1168] sm:$0xff]
  %v605 = vld [vmem:[%s1 + $0x1170] sm:$0xff]
  %v606 = vld [vmem:[%s1 + $0x1178] sm:$0xff]
  %v607 = vld [vmem:[%s1 + $0x1180] sm:$0xff]
  %v608 = vld [vmem:[%s1 + $0x1188] sm:$0xff]
  %v609 = vld [vmem:[%s1 + $0x1190] sm:$0xff]
  %v610 = vld [vmem:[%s1 + $0x1198] sm:$0xff]
  %v611 = vld [vmem:[%s1 + $0x11a0] sm:$0xff]
  %v612 = vld [vmem:[%s1 + $0x11a8] sm:$0xff]
  %v613 = vld [vmem:[%s1 + $0x11b0] sm:$0xff]
  %v614 = vld [vmem:[%s1 + $0x11b8] sm:$0xff]
  %v615 = vld [vmem:[%s1 + $0x11c0] sm:$0xff]
  %v616 = vld [vmem:[%s1 + $0x11c8] sm:$0xff]
  %v617 = vld [vmem:[%s1 + $0x11d0] sm:$0xff]
  %v618 = vld [vmem:[%s1 + $0x11d8] sm:$0xff]
  %v619 = vld [vmem:[%s1 + $0x11e0] sm:$0xff]
  %v620 = vld [vmem:[%s1 + $0x11e8] sm:$0xff]
  %v621 = vld [vmem:[%s1 + $0x11f0] sm:$0xff]
  %v622 = vld [vmem:[%s1 + $0x11f8] sm:$0xff]
  %v623 = vld [vmem:[%s1 + $0x1200] sm:$0xff]
  %v624 = vld [vmem:[%s1 + $0x1208] sm:$0xff]
  %v625 = vld [vmem:[%s1 + $0x1210] sm:$0xff]
  %v626 = vld [vmem:[%s1 + $0x1218] sm:$0xff]
  %v627 = vld [vmem:[%s1 + $0x1220] sm:$0xff]
  %v628 = vld [vmem:[%s1 + $0x1228] sm:$0xff]
  %v629 = vld [vmem:[%s1 + $0x1230] sm:$0xff]
  %v630 = vld [vmem:[%s1 + $0x1238] sm:$0xff]
  %v631 = vld [vmem:[%s1 + $0x1240] sm:$0xff]
  %v632 = vld [vmem:[%s1 + $0x1248] sm:$0xff]
  %v633 = vld [vmem:[%s1 + $0x1250] sm:$0xff]
  %v634 = vld [vmem:[%s1 + $0x1258] sm:$0xff]
  %v635 = vld [vmem:[%s1 + $0x1260] sm:$0xff]
  %v636 = vld [vmem:[%s1 + $0x1268] sm:$0xff]
  %v637 = vld [vmem:[%s1 + $0x1270] sm:$0xff]
  %v638 = vld [vmem:[%s1 + $0x1278] sm:$0xff]
  %v639 = vld [vmem:[%s1 + $0x1280] sm:$0xff]
  %v640 = vld [vmem:[%s1 + $0x1288] sm:$0xff]
  %v641 = vld [vmem:[%s1 + $0x1290] sm:$0xff]
  %v642 = vld [vmem:[%s1 + $0x1298] sm:$0xff]
  %v643 = vld [vmem:[%s1 + $0x12a0] sm:$0xff]
  %v644 = vld [vmem:[%s1 + $0x12a8] sm:$0xff]
  %v645 = vld [vmem:[%s1 + $0x12b0] sm:$0xff]
  %v646 = vld [vmem:[%s1 + $0x12b8] sm:$0xff]
  %v647 = vld [vmem:[%s1 + $0x12c0] sm:$0xff]
  %v648 = vld [vmem:[%s1 + $0x12c8] sm:$0xff]
  %v649 = vld [vmem:[%s1 + $0x12d0] sm:$0xff]
  %v650 = vld [vmem:[%s1 + $0x12d8] sm:$0xff]
  %v651 = vld [vmem:[%s1 + $0x12e0] sm:$0xff]
  %v652 = vld [vmem:[%s1 + $0x12e8] sm:$0xff]
  %v653 = vld [vmem:[%s1 + $0x12f0] sm:$0xff]
  %v654 = vld [vmem:[%s1 + $0x12f8] sm:$0xff]
  %v655 = vld [vmem:[%s1 + $0x1300] sm:$0xff]
  %v656 = vld [vmem:[%s1 + $0x1308] sm:$0xff]
  %v657 = vld [vmem:[%s1 + $0x1310] sm:$0xff]
  %v658 = vld [vmem:[%s1 + $0x1318] sm:$0xff]
  %v659 = vld [vmem:[%s1 + $0x1320] sm:$0xff]
  %v660 = vld [vmem:[%s1 + $0x1328] sm:$0xff]
  %v661 = vld [vmem:[%s1 + $0x1330] sm:$0xff]
  %v662 = vld [vmem:[%s1 + $0x1338] sm:$0xff]
  %v663 = vld [vmem:[%s1 + $0x1340] sm:$0xff]
  %v664 = vld [vmem:[%s1 + $0x1348] sm:$0xff]
  %v665 = vld [vmem:[%s1 + $0x1350] sm:$0xff]
  %v666 = vld [vmem:[%s1 + $0x1358] sm:$0xff]
  %v667 = vld [vmem:[%s1 + $0x1360] sm:$0xff]
  %v668 = vld [vmem:[%s1 + $0x1368] sm:$0xff]
  %v669 = vld [vmem:[%s1 + $0x1370] sm:$0xff]
  %v670 = vld [vmem:[%s1 + $0x1378] sm:$0xff]
  %v671 = vld [vmem:[%s1 + $0x1380] sm:$0xff]
  %v672 = vld [vmem:[%s1 + $0x1388] sm:$0xff]
  %v673 = vld [vmem:[%s1 + $0x1390] sm:$0xff]
  %v674 = vld [vmem:[%s1 + $0x1398] sm:$0xff]
  %v675 = vld [vmem:[%s1 + $0x13a0] sm:$0xff]
  %v676 = vld [vmem:[%s1 + $0x13a8] sm:$0xff]
  %v677 = vld [vmem:[%s1 + $0x13b0] sm:$0xff]
  %v678 = vld [vmem:[%s1 + $0x13b8] sm:$0xff]
  %v679 = vld [vmem:[%s1 + $0x13c0] sm:$0xff]
  %v680 = vld [vmem:[%s1 + $0x13c8] sm:$0xff]
  %v681 = vld [vmem:[%s1 + $0x13d0] sm:$0xff]
  %v682 = vld [vmem:[%s1 + $0x13d8] sm:$0xff]
  %v683 = vld [vmem:[%s1 + $0x13e0] sm:$0xff]
  %v684 = vld [vmem:[%s1 + $0x13e8] sm:$0xff]
  %v685 = vld [vmem:[%s1 + $0x13f0] sm:$0xff]
  %v686 = vld [vmem:[%s1 + $0x13f8] sm:$0xff]
  %v687 = vld [vmem:[%s1 + $0x1400] sm:$0xff]
  %v688 = vld [vmem:[%s1 + $0x1408] sm:$0xff]
  %v689 = vld [vmem:[%s1 + $0x1410] sm:$0xff]
  %v690 = vld [vmem:[%s1 + $0x1418] sm:$0xff]
  %v691 = vld [vmem:[%s1 + $0x1420] sm:$0xff]
  %v692 = vld [vmem:[%s1 + $0x1428] sm:$0xff]
  %v693 = vld [vmem:[%s1 + $0x1430] sm:$0xff]
  %v694 = vld [vmem:[%s1 + $0x1438] sm:$0xff]
  %v695 = vld [vmem:[%s1 + $0x1440] sm:$0xff]
  %v696 = vld [vmem:[%s1 + $0x1448] sm:$0xff]
  %v697 = vld [vmem:[%s1 + $0x1450] sm:$0xff]
  %v698 = vld [vmem:[%s1 + $0x1458] sm:$0xff]
  %v699 = vld [vmem:[%s1 + $0x1460] sm:$0xff]
  %v700 = vld [vmem:[%s1 + $0x1468] sm:$0xff]
  %v701 = vld [vmem:[%s1 + $0x1470] sm:$0xff]
  %v702 = vld [vmem:[%s1 + $0x1478] sm:$0xff]
  %v703 = vld [vmem:[%s1 + $0x1480] sm:$0xff]
  %v704 = vld [vmem:[%s1 + $0x1488] sm:$0xff]
  %v705 = vld [vmem:[%s1 + $0x1490] sm:$0xff]
  %v706 = vld [vmem:[%s1 + $0x1498] sm:$0xff]
  %v707 = vld [vmem:[%s1 + $0x14a0] sm:$0xff]
  %v708 = vld [vmem:[%s1 + $0x14a8] sm:$0xff]
  %v709 = vld [vmem:[%s1 + $0x14b0] sm:$0xff]
  %v710 = vld [vmem:[%s1 + $0x14b8] sm:$0xff]
  %v711 = vld [vmem:[%s1 + $0x14c0] sm:$0xff]
  %v712 = vld [vmem:[%s1 + $0x14c8] sm:$0xff]
  %v713 = vld [vmem:[%s1 + $0x14d0] sm:$0xff]
  %v714 = vld [vmem:[%s1 + $0x14d8] sm:$0xff]
  %v715 = vld [vmem:[%s1 + $0x14e0] sm:$0xff]
  %v716 = vld [vmem:[%s1 + $0x14e8] sm:$0xff]
  %v717 = vld [vmem:[%s1 + $0x14f0] sm:$0xff]
  %v718 = vld [vmem:[%s1 + $0x14f8] sm:$0xff]
  %v719 = vld [vmem:[%s1 + $0x1500] sm:$0xff]
  %v720 = vld [vmem:[%s1 + $0x1508] sm:$0xff]
  %v721 = vld [vmem:[%s1 + $0x1510] sm:$0xff]
  %v722 = vld [vmem:[%s1 + $0x1518] sm:$0xff]
  %v723 = vld [vmem:[%s1 + $0x1520] sm:$0xff]
  %v724 = vld [vmem:[%s1 + $0x1528] sm:$0xff]
  %v725 = vld [vmem:[%s1 + $0x1530] sm:$0xff]
  %v726 = vld [vmem:[%s1 + $0x1538] sm:$0xff]
  %v727 = vld [vmem:[%s1 + $0x1540] sm:$0xff]
  %v728 = vld [vmem:[%s1 + $0x1548] sm:$0xff]
  %v729 = vld [vmem:[%s1 + $0x1550] sm:$0xff]
  %v730 = vld [vmem:[%s1 + $0x1558] sm:$0xff]
  %v731 = vld [vmem:[%s1 + $0x1560] sm:$0xff]
  %v732 = vld [vmem:[%s1 + $0x1568] sm:$0xff]
  %v733 = vld [vmem:[%s1 + $0x1570] sm:$0xff]
  %v734 = vld [vmem:[%s1 + $0x1578] sm:$0xff]
  %v735 = vld [vmem:[%s1 + $0x1580] sm:$0xff]
  %v736 = vld [vmem:[%s1 + $0x1588] sm:$0xff]
  %v737 = vld [vmem:[%s1 + $0x1590] sm:$0xff]
  %v738 = vld [vmem:[%s1 + $0x1598] sm:$0xff]
  %v739 = vld [vmem:[%s1 + $0x15a0] sm:$0xff]
  %v740 = vld [vmem:[%s1 + $0x15a8] sm:$0xff]
  %v741 = vld [vmem:[%s1 + $0x15b0] sm:$0xff]
  %v742 = vld [vmem:[%s1 + $0x15b8] sm:$0xff]
  %v743 = vld [vmem:[%s1 + $0x15c0] sm:$0xff]
  %v744 = vld [vmem:[%s1 + $0x15c8] sm:$0xff]
  %v745 = vld [vmem:[%s1 + $0x15d0] sm:$0xff]
  %v746 = vld [vmem:[%s1 + $0x15d8] sm:$0xff]
  %v747 = vld [vmem:[%s1 + $0x15e0] sm:$0xff]
  %v748 = vld [vmem:[%s1 + $0x15e8] sm:$0xff]
  %v749 = vld [vmem:[%s1 + $0x15f0] sm:$0xff]
  %v750 = vld [vmem:[%s1 + $0x15f8] sm:$0xff]
  %v751 = vld [vmem:[%s1 + $0x1600] sm:$0xff]
  %v752 = vld [vmem:[%s1 + $0x1608] sm:$0xff]
  %v753 = vld [vmem:[%s1 + $0x1610] sm:$0xff]
  %v754 = vld [vmem:[%s1 + $0x1618] sm:$0xff]
  %v755 = vld [vmem:[%s1 + $0x1620] sm:$0xff]
  %v756 = vld [vmem:[%s1 + $0x1628] sm:$0xff]
  %v757 = vld [vmem:[%s1 + $0x1630] sm:$0xff]
  %v758 = vld [vmem:[%s1 + $0x1638] sm:$0xff]
  %v759 = vld [vmem:[%s1 + $0x1640] sm:$0xff]
  %v760 = vld [vmem:[%s1 + $0x1648] sm:$0xff]
  %v761 = vld [vmem:[%s1 + $0x1650] sm:$0xff]
  %v762 = vld [vmem:[%s1 + $0x1658] sm:$0xff]
  %v763 = vld [vmem:[%s1 + $0x1660] sm:$0xff]
  %v764 = vld [vmem:[%s1 + $0x1668] sm:$0xff]
  %v765 = vld [vmem:[%s1 + $0x1670] sm:$0xff]
  %v766 = vld [vmem:[%s1 + $0x1678] sm:$0xff]
  %v767 = vld [vmem:[%s1 + $0x1680] sm:$0xff]
  %v768 = vld [vmem:[%s1 + $0x1688] sm:$0xff]
  %v769 = vld [vmem:[%s1 + $0x1690] sm:$0xff]
  %v770 = vld [vmem:[%s1 + $0x1698] sm:$0xff]
  %v771 = vld [vmem:[%s1 + $0x16a0] sm:$0xff]
  %v772 = vld [vmem:[%s1 + $0x16a8] sm:$0xff]
  %v773 = vld [vmem:[%s1 + $0x16b0] sm:$0xff]
  %v774 = vld [vmem:[%s1 + $0x16b8] sm:$0xff]
  %v775 = vld [vmem:[%s1 + $0x16c0] sm:$0xff]
  %v776 = vld [vmem:[%s1 + $0x16c8] sm:$0xff]
  %v777 = vld [vmem:[%s1 + $0x16d0] sm:$0xff]
  %v778 = vld [vmem:[%s1 + $0x16d8] sm:$0xff]
  %v779 = vld [vmem:[%s1 + $0x16e0] sm:$0xff]
  %v780 = vld [vmem:[%s1 + $0x16e8] sm:$0xff]
  %v781 = vld [vmem:[%s1 + $0x16f0] sm:$0xff]
  %v782 = vld [vmem:[%s1 + $0x16f8] sm:$0xff]
  %v783 = vld [vmem:[%s1 + $0x1700] sm:$0xff]
  %v784 = vld [vmem:[%s1 + $0x1708] sm:$0xff]
  %v785 = vld [vmem:[%s1 + $0x1710] sm:$0xff]
  %v786 = vld [vmem:[%s1 + $0x1718] sm:$0xff]
  %v787 = vld [vmem:[%s1 + $0x1720] sm:$0xff]
  %v788 = vld [vmem:[%s1 + $0x1728] sm:$0xff]
  %v789 = vld [vmem:[%s1 + $0x1730] sm:$0xff]
  %v790 = vld [vmem:[%s1 + $0x1738] sm:$0xff]
  %v791 = vld [vmem:[%s1 + $0x1740] sm:$0xff]
  %v792 = vld [vmem:[%s1 + $0x1748] sm:$0xff]
  %v793 = vld [vmem:[%s1 + $0x1750] sm:$0xff]
  %v794 = vld [vmem:[%s1 + $0x1758] sm:$0xff]
  %v795 = vld [vmem:[%s1 + $0x1760] sm:$0xff]
  %v796 = vld [vmem:[%s1 + $0x1768] sm:$0xff]
  %v797 = vld [vmem:[%s1 + $0x1770] sm:$0xff]
  %v798 = vld [vmem:[%s1 + $0x1778] sm:$0xff]
  %v799 = vld [vmem:[%s1 + $0x1780] sm:$0xff]
  %v800 = vld [vmem:[%s1 + $0x1788] sm:$0xff]
  %v801 = vld [vmem:[%s1 + $0x1790] sm:$0xff]
  %v802 = vld [vmem:[%s1 + $0x1798] sm:$0xff]
  %v803 = vld [vmem:[%s1 + $0x17a0] sm:$0xff]
  %v804 = vld [vmem:[%s1 + $0x17a8] sm:$0xff]
  %v805 = vld [vmem:[%s1 + $0x17b0] sm:$0xff]
  %v806 = vld [vmem:[%s1 + $0x17b8] sm:$0xff]
  %v807 = vld [vmem:[%s1 + $0x17c0] sm:$0xff]
  %v808 = vld [vmem:[%s1 + $0x17c8] sm:$0xff]
  %v809 = vld [vmem:[%s1 + $0x17d0] sm:$0xff]
  %v810 = vld [vmem:[%s1 + $0x17d8] sm:$0xff]
  %v811 = vld [vmem:[%s1 + $0x17e0] sm:$0xff]
  %v812 = vld [vmem:[%s1 + $0x17e8] sm:$0xff]
  %v813 = vld [vmem:[%s1 + $0x17f0] sm:$0xff]
  %v814 = vld [vmem:[%s1 + $0x17f8] sm:$0xff]
  %v815 = vld [vmem:[%s1 + $0x1800] sm:$0xff]
  %v816 = vld [vmem:[%s1 + $0x1808] sm:$0xff]
  %v817 = vld [vmem:[%s1 + $0x1810] sm:$0xff]
  %v818 = vld [vmem:[%s1 + $0x1818] sm:$0xff]
  %v819 = vld [vmem:[%s1 + $0x1820] sm:$0xff]
  %v820 = vld [vmem:[%s1 + $0x1828] sm:$0xff]
  %v821 = vld [vmem:[%s1 + $0x1830] sm:$0xff]
  %v822 = vld [vmem:[%s1 + $0x1838] sm:$0xff]
  %v823 = vld [vmem:[%s1 + $0x1840] sm:$0xff]
  %v824 = vld [vmem:[%s1 + $0x1848] sm:$0xff]
  %v825 = vld [vmem:[%s1 + $0x1850] sm:$0xff]
  %v826 = vld [vmem:[%s1 + $0x1858] sm:$0xff]
  %v827 = vld [vmem:[%s1 + $0x1860] sm:$0xff]
  %v828 = vld [vmem:[%s1 + $0x1868] sm:$0xff]
  %v829 = vld [vmem:[%s1 + $0x1870] sm:$0xff]
  %v830 = vld [vmem:[%s1 + $0x1878] sm:$0xff]
  %v831 = vld [vmem:[%s2] sm:$0xf]
  %v833 = vlaneseq
  %v834 = vshrl.u32 %v833, 7
  %v835 = vsub.s32 0, %v834
  %v836 = vrot.slane %v831, %v835
  %v837 = vlaneseq
  %v838 = vshrl.u32 %v837, 7
  %v839 = vsub.s32 1, %v838
  %v840 = vrot.slane %v831, %v839
  %v841 = vlaneseq
  %v842 = vshrl.u32 %v841, 7
  %v843 = vsub.s32 2, %v842
  %v844 = vrot.slane %v831, %v843
  %v845 = vlaneseq
  %v846 = vshrl.u32 %v845, 7
  %v847 = vsub.s32 3, %v846
  %v848 = vrot.slane %v831, %v847
  %v879 = vunpack.c.l.b16 %v21
  %v880 = vunpack.c.h.b16 %v21
  %v881 = vunpack.c.l.b16 %v22
  %v882 = vunpack.c.h.b16 %v22
  %v883 = vunpack.c.l.b16 %v23
  %v884 = vunpack.c.h.b16 %v23
  %v885 = vunpack.c.l.b16 %v24
  %v886 = vunpack.c.h.b16 %v24
  %v887 = vunpack.c.l.b16 %v25
  %v888 = vunpack.c.h.b16 %v25
  %v889 = vunpack.c.l.b16 %v26
  %v890 = vunpack.c.h.b16 %v26
  %v891 = vunpack.c.l.b16 %v27
  %v892 = vunpack.c.h.b16 %v27
  %v893 = vunpack.c.l.b16 %v28
  %v894 = vunpack.c.h.b16 %v28
  %v895 = vunpack.c.l.b16 %v29
  %v896 = vunpack.c.h.b16 %v29
  %v897 = vunpack.c.l.b16 %v30
  %v898 = vunpack.c.h.b16 %v30
  %v899 = vunpack.c.l.b16 %v31
  %v900 = vunpack.c.h.b16 %v31
  %v901 = vunpack.c.l.b16 %v32
  %v902 = vunpack.c.h.b16 %v32
  %v903 = vunpack.c.l.b16 %v33
  %v904 = vunpack.c.l.b16 %v34
  %v905 = vunpack.c.h.b16 %v34
  %v906 = vunpack.c.l.b16 %v35
  %v907 = vunpack.c.h.b16 %v35
  %v908 = vunpack.c.l.b16 %v36
  %v909 = vunpack.c.h.b16 %v36
  %v910 = vunpack.c.l.b16 %v37
  %v911 = vunpack.c.h.b16 %v37
  %v912 = vunpack.c.l.b16 %v38
  %v913 = vunpack.c.h.b16 %v38
  %v914 = vunpack.c.l.b16 %v39
  %v915 = vunpack.c.h.b16 %v39
  %v916 = vunpack.c.l.b16 %v40
  %v917 = vunpack.c.h.b16 %v40
  %v918 = vunpack.c.l.b16 %v41
  %v919 = vunpack.c.h.b16 %v41
  %v920 = vunpack.c.l.b16 %v42
  %v921 = vunpack.c.h.b16 %v42
  %v922 = vunpack.c.l.b16 %v43
  %v923 = vunpack.c.h.b16 %v43
  %v924 = vunpack.c.l.b16 %v44
  %v925 = vunpack.c.h.b16 %v44
  %v926 = vunpack.c.l.b16 %v45
  %v927 = vunpack.c.h.b16 %v45
  %v928 = vunpack.c.l.b16 %v46
  %v929 = vpack.c.b16 %v904, %v879
  %v930 = vpack.c.b16 %v905, %v880
  %v931 = vpack.c.b16 %v906, %v881
  %v932 = vpack.c.b16 %v907, %v882
  %v933 = vpack.c.b16 %v908, %v883
  %v934 = vpack.c.b16 %v909, %v884
  %v935 = vpack.c.b16 %v910, %v885
  %v936 = vpack.c.b16 %v911, %v886
  %v937 = vpack.c.b16 %v912, %v887
  %v938 = vpack.c.b16 %v913, %v888
  %v939 = vpack.c.b16 %v914, %v889
  %v940 = vpack.c.b16 %v915, %v890
  %v941 = vpack.c.b16 %v916, %v891
  %v942 = vpack.c.b16 %v917, %v892
  %v943 = vpack.c.b16 %v918, %v893
  %v944 = vpack.c.b16 %v919, %v894
  %v945 = vpack.c.b16 %v920, %v895
  %v946 = vpack.c.b16 %v921, %v896
  %v947 = vpack.c.b16 %v922, %v897
  %v948 = vpack.c.b16 %v923, %v898
  %v949 = vpack.c.b16 %v924, %v899
  %v950 = vpack.c.b16 %v925, %v900
  %v951 = vpack.c.b16 %v926, %v901
  %v952 = vpack.c.b16 %v927, %v902
  %v953 = vpack.c.b16 %v928, %v903
  %v1762 = vunpack.c.l.b16 %v47
  %v1763 = vunpack.c.h.b16 %v47
  %v1764 = vunpack.c.l.b16 %v48
  %v1765 = vunpack.c.h.b16 %v48
  %v1766 = vunpack.c.l.b16 %v49
  %v1767 = vunpack.c.h.b16 %v49
  %v1768 = vunpack.c.l.b16 %v50
  %v1769 = vunpack.c.h.b16 %v50
  %v1770 = vunpack.c.l.b16 %v51
  %v1771 = vunpack.c.h.b16 %v51
  %v1772 = vunpack.c.l.b16 %v52
  %v1773 = vunpack.c.h.b16 %v52
  %v1774 = vunpack.c.l.b16 %v53
  %v1775 = vunpack.c.h.b16 %v53
  %v1776 = vunpack.c.l.b16 %v54
  %v1777 = vunpack.c.h.b16 %v54
  %v1778 = vunpack.c.l.b16 %v55
  %v1779 = vunpack.c.h.b16 %v55
  %v1780 = vunpack.c.l.b16 %v56
  %v1781 = vunpack.c.h.b16 %v56
  %v1782 = vunpack.c.l.b16 %v57
  %v1783 = vunpack.c.h.b16 %v57
  %v1784 = vunpack.c.l.b16 %v58
  %v1785 = vunpack.c.h.b16 %v58
  %v1786 = vunpack.c.l.b16 %v59
  %v1787 = vunpack.c.h.b16 %v59
  %v1788 = vunpack.c.l.b16 %v60
  %v1789 = vunpack.c.h.b16 %v60
  %v1790 = vunpack.c.l.b16 %v61
  %v1791 = vunpack.c.h.b16 %v61
  %v1792 = vunpack.c.l.b16 %v62
  %v1793 = vunpack.c.h.b16 %v62
  %v1794 = vunpack.c.l.b16 %v63
  %v1795 = vunpack.c.h.b16 %v63
  %v1796 = vunpack.c.l.b16 %v64
  %v1797 = vunpack.c.h.b16 %v64
  %v1798 = vunpack.c.l.b16 %v65
  %v1799 = vunpack.c.h.b16 %v65
  %v1800 = vunpack.c.l.b16 %v66
  %v1801 = vunpack.c.h.b16 %v66
  %v1802 = vunpack.c.l.b16 %v67
  %v1803 = vunpack.c.h.b16 %v67
  %v1804 = vunpack.c.l.b16 %v68
  %v1805 = vunpack.c.h.b16 %v68
  %v1806 = vunpack.c.l.b16 %v69
  %v1807 = vunpack.c.h.b16 %v69
  %v1808 = vunpack.c.l.b16 %v70
  %v1809 = vunpack.c.h.b16 %v70
  %v1810 = vunpack.c.l.b16 %v71
  %v1811 = vunpack.c.h.b16 %v71
  %v1812 = vunpack.c.l.b16 %v72
  %v1813 = vunpack.c.h.b16 %v72
  %v1814 = vunpack.c.l.b16 %v73
  %v1815 = vunpack.c.h.b16 %v73
  %v1816 = vunpack.c.l.b16 %v74
  %v1817 = vunpack.c.h.b16 %v74
  %v1818 = vunpack.c.l.b16 %v75
  %v1819 = vunpack.c.h.b16 %v75
  %v1820 = vunpack.c.l.b16 %v76
  %v1821 = vunpack.c.h.b16 %v76
  %v1822 = vunpack.c.l.b16 %v77
  %v1823 = vunpack.c.h.b16 %v77
  %v1824 = vunpack.c.l.b16 %v78
  %v1825 = vunpack.c.h.b16 %v78
  %v1826 = vunpack.c.l.b16 %v79
  %v1827 = vunpack.c.h.b16 %v79
  %v1828 = vunpack.c.l.b16 %v80
  %v1829 = vunpack.c.h.b16 %v80
  %v1830 = vunpack.c.l.b16 %v81
  %v1831 = vunpack.c.h.b16 %v81
  %v1832 = vunpack.c.l.b16 %v82
  %v1833 = vunpack.c.h.b16 %v82
  %v1834 = vunpack.c.l.b16 %v83
  %v1835 = vunpack.c.h.b16 %v83
  %v1836 = vunpack.c.l.b16 %v84
  %v1837 = vunpack.c.h.b16 %v84
  %v1838 = vunpack.c.l.b16 %v85
  %v1839 = vunpack.c.h.b16 %v85
  %v1840 = vunpack.c.l.b16 %v86
  %v1841 = vunpack.c.h.b16 %v86
  %v1842 = vunpack.c.l.b16 %v87
  %v1843 = vunpack.c.h.b16 %v87
  %v1844 = vunpack.c.l.b16 %v88
  %v1845 = vunpack.c.h.b16 %v88
  %v1846 = vunpack.c.l.b16 %v89
  %v1847 = vunpack.c.h.b16 %v89
  %v1848 = vunpack.c.l.b16 %v90
  %v1849 = vunpack.c.h.b16 %v90
  %v1850 = vunpack.c.l.b16 %v91
  %v1851 = vunpack.c.h.b16 %v91
  %v1852 = vunpack.c.l.b16 %v92
  %v1853 = vunpack.c.h.b16 %v92
  %v1854 = vunpack.c.l.b16 %v93
  %v1855 = vunpack.c.h.b16 %v93
  %v1856 = vunpack.c.l.b16 %v94
  %v1857 = vunpack.c.h.b16 %v94
  %v1858 = vunpack.c.l.b16 %v95
  %v1859 = vunpack.c.h.b16 %v95
  %v1860 = vunpack.c.l.b16 %v96
  %v1861 = vunpack.c.h.b16 %v96
  %v1862 = vunpack.c.l.b16 %v97
  %v1863 = vunpack.c.h.b16 %v97
  %v1864 = vunpack.c.l.b16 %v98
  %v1865 = vunpack.c.h.b16 %v98
  %v1866 = vunpack.c.l.b16 %v99
  %v1867 = vunpack.c.h.b16 %v99
  %v1868 = vunpack.c.l.b16 %v100
  %v1869 = vunpack.c.h.b16 %v100
  %v1870 = vunpack.c.l.b16 %v101
  %v1871 = vunpack.c.h.b16 %v101
  %v1872 = vunpack.c.l.b16 %v102
  %v1873 = vunpack.c.h.b16 %v102
  %v1874 = vunpack.c.l.b16 %v103
  %v1875 = vunpack.c.h.b16 %v103
  %v1876 = vunpack.c.l.b16 %v104
  %v1877 = vunpack.c.h.b16 %v104
  %v1878 = vunpack.c.l.b16 %v105
  %v1879 = vunpack.c.h.b16 %v105
  %v1880 = vunpack.c.l.b16 %v106
  %v1881 = vunpack.c.h.b16 %v106
  %v1882 = vunpack.c.l.b16 %v107
  %v1883 = vunpack.c.h.b16 %v107
  %v1884 = vunpack.c.l.b16 %v108
  %v1885 = vunpack.c.h.b16 %v108
  %v1886 = vunpack.c.l.b16 %v109
  %v1887 = vunpack.c.h.b16 %v109
  %v1888 = vunpack.c.l.b16 %v110
  %v1889 = vunpack.c.h.b16 %v110
  %v1890 = vunpack.c.l.b16 %v111
  %v1891 = vunpack.c.h.b16 %v111
  %v1892 = vunpack.c.l.b16 %v112
  %v1893 = vunpack.c.h.b16 %v112
  %v1894 = vunpack.c.l.b16 %v113
  %v1895 = vunpack.c.h.b16 %v113
  %v1896 = vunpack.c.l.b16 %v114
  %v1897 = vunpack.c.h.b16 %v114
  %v1898 = vunpack.c.l.b16 %v115
  %v1899 = vunpack.c.h.b16 %v115
  %v1900 = vunpack.c.l.b16 %v116
  %v1901 = vunpack.c.h.b16 %v116
  %v1902 = vunpack.c.l.b16 %v117
  %v1903 = vunpack.c.h.b16 %v117
  %v1904 = vunpack.c.l.b16 %v118
  %v1905 = vunpack.c.h.b16 %v118
  %v1906 = vunpack.c.l.b16 %v119
  %v1907 = vunpack.c.h.b16 %v119
  %v1908 = vunpack.c.l.b16 %v120
  %v1909 = vunpack.c.h.b16 %v120
  %v1910 = vunpack.c.l.b16 %v121
  %v1911 = vunpack.c.h.b16 %v121
  %v1912 = vunpack.c.l.b16 %v122
  %v1913 = vunpack.c.h.b16 %v122
  %v1914 = vunpack.c.l.b16 %v123
  %v1915 = vunpack.c.h.b16 %v123
  %v1916 = vunpack.c.l.b16 %v124
  %v1917 = vunpack.c.h.b16 %v124
  %v1918 = vunpack.c.l.b16 %v125
  %v1919 = vunpack.c.h.b16 %v125
  %v1920 = vunpack.c.l.b16 %v126
  %v1921 = vunpack.c.h.b16 %v126
  %v1922 = vunpack.c.l.b16 %v127
  %v1923 = vunpack.c.h.b16 %v127
  %v1924 = vunpack.c.l.b16 %v128
  %v1925 = vunpack.c.h.b16 %v128
  %v1926 = vunpack.c.l.b16 %v129
  %v1927 = vunpack.c.h.b16 %v129
  %v1928 = vunpack.c.l.b16 %v130
  %v1929 = vunpack.c.h.b16 %v130
  %v1930 = vunpack.c.l.b16 %v131
  %v1931 = vunpack.c.h.b16 %v131
  %v1932 = vunpack.c.l.b16 %v132
  %v1933 = vunpack.c.h.b16 %v132
  %v1934 = vunpack.c.l.b16 %v133
  %v1935 = vunpack.c.h.b16 %v133
  %v1936 = vunpack.c.l.b16 %v134
  %v1937 = vunpack.c.h.b16 %v134
  %v1938 = vunpack.c.l.b16 %v135
  %v1939 = vunpack.c.h.b16 %v135
  %v1940 = vunpack.c.l.b16 %v136
  %v1941 = vunpack.c.h.b16 %v136
  %v1942 = vunpack.c.l.b16 %v137
  %v1943 = vunpack.c.h.b16 %v137
  %v1944 = vunpack.c.l.b16 %v138
  %v1945 = vunpack.c.h.b16 %v138
  %v1946 = vunpack.c.l.b16 %v139
  %v1947 = vunpack.c.h.b16 %v139
  %v1948 = vunpack.c.l.b16 %v140
  %v1949 = vunpack.c.h.b16 %v140
  %v1950 = vunpack.c.l.b16 %v141
  %v1951 = vunpack.c.h.b16 %v141
  %v1952 = vunpack.c.l.b16 %v142
  %v1953 = vunpack.c.h.b16 %v142
  %v1954 = vunpack.c.l.b16 %v143
  %v1955 = vunpack.c.h.b16 %v143
  %v1956 = vunpack.c.l.b16 %v144
  %v1957 = vunpack.c.h.b16 %v144
  %v1958 = vunpack.c.l.b16 %v145
  %v1959 = vunpack.c.h.b16 %v145
  %v1960 = vunpack.c.l.b16 %v146
  %v1961 = vunpack.c.h.b16 %v146
  %v1962 = vunpack.c.l.b16 %v147
  %v1963 = vunpack.c.h.b16 %v147
  %v1964 = vunpack.c.l.b16 %v148
  %v1965 = vunpack.c.h.b16 %v148
  %v1966 = vunpack.c.l.b16 %v149
  %v1967 = vunpack.c.h.b16 %v149
  %v1968 = vunpack.c.l.b16 %v150
  %v1969 = vunpack.c.h.b16 %v150
  %v1970 = vunpack.c.l.b16 %v151
  %v1971 = vunpack.c.h.b16 %v151
  %v1972 = vunpack.c.l.b16 %v152
  %v1973 = vunpack.c.h.b16 %v152
  %v1974 = vunpack.c.l.b16 %v153
  %v1975 = vunpack.c.h.b16 %v153
  %v1976 = vunpack.c.l.b16 %v154
  %v1977 = vunpack.c.h.b16 %v154
  %v1978 = vunpack.c.l.b16 %v155
  %v1979 = vunpack.c.h.b16 %v155
  %v1980 = vunpack.c.l.b16 %v156
  %v1981 = vunpack.c.h.b16 %v156
  %v1982 = vunpack.c.l.b16 %v157
  %v1983 = vunpack.c.h.b16 %v157
  %v1984 = vunpack.c.l.b16 %v158
  %v1985 = vunpack.c.h.b16 %v158
  %v1986 = vunpack.c.l.b16 %v159
  %v1987 = vunpack.c.h.b16 %v159
  %v1988 = vunpack.c.l.b16 %v160
  %v1989 = vunpack.c.h.b16 %v160
  %v1990 = vunpack.c.l.b16 %v161
  %v1991 = vunpack.c.h.b16 %v161
  %v1992 = vunpack.c.l.b16 %v162
  %v1993 = vunpack.c.h.b16 %v162
  %v1994 = vunpack.c.l.b16 %v163
  %v1995 = vunpack.c.h.b16 %v163
  %v1996 = vunpack.c.l.b16 %v164
  %v1997 = vunpack.c.h.b16 %v164
  %v1998 = vunpack.c.l.b16 %v165
  %v1999 = vunpack.c.h.b16 %v165
  %v2000 = vunpack.c.l.b16 %v166
  %v2001 = vunpack.c.h.b16 %v166
  %v2002 = vunpack.c.l.b16 %v167
  %v2003 = vunpack.c.h.b16 %v167
  %v2004 = vunpack.c.l.b16 %v168
  %v2005 = vunpack.c.h.b16 %v168
  %v2006 = vunpack.c.l.b16 %v169
  %v2007 = vunpack.c.h.b16 %v169
  %v2008 = vunpack.c.l.b16 %v170
  %v2009 = vunpack.c.h.b16 %v170
  %v2010 = vunpack.c.l.b16 %v171
  %v2011 = vunpack.c.h.b16 %v171
  %v2012 = vunpack.c.l.b16 %v172
  %v2013 = vunpack.c.h.b16 %v172
  %v2014 = vunpack.c.l.b16 %v173
  %v2015 = vunpack.c.h.b16 %v173
  %v2016 = vunpack.c.l.b16 %v174
  %v2017 = vunpack.c.h.b16 %v174
  %v2018 = vunpack.c.l.b16 %v175
  %v2019 = vunpack.c.h.b16 %v175
  %v2020 = vunpack.c.l.b16 %v176
  %v2021 = vunpack.c.h.b16 %v176
  %v2022 = vunpack.c.l.b16 %v177
  %v2023 = vunpack.c.h.b16 %v177
  %v2024 = vunpack.c.l.b16 %v178
  %v2025 = vunpack.c.h.b16 %v178
  %v2026 = vunpack.c.l.b16 %v179
  %v2027 = vunpack.c.h.b16 %v179
  %v2028 = vunpack.c.l.b16 %v180
  %v2029 = vunpack.c.h.b16 %v180
  %v2030 = vunpack.c.l.b16 %v181
  %v2031 = vunpack.c.h.b16 %v181
  %v2032 = vunpack.c.l.b16 %v182
  %v2033 = vunpack.c.h.b16 %v182
  %v2034 = vunpack.c.l.b16 %v183
  %v2035 = vunpack.c.h.b16 %v183
  %v2036 = vunpack.c.l.b16 %v184
  %v2037 = vunpack.c.h.b16 %v184
  %v2038 = vunpack.c.l.b16 %v185
  %v2039 = vunpack.c.h.b16 %v185
  %v2040 = vunpack.c.l.b16 %v186
  %v2041 = vunpack.c.h.b16 %v186
  %v2042 = vunpack.c.l.b16 %v187
  %v2043 = vunpack.c.h.b16 %v187
  %v2044 = vunpack.c.l.b16 %v188
  %v2045 = vunpack.c.h.b16 %v188
  %v2046 = vunpack.c.l.b16 %v189
  %v2047 = vunpack.c.h.b16 %v189
  %v2048 = vunpack.c.l.b16 %v190
  %v2049 = vunpack.c.h.b16 %v190
  %v2050 = vunpack.c.l.b16 %v191
  %v2051 = vunpack.c.h.b16 %v191
  %v2052 = vunpack.c.l.b16 %v192
  %v2053 = vunpack.c.h.b16 %v192
  %v2054 = vunpack.c.l.b16 %v193
  %v2055 = vunpack.c.h.b16 %v193
  %v2056 = vunpack.c.l.b16 %v194
  %v2057 = vunpack.c.h.b16 %v194
  %v2058 = vunpack.c.l.b16 %v195
  %v2059 = vunpack.c.h.b16 %v195
  %v2060 = vunpack.c.l.b16 %v196
  %v2061 = vunpack.c.h.b16 %v196
  %v2062 = vunpack.c.l.b16 %v197
  %v2063 = vunpack.c.h.b16 %v197
  %v2064 = vunpack.c.l.b16 %v198
  %v2065 = vunpack.c.h.b16 %v198
  %v2066 = vunpack.c.l.b16 %v199
  %v2067 = vunpack.c.h.b16 %v199
  %v2068 = vunpack.c.l.b16 %v200
  %v2069 = vunpack.c.h.b16 %v200
  %v2070 = vunpack.c.l.b16 %v201
  %v2071 = vunpack.c.h.b16 %v201
  %v2072 = vunpack.c.l.b16 %v202
  %v2073 = vunpack.c.h.b16 %v202
  %v2074 = vunpack.c.l.b16 %v203
  %v2075 = vunpack.c.h.b16 %v203
  %v2076 = vunpack.c.l.b16 %v204
  %v2077 = vunpack.c.h.b16 %v204
  %v2078 = vunpack.c.l.b16 %v205
  %v2079 = vunpack.c.h.b16 %v205
  %v2080 = vunpack.c.l.b16 %v206
  %v2081 = vunpack.c.h.b16 %v206
  %v2082 = vunpack.c.l.b16 %v207
  %v2083 = vunpack.c.h.b16 %v207
  %v2084 = vunpack.c.l.b16 %v208
  %v2085 = vunpack.c.h.b16 %v208
  %v2086 = vunpack.c.l.b16 %v209
  %v2087 = vunpack.c.h.b16 %v209
  %v2088 = vunpack.c.l.b16 %v210
  %v2089 = vunpack.c.h.b16 %v210
  %v2090 = vunpack.c.l.b16 %v211
  %v2091 = vunpack.c.h.b16 %v211
  %v2092 = vunpack.c.l.b16 %v212
  %v2093 = vunpack.c.h.b16 %v212
  %v2094 = vunpack.c.l.b16 %v213
  %v2095 = vunpack.c.h.b16 %v213
  %v2096 = vunpack.c.l.b16 %v214
  %v2097 = vunpack.c.h.b16 %v214
  %v2098 = vunpack.c.l.b16 %v215
  %v2099 = vunpack.c.h.b16 %v215
  %v2100 = vunpack.c.l.b16 %v216
  %v2101 = vunpack.c.h.b16 %v216
  %v2102 = vunpack.c.l.b16 %v217
  %v2103 = vunpack.c.h.b16 %v217
  %v2104 = vunpack.c.l.b16 %v218
  %v2105 = vunpack.c.h.b16 %v218
  %v2106 = vunpack.c.l.b16 %v219
  %v2107 = vunpack.c.h.b16 %v219
  %v2108 = vunpack.c.l.b16 %v220
  %v2109 = vunpack.c.h.b16 %v220
  %v2110 = vunpack.c.l.b16 %v221
  %v2111 = vunpack.c.h.b16 %v221
  %v2112 = vunpack.c.l.b16 %v222
  %v2113 = vunpack.c.h.b16 %v222
  %v2114 = vunpack.c.l.b16 %v223
  %v2115 = vunpack.c.h.b16 %v223
  %v2116 = vunpack.c.l.b16 %v224
  %v2117 = vunpack.c.h.b16 %v224
  %v2118 = vunpack.c.l.b16 %v225
  %v2119 = vunpack.c.h.b16 %v225
  %v2120 = vunpack.c.l.b16 %v226
  %v2121 = vunpack.c.h.b16 %v226
  %v2122 = vunpack.c.l.b16 %v227
  %v2123 = vunpack.c.h.b16 %v227
  %v2124 = vunpack.c.l.b16 %v228
  %v2125 = vunpack.c.h.b16 %v228
  %v2126 = vunpack.c.l.b16 %v229
  %v2127 = vunpack.c.h.b16 %v229
  %v2128 = vunpack.c.l.b16 %v230
  %v2129 = vunpack.c.h.b16 %v230
  %v2130 = vunpack.c.l.b16 %v231
  %v2131 = vunpack.c.h.b16 %v231
  %v2132 = vunpack.c.l.b16 %v232
  %v2133 = vunpack.c.h.b16 %v232
  %v2134 = vunpack.c.l.b16 %v233
  %v2135 = vunpack.c.h.b16 %v233
  %v2136 = vunpack.c.l.b16 %v234
  %v2137 = vunpack.c.h.b16 %v234
  %v2138 = vunpack.c.l.b16 %v235
  %v2139 = vunpack.c.h.b16 %v235
  %v2140 = vunpack.c.l.b16 %v236
  %v2141 = vunpack.c.h.b16 %v236
  %v2142 = vunpack.c.l.b16 %v237
  %v2143 = vunpack.c.h.b16 %v237
  %v2144 = vunpack.c.l.b16 %v238
  %v2145 = vunpack.c.h.b16 %v238
  %v2146 = vunpack.c.l.b16 %v239
  %v2147 = vunpack.c.h.b16 %v239
  %v2148 = vunpack.c.l.b16 %v240
  %v2149 = vunpack.c.h.b16 %v240
  %v2150 = vunpack.c.l.b16 %v241
  %v2151 = vunpack.c.h.b16 %v241
  %v2152 = vunpack.c.l.b16 %v242
  %v2153 = vunpack.c.h.b16 %v242
  %v2154 = vunpack.c.l.b16 %v243
  %v2155 = vunpack.c.h.b16 %v243
  %v2156 = vunpack.c.l.b16 %v244
  %v2157 = vunpack.c.h.b16 %v244
  %v2158 = vunpack.c.l.b16 %v245
  %v2159 = vunpack.c.h.b16 %v245
  %v2160 = vunpack.c.l.b16 %v246
  %v2161 = vunpack.c.h.b16 %v246
  %v2162 = vunpack.c.l.b16 %v247
  %v2163 = vunpack.c.h.b16 %v247
  %v2164 = vunpack.c.l.b16 %v248
  %v2165 = vunpack.c.h.b16 %v248
  %v2166 = vunpack.c.l.b16 %v249
  %v2167 = vunpack.c.h.b16 %v249
  %v2168 = vunpack.c.l.b16 %v250
  %v2169 = vunpack.c.h.b16 %v250
  %v2170 = vunpack.c.l.b16 %v251
  %v2171 = vunpack.c.h.b16 %v251
  %v2172 = vunpack.c.l.b16 %v252
  %v2173 = vunpack.c.h.b16 %v252
  %v2174 = vunpack.c.l.b16 %v253
  %v2175 = vunpack.c.h.b16 %v253
  %v2176 = vunpack.c.l.b16 %v254
  %v2177 = vunpack.c.h.b16 %v254
  %v2178 = vunpack.c.l.b16 %v255
  %v2179 = vunpack.c.h.b16 %v255
  %v2180 = vunpack.c.l.b16 %v256
  %v2181 = vunpack.c.h.b16 %v256
  %v2182 = vunpack.c.l.b16 %v257
  %v2183 = vunpack.c.h.b16 %v257
  %v2184 = vunpack.c.l.b16 %v258
  %v2185 = vunpack.c.h.b16 %v258
  %v2186 = vunpack.c.l.b16 %v259
  %v2187 = vunpack.c.h.b16 %v259
  %v2188 = vunpack.c.l.b16 %v260
  %v2189 = vunpack.c.h.b16 %v260
  %v2190 = vunpack.c.l.b16 %v261
  %v2191 = vunpack.c.h.b16 %v261
  %v2192 = vunpack.c.l.b16 %v262
  %v2193 = vunpack.c.h.b16 %v262
  %v2194 = vunpack.c.l.b16 %v263
  %v2195 = vunpack.c.h.b16 %v263
  %v2196 = vunpack.c.l.b16 %v264
  %v2197 = vunpack.c.h.b16 %v264
  %v2198 = vunpack.c.l.b16 %v265
  %v2199 = vunpack.c.h.b16 %v265
  %v2200 = vunpack.c.l.b16 %v266
  %v2201 = vunpack.c.h.b16 %v266
  %v2202 = vunpack.c.l.b16 %v267
  %v2203 = vunpack.c.h.b16 %v267
  %v2204 = vunpack.c.l.b16 %v268
  %v2205 = vunpack.c.h.b16 %v268
  %v2206 = vunpack.c.l.b16 %v269
  %v2207 = vunpack.c.h.b16 %v269
  %v2208 = vunpack.c.l.b16 %v270
  %v2209 = vunpack.c.h.b16 %v270
  %v2210 = vunpack.c.l.b16 %v271
  %v2211 = vunpack.c.h.b16 %v271
  %v2212 = vunpack.c.l.b16 %v272
  %v2213 = vunpack.c.h.b16 %v272
  %v2214 = vunpack.c.l.b16 %v273
  %v2215 = vunpack.c.h.b16 %v273
  %v2216 = vunpack.c.l.b16 %v274
  %v2217 = vunpack.c.h.b16 %v274
  %v2218 = vunpack.c.l.b16 %v275
  %v2219 = vunpack.c.h.b16 %v275
  %v2220 = vunpack.c.l.b16 %v276
  %v2221 = vunpack.c.h.b16 %v276
  %v2222 = vunpack.c.l.b16 %v277
  %v2223 = vunpack.c.h.b16 %v277
  %v2224 = vunpack.c.l.b16 %v278
  %v2225 = vunpack.c.h.b16 %v278
  %v2226 = vunpack.c.l.b16 %v279
  %v2227 = vunpack.c.h.b16 %v279
  %v2228 = vunpack.c.l.b16 %v280
  %v2229 = vunpack.c.h.b16 %v280
  %v2230 = vunpack.c.l.b16 %v281
  %v2231 = vunpack.c.h.b16 %v281
  %v2232 = vunpack.c.l.b16 %v282
  %v2233 = vunpack.c.h.b16 %v282
  %v2234 = vunpack.c.l.b16 %v283
  %v2235 = vunpack.c.h.b16 %v283
  %v2236 = vunpack.c.l.b16 %v284
  %v2237 = vunpack.c.h.b16 %v284
  %v2238 = vunpack.c.l.b16 %v285
  %v2239 = vunpack.c.h.b16 %v285
  %v2240 = vunpack.c.l.b16 %v286
  %v2241 = vunpack.c.h.b16 %v286
  %v2242 = vunpack.c.l.b16 %v287
  %v2243 = vunpack.c.h.b16 %v287
  %v2244 = vunpack.c.l.b16 %v288
  %v2245 = vunpack.c.h.b16 %v288
  %v2246 = vunpack.c.l.b16 %v289
  %v2247 = vunpack.c.h.b16 %v289
  %v2248 = vunpack.c.l.b16 %v290
  %v2249 = vunpack.c.h.b16 %v290
  %v2250 = vunpack.c.l.b16 %v291
  %v2251 = vunpack.c.h.b16 %v291
  %v2252 = vunpack.c.l.b16 %v292
  %v2253 = vunpack.c.h.b16 %v292
  %v2254 = vunpack.c.l.b16 %v293
  %v2255 = vunpack.c.h.b16 %v293
  %v2256 = vunpack.c.l.b16 %v294
  %v2257 = vunpack.c.h.b16 %v294
  %v2258 = vunpack.c.l.b16 %v295
  %v2259 = vunpack.c.h.b16 %v295
  %v2260 = vunpack.c.l.b16 %v296
  %v2261 = vunpack.c.h.b16 %v296
  %v2262 = vunpack.c.l.b16 %v297
  %v2263 = vunpack.c.h.b16 %v297
  %v2264 = vunpack.c.l.b16 %v298
  %v2265 = vunpack.c.h.b16 %v298
  %v2266 = vunpack.c.l.b16 %v299
  %v2267 = vunpack.c.h.b16 %v299
  %v2268 = vunpack.c.l.b16 %v300
  %v2269 = vunpack.c.h.b16 %v300
  %v2270 = vunpack.c.l.b16 %v301
  %v2271 = vunpack.c.h.b16 %v301
  %v2272 = vunpack.c.l.b16 %v302
  %v2273 = vunpack.c.h.b16 %v302
  %v2274 = vunpack.c.l.b16 %v303
  %v2275 = vunpack.c.h.b16 %v303
  %v2276 = vunpack.c.l.b16 %v304
  %v2277 = vunpack.c.h.b16 %v304
  %v2278 = vunpack.c.l.b16 %v305
  %v2279 = vunpack.c.h.b16 %v305
  %v2280 = vunpack.c.l.b16 %v306
  %v2281 = vunpack.c.h.b16 %v306
  %v2282 = vunpack.c.l.b16 %v307
  %v2283 = vunpack.c.h.b16 %v307
  %v2284 = vunpack.c.l.b16 %v308
  %v2285 = vunpack.c.h.b16 %v308
  %v2286 = vunpack.c.l.b16 %v309
  %v2287 = vunpack.c.h.b16 %v309
  %v2288 = vunpack.c.l.b16 %v310
  %v2289 = vunpack.c.h.b16 %v310
  %v2290 = vunpack.c.l.b16 %v311
  %v2291 = vunpack.c.h.b16 %v311
  %v2292 = vunpack.c.l.b16 %v312
  %v2293 = vunpack.c.h.b16 %v312
  %v2294 = vunpack.c.l.b16 %v313
  %v2295 = vunpack.c.h.b16 %v313
  %v2296 = vunpack.c.l.b16 %v314
  %v2297 = vunpack.c.h.b16 %v314
  %v2298 = vunpack.c.l.b16 %v315
  %v2299 = vunpack.c.h.b16 %v315
  %v2300 = vunpack.c.l.b16 %v316
  %v2301 = vunpack.c.h.b16 %v316
  %v2302 = vunpack.c.l.b16 %v317
  %v2303 = vunpack.c.h.b16 %v317
  %v2304 = vunpack.c.l.b16 %v318
  %v2305 = vunpack.c.h.b16 %v318
  %v2306 = vunpack.c.l.b16 %v319
  %v2307 = vunpack.c.h.b16 %v319
  %v2308 = vunpack.c.l.b16 %v320
  %v2309 = vunpack.c.h.b16 %v320
  %v2310 = vunpack.c.l.b16 %v321
  %v2311 = vunpack.c.h.b16 %v321
  %v2312 = vunpack.c.l.b16 %v322
  %v2313 = vunpack.c.h.b16 %v322
  %v2314 = vunpack.c.l.b16 %v323
  %v2315 = vunpack.c.h.b16 %v323
  %v2316 = vunpack.c.l.b16 %v324
  %v2317 = vunpack.c.h.b16 %v324
  %v2318 = vunpack.c.l.b16 %v325
  %v2319 = vunpack.c.h.b16 %v325
  %v2320 = vunpack.c.l.b16 %v326
  %v2321 = vunpack.c.h.b16 %v326
  %v2322 = vunpack.c.l.b16 %v327
  %v2323 = vunpack.c.h.b16 %v327
  %v2324 = vunpack.c.l.b16 %v328
  %v2325 = vunpack.c.h.b16 %v328
  %v2326 = vunpack.c.l.b16 %v329
  %v2327 = vunpack.c.h.b16 %v329
  %v2328 = vunpack.c.l.b16 %v330
  %v2329 = vunpack.c.h.b16 %v330
  %v2330 = vunpack.c.l.b16 %v331
  %v2331 = vunpack.c.h.b16 %v331
  %v2332 = vunpack.c.l.b16 %v332
  %v2333 = vunpack.c.h.b16 %v332
  %v2334 = vunpack.c.l.b16 %v333
  %v2335 = vunpack.c.h.b16 %v333
  %v2336 = vunpack.c.l.b16 %v334
  %v2337 = vunpack.c.h.b16 %v334
  %v2338 = vunpack.c.l.b16 %v335
  %v2339 = vunpack.c.h.b16 %v335
  %v2340 = vunpack.c.l.b16 %v336
  %v2341 = vunpack.c.h.b16 %v336
  %v2342 = vunpack.c.l.b16 %v337
  %v2343 = vunpack.c.h.b16 %v337
  %v2344 = vunpack.c.l.b16 %v338
  %v2345 = vunpack.c.h.b16 %v338
  %v2346 = vunpack.c.l.b16 %v339
  %v2347 = vunpack.c.h.b16 %v339
  %v2348 = vunpack.c.l.b16 %v340
  %v2349 = vunpack.c.h.b16 %v340
  %v2350 = vunpack.c.l.b16 %v341
  %v2351 = vunpack.c.h.b16 %v341
  %v2352 = vunpack.c.l.b16 %v342
  %v2353 = vunpack.c.h.b16 %v342
  %v2354 = vunpack.c.l.b16 %v343
  %v2355 = vunpack.c.h.b16 %v343
  %v2356 = vunpack.c.l.b16 %v344
  %v2357 = vunpack.c.h.b16 %v344
  %v2358 = vunpack.c.l.b16 %v345
  %v2359 = vunpack.c.h.b16 %v345
  %v2360 = vunpack.c.l.b16 %v346
  %v2361 = vunpack.c.h.b16 %v346
  %v2362 = vunpack.c.l.b16 %v347
  %v2363 = vunpack.c.h.b16 %v347
  %v2364 = vunpack.c.l.b16 %v348
  %v2365 = vunpack.c.h.b16 %v348
  %v2366 = vunpack.c.l.b16 %v349
  %v2367 = vunpack.c.h.b16 %v349
  %v2368 = vunpack.c.l.b16 %v350
  %v2369 = vunpack.c.h.b16 %v350
  %v2370 = vunpack.c.l.b16 %v351
  %v2371 = vunpack.c.h.b16 %v351
  %v2372 = vunpack.c.l.b16 %v352
  %v2373 = vunpack.c.h.b16 %v352
  %v2374 = vunpack.c.l.b16 %v353
  %v2375 = vunpack.c.h.b16 %v353
  %v2376 = vunpack.c.l.b16 %v354
  %v2377 = vunpack.c.h.b16 %v354
  %v2378 = vunpack.c.l.b16 %v355
  %v2379 = vunpack.c.h.b16 %v355
  %v2380 = vunpack.c.l.b16 %v356
  %v2381 = vunpack.c.h.b16 %v356
  %v2382 = vunpack.c.l.b16 %v357
  %v2383 = vunpack.c.h.b16 %v357
  %v2384 = vunpack.c.l.b16 %v358
  %v2385 = vunpack.c.h.b16 %v358
  %v2386 = vunpack.c.l.b16 %v359
  %v2387 = vunpack.c.h.b16 %v359
  %v2388 = vunpack.c.l.b16 %v360
  %v2389 = vunpack.c.h.b16 %v360
  %v2390 = vunpack.c.l.b16 %v361
  %v2391 = vunpack.c.h.b16 %v361
  %v2392 = vunpack.c.l.b16 %v362
  %v2393 = vunpack.c.h.b16 %v362
  %v2394 = vunpack.c.l.b16 %v363
  %v2395 = vunpack.c.h.b16 %v363
  %v2396 = vunpack.c.l.b16 %v364
  %v2397 = vunpack.c.h.b16 %v364
  %v2398 = vunpack.c.l.b16 %v365
  %v2399 = vunpack.c.h.b16 %v365
  %v2400 = vunpack.c.l.b16 %v366
  %v2401 = vunpack.c.h.b16 %v366
  %v2402 = vunpack.c.l.b16 %v367
  %v2403 = vunpack.c.h.b16 %v367
  %v2404 = vunpack.c.l.b16 %v368
  %v2405 = vunpack.c.h.b16 %v368
  %v2406 = vunpack.c.l.b16 %v369
  %v2407 = vunpack.c.h.b16 %v369
  %v2408 = vunpack.c.l.b16 %v370
  %v2409 = vunpack.c.h.b16 %v370
  %v2410 = vunpack.c.l.b16 %v371
  %v2411 = vunpack.c.h.b16 %v371
  %v2412 = vunpack.c.l.b16 %v372
  %v2413 = vunpack.c.h.b16 %v372
  %v2414 = vunpack.c.l.b16 %v373
  %v2415 = vunpack.c.h.b16 %v373
  %v2416 = vunpack.c.l.b16 %v374
  %v2417 = vunpack.c.h.b16 %v374
  %v2418 = vunpack.c.l.b16 %v375
  %v2419 = vunpack.c.h.b16 %v375
  %v2420 = vunpack.c.l.b16 %v376
  %v2421 = vunpack.c.h.b16 %v376
  %v2422 = vunpack.c.l.b16 %v377
  %v2423 = vunpack.c.h.b16 %v377
  %v2424 = vunpack.c.l.b16 %v378
  %v2425 = vunpack.c.h.b16 %v378
  %v2426 = vunpack.c.l.b16 %v379
  %v2427 = vunpack.c.h.b16 %v379
  %v2428 = vunpack.c.l.b16 %v380
  %v2429 = vunpack.c.h.b16 %v380
  %v2430 = vunpack.c.l.b16 %v381
  %v2431 = vunpack.c.h.b16 %v381
  %v2432 = vunpack.c.l.b16 %v382
  %v2433 = vunpack.c.h.b16 %v382
  %v2434 = vunpack.c.l.b16 %v383
  %v2435 = vunpack.c.h.b16 %v383
  %v2436 = vunpack.c.l.b16 %v384
  %v2437 = vunpack.c.h.b16 %v384
  %v2438 = vunpack.c.l.b16 %v385
  %v2439 = vunpack.c.h.b16 %v385
  %v2440 = vunpack.c.l.b16 %v386
  %v2441 = vunpack.c.h.b16 %v386
  %v2442 = vunpack.c.l.b16 %v387
  %v2443 = vunpack.c.h.b16 %v387
  %v2444 = vunpack.c.l.b16 %v388
  %v2445 = vunpack.c.h.b16 %v388
  %v2446 = vunpack.c.l.b16 %v389
  %v2447 = vunpack.c.h.b16 %v389
  %v2448 = vunpack.c.l.b16 %v390
  %v2449 = vunpack.c.h.b16 %v390
  %v2450 = vunpack.c.l.b16 %v391
  %v2451 = vunpack.c.h.b16 %v391
  %v2452 = vunpack.c.l.b16 %v392
  %v2453 = vunpack.c.h.b16 %v392
  %v2454 = vunpack.c.l.b16 %v393
  %v2455 = vunpack.c.h.b16 %v393
  %v2456 = vunpack.c.l.b16 %v394
  %v2457 = vunpack.c.h.b16 %v394
  %v2458 = vunpack.c.l.b16 %v395
  %v2459 = vunpack.c.h.b16 %v395
  %v2460 = vunpack.c.l.b16 %v396
  %v2461 = vunpack.c.h.b16 %v396
  %v2462 = vunpack.c.l.b16 %v397
  %v2463 = vunpack.c.h.b16 %v397
  %v2464 = vunpack.c.l.b16 %v398
  %v2465 = vunpack.c.h.b16 %v398
  %v2466 = vunpack.c.l.b16 %v399
  %v2467 = vunpack.c.h.b16 %v399
  %v2468 = vunpack.c.l.b16 %v400
  %v2469 = vunpack.c.h.b16 %v400
  %v2470 = vunpack.c.l.b16 %v401
  %v2471 = vunpack.c.h.b16 %v401
  %v2472 = vunpack.c.l.b16 %v402
  %v2473 = vunpack.c.h.b16 %v402
  %v2474 = vunpack.c.l.b16 %v403
  %v2475 = vunpack.c.h.b16 %v403
  %v2476 = vunpack.c.l.b16 %v404
  %v2477 = vunpack.c.h.b16 %v404
  %v2478 = vunpack.c.l.b16 %v405
  %v2479 = vunpack.c.h.b16 %v405
  %v2480 = vunpack.c.l.b16 %v406
  %v2481 = vunpack.c.h.b16 %v406
  %v2482 = vunpack.c.l.b16 %v407
  %v2483 = vunpack.c.h.b16 %v407
  %v2484 = vunpack.c.l.b16 %v408
  %v2485 = vunpack.c.h.b16 %v408
  %v2486 = vunpack.c.l.b16 %v409
  %v2487 = vunpack.c.h.b16 %v409
  %v2488 = vunpack.c.l.b16 %v410
  %v2489 = vunpack.c.h.b16 %v410
  %v2490 = vunpack.c.l.b16 %v411
  %v2491 = vunpack.c.h.b16 %v411
  %v2492 = vunpack.c.l.b16 %v412
  %v2493 = vunpack.c.h.b16 %v412
  %v2494 = vunpack.c.l.b16 %v413
  %v2495 = vunpack.c.h.b16 %v413
  %v2496 = vunpack.c.l.b16 %v414
  %v2497 = vunpack.c.h.b16 %v414
  %v2498 = vunpack.c.l.b16 %v415
  %v2499 = vunpack.c.h.b16 %v415
  %v2500 = vunpack.c.l.b16 %v416
  %v2501 = vunpack.c.h.b16 %v416
  %v2502 = vunpack.c.l.b16 %v417
  %v2503 = vunpack.c.h.b16 %v417
  %v2504 = vunpack.c.l.b16 %v418
  %v2505 = vunpack.c.h.b16 %v418
  %v2506 = vunpack.c.l.b16 %v419
  %v2507 = vunpack.c.h.b16 %v419
  %v2508 = vunpack.c.l.b16 %v420
  %v2509 = vunpack.c.h.b16 %v420
  %v2510 = vunpack.c.l.b16 %v421
  %v2511 = vunpack.c.h.b16 %v421
  %v2512 = vunpack.c.l.b16 %v422
  %v2513 = vunpack.c.h.b16 %v422
  %v2514 = vunpack.c.l.b16 %v423
  %v2515 = vunpack.c.h.b16 %v423
  %v2516 = vunpack.c.l.b16 %v424
  %v2517 = vunpack.c.h.b16 %v424
  %v2518 = vunpack.c.l.b16 %v425
  %v2519 = vunpack.c.h.b16 %v425
  %v2520 = vunpack.c.l.b16 %v426
  %v2521 = vunpack.c.h.b16 %v426
  %v2522 = vunpack.c.l.b16 %v427
  %v2523 = vunpack.c.h.b16 %v427
  %v2524 = vunpack.c.l.b16 %v428
  %v2525 = vunpack.c.h.b16 %v428
  %v2526 = vunpack.c.l.b16 %v429
  %v2527 = vunpack.c.h.b16 %v429
  %v2528 = vunpack.c.l.b16 %v430
  %v2529 = vunpack.c.h.b16 %v430
  %v2530 = vunpack.c.l.b16 %v431
  %v2531 = vunpack.c.h.b16 %v431
  %v2532 = vunpack.c.l.b16 %v432
  %v2533 = vunpack.c.h.b16 %v432
  %v2534 = vunpack.c.l.b16 %v433
  %v2535 = vunpack.c.h.b16 %v433
  %v2536 = vunpack.c.l.b16 %v434
  %v2537 = vunpack.c.h.b16 %v434
  %v2538 = vunpack.c.l.b16 %v435
  %v2539 = vunpack.c.h.b16 %v435
  %v2540 = vunpack.c.l.b16 %v436
  %v2541 = vunpack.c.h.b16 %v436
  %v2542 = vunpack.c.l.b16 %v437
  %v2543 = vunpack.c.h.b16 %v437
  %v2544 = vunpack.c.l.b16 %v438
  %v2545 = vunpack.c.h.b16 %v438
  %v2546 = vunpack.c.l.b16 %v439
  %v2547 = vunpack.c.h.b16 %v439
  %v2548 = vunpack.c.l.b16 %v440
  %v2549 = vunpack.c.h.b16 %v440
  %v2550 = vunpack.c.l.b16 %v441
  %v2551 = vunpack.c.h.b16 %v441
  %v2552 = vunpack.c.l.b16 %v442
  %v2553 = vunpack.c.h.b16 %v442
  %v2554 = vunpack.c.l.b16 %v443
  %v2555 = vunpack.c.h.b16 %v443
  %v2556 = vunpack.c.l.b16 %v444
  %v2557 = vunpack.c.h.b16 %v444
  %v2558 = vunpack.c.l.b16 %v445
  %v2559 = vunpack.c.h.b16 %v445
  %v2560 = vunpack.c.l.b16 %v446
  %v2561 = vunpack.c.h.b16 %v446
  %v2562 = vunpack.c.l.b16 %v447
  %v2563 = vunpack.c.h.b16 %v447
  %v2564 = vunpack.c.l.b16 %v448
  %v2565 = vunpack.c.h.b16 %v448
  %v2566 = vunpack.c.l.b16 %v449
  %v2567 = vunpack.c.h.b16 %v449
  %v2568 = vunpack.c.l.b16 %v450
  %v2569 = vunpack.c.h.b16 %v450
  %v2570 = vunpack.c.l.b16 %v451
  %v2571 = vunpack.c.h.b16 %v451
  %v2572 = vunpack.c.l.b16 %v452
  %v2573 = vunpack.c.h.b16 %v452
  %v2574 = vunpack.c.l.b16 %v453
  %v2575 = vunpack.c.h.b16 %v453
  %v2576 = vunpack.c.l.b16 %v454
  %v2577 = vunpack.c.h.b16 %v454
  %v2578 = vunpack.c.l.b16 %v455
  %v2579 = vunpack.c.h.b16 %v455
  %v2580 = vunpack.c.l.b16 %v456
  %v2581 = vunpack.c.h.b16 %v456
  %v2582 = vunpack.c.l.b16 %v457
  %v2583 = vunpack.c.h.b16 %v457
  %v2584 = vunpack.c.l.b16 %v458
  %v2585 = vunpack.c.h.b16 %v458
  %v2586 = vunpack.c.l.b16 %v459
  %v2587 = vunpack.c.h.b16 %v459
  %v2588 = vunpack.c.l.b16 %v460
  %v2589 = vunpack.c.h.b16 %v460
  %v2590 = vunpack.c.l.b16 %v461
  %v2591 = vunpack.c.h.b16 %v461
  %v2592 = vunpack.c.l.b16 %v462
  %v2593 = vunpack.c.h.b16 %v462
  %v2594 = vunpack.c.l.b16 %v463
  %v2595 = vunpack.c.h.b16 %v463
  %v2596 = vunpack.c.l.b16 %v464
  %v2597 = vunpack.c.h.b16 %v464
  %v2598 = vunpack.c.l.b16 %v465
  %v2599 = vunpack.c.h.b16 %v465
  %v2600 = vunpack.c.l.b16 %v466
  %v2601 = vunpack.c.h.b16 %v466
  %v2602 = vunpack.c.l.b16 %v467
  %v2603 = vunpack.c.h.b16 %v467
  %v2604 = vunpack.c.l.b16 %v468
  %v2605 = vunpack.c.h.b16 %v468
  %v2606 = vunpack.c.l.b16 %v469
  %v2607 = vunpack.c.h.b16 %v469
  %v2608 = vunpack.c.l.b16 %v470
  %v2609 = vunpack.c.h.b16 %v470
  %v2610 = vunpack.c.l.b16 %v471
  %v2611 = vunpack.c.h.b16 %v471
  %v2612 = vunpack.c.l.b16 %v472
  %v2613 = vunpack.c.h.b16 %v472
  %v2614 = vunpack.c.l.b16 %v473
  %v2615 = vunpack.c.h.b16 %v473
  %v2616 = vunpack.c.l.b16 %v474
  %v2617 = vunpack.c.h.b16 %v474
  %v2618 = vunpack.c.l.b16 %v475
  %v2619 = vunpack.c.h.b16 %v475
  %v2620 = vunpack.c.l.b16 %v476
  %v2621 = vunpack.c.h.b16 %v476
  %v2622 = vunpack.c.l.b16 %v477
  %v2623 = vunpack.c.h.b16 %v477
  %v2624 = vunpack.c.l.b16 %v478
  %v2625 = vunpack.c.h.b16 %v478
  %v2626 = vunpack.c.l.b16 %v479
  %v2627 = vunpack.c.h.b16 %v479
  %v2628 = vunpack.c.l.b16 %v480
  %v2629 = vunpack.c.h.b16 %v480
  %v2630 = vunpack.c.l.b16 %v481
  %v2631 = vunpack.c.h.b16 %v481
  %v2632 = vunpack.c.l.b16 %v482
  %v2633 = vunpack.c.h.b16 %v482
  %v2634 = vunpack.c.l.b16 %v483
  %v2635 = vunpack.c.h.b16 %v483
  %v2636 = vunpack.c.l.b16 %v484
  %v2637 = vunpack.c.h.b16 %v484
  %v2638 = vunpack.c.l.b16 %v485
  %v2639 = vunpack.c.h.b16 %v485
  %v2640 = vunpack.c.l.b16 %v486
  %v2641 = vunpack.c.h.b16 %v486
  %v2642 = vunpack.c.l.b16 %v487
  %v2643 = vunpack.c.h.b16 %v487
  %v2644 = vunpack.c.l.b16 %v488
  %v2645 = vunpack.c.h.b16 %v488
  %v2646 = vunpack.c.l.b16 %v489
  %v2647 = vunpack.c.h.b16 %v489
  %v2648 = vunpack.c.l.b16 %v490
  %v2649 = vunpack.c.h.b16 %v490
  %v2650 = vunpack.c.l.b16 %v491
  %v2651 = vunpack.c.h.b16 %v491
  %v2652 = vunpack.c.l.b16 %v492
  %v2653 = vunpack.c.h.b16 %v492
  %v2654 = vunpack.c.l.b16 %v493
  %v2655 = vunpack.c.h.b16 %v493
  %v2656 = vunpack.c.l.b16 %v494
  %v2657 = vunpack.c.h.b16 %v494
  %v2658 = vunpack.c.l.b16 %v495
  %v2659 = vunpack.c.h.b16 %v495
  %v2660 = vunpack.c.l.b16 %v496
  %v2661 = vunpack.c.h.b16 %v496
  %v2662 = vunpack.c.l.b16 %v497
  %v2663 = vunpack.c.h.b16 %v497
  %v2664 = vunpack.c.l.b16 %v498
  %v2665 = vunpack.c.h.b16 %v498
  %v2666 = vunpack.c.l.b16 %v499
  %v2667 = vunpack.c.h.b16 %v499
  %v2668 = vunpack.c.l.b16 %v500
  %v2669 = vunpack.c.h.b16 %v500
  %v2670 = vunpack.c.l.b16 %v501
  %v2671 = vunpack.c.h.b16 %v501
  %v2672 = vunpack.c.l.b16 %v502
  %v2673 = vunpack.c.h.b16 %v502
  %v2674 = vunpack.c.l.b16 %v503
  %v2675 = vunpack.c.h.b16 %v503
  %v2676 = vunpack.c.l.b16 %v504
  %v2677 = vunpack.c.h.b16 %v504
  %v2678 = vunpack.c.l.b16 %v505
  %v2679 = vunpack.c.h.b16 %v505
  %v2680 = vunpack.c.l.b16 %v506
  %v2681 = vunpack.c.h.b16 %v506
  %v2682 = vunpack.c.l.b16 %v507
  %v2683 = vunpack.c.h.b16 %v507
  %v2684 = vunpack.c.l.b16 %v508
  %v2685 = vunpack.c.h.b16 %v508
  %v2686 = vunpack.c.l.b16 %v509
  %v2687 = vunpack.c.h.b16 %v509
  %v2688 = vunpack.c.l.b16 %v510
  %v2689 = vunpack.c.h.b16 %v510
  %v2690 = vunpack.c.l.b16 %v511
  %v2691 = vunpack.c.h.b16 %v511
  %v2692 = vunpack.c.l.b16 %v512
  %v2693 = vunpack.c.h.b16 %v512
  %v2694 = vunpack.c.l.b16 %v513
  %v2695 = vunpack.c.h.b16 %v513
  %v2696 = vunpack.c.l.b16 %v514
  %v2697 = vunpack.c.h.b16 %v514
  %v2698 = vunpack.c.l.b16 %v515
  %v2699 = vunpack.c.h.b16 %v515
  %v2700 = vunpack.c.l.b16 %v516
  %v2701 = vunpack.c.h.b16 %v516
  %v2702 = vunpack.c.l.b16 %v517
  %v2703 = vunpack.c.h.b16 %v517
  %v2704 = vunpack.c.l.b16 %v518
  %v2705 = vunpack.c.h.b16 %v518
  %v2706 = vunpack.c.l.b16 %v519
  %v2707 = vunpack.c.h.b16 %v519
  %v2708 = vunpack.c.l.b16 %v520
  %v2709 = vunpack.c.h.b16 %v520
  %v2710 = vunpack.c.l.b16 %v521
  %v2711 = vunpack.c.h.b16 %v521
  %v2712 = vunpack.c.l.b16 %v522
  %v2713 = vunpack.c.h.b16 %v522
  %v2714 = vunpack.c.l.b16 %v523
  %v2715 = vunpack.c.h.b16 %v523
  %v2716 = vunpack.c.l.b16 %v524
  %v2717 = vunpack.c.h.b16 %v524
  %v2718 = vunpack.c.l.b16 %v525
  %v2719 = vunpack.c.h.b16 %v525
  %v2720 = vunpack.c.l.b16 %v526
  %v2721 = vunpack.c.h.b16 %v526
  %v2722 = vunpack.c.l.b16 %v527
  %v2723 = vunpack.c.h.b16 %v527
  %v2724 = vunpack.c.l.b16 %v528
  %v2725 = vunpack.c.h.b16 %v528
  %v2726 = vunpack.c.l.b16 %v529
  %v2727 = vunpack.c.h.b16 %v529
  %v2728 = vunpack.c.l.b16 %v530
  %v2729 = vunpack.c.h.b16 %v530
  %v2730 = vunpack.c.l.b16 %v531
  %v2731 = vunpack.c.h.b16 %v531
  %v2732 = vunpack.c.l.b16 %v532
  %v2733 = vunpack.c.h.b16 %v532
  %v2734 = vunpack.c.l.b16 %v533
  %v2735 = vunpack.c.h.b16 %v533
  %v2736 = vunpack.c.l.b16 %v534
  %v2737 = vunpack.c.h.b16 %v534
  %v2738 = vunpack.c.l.b16 %v535
  %v2739 = vunpack.c.h.b16 %v535
  %v2740 = vunpack.c.l.b16 %v536
  %v2741 = vunpack.c.h.b16 %v536
  %v2742 = vunpack.c.l.b16 %v537
  %v2743 = vunpack.c.h.b16 %v537
  %v2744 = vunpack.c.l.b16 %v538
  %v2745 = vunpack.c.h.b16 %v538
  %v2746 = vunpack.c.l.b16 %v539
  %v2747 = vunpack.c.h.b16 %v539
  %v2748 = vunpack.c.l.b16 %v540
  %v2749 = vunpack.c.h.b16 %v540
  %v2750 = vunpack.c.l.b16 %v541
  %v2751 = vunpack.c.h.b16 %v541
  %v2752 = vunpack.c.l.b16 %v542
  %v2753 = vunpack.c.h.b16 %v542
  %v2754 = vunpack.c.l.b16 %v543
  %v2755 = vunpack.c.h.b16 %v543
  %v2756 = vunpack.c.l.b16 %v544
  %v2757 = vunpack.c.h.b16 %v544
  %v2758 = vunpack.c.l.b16 %v545
  %v2759 = vunpack.c.h.b16 %v545
  %v2760 = vunpack.c.l.b16 %v546
  %v2761 = vunpack.c.h.b16 %v546
  %v2762 = vunpack.c.l.b16 %v547
  %v2763 = vunpack.c.h.b16 %v547
  %v2764 = vunpack.c.l.b16 %v548
  %v2765 = vunpack.c.h.b16 %v548
  %v2766 = vunpack.c.l.b16 %v549
  %v2767 = vunpack.c.h.b16 %v549
  %v2768 = vunpack.c.l.b16 %v550
  %v2769 = vunpack.c.h.b16 %v550
  %v2770 = vunpack.c.l.b16 %v551
  %v2771 = vunpack.c.h.b16 %v551
  %v2772 = vunpack.c.l.b16 %v552
  %v2773 = vunpack.c.h.b16 %v552
  %v2774 = vunpack.c.l.b16 %v553
  %v2775 = vunpack.c.h.b16 %v553
  %v2776 = vunpack.c.l.b16 %v554
  %v2777 = vunpack.c.h.b16 %v554
  %v2778 = vunpack.c.l.b16 %v555
  %v2779 = vunpack.c.h.b16 %v555
  %v2780 = vunpack.c.l.b16 %v556
  %v2781 = vunpack.c.h.b16 %v556
  %v2782 = vunpack.c.l.b16 %v557
  %v2783 = vunpack.c.h.b16 %v557
  %v2784 = vunpack.c.l.b16 %v558
  %v2785 = vunpack.c.h.b16 %v558
  %v2786 = vunpack.c.l.b16 %v559
  %v2787 = vunpack.c.h.b16 %v559
  %v2788 = vunpack.c.l.b16 %v560
  %v2789 = vunpack.c.h.b16 %v560
  %v2790 = vunpack.c.l.b16 %v561
  %v2791 = vunpack.c.h.b16 %v561
  %v2792 = vunpack.c.l.b16 %v562
  %v2793 = vunpack.c.h.b16 %v562
  %v2794 = vunpack.c.l.b16 %v563
  %v2795 = vunpack.c.h.b16 %v563
  %v2796 = vunpack.c.l.b16 %v564
  %v2797 = vunpack.c.h.b16 %v564
  %v2798 = vunpack.c.l.b16 %v565
  %v2799 = vunpack.c.h.b16 %v565
  %v2800 = vunpack.c.l.b16 %v566
  %v2801 = vunpack.c.h.b16 %v566
  %v2802 = vunpack.c.l.b16 %v567
  %v2803 = vunpack.c.h.b16 %v567
  %v2804 = vunpack.c.l.b16 %v568
  %v2805 = vunpack.c.h.b16 %v568
  %v2806 = vunpack.c.l.b16 %v569
  %v2807 = vunpack.c.h.b16 %v569
  %v2808 = vunpack.c.l.b16 %v570
  %v2809 = vunpack.c.h.b16 %v570
  %v2810 = vunpack.c.l.b16 %v571
  %v2811 = vunpack.c.h.b16 %v571
  %v2812 = vunpack.c.l.b16 %v572
  %v2813 = vunpack.c.h.b16 %v572
  %v2814 = vunpack.c.l.b16 %v573
  %v2815 = vunpack.c.h.b16 %v573
  %v2816 = vunpack.c.l.b16 %v574
  %v2817 = vunpack.c.h.b16 %v574
  %v2818 = vunpack.c.l.b16 %v575
  %v2819 = vunpack.c.h.b16 %v575
  %v2820 = vunpack.c.l.b16 %v576
  %v2821 = vunpack.c.h.b16 %v576
  %v2822 = vunpack.c.l.b16 %v577
  %v2823 = vunpack.c.h.b16 %v577
  %v2824 = vunpack.c.l.b16 %v578
  %v2825 = vunpack.c.h.b16 %v578
  %v2826 = vunpack.c.l.b16 %v579
  %v2827 = vunpack.c.h.b16 %v579
  %v2828 = vunpack.c.l.b16 %v580
  %v2829 = vunpack.c.h.b16 %v580
  %v2830 = vunpack.c.l.b16 %v581
  %v2831 = vunpack.c.h.b16 %v581
  %v2832 = vunpack.c.l.b16 %v582
  %v2833 = vunpack.c.h.b16 %v582
  %v2834 = vunpack.c.l.b16 %v583
  %v2835 = vunpack.c.h.b16 %v583
  %v2836 = vunpack.c.l.b16 %v584
  %v2837 = vunpack.c.h.b16 %v584
  %v2838 = vunpack.c.l.b16 %v585
  %v2839 = vunpack.c.h.b16 %v585
  %v2840 = vunpack.c.l.b16 %v586
  %v2841 = vunpack.c.h.b16 %v586
  %v2842 = vunpack.c.l.b16 %v587
  %v2843 = vunpack.c.h.b16 %v587
  %v2844 = vunpack.c.l.b16 %v588
  %v2845 = vunpack.c.h.b16 %v588
  %v2846 = vunpack.c.l.b16 %v589
  %v2847 = vunpack.c.h.b16 %v589
  %v2848 = vunpack.c.l.b16 %v590
  %v2849 = vunpack.c.h.b16 %v590
  %v2850 = vunpack.c.l.b16 %v591
  %v2851 = vunpack.c.h.b16 %v591
  %v2852 = vunpack.c.l.b16 %v592
  %v2853 = vunpack.c.h.b16 %v592
  %v2854 = vunpack.c.l.b16 %v593
  %v2855 = vunpack.c.h.b16 %v593
  %v2856 = vunpack.c.l.b16 %v594
  %v2857 = vunpack.c.h.b16 %v594
  %v2858 = vunpack.c.l.b16 %v595
  %v2859 = vunpack.c.h.b16 %v595
  %v2860 = vunpack.c.l.b16 %v596
  %v2861 = vunpack.c.h.b16 %v596
  %v2862 = vunpack.c.l.b16 %v597
  %v2863 = vunpack.c.h.b16 %v597
  %v2864 = vunpack.c.l.b16 %v598
  %v2865 = vunpack.c.h.b16 %v598
  %v2866 = vunpack.c.l.b16 %v599
  %v2867 = vunpack.c.h.b16 %v599
  %v2868 = vunpack.c.l.b16 %v600
  %v2869 = vunpack.c.h.b16 %v600
  %v2870 = vunpack.c.l.b16 %v601
  %v2871 = vunpack.c.h.b16 %v601
  %v2872 = vunpack.c.l.b16 %v602
  %v2873 = vunpack.c.h.b16 %v602
  %v2874 = vunpack.c.l.b16 %v603
  %v2875 = vunpack.c.h.b16 %v603
  %v2876 = vunpack.c.l.b16 %v604
  %v2877 = vunpack.c.h.b16 %v604
  %v2878 = vunpack.c.l.b16 %v605
  %v2879 = vunpack.c.h.b16 %v605
  %v2880 = vunpack.c.l.b16 %v606
  %v2881 = vunpack.c.h.b16 %v606
  %v2882 = vunpack.c.l.b16 %v607
  %v2883 = vunpack.c.h.b16 %v607
  %v2884 = vunpack.c.l.b16 %v608
  %v2885 = vunpack.c.h.b16 %v608
  %v2886 = vunpack.c.l.b16 %v609
  %v2887 = vunpack.c.h.b16 %v609
  %v2888 = vunpack.c.l.b16 %v610
  %v2889 = vunpack.c.h.b16 %v610
  %v2890 = vunpack.c.l.b16 %v611
  %v2891 = vunpack.c.h.b16 %v611
  %v2892 = vunpack.c.l.b16 %v612
  %v2893 = vunpack.c.h.b16 %v612
  %v2894 = vunpack.c.l.b16 %v613
  %v2895 = vunpack.c.h.b16 %v613
  %v2896 = vunpack.c.l.b16 %v614
  %v2897 = vunpack.c.h.b16 %v614
  %v2898 = vunpack.c.l.b16 %v615
  %v2899 = vunpack.c.h.b16 %v615
  %v2900 = vunpack.c.l.b16 %v616
  %v2901 = vunpack.c.h.b16 %v616
  %v2902 = vunpack.c.l.b16 %v617
  %v2903 = vunpack.c.h.b16 %v617
  %v2904 = vunpack.c.l.b16 %v618
  %v2905 = vunpack.c.h.b16 %v618
  %v2906 = vunpack.c.l.b16 %v619
  %v2907 = vunpack.c.h.b16 %v619
  %v2908 = vunpack.c.l.b16 %v620
  %v2909 = vunpack.c.h.b16 %v620
  %v2910 = vunpack.c.l.b16 %v621
  %v2911 = vunpack.c.h.b16 %v621
  %v2912 = vunpack.c.l.b16 %v622
  %v2913 = vunpack.c.h.b16 %v622
  %v2914 = vunpack.c.l.b16 %v623
  %v2915 = vunpack.c.h.b16 %v623
  %v2916 = vunpack.c.l.b16 %v624
  %v2917 = vunpack.c.h.b16 %v624
  %v2918 = vunpack.c.l.b16 %v625
  %v2919 = vunpack.c.h.b16 %v625
  %v2920 = vunpack.c.l.b16 %v626
  %v2921 = vunpack.c.h.b16 %v626
  %v2922 = vunpack.c.l.b16 %v627
  %v2923 = vunpack.c.h.b16 %v627
  %v2924 = vunpack.c.l.b16 %v628
  %v2925 = vunpack.c.h.b16 %v628
  %v2926 = vunpack.c.l.b16 %v629
  %v2927 = vunpack.c.h.b16 %v629
  %v2928 = vunpack.c.l.b16 %v630
  %v2929 = vunpack.c.h.b16 %v630
  %v2930 = vunpack.c.l.b16 %v631
  %v2931 = vunpack.c.h.b16 %v631
  %v2932 = vunpack.c.l.b16 %v632
  %v2933 = vunpack.c.h.b16 %v632
  %v2934 = vunpack.c.l.b16 %v633
  %v2935 = vunpack.c.h.b16 %v633
  %v2936 = vunpack.c.l.b16 %v634
  %v2937 = vunpack.c.h.b16 %v634
  %v2938 = vunpack.c.l.b16 %v635
  %v2939 = vunpack.c.h.b16 %v635
  %v2940 = vunpack.c.l.b16 %v636
  %v2941 = vunpack.c.h.b16 %v636
  %v2942 = vunpack.c.l.b16 %v637
  %v2943 = vunpack.c.h.b16 %v637
  %v2944 = vunpack.c.l.b16 %v638
  %v2945 = vunpack.c.h.b16 %v638
  %v2946 = vunpack.c.l.b16 %v639
  %v2947 = vunpack.c.h.b16 %v639
  %v2948 = vunpack.c.l.b16 %v640
  %v2949 = vunpack.c.h.b16 %v640
  %v2950 = vunpack.c.l.b16 %v641
  %v2951 = vunpack.c.h.b16 %v641
  %v2952 = vunpack.c.l.b16 %v642
  %v2953 = vunpack.c.h.b16 %v642
  %v2954 = vunpack.c.l.b16 %v643
  %v2955 = vunpack.c.h.b16 %v643
  %v2956 = vunpack.c.l.b16 %v644
  %v2957 = vunpack.c.h.b16 %v644
  %v2958 = vunpack.c.l.b16 %v645
  %v2959 = vunpack.c.h.b16 %v645
  %v2960 = vunpack.c.l.b16 %v646
  %v2961 = vunpack.c.h.b16 %v646
  %v2962 = vunpack.c.l.b16 %v647
  %v2963 = vunpack.c.h.b16 %v647
  %v2964 = vunpack.c.l.b16 %v648
  %v2965 = vunpack.c.h.b16 %v648
  %v2966 = vunpack.c.l.b16 %v649
  %v2967 = vunpack.c.h.b16 %v649
  %v2968 = vunpack.c.l.b16 %v650
  %v2969 = vunpack.c.h.b16 %v650
  %v2970 = vunpack.c.l.b16 %v651
  %v2971 = vunpack.c.h.b16 %v651
  %v2972 = vunpack.c.l.b16 %v652
  %v2973 = vunpack.c.h.b16 %v652
  %v2974 = vunpack.c.l.b16 %v653
  %v2975 = vunpack.c.h.b16 %v653
  %v2976 = vunpack.c.l.b16 %v654
  %v2977 = vunpack.c.h.b16 %v654
  %v2978 = vunpack.c.l.b16 %v655
  %v2979 = vunpack.c.h.b16 %v655
  %v2980 = vunpack.c.l.b16 %v656
  %v2981 = vunpack.c.h.b16 %v656
  %v2982 = vunpack.c.l.b16 %v657
  %v2983 = vunpack.c.h.b16 %v657
  %v2984 = vunpack.c.l.b16 %v658
  %v2985 = vunpack.c.h.b16 %v658
  %v2986 = vunpack.c.l.b16 %v659
  %v2987 = vunpack.c.h.b16 %v659
  %v2988 = vunpack.c.l.b16 %v660
  %v2989 = vunpack.c.h.b16 %v660
  %v2990 = vunpack.c.l.b16 %v661
  %v2991 = vunpack.c.h.b16 %v661
  %v2992 = vunpack.c.l.b16 %v662
  %v2993 = vunpack.c.h.b16 %v662
  %v2994 = vunpack.c.l.b16 %v663
  %v2995 = vunpack.c.h.b16 %v663
  %v2996 = vunpack.c.l.b16 %v664
  %v2997 = vunpack.c.h.b16 %v664
  %v2998 = vunpack.c.l.b16 %v665
  %v2999 = vunpack.c.h.b16 %v665
  %v3000 = vunpack.c.l.b16 %v666
  %v3001 = vunpack.c.h.b16 %v666
  %v3002 = vunpack.c.l.b16 %v667
  %v3003 = vunpack.c.h.b16 %v667
  %v3004 = vunpack.c.l.b16 %v668
  %v3005 = vunpack.c.h.b16 %v668
  %v3006 = vunpack.c.l.b16 %v669
  %v3007 = vunpack.c.h.b16 %v669
  %v3008 = vunpack.c.l.b16 %v670
  %v3009 = vunpack.c.h.b16 %v670
  %v3010 = vunpack.c.l.b16 %v671
  %v3011 = vunpack.c.h.b16 %v671
  %v3012 = vunpack.c.l.b16 %v672
  %v3013 = vunpack.c.h.b16 %v672
  %v3014 = vunpack.c.l.b16 %v673
  %v3015 = vunpack.c.h.b16 %v673
  %v3016 = vunpack.c.l.b16 %v674
  %v3017 = vunpack.c.h.b16 %v674
  %v3018 = vunpack.c.l.b16 %v675
  %v3019 = vunpack.c.h.b16 %v675
  %v3020 = vunpack.c.l.b16 %v676
  %v3021 = vunpack.c.h.b16 %v676
  %v3022 = vunpack.c.l.b16 %v677
  %v3023 = vunpack.c.h.b16 %v677
  %v3024 = vunpack.c.l.b16 %v678
  %v3025 = vunpack.c.h.b16 %v678
  %v3026 = vunpack.c.l.b16 %v679
  %v3027 = vunpack.c.h.b16 %v679
  %v3028 = vunpack.c.l.b16 %v680
  %v3029 = vunpack.c.h.b16 %v680
  %v3030 = vunpack.c.l.b16 %v681
  %v3031 = vunpack.c.h.b16 %v681
  %v3032 = vunpack.c.l.b16 %v682
  %v3033 = vunpack.c.h.b16 %v682
  %v3034 = vunpack.c.l.b16 %v683
  %v3035 = vunpack.c.h.b16 %v683
  %v3036 = vunpack.c.l.b16 %v684
  %v3037 = vunpack.c.h.b16 %v684
  %v3038 = vunpack.c.l.b16 %v685
  %v3039 = vunpack.c.h.b16 %v685
  %v3040 = vunpack.c.l.b16 %v686
  %v3041 = vunpack.c.h.b16 %v686
  %v3042 = vunpack.c.l.b16 %v687
  %v3043 = vunpack.c.h.b16 %v687
  %v3044 = vunpack.c.l.b16 %v688
  %v3045 = vunpack.c.h.b16 %v688
  %v3046 = vunpack.c.l.b16 %v689
  %v3047 = vunpack.c.h.b16 %v689
  %v3048 = vunpack.c.l.b16 %v690
  %v3049 = vunpack.c.h.b16 %v690
  %v3050 = vunpack.c.l.b16 %v691
  %v3051 = vunpack.c.h.b16 %v691
  %v3052 = vunpack.c.l.b16 %v692
  %v3053 = vunpack.c.h.b16 %v692
  %v3054 = vunpack.c.l.b16 %v693
  %v3055 = vunpack.c.h.b16 %v693
  %v3056 = vunpack.c.l.b16 %v694
  %v3057 = vunpack.c.h.b16 %v694
  %v3058 = vunpack.c.l.b16 %v695
  %v3059 = vunpack.c.h.b16 %v695
  %v3060 = vunpack.c.l.b16 %v696
  %v3061 = vunpack.c.h.b16 %v696
  %v3062 = vunpack.c.l.b16 %v697
  %v3063 = vunpack.c.h.b16 %v697
  %v3064 = vunpack.c.l.b16 %v698
  %v3065 = vunpack.c.h.b16 %v698
  %v3066 = vunpack.c.l.b16 %v699
  %v3067 = vunpack.c.h.b16 %v699
  %v3068 = vunpack.c.l.b16 %v700
  %v3069 = vunpack.c.h.b16 %v700
  %v3070 = vunpack.c.l.b16 %v701
  %v3071 = vunpack.c.h.b16 %v701
  %v3072 = vunpack.c.l.b16 %v702
  %v3073 = vunpack.c.h.b16 %v702
  %v3074 = vunpack.c.l.b16 %v703
  %v3075 = vunpack.c.h.b16 %v703
  %v3076 = vunpack.c.l.b16 %v704
  %v3077 = vunpack.c.h.b16 %v704
  %v3078 = vunpack.c.l.b16 %v705
  %v3079 = vunpack.c.h.b16 %v705
  %v3080 = vunpack.c.l.b16 %v706
  %v3081 = vunpack.c.h.b16 %v706
  %v3082 = vunpack.c.l.b16 %v707
  %v3083 = vunpack.c.h.b16 %v707
  %v3084 = vunpack.c.l.b16 %v708
  %v3085 = vunpack.c.h.b16 %v708
  %v3086 = vunpack.c.l.b16 %v709
  %v3087 = vunpack.c.h.b16 %v709
  %v3088 = vunpack.c.l.b16 %v710
  %v3089 = vunpack.c.h.b16 %v710
  %v3090 = vunpack.c.l.b16 %v711
  %v3091 = vunpack.c.h.b16 %v711
  %v3092 = vunpack.c.l.b16 %v712
  %v3093 = vunpack.c.h.b16 %v712
  %v3094 = vunpack.c.l.b16 %v713
  %v3095 = vunpack.c.h.b16 %v713
  %v3096 = vunpack.c.l.b16 %v714
  %v3097 = vunpack.c.h.b16 %v714
  %v3098 = vunpack.c.l.b16 %v715
  %v3099 = vunpack.c.h.b16 %v715
  %v3100 = vunpack.c.l.b16 %v716
  %v3101 = vunpack.c.h.b16 %v716
  %v3102 = vunpack.c.l.b16 %v717
  %v3103 = vunpack.c.h.b16 %v717
  %v3104 = vunpack.c.l.b16 %v718
  %v3105 = vunpack.c.h.b16 %v718
  %v3106 = vunpack.c.l.b16 %v719
  %v3107 = vunpack.c.h.b16 %v719
  %v3108 = vunpack.c.l.b16 %v720
  %v3109 = vunpack.c.h.b16 %v720
  %v3110 = vunpack.c.l.b16 %v721
  %v3111 = vunpack.c.h.b16 %v721
  %v3112 = vunpack.c.l.b16 %v722
  %v3113 = vunpack.c.h.b16 %v722
  %v3114 = vunpack.c.l.b16 %v723
  %v3115 = vunpack.c.h.b16 %v723
  %v3116 = vunpack.c.l.b16 %v724
  %v3117 = vunpack.c.h.b16 %v724
  %v3118 = vunpack.c.l.b16 %v725
  %v3119 = vunpack.c.h.b16 %v725
  %v3120 = vunpack.c.l.b16 %v726
  %v3121 = vunpack.c.h.b16 %v726
  %v3122 = vunpack.c.l.b16 %v727
  %v3123 = vunpack.c.h.b16 %v727
  %v3124 = vunpack.c.l.b16 %v728
  %v3125 = vunpack.c.h.b16 %v728
  %v3126 = vunpack.c.l.b16 %v729
  %v3127 = vunpack.c.h.b16 %v729
  %v3128 = vunpack.c.l.b16 %v730
  %v3129 = vunpack.c.h.b16 %v730
  %v3130 = vunpack.c.l.b16 %v731
  %v3131 = vunpack.c.h.b16 %v731
  %v3132 = vunpack.c.l.b16 %v732
  %v3133 = vunpack.c.h.b16 %v732
  %v3134 = vunpack.c.l.b16 %v733
  %v3135 = vunpack.c.h.b16 %v733
  %v3136 = vunpack.c.l.b16 %v734
  %v3137 = vunpack.c.h.b16 %v734
  %v3138 = vunpack.c.l.b16 %v735
  %v3139 = vunpack.c.h.b16 %v735
  %v3140 = vunpack.c.l.b16 %v736
  %v3141 = vunpack.c.h.b16 %v736
  %v3142 = vunpack.c.l.b16 %v737
  %v3143 = vunpack.c.h.b16 %v737
  %v3144 = vunpack.c.l.b16 %v738
  %v3145 = vunpack.c.h.b16 %v738
  %v3146 = vunpack.c.l.b16 %v739
  %v3147 = vunpack.c.h.b16 %v739
  %v3148 = vunpack.c.l.b16 %v740
  %v3149 = vunpack.c.h.b16 %v740
  %v3150 = vunpack.c.l.b16 %v741
  %v3151 = vunpack.c.h.b16 %v741
  %v3152 = vunpack.c.l.b16 %v742
  %v3153 = vunpack.c.h.b16 %v742
  %v3154 = vunpack.c.l.b16 %v743
  %v3155 = vunpack.c.h.b16 %v743
  %v3156 = vunpack.c.l.b16 %v744
  %v3157 = vunpack.c.h.b16 %v744
  %v3158 = vunpack.c.l.b16 %v745
  %v3159 = vunpack.c.h.b16 %v745
  %v3160 = vunpack.c.l.b16 %v746
  %v3161 = vunpack.c.h.b16 %v746
  %v3162 = vunpack.c.l.b16 %v747
  %v3163 = vunpack.c.h.b16 %v747
  %v3164 = vunpack.c.l.b16 %v748
  %v3165 = vunpack.c.h.b16 %v748
  %v3166 = vunpack.c.l.b16 %v749
  %v3167 = vunpack.c.h.b16 %v749
  %v3168 = vunpack.c.l.b16 %v750
  %v3169 = vunpack.c.h.b16 %v750
  %v3170 = vunpack.c.l.b16 %v751
  %v3171 = vunpack.c.h.b16 %v751
  %v3172 = vunpack.c.l.b16 %v752
  %v3173 = vunpack.c.h.b16 %v752
  %v3174 = vunpack.c.l.b16 %v753
  %v3175 = vunpack.c.h.b16 %v753
  %v3176 = vunpack.c.l.b16 %v754
  %v3177 = vunpack.c.h.b16 %v754
  %v3178 = vunpack.c.l.b16 %v755
  %v3179 = vunpack.c.h.b16 %v755
  %v3180 = vunpack.c.l.b16 %v756
  %v3181 = vunpack.c.h.b16 %v756
  %v3182 = vunpack.c.l.b16 %v757
  %v3183 = vunpack.c.h.b16 %v757
  %v3184 = vunpack.c.l.b16 %v758
  %v3185 = vunpack.c.h.b16 %v758
  %v3186 = vunpack.c.l.b16 %v759
  %v3187 = vunpack.c.h.b16 %v759
  %v3188 = vunpack.c.l.b16 %v760
  %v3189 = vunpack.c.h.b16 %v760
  %v3190 = vunpack.c.l.b16 %v761
  %v3191 = vunpack.c.h.b16 %v761
  %v3192 = vunpack.c.l.b16 %v762
  %v3193 = vunpack.c.h.b16 %v762
  %v3194 = vunpack.c.l.b16 %v763
  %v3195 = vunpack.c.h.b16 %v763
  %v3196 = vunpack.c.l.b16 %v764
  %v3197 = vunpack.c.h.b16 %v764
  %v3198 = vunpack.c.l.b16 %v765
  %v3199 = vunpack.c.h.b16 %v765
  %v3200 = vunpack.c.l.b16 %v766
  %v3201 = vunpack.c.h.b16 %v766
  %v3202 = vunpack.c.l.b16 %v767
  %v3203 = vunpack.c.h.b16 %v767
  %v3204 = vunpack.c.l.b16 %v768
  %v3205 = vunpack.c.h.b16 %v768
  %v3206 = vunpack.c.l.b16 %v769
  %v3207 = vunpack.c.h.b16 %v769
  %v3208 = vunpack.c.l.b16 %v770
  %v3209 = vunpack.c.h.b16 %v770
  %v3210 = vunpack.c.l.b16 %v771
  %v3211 = vunpack.c.h.b16 %v771
  %v3212 = vunpack.c.l.b16 %v772
  %v3213 = vunpack.c.h.b16 %v772
  %v3214 = vunpack.c.l.b16 %v773
  %v3215 = vunpack.c.h.b16 %v773
  %v3216 = vunpack.c.l.b16 %v774
  %v3217 = vunpack.c.h.b16 %v774
  %v3218 = vunpack.c.l.b16 %v775
  %v3219 = vunpack.c.h.b16 %v775
  %v3220 = vunpack.c.l.b16 %v776
  %v3221 = vunpack.c.h.b16 %v776
  %v3222 = vunpack.c.l.b16 %v777
  %v3223 = vunpack.c.h.b16 %v777
  %v3224 = vunpack.c.l.b16 %v778
  %v3225 = vunpack.c.h.b16 %v778
  %v3226 = vunpack.c.l.b16 %v779
  %v3227 = vunpack.c.h.b16 %v779
  %v3228 = vunpack.c.l.b16 %v780
  %v3229 = vunpack.c.h.b16 %v780
  %v3230 = vunpack.c.l.b16 %v781
  %v3231 = vunpack.c.h.b16 %v781
  %v3232 = vunpack.c.l.b16 %v782
  %v3233 = vunpack.c.h.b16 %v782
  %v3234 = vunpack.c.l.b16 %v783
  %v3235 = vunpack.c.h.b16 %v783
  %v3236 = vunpack.c.l.b16 %v784
  %v3237 = vunpack.c.h.b16 %v784
  %v3238 = vunpack.c.l.b16 %v785
  %v3239 = vunpack.c.h.b16 %v785
  %v3240 = vunpack.c.l.b16 %v786
  %v3241 = vunpack.c.h.b16 %v786
  %v3242 = vunpack.c.l.b16 %v787
  %v3243 = vunpack.c.h.b16 %v787
  %v3244 = vunpack.c.l.b16 %v788
  %v3245 = vunpack.c.h.b16 %v788
  %v3246 = vunpack.c.l.b16 %v789
  %v3247 = vunpack.c.h.b16 %v789
  %v3248 = vunpack.c.l.b16 %v790
  %v3249 = vunpack.c.h.b16 %v790
  %v3250 = vunpack.c.l.b16 %v791
  %v3251 = vunpack.c.h.b16 %v791
  %v3252 = vunpack.c.l.b16 %v792
  %v3253 = vunpack.c.h.b16 %v792
  %v3254 = vunpack.c.l.b16 %v793
  %v3255 = vunpack.c.h.b16 %v793
  %v3256 = vunpack.c.l.b16 %v794
  %v3257 = vunpack.c.h.b16 %v794
  %v3258 = vunpack.c.l.b16 %v795
  %v3259 = vunpack.c.h.b16 %v795
  %v3260 = vunpack.c.l.b16 %v796
  %v3261 = vunpack.c.h.b16 %v796
  %v3262 = vunpack.c.l.b16 %v797
  %v3263 = vunpack.c.h.b16 %v797
  %v3264 = vunpack.c.l.b16 %v798
  %v3265 = vunpack.c.h.b16 %v798
  %v3266 = vunpack.c.l.b16 %v799
  %v3267 = vunpack.c.h.b16 %v799
  %v3268 = vunpack.c.l.b16 %v800
  %v3269 = vunpack.c.h.b16 %v800
  %v3270 = vunpack.c.l.b16 %v801
  %v3271 = vunpack.c.h.b16 %v801
  %v3272 = vunpack.c.l.b16 %v802
  %v3273 = vunpack.c.h.b16 %v802
  %v3274 = vunpack.c.l.b16 %v803
  %v3275 = vunpack.c.h.b16 %v803
  %v3276 = vunpack.c.l.b16 %v804
  %v3277 = vunpack.c.h.b16 %v804
  %v3278 = vunpack.c.l.b16 %v805
  %v3279 = vunpack.c.h.b16 %v805
  %v3280 = vunpack.c.l.b16 %v806
  %v3281 = vunpack.c.h.b16 %v806
  %v3282 = vunpack.c.l.b16 %v807
  %v3283 = vunpack.c.h.b16 %v807
  %v3284 = vunpack.c.l.b16 %v808
  %v3285 = vunpack.c.h.b16 %v808
  %v3286 = vunpack.c.l.b16 %v809
  %v3287 = vunpack.c.h.b16 %v809
  %v3288 = vunpack.c.l.b16 %v810
  %v3289 = vunpack.c.h.b16 %v810
  %v3290 = vunpack.c.l.b16 %v811
  %v3291 = vunpack.c.h.b16 %v811
  %v3292 = vunpack.c.l.b16 %v812
  %v3293 = vunpack.c.h.b16 %v812
  %v3294 = vunpack.c.l.b16 %v813
  %v3295 = vunpack.c.h.b16 %v813
  %v3296 = vunpack.c.l.b16 %v814
  %v3297 = vunpack.c.h.b16 %v814
  %v3298 = vunpack.c.l.b16 %v815
  %v3299 = vunpack.c.h.b16 %v815
  %v3300 = vunpack.c.l.b16 %v816
  %v3301 = vunpack.c.h.b16 %v816
  %v3302 = vunpack.c.l.b16 %v817
  %v3303 = vunpack.c.h.b16 %v817
  %v3304 = vunpack.c.l.b16 %v818
  %v3305 = vunpack.c.h.b16 %v818
  %v3306 = vunpack.c.l.b16 %v819
  %v3307 = vunpack.c.h.b16 %v819
  %v3308 = vunpack.c.l.b16 %v820
  %v3309 = vunpack.c.h.b16 %v820
  %v3310 = vunpack.c.l.b16 %v821
  %v3311 = vunpack.c.h.b16 %v821
  %v3312 = vunpack.c.l.b16 %v822
  %v3313 = vunpack.c.h.b16 %v822
  %v3314 = vunpack.c.l.b16 %v823
  %v3315 = vunpack.c.h.b16 %v823
  %v3316 = vunpack.c.l.b16 %v824
  %v3317 = vunpack.c.h.b16 %v824
  %v3318 = vunpack.c.l.b16 %v825
  %v3319 = vunpack.c.h.b16 %v825
  %v3320 = vunpack.c.l.b16 %v826
  %v3321 = vunpack.c.h.b16 %v826
  %v3322 = vunpack.c.l.b16 %v827
  %v3323 = vunpack.c.h.b16 %v827
  %v3324 = vunpack.c.l.b16 %v828
  %v3325 = vunpack.c.h.b16 %v828
  %v3326 = vunpack.c.l.b16 %v829
  %v3327 = vunpack.c.h.b16 %v829
  %v3328 = vunpack.c.l.b16 %v830
  %v3329 = vunpack.c.h.b16 %v830
  %v3330 = vpack.c.b16 %v1766, %v1762
  %v3331 = vpack.c.b16 %v1767, %v1763
  %v3332 = vpack.c.b16 %v1768, %v1764
  %v3333 = vpack.c.b16 %v1769, %v1765
  %v3334 = vpack.c.b16 %v1774, %v1770
  %v3335 = vpack.c.b16 %v1775, %v1771
  %v3336 = vpack.c.b16 %v1776, %v1772
  %v3337 = vpack.c.b16 %v1777, %v1773
  %v3338 = vpack.c.b16 %v1782, %v1778
  %v3339 = vpack.c.b16 %v1783, %v1779
  %v3340 = vpack.c.b16 %v1784, %v1780
  %v3341 = vpack.c.b16 %v1785, %v1781
  %v3342 = vpack.c.b16 %v1790, %v1786
  %v3343 = vpack.c.b16 %v1791, %v1787
  %v3344 = vpack.c.b16 %v1792, %v1788
  %v3345 = vpack.c.b16 %v1793, %v1789
  %v3346 = vpack.c.b16 %v1798, %v1794
  %v3347 = vpack.c.b16 %v1799, %v1795
  %v3348 = vpack.c.b16 %v1800, %v1796
  %v3349 = vpack.c.b16 %v1801, %v1797
  %v3350 = vpack.c.b16 %v1806, %v1802
  %v3351 = vpack.c.b16 %v1807, %v1803
  %v3352 = vpack.c.b16 %v1808, %v1804
  %v3353 = vpack.c.b16 %v1809, %v1805
  %v3354 = vpack.c.b16 %v1814, %v1810
  %v3355 = vpack.c.b16 %v1815, %v1811
  %v3356 = vpack.c.b16 %v1816, %v1812
  %v3357 = vpack.c.b16 %v1817, %v1813
  %v3358 = vpack.c.b16 %v1822, %v1818
  %v3359 = vpack.c.b16 %v1823, %v1819
  %v3360 = vpack.c.b16 %v1824, %v1820
  %v3361 = vpack.c.b16 %v1825, %v1821
  %v3362 = vpack.c.b16 %v1830, %v1826
  %v3363 = vpack.c.b16 %v1831, %v1827
  %v3364 = vpack.c.b16 %v1832, %v1828
  %v3365 = vpack.c.b16 %v1833, %v1829
  %v3366 = vpack.c.b16 %v1838, %v1834
  %v3367 = vpack.c.b16 %v1839, %v1835
  %v3368 = vpack.c.b16 %v1840, %v1836
  %v3369 = vpack.c.b16 %v1841, %v1837
  %v3370 = vpack.c.b16 %v1846, %v1842
  %v3371 = vpack.c.b16 %v1847, %v1843
  %v3372 = vpack.c.b16 %v1848, %v1844
  %v3373 = vpack.c.b16 %v1849, %v1845
  %v3374 = vpack.c.b16 %v1854, %v1850
  %v3375 = vpack.c.b16 %v1855, %v1851
  %v3376 = vpack.c.b16 %v1856, %v1852
  %v3377 = vpack.c.b16 %v1857, %v1853
  %v3378 = vpack.c.b16 %v1862, %v1858
  %v3379 = vpack.c.b16 %v1863, %v1859
  %v3380 = vpack.c.b16 %v1864, %v1860
  %v3381 = vpack.c.b16 %v1865, %v1861
  %v3382 = vpack.c.b16 %v1870, %v1866
  %v3383 = vpack.c.b16 %v1871, %v1867
  %v3384 = vpack.c.b16 %v1872, %v1868
  %v3385 = vpack.c.b16 %v1873, %v1869
  %v3386 = vpack.c.b16 %v1878, %v1874
  %v3387 = vpack.c.b16 %v1879, %v1875
  %v3388 = vpack.c.b16 %v1880, %v1876
  %v3389 = vpack.c.b16 %v1881, %v1877
  %v3390 = vpack.c.b16 %v1886, %v1882
  %v3391 = vpack.c.b16 %v1887, %v1883
  %v3392 = vpack.c.b16 %v1888, %v1884
  %v3393 = vpack.c.b16 %v1889, %v1885
  %v3394 = vpack.c.b16 %v1894, %v1890
  %v3395 = vpack.c.b16 %v1895, %v1891
  %v3396 = vpack.c.b16 %v1896, %v1892
  %v3397 = vpack.c.b16 %v1897, %v1893
  %v3398 = vpack.c.b16 %v1902, %v1898
  %v3399 = vpack.c.b16 %v1903, %v1899
  %v3400 = vpack.c.b16 %v1904, %v1900
  %v3401 = vpack.c.b16 %v1905, %v1901
  %v3402 = vpack.c.b16 %v1910, %v1906
  %v3403 = vpack.c.b16 %v1911, %v1907
  %v3404 = vpack.c.b16 %v1912, %v1908
  %v3405 = vpack.c.b16 %v1913, %v1909
  %v3406 = vpack.c.b16 %v1918, %v1914
  %v3407 = vpack.c.b16 %v1919, %v1915
  %v3408 = vpack.c.b16 %v1920, %v1916
  %v3409 = vpack.c.b16 %v1921, %v1917
  %v3410 = vpack.c.b16 %v1926, %v1922
  %v3411 = vpack.c.b16 %v1927, %v1923
  %v3412 = vpack.c.b16 %v1928, %v1924
  %v3413 = vpack.c.b16 %v1929, %v1925
  %v3414 = vpack.c.b16 %v1934, %v1930
  %v3415 = vpack.c.b16 %v1935, %v1931
  %v3416 = vpack.c.b16 %v1936, %v1932
  %v3417 = vpack.c.b16 %v1937, %v1933
  %v3418 = vpack.c.b16 %v1942, %v1938
  %v3419 = vpack.c.b16 %v1943, %v1939
  %v3420 = vpack.c.b16 %v1944, %v1940
  %v3421 = vpack.c.b16 %v1945, %v1941
  %v3422 = vpack.c.b16 %v1950, %v1946
  %v3423 = vpack.c.b16 %v1951, %v1947
  %v3424 = vpack.c.b16 %v1952, %v1948
  %v3425 = vpack.c.b16 %v1953, %v1949
  %v3426 = vpack.c.b16 %v1958, %v1954
  %v3427 = vpack.c.b16 %v1959, %v1955
  %v3428 = vpack.c.b16 %v1960, %v1956
  %v3429 = vpack.c.b16 %v1961, %v1957
  %v3430 = vpack.c.b16 %v1966, %v1962
  %v3431 = vpack.c.b16 %v1967, %v1963
  %v3432 = vpack.c.b16 %v1968, %v1964
  %v3433 = vpack.c.b16 %v1969, %v1965
  %v3434 = vpack.c.b16 %v1974, %v1970
  %v3435 = vpack.c.b16 %v1975, %v1971
  %v3436 = vpack.c.b16 %v1976, %v1972
  %v3437 = vpack.c.b16 %v1977, %v1973
  %v3438 = vpack.c.b16 %v1982, %v1978
  %v3439 = vpack.c.b16 %v1983, %v1979
  %v3440 = vpack.c.b16 %v1984, %v1980
  %v3441 = vpack.c.b16 %v1985, %v1981
  %v3442 = vpack.c.b16 %v1990, %v1986
  %v3443 = vpack.c.b16 %v1991, %v1987
  %v3444 = vpack.c.b16 %v1992, %v1988
  %v3445 = vpack.c.b16 %v1993, %v1989
  %v3446 = vpack.c.b16 %v1998, %v1994
  %v3447 = vpack.c.b16 %v1999, %v1995
  %v3448 = vpack.c.b16 %v2000, %v1996
  %v3449 = vpack.c.b16 %v2001, %v1997
  %v3450 = vpack.c.b16 %v2006, %v2002
  %v3451 = vpack.c.b16 %v2007, %v2003
  %v3452 = vpack.c.b16 %v2008, %v2004
  %v3453 = vpack.c.b16 %v2009, %v2005
  %v3454 = vpack.c.b16 %v2014, %v2010
  %v3455 = vpack.c.b16 %v2015, %v2011
  %v3456 = vpack.c.b16 %v2016, %v2012
  %v3457 = vpack.c.b16 %v2017, %v2013
  %v3458 = vpack.c.b16 %v2022, %v2018
  %v3459 = vpack.c.b16 %v2023, %v2019
  %v3460 = vpack.c.b16 %v2024, %v2020
  %v3461 = vpack.c.b16 %v2025, %v2021
  %v3462 = vpack.c.b16 %v2030, %v2026
  %v3463 = vpack.c.b16 %v2031, %v2027
  %v3464 = vpack.c.b16 %v2032, %v2028
  %v3465 = vpack.c.b16 %v2033, %v2029
  %v3466 = vpack.c.b16 %v2038, %v2034
  %v3467 = vpack.c.b16 %v2039, %v2035
  %v3468 = vpack.c.b16 %v2040, %v2036
  %v3469 = vpack.c.b16 %v2041, %v2037
  %v3470 = vpack.c.b16 %v2046, %v2042
  %v3471 = vpack.c.b16 %v2047, %v2043
  %v3472 = vpack.c.b16 %v2048, %v2044
  %v3473 = vpack.c.b16 %v2049, %v2045
  %v3474 = vpack.c.b16 %v2054, %v2050
  %v3475 = vpack.c.b16 %v2055, %v2051
  %v3476 = vpack.c.b16 %v2056, %v2052
  %v3477 = vpack.c.b16 %v2057, %v2053
  %v3478 = vpack.c.b16 %v2062, %v2058
  %v3479 = vpack.c.b16 %v2063, %v2059
  %v3480 = vpack.c.b16 %v2064, %v2060
  %v3481 = vpack.c.b16 %v2065, %v2061
  %v3482 = vpack.c.b16 %v2070, %v2066
  %v3483 = vpack.c.b16 %v2071, %v2067
  %v3484 = vpack.c.b16 %v2072, %v2068
  %v3485 = vpack.c.b16 %v2073, %v2069
  %v3486 = vpack.c.b16 %v2078, %v2074
  %v3487 = vpack.c.b16 %v2079, %v2075
  %v3488 = vpack.c.b16 %v2080, %v2076
  %v3489 = vpack.c.b16 %v2081, %v2077
  %v3490 = vpack.c.b16 %v2086, %v2082
  %v3491 = vpack.c.b16 %v2087, %v2083
  %v3492 = vpack.c.b16 %v2088, %v2084
  %v3493 = vpack.c.b16 %v2089, %v2085
  %v3494 = vpack.c.b16 %v2094, %v2090
  %v3495 = vpack.c.b16 %v2095, %v2091
  %v3496 = vpack.c.b16 %v2096, %v2092
  %v3497 = vpack.c.b16 %v2097, %v2093
  %v3498 = vpack.c.b16 %v2102, %v2098
  %v3499 = vpack.c.b16 %v2103, %v2099
  %v3500 = vpack.c.b16 %v2104, %v2100
  %v3501 = vpack.c.b16 %v2105, %v2101
  %v3502 = vpack.c.b16 %v2110, %v2106
  %v3503 = vpack.c.b16 %v2111, %v2107
  %v3504 = vpack.c.b16 %v2112, %v2108
  %v3505 = vpack.c.b16 %v2113, %v2109
  %v3506 = vpack.c.b16 %v2118, %v2114
  %v3507 = vpack.c.b16 %v2119, %v2115
  %v3508 = vpack.c.b16 %v2120, %v2116
  %v3509 = vpack.c.b16 %v2121, %v2117
  %v3510 = vpack.c.b16 %v2126, %v2122
  %v3511 = vpack.c.b16 %v2127, %v2123
  %v3512 = vpack.c.b16 %v2128, %v2124
  %v3513 = vpack.c.b16 %v2129, %v2125
  %v3514 = vpack.c.b16 %v2134, %v2130
  %v3515 = vpack.c.b16 %v2135, %v2131
  %v3516 = vpack.c.b16 %v2136, %v2132
  %v3517 = vpack.c.b16 %v2137, %v2133
  %v3518 = vpack.c.b16 %v2142, %v2138
  %v3519 = vpack.c.b16 %v2143, %v2139
  %v3520 = vpack.c.b16 %v2144, %v2140
  %v3521 = vpack.c.b16 %v2145, %v2141
  %v3522 = vpack.c.b16 %v2150, %v2146
  %v3523 = vpack.c.b16 %v2151, %v2147
  %v3524 = vpack.c.b16 %v2152, %v2148
  %v3525 = vpack.c.b16 %v2153, %v2149
  %v3526 = vpack.c.b16 %v2158, %v2154
  %v3527 = vpack.c.b16 %v2159, %v2155
  %v3528 = vpack.c.b16 %v2160, %v2156
  %v3529 = vpack.c.b16 %v2161, %v2157
  %v3530 = vpack.c.b16 %v2166, %v2162
  %v3531 = vpack.c.b16 %v2167, %v2163
  %v3532 = vpack.c.b16 %v2168, %v2164
  %v3533 = vpack.c.b16 %v2169, %v2165
  %v3534 = vpack.c.b16 %v2174, %v2170
  %v3535 = vpack.c.b16 %v2175, %v2171
  %v3536 = vpack.c.b16 %v2176, %v2172
  %v3537 = vpack.c.b16 %v2177, %v2173
  %v3538 = vpack.c.b16 %v2182, %v2178
  %v3539 = vpack.c.b16 %v2183, %v2179
  %v3540 = vpack.c.b16 %v2184, %v2180
  %v3541 = vpack.c.b16 %v2185, %v2181
  %v3542 = vpack.c.b16 %v2190, %v2186
  %v3543 = vpack.c.b16 %v2191, %v2187
  %v3544 = vpack.c.b16 %v2192, %v2188
  %v3545 = vpack.c.b16 %v2193, %v2189
  %v3546 = vpack.c.b16 %v2198, %v2194
  %v3547 = vpack.c.b16 %v2199, %v2195
  %v3548 = vpack.c.b16 %v2200, %v2196
  %v3549 = vpack.c.b16 %v2201, %v2197
  %v3550 = vpack.c.b16 %v2206, %v2202
  %v3551 = vpack.c.b16 %v2207, %v2203
  %v3552 = vpack.c.b16 %v2208, %v2204
  %v3553 = vpack.c.b16 %v2209, %v2205
  %v3554 = vpack.c.b16 %v2214, %v2210
  %v3555 = vpack.c.b16 %v2215, %v2211
  %v3556 = vpack.c.b16 %v2216, %v2212
  %v3557 = vpack.c.b16 %v2217, %v2213
  %v3558 = vpack.c.b16 %v2222, %v2218
  %v3559 = vpack.c.b16 %v2223, %v2219
  %v3560 = vpack.c.b16 %v2224, %v2220
  %v3561 = vpack.c.b16 %v2225, %v2221
  %v3562 = vpack.c.b16 %v2230, %v2226
  %v3563 = vpack.c.b16 %v2231, %v2227
  %v3564 = vpack.c.b16 %v2232, %v2228
  %v3565 = vpack.c.b16 %v2233, %v2229
  %v3566 = vpack.c.b16 %v2238, %v2234
  %v3567 = vpack.c.b16 %v2239, %v2235
  %v3568 = vpack.c.b16 %v2240, %v2236
  %v3569 = vpack.c.b16 %v2241, %v2237
  %v3570 = vpack.c.b16 %v2246, %v2242
  %v3571 = vpack.c.b16 %v2247, %v2243
  %v3572 = vpack.c.b16 %v2248, %v2244
  %v3573 = vpack.c.b16 %v2249, %v2245
  %v3574 = vpack.c.b16 %v2254, %v2250
  %v3575 = vpack.c.b16 %v2255, %v2251
  %v3576 = vpack.c.b16 %v2256, %v2252
  %v3577 = vpack.c.b16 %v2257, %v2253
  %v3578 = vpack.c.b16 %v2262, %v2258
  %v3579 = vpack.c.b16 %v2263, %v2259
  %v3580 = vpack.c.b16 %v2264, %v2260
  %v3581 = vpack.c.b16 %v2265, %v2261
  %v3582 = vpack.c.b16 %v2270, %v2266
  %v3583 = vpack.c.b16 %v2271, %v2267
  %v3584 = vpack.c.b16 %v2272, %v2268
  %v3585 = vpack.c.b16 %v2273, %v2269
  %v3586 = vpack.c.b16 %v2278, %v2274
  %v3587 = vpack.c.b16 %v2279, %v2275
  %v3588 = vpack.c.b16 %v2280, %v2276
  %v3589 = vpack.c.b16 %v2281, %v2277
  %v3590 = vpack.c.b16 %v2286, %v2282
  %v3591 = vpack.c.b16 %v2287, %v2283
  %v3592 = vpack.c.b16 %v2288, %v2284
  %v3593 = vpack.c.b16 %v2289, %v2285
  %v3594 = vpack.c.b16 %v2294, %v2290
  %v3595 = vpack.c.b16 %v2295, %v2291
  %v3596 = vpack.c.b16 %v2296, %v2292
  %v3597 = vpack.c.b16 %v2297, %v2293
  %v3598 = vpack.c.b16 %v2302, %v2298
  %v3599 = vpack.c.b16 %v2303, %v2299
  %v3600 = vpack.c.b16 %v2304, %v2300
  %v3601 = vpack.c.b16 %v2305, %v2301
  %v3602 = vpack.c.b16 %v2310, %v2306
  %v3603 = vpack.c.b16 %v2311, %v2307
  %v3604 = vpack.c.b16 %v2312, %v2308
  %v3605 = vpack.c.b16 %v2313, %v2309
  %v3606 = vpack.c.b16 %v2318, %v2314
  %v3607 = vpack.c.b16 %v2319, %v2315
  %v3608 = vpack.c.b16 %v2320, %v2316
  %v3609 = vpack.c.b16 %v2321, %v2317
  %v3610 = vpack.c.b16 %v2326, %v2322
  %v3611 = vpack.c.b16 %v2327, %v2323
  %v3612 = vpack.c.b16 %v2328, %v2324
  %v3613 = vpack.c.b16 %v2329, %v2325
  %v3614 = vpack.c.b16 %v2334, %v2330
  %v3615 = vpack.c.b16 %v2335, %v2331
  %v3616 = vpack.c.b16 %v2336, %v2332
  %v3617 = vpack.c.b16 %v2337, %v2333
  %v3618 = vpack.c.b16 %v2342, %v2338
  %v3619 = vpack.c.b16 %v2343, %v2339
  %v3620 = vpack.c.b16 %v2344, %v2340
  %v3621 = vpack.c.b16 %v2345, %v2341
  %v3622 = vpack.c.b16 %v2350, %v2346
  %v3623 = vpack.c.b16 %v2351, %v2347
  %v3624 = vpack.c.b16 %v2352, %v2348
  %v3625 = vpack.c.b16 %v2353, %v2349
  %v3626 = vpack.c.b16 %v2358, %v2354
  %v3627 = vpack.c.b16 %v2359, %v2355
  %v3628 = vpack.c.b16 %v2360, %v2356
  %v3629 = vpack.c.b16 %v2361, %v2357
  %v3630 = vpack.c.b16 %v2366, %v2362
  %v3631 = vpack.c.b16 %v2367, %v2363
  %v3632 = vpack.c.b16 %v2368, %v2364
  %v3633 = vpack.c.b16 %v2369, %v2365
  %v3634 = vpack.c.b16 %v2374, %v2370
  %v3635 = vpack.c.b16 %v2375, %v2371
  %v3636 = vpack.c.b16 %v2376, %v2372
  %v3637 = vpack.c.b16 %v2377, %v2373
  %v3638 = vpack.c.b16 %v2382, %v2378
  %v3639 = vpack.c.b16 %v2383, %v2379
  %v3640 = vpack.c.b16 %v2384, %v2380
  %v3641 = vpack.c.b16 %v2385, %v2381
  %v3642 = vpack.c.b16 %v2390, %v2386
  %v3643 = vpack.c.b16 %v2391, %v2387
  %v3644 = vpack.c.b16 %v2392, %v2388
  %v3645 = vpack.c.b16 %v2393, %v2389
  %v3646 = vpack.c.b16 %v2398, %v2394
  %v3647 = vpack.c.b16 %v2399, %v2395
  %v3648 = vpack.c.b16 %v2400, %v2396
  %v3649 = vpack.c.b16 %v2401, %v2397
  %v3650 = vpack.c.b16 %v2406, %v2402
  %v3651 = vpack.c.b16 %v2407, %v2403
  %v3652 = vpack.c.b16 %v2408, %v2404
  %v3653 = vpack.c.b16 %v2409, %v2405
  %v3654 = vpack.c.b16 %v2414, %v2410
  %v3655 = vpack.c.b16 %v2415, %v2411
  %v3656 = vpack.c.b16 %v2416, %v2412
  %v3657 = vpack.c.b16 %v2417, %v2413
  %v3658 = vpack.c.b16 %v2422, %v2418
  %v3659 = vpack.c.b16 %v2423, %v2419
  %v3660 = vpack.c.b16 %v2424, %v2420
  %v3661 = vpack.c.b16 %v2425, %v2421
  %v3662 = vpack.c.b16 %v2430, %v2426
  %v3663 = vpack.c.b16 %v2431, %v2427
  %v3664 = vpack.c.b16 %v2432, %v2428
  %v3665 = vpack.c.b16 %v2433, %v2429
  %v3666 = vpack.c.b16 %v2438, %v2434
  %v3667 = vpack.c.b16 %v2439, %v2435
  %v3668 = vpack.c.b16 %v2440, %v2436
  %v3669 = vpack.c.b16 %v2441, %v2437
  %v3670 = vpack.c.b16 %v2446, %v2442
  %v3671 = vpack.c.b16 %v2447, %v2443
  %v3672 = vpack.c.b16 %v2448, %v2444
  %v3673 = vpack.c.b16 %v2449, %v2445
  %v3674 = vpack.c.b16 %v2454, %v2450
  %v3675 = vpack.c.b16 %v2455, %v2451
  %v3676 = vpack.c.b16 %v2456, %v2452
  %v3677 = vpack.c.b16 %v2457, %v2453
  %v3678 = vpack.c.b16 %v2462, %v2458
  %v3679 = vpack.c.b16 %v2463, %v2459
  %v3680 = vpack.c.b16 %v2464, %v2460
  %v3681 = vpack.c.b16 %v2465, %v2461
  %v3682 = vpack.c.b16 %v2470, %v2466
  %v3683 = vpack.c.b16 %v2471, %v2467
  %v3684 = vpack.c.b16 %v2472, %v2468
  %v3685 = vpack.c.b16 %v2473, %v2469
  %v3686 = vpack.c.b16 %v2478, %v2474
  %v3687 = vpack.c.b16 %v2479, %v2475
  %v3688 = vpack.c.b16 %v2480, %v2476
  %v3689 = vpack.c.b16 %v2481, %v2477
  %v3690 = vpack.c.b16 %v2486, %v2482
  %v3691 = vpack.c.b16 %v2487, %v2483
  %v3692 = vpack.c.b16 %v2488, %v2484
  %v3693 = vpack.c.b16 %v2489, %v2485
  %v3694 = vpack.c.b16 %v2494, %v2490
  %v3695 = vpack.c.b16 %v2495, %v2491
  %v3696 = vpack.c.b16 %v2496, %v2492
  %v3697 = vpack.c.b16 %v2497, %v2493
  %v3698 = vpack.c.b16 %v2502, %v2498
  %v3699 = vpack.c.b16 %v2503, %v2499
  %v3700 = vpack.c.b16 %v2504, %v2500
  %v3701 = vpack.c.b16 %v2505, %v2501
  %v3702 = vpack.c.b16 %v2510, %v2506
  %v3703 = vpack.c.b16 %v2511, %v2507
  %v3704 = vpack.c.b16 %v2512, %v2508
  %v3705 = vpack.c.b16 %v2513, %v2509
  %v3706 = vpack.c.b16 %v2518, %v2514
  %v3707 = vpack.c.b16 %v2519, %v2515
  %v3708 = vpack.c.b16 %v2520, %v2516
  %v3709 = vpack.c.b16 %v2521, %v2517
  %v3710 = vpack.c.b16 %v2526, %v2522
  %v3711 = vpack.c.b16 %v2527, %v2523
  %v3712 = vpack.c.b16 %v2528, %v2524
  %v3713 = vpack.c.b16 %v2529, %v2525
  %v3714 = vpack.c.b16 %v2534, %v2530
  %v3715 = vpack.c.b16 %v2535, %v2531
  %v3716 = vpack.c.b16 %v2536, %v2532
  %v3717 = vpack.c.b16 %v2537, %v2533
  %v3718 = vpack.c.b16 %v2542, %v2538
  %v3719 = vpack.c.b16 %v2543, %v2539
  %v3720 = vpack.c.b16 %v2544, %v2540
  %v3721 = vpack.c.b16 %v2545, %v2541
  %v3722 = vpack.c.b16 %v2550, %v2546
  %v3723 = vpack.c.b16 %v2551, %v2547
  %v3724 = vpack.c.b16 %v2552, %v2548
  %v3725 = vpack.c.b16 %v2553, %v2549
  %v3726 = vpack.c.b16 %v2558, %v2554
  %v3727 = vpack.c.b16 %v2559, %v2555
  %v3728 = vpack.c.b16 %v2560, %v2556
  %v3729 = vpack.c.b16 %v2561, %v2557
  %v3730 = vpack.c.b16 %v2566, %v2562
  %v3731 = vpack.c.b16 %v2567, %v2563
  %v3732 = vpack.c.b16 %v2568, %v2564
  %v3733 = vpack.c.b16 %v2569, %v2565
  %v3734 = vpack.c.b16 %v2574, %v2570
  %v3735 = vpack.c.b16 %v2575, %v2571
  %v3736 = vpack.c.b16 %v2576, %v2572
  %v3737 = vpack.c.b16 %v2577, %v2573
  %v3738 = vpack.c.b16 %v2582, %v2578
  %v3739 = vpack.c.b16 %v2583, %v2579
  %v3740 = vpack.c.b16 %v2584, %v2580
  %v3741 = vpack.c.b16 %v2585, %v2581
  %v3742 = vpack.c.b16 %v2590, %v2586
  %v3743 = vpack.c.b16 %v2591, %v2587
  %v3744 = vpack.c.b16 %v2592, %v2588
  %v3745 = vpack.c.b16 %v2593, %v2589
  %v3746 = vpack.c.b16 %v2598, %v2594
  %v3747 = vpack.c.b16 %v2599, %v2595
  %v3748 = vpack.c.b16 %v2600, %v2596
  %v3749 = vpack.c.b16 %v2601, %v2597
  %v3750 = vpack.c.b16 %v2606, %v2602
  %v3751 = vpack.c.b16 %v2607, %v2603
  %v3752 = vpack.c.b16 %v2608, %v2604
  %v3753 = vpack.c.b16 %v2609, %v2605
  %v3754 = vpack.c.b16 %v2614, %v2610
  %v3755 = vpack.c.b16 %v2615, %v2611
  %v3756 = vpack.c.b16 %v2616, %v2612
  %v3757 = vpack.c.b16 %v2617, %v2613
  %v3758 = vpack.c.b16 %v2622, %v2618
  %v3759 = vpack.c.b16 %v2623, %v2619
  %v3760 = vpack.c.b16 %v2624, %v2620
  %v3761 = vpack.c.b16 %v2625, %v2621
  %v3762 = vpack.c.b16 %v2630, %v2626
  %v3763 = vpack.c.b16 %v2631, %v2627
  %v3764 = vpack.c.b16 %v2632, %v2628
  %v3765 = vpack.c.b16 %v2633, %v2629
  %v3766 = vpack.c.b16 %v2638, %v2634
  %v3767 = vpack.c.b16 %v2639, %v2635
  %v3768 = vpack.c.b16 %v2640, %v2636
  %v3769 = vpack.c.b16 %v2641, %v2637
  %v3770 = vpack.c.b16 %v2646, %v2642
  %v3771 = vpack.c.b16 %v2647, %v2643
  %v3772 = vpack.c.b16 %v2648, %v2644
  %v3773 = vpack.c.b16 %v2649, %v2645
  %v3774 = vpack.c.b16 %v2654, %v2650
  %v3775 = vpack.c.b16 %v2655, %v2651
  %v3776 = vpack.c.b16 %v2656, %v2652
  %v3777 = vpack.c.b16 %v2657, %v2653
  %v3778 = vpack.c.b16 %v2662, %v2658
  %v3779 = vpack.c.b16 %v2663, %v2659
  %v3780 = vpack.c.b16 %v2664, %v2660
  %v3781 = vpack.c.b16 %v2665, %v2661
  %v3782 = vpack.c.b16 %v2670, %v2666
  %v3783 = vpack.c.b16 %v2671, %v2667
  %v3784 = vpack.c.b16 %v2672, %v2668
  %v3785 = vpack.c.b16 %v2673, %v2669
  %v3786 = vpack.c.b16 %v2678, %v2674
  %v3787 = vpack.c.b16 %v2679, %v2675
  %v3788 = vpack.c.b16 %v2680, %v2676
  %v3789 = vpack.c.b16 %v2681, %v2677
  %v3790 = vpack.c.b16 %v2686, %v2682
  %v3791 = vpack.c.b16 %v2687, %v2683
  %v3792 = vpack.c.b16 %v2688, %v2684
  %v3793 = vpack.c.b16 %v2689, %v2685
  %v3794 = vpack.c.b16 %v2694, %v2690
  %v3795 = vpack.c.b16 %v2695, %v2691
  %v3796 = vpack.c.b16 %v2696, %v2692
  %v3797 = vpack.c.b16 %v2697, %v2693
  %v3798 = vpack.c.b16 %v2702, %v2698
  %v3799 = vpack.c.b16 %v2703, %v2699
  %v3800 = vpack.c.b16 %v2704, %v2700
  %v3801 = vpack.c.b16 %v2705, %v2701
  %v3802 = vpack.c.b16 %v2710, %v2706
  %v3803 = vpack.c.b16 %v2711, %v2707
  %v3804 = vpack.c.b16 %v2712, %v2708
  %v3805 = vpack.c.b16 %v2713, %v2709
  %v3806 = vpack.c.b16 %v2718, %v2714
  %v3807 = vpack.c.b16 %v2719, %v2715
  %v3808 = vpack.c.b16 %v2720, %v2716
  %v3809 = vpack.c.b16 %v2721, %v2717
  %v3810 = vpack.c.b16 %v2726, %v2722
  %v3811 = vpack.c.b16 %v2727, %v2723
  %v3812 = vpack.c.b16 %v2728, %v2724
  %v3813 = vpack.c.b16 %v2729, %v2725
  %v3814 = vpack.c.b16 %v2734, %v2730
  %v3815 = vpack.c.b16 %v2735, %v2731
  %v3816 = vpack.c.b16 %v2736, %v2732
  %v3817 = vpack.c.b16 %v2737, %v2733
  %v3818 = vpack.c.b16 %v2742, %v2738
  %v3819 = vpack.c.b16 %v2743, %v2739
  %v3820 = vpack.c.b16 %v2744, %v2740
  %v3821 = vpack.c.b16 %v2745, %v2741
  %v3822 = vpack.c.b16 %v2750, %v2746
  %v3823 = vpack.c.b16 %v2751, %v2747
  %v3824 = vpack.c.b16 %v2752, %v2748
  %v3825 = vpack.c.b16 %v2753, %v2749
  %v3826 = vpack.c.b16 %v2758, %v2754
  %v3827 = vpack.c.b16 %v2759, %v2755
  %v3828 = vpack.c.b16 %v2760, %v2756
  %v3829 = vpack.c.b16 %v2761, %v2757
  %v3830 = vpack.c.b16 %v2766, %v2762
  %v3831 = vpack.c.b16 %v2767, %v2763
  %v3832 = vpack.c.b16 %v2768, %v2764
  %v3833 = vpack.c.b16 %v2769, %v2765
  %v3834 = vpack.c.b16 %v2774, %v2770
  %v3835 = vpack.c.b16 %v2775, %v2771
  %v3836 = vpack.c.b16 %v2776, %v2772
  %v3837 = vpack.c.b16 %v2777, %v2773
  %v3838 = vpack.c.b16 %v2782, %v2778
  %v3839 = vpack.c.b16 %v2783, %v2779
  %v3840 = vpack.c.b16 %v2784, %v2780
  %v3841 = vpack.c.b16 %v2785, %v2781
  %v3842 = vpack.c.b16 %v2790, %v2786
  %v3843 = vpack.c.b16 %v2791, %v2787
  %v3844 = vpack.c.b16 %v2792, %v2788
  %v3845 = vpack.c.b16 %v2793, %v2789
  %v3846 = vpack.c.b16 %v2798, %v2794
  %v3847 = vpack.c.b16 %v2799, %v2795
  %v3848 = vpack.c.b16 %v2800, %v2796
  %v3849 = vpack.c.b16 %v2801, %v2797
  %v3850 = vpack.c.b16 %v2806, %v2802
  %v3851 = vpack.c.b16 %v2807, %v2803
  %v3852 = vpack.c.b16 %v2808, %v2804
  %v3853 = vpack.c.b16 %v2809, %v2805
  %v3854 = vpack.c.b16 %v2814, %v2810
  %v3855 = vpack.c.b16 %v2815, %v2811
  %v3856 = vpack.c.b16 %v2816, %v2812
  %v3857 = vpack.c.b16 %v2817, %v2813
  %v3858 = vpack.c.b16 %v2822, %v2818
  %v3859 = vpack.c.b16 %v2823, %v2819
  %v3860 = vpack.c.b16 %v2824, %v2820
  %v3861 = vpack.c.b16 %v2825, %v2821
  %v3862 = vpack.c.b16 %v2830, %v2826
  %v3863 = vpack.c.b16 %v2831, %v2827
  %v3864 = vpack.c.b16 %v2832, %v2828
  %v3865 = vpack.c.b16 %v2833, %v2829
  %v3866 = vpack.c.b16 %v2838, %v2834
  %v3867 = vpack.c.b16 %v2839, %v2835
  %v3868 = vpack.c.b16 %v2840, %v2836
  %v3869 = vpack.c.b16 %v2841, %v2837
  %v3870 = vpack.c.b16 %v2846, %v2842
  %v3871 = vpack.c.b16 %v2847, %v2843
  %v3872 = vpack.c.b16 %v2848, %v2844
  %v3873 = vpack.c.b16 %v2849, %v2845
  %v3874 = vpack.c.b16 %v2854, %v2850
  %v3875 = vpack.c.b16 %v2855, %v2851
  %v3876 = vpack.c.b16 %v2856, %v2852
  %v3877 = vpack.c.b16 %v2857, %v2853
  %v3878 = vpack.c.b16 %v2862, %v2858
  %v3879 = vpack.c.b16 %v2863, %v2859
  %v3880 = vpack.c.b16 %v2864, %v2860
  %v3881 = vpack.c.b16 %v2865, %v2861
  %v3882 = vpack.c.b16 %v2870, %v2866
  %v3883 = vpack.c.b16 %v2871, %v2867
  %v3884 = vpack.c.b16 %v2872, %v2868
  %v3885 = vpack.c.b16 %v2873, %v2869
  %v3886 = vpack.c.b16 %v2878, %v2874
  %v3887 = vpack.c.b16 %v2879, %v2875
  %v3888 = vpack.c.b16 %v2880, %v2876
  %v3889 = vpack.c.b16 %v2881, %v2877
  %v3890 = vpack.c.b16 %v2886, %v2882
  %v3891 = vpack.c.b16 %v2887, %v2883
  %v3892 = vpack.c.b16 %v2888, %v2884
  %v3893 = vpack.c.b16 %v2889, %v2885
  %v3894 = vpack.c.b16 %v2894, %v2890
  %v3895 = vpack.c.b16 %v2895, %v2891
  %v3896 = vpack.c.b16 %v2896, %v2892
  %v3897 = vpack.c.b16 %v2897, %v2893
  %v3898 = vpack.c.b16 %v2902, %v2898
  %v3899 = vpack.c.b16 %v2903, %v2899
  %v3900 = vpack.c.b16 %v2904, %v2900
  %v3901 = vpack.c.b16 %v2905, %v2901
  %v3902 = vpack.c.b16 %v2910, %v2906
  %v3903 = vpack.c.b16 %v2911, %v2907
  %v3904 = vpack.c.b16 %v2912, %v2908
  %v3905 = vpack.c.b16 %v2913, %v2909
  %v3906 = vpack.c.b16 %v2918, %v2914
  %v3907 = vpack.c.b16 %v2919, %v2915
  %v3908 = vpack.c.b16 %v2920, %v2916
  %v3909 = vpack.c.b16 %v2921, %v2917
  %v3910 = vpack.c.b16 %v2926, %v2922
  %v3911 = vpack.c.b16 %v2927, %v2923
  %v3912 = vpack.c.b16 %v2928, %v2924
  %v3913 = vpack.c.b16 %v2929, %v2925
  %v3914 = vpack.c.b16 %v2934, %v2930
  %v3915 = vpack.c.b16 %v2935, %v2931
  %v3916 = vpack.c.b16 %v2936, %v2932
  %v3917 = vpack.c.b16 %v2937, %v2933
  %v3918 = vpack.c.b16 %v2942, %v2938
  %v3919 = vpack.c.b16 %v2943, %v2939
  %v3920 = vpack.c.b16 %v2944, %v2940
  %v3921 = vpack.c.b16 %v2945, %v2941
  %v3922 = vpack.c.b16 %v2950, %v2946
  %v3923 = vpack.c.b16 %v2951, %v2947
  %v3924 = vpack.c.b16 %v2952, %v2948
  %v3925 = vpack.c.b16 %v2953, %v2949
  %v3926 = vpack.c.b16 %v2958, %v2954
  %v3927 = vpack.c.b16 %v2959, %v2955
  %v3928 = vpack.c.b16 %v2960, %v2956
  %v3929 = vpack.c.b16 %v2961, %v2957
  %v3930 = vpack.c.b16 %v2966, %v2962
  %v3931 = vpack.c.b16 %v2967, %v2963
  %v3932 = vpack.c.b16 %v2968, %v2964
  %v3933 = vpack.c.b16 %v2969, %v2965
  %v3934 = vpack.c.b16 %v2974, %v2970
  %v3935 = vpack.c.b16 %v2975, %v2971
  %v3936 = vpack.c.b16 %v2976, %v2972
  %v3937 = vpack.c.b16 %v2977, %v2973
  %v3938 = vpack.c.b16 %v2982, %v2978
  %v3939 = vpack.c.b16 %v2983, %v2979
  %v3940 = vpack.c.b16 %v2984, %v2980
  %v3941 = vpack.c.b16 %v2985, %v2981
  %v3942 = vpack.c.b16 %v2990, %v2986
  %v3943 = vpack.c.b16 %v2991, %v2987
  %v3944 = vpack.c.b16 %v2992, %v2988
  %v3945 = vpack.c.b16 %v2993, %v2989
  %v3946 = vpack.c.b16 %v2998, %v2994
  %v3947 = vpack.c.b16 %v2999, %v2995
  %v3948 = vpack.c.b16 %v3000, %v2996
  %v3949 = vpack.c.b16 %v3001, %v2997
  %v3950 = vpack.c.b16 %v3006, %v3002
  %v3951 = vpack.c.b16 %v3007, %v3003
  %v3952 = vpack.c.b16 %v3008, %v3004
  %v3953 = vpack.c.b16 %v3009, %v3005
  %v3954 = vpack.c.b16 %v3014, %v3010
  %v3955 = vpack.c.b16 %v3015, %v3011
  %v3956 = vpack.c.b16 %v3016, %v3012
  %v3957 = vpack.c.b16 %v3017, %v3013
  %v3958 = vpack.c.b16 %v3022, %v3018
  %v3959 = vpack.c.b16 %v3023, %v3019
  %v3960 = vpack.c.b16 %v3024, %v3020
  %v3961 = vpack.c.b16 %v3025, %v3021
  %v3962 = vpack.c.b16 %v3030, %v3026
  %v3963 = vpack.c.b16 %v3031, %v3027
  %v3964 = vpack.c.b16 %v3032, %v3028
  %v3965 = vpack.c.b16 %v3033, %v3029
  %v3966 = vpack.c.b16 %v3038, %v3034
  %v3967 = vpack.c.b16 %v3039, %v3035
  %v3968 = vpack.c.b16 %v3040, %v3036
  %v3969 = vpack.c.b16 %v3041, %v3037
  %v3970 = vpack.c.b16 %v3046, %v3042
  %v3971 = vpack.c.b16 %v3047, %v3043
  %v3972 = vpack.c.b16 %v3048, %v3044
  %v3973 = vpack.c.b16 %v3049, %v3045
  %v3974 = vpack.c.b16 %v3054, %v3050
  %v3975 = vpack.c.b16 %v3055, %v3051
  %v3976 = vpack.c.b16 %v3056, %v3052
  %v3977 = vpack.c.b16 %v3057, %v3053
  %v3978 = vpack.c.b16 %v3062, %v3058
  %v3979 = vpack.c.b16 %v3063, %v3059
  %v3980 = vpack.c.b16 %v3064, %v3060
  %v3981 = vpack.c.b16 %v3065, %v3061
  %v3982 = vpack.c.b16 %v3070, %v3066
  %v3983 = vpack.c.b16 %v3071, %v3067
  %v3984 = vpack.c.b16 %v3072, %v3068
  %v3985 = vpack.c.b16 %v3073, %v3069
  %v3986 = vpack.c.b16 %v3078, %v3074
  %v3987 = vpack.c.b16 %v3079, %v3075
  %v3988 = vpack.c.b16 %v3080, %v3076
  %v3989 = vpack.c.b16 %v3081, %v3077
  %v3990 = vpack.c.b16 %v3086, %v3082
  %v3991 = vpack.c.b16 %v3087, %v3083
  %v3992 = vpack.c.b16 %v3088, %v3084
  %v3993 = vpack.c.b16 %v3089, %v3085
  %v3994 = vpack.c.b16 %v3094, %v3090
  %v3995 = vpack.c.b16 %v3095, %v3091
  %v3996 = vpack.c.b16 %v3096, %v3092
  %v3997 = vpack.c.b16 %v3097, %v3093
  %v3998 = vpack.c.b16 %v3102, %v3098
  %v3999 = vpack.c.b16 %v3103, %v3099
  %v4000 = vpack.c.b16 %v3104, %v3100
  %v4001 = vpack.c.b16 %v3105, %v3101
  %v4002 = vpack.c.b16 %v3110, %v3106
  %v4003 = vpack.c.b16 %v3111, %v3107
  %v4004 = vpack.c.b16 %v3112, %v3108
  %v4005 = vpack.c.b16 %v3113, %v3109
  %v4006 = vpack.c.b16 %v3118, %v3114
  %v4007 = vpack.c.b16 %v3119, %v3115
  %v4008 = vpack.c.b16 %v3120, %v3116
  %v4009 = vpack.c.b16 %v3121, %v3117
  %v4010 = vpack.c.b16 %v3126, %v3122
  %v4011 = vpack.c.b16 %v3127, %v3123
  %v4012 = vpack.c.b16 %v3128, %v3124
  %v4013 = vpack.c.b16 %v3129, %v3125
  %v4014 = vpack.c.b16 %v3134, %v3130
  %v4015 = vpack.c.b16 %v3135, %v3131
  %v4016 = vpack.c.b16 %v3136, %v3132
  %v4017 = vpack.c.b16 %v3137, %v3133
  %v4018 = vpack.c.b16 %v3142, %v3138
  %v4019 = vpack.c.b16 %v3143, %v3139
  %v4020 = vpack.c.b16 %v3144, %v3140
  %v4021 = vpack.c.b16 %v3145, %v3141
  %v4022 = vpack.c.b16 %v3150, %v3146
  %v4023 = vpack.c.b16 %v3151, %v3147
  %v4024 = vpack.c.b16 %v3152, %v3148
  %v4025 = vpack.c.b16 %v3153, %v3149
  %v4026 = vpack.c.b16 %v3158, %v3154
  %v4027 = vpack.c.b16 %v3159, %v3155
  %v4028 = vpack.c.b16 %v3160, %v3156
  %v4029 = vpack.c.b16 %v3161, %v3157
  %v4030 = vpack.c.b16 %v3166, %v3162
  %v4031 = vpack.c.b16 %v3167, %v3163
  %v4032 = vpack.c.b16 %v3168, %v3164
  %v4033 = vpack.c.b16 %v3169, %v3165
  %v4034 = vpack.c.b16 %v3174, %v3170
  %v4035 = vpack.c.b16 %v3175, %v3171
  %v4036 = vpack.c.b16 %v3176, %v3172
  %v4037 = vpack.c.b16 %v3177, %v3173
  %v4038 = vpack.c.b16 %v3182, %v3178
  %v4039 = vpack.c.b16 %v3183, %v3179
  %v4040 = vpack.c.b16 %v3184, %v3180
  %v4041 = vpack.c.b16 %v3185, %v3181
  %v4042 = vpack.c.b16 %v3190, %v3186
  %v4043 = vpack.c.b16 %v3191, %v3187
  %v4044 = vpack.c.b16 %v3192, %v3188
  %v4045 = vpack.c.b16 %v3193, %v3189
  %v4046 = vpack.c.b16 %v3198, %v3194
  %v4047 = vpack.c.b16 %v3199, %v3195
  %v4048 = vpack.c.b16 %v3200, %v3196
  %v4049 = vpack.c.b16 %v3201, %v3197
  %v4050 = vpack.c.b16 %v3206, %v3202
  %v4051 = vpack.c.b16 %v3207, %v3203
  %v4052 = vpack.c.b16 %v3208, %v3204
  %v4053 = vpack.c.b16 %v3209, %v3205
  %v4054 = vpack.c.b16 %v3214, %v3210
  %v4055 = vpack.c.b16 %v3215, %v3211
  %v4056 = vpack.c.b16 %v3216, %v3212
  %v4057 = vpack.c.b16 %v3217, %v3213
  %v4058 = vpack.c.b16 %v3222, %v3218
  %v4059 = vpack.c.b16 %v3223, %v3219
  %v4060 = vpack.c.b16 %v3224, %v3220
  %v4061 = vpack.c.b16 %v3225, %v3221
  %v4062 = vpack.c.b16 %v3230, %v3226
  %v4063 = vpack.c.b16 %v3231, %v3227
  %v4064 = vpack.c.b16 %v3232, %v3228
  %v4065 = vpack.c.b16 %v3233, %v3229
  %v4066 = vpack.c.b16 %v3238, %v3234
  %v4067 = vpack.c.b16 %v3239, %v3235
  %v4068 = vpack.c.b16 %v3240, %v3236
  %v4069 = vpack.c.b16 %v3241, %v3237
  %v4070 = vpack.c.b16 %v3246, %v3242
  %v4071 = vpack.c.b16 %v3247, %v3243
  %v4072 = vpack.c.b16 %v3248, %v3244
  %v4073 = vpack.c.b16 %v3249, %v3245
  %v4074 = vpack.c.b16 %v3254, %v3250
  %v4075 = vpack.c.b16 %v3255, %v3251
  %v4076 = vpack.c.b16 %v3256, %v3252
  %v4077 = vpack.c.b16 %v3257, %v3253
  %v4078 = vpack.c.b16 %v3262, %v3258
  %v4079 = vpack.c.b16 %v3263, %v3259
  %v4080 = vpack.c.b16 %v3264, %v3260
  %v4081 = vpack.c.b16 %v3265, %v3261
  %v4082 = vpack.c.b16 %v3270, %v3266
  %v4083 = vpack.c.b16 %v3271, %v3267
  %v4084 = vpack.c.b16 %v3272, %v3268
  %v4085 = vpack.c.b16 %v3273, %v3269
  %v4086 = vpack.c.b16 %v3278, %v3274
  %v4087 = vpack.c.b16 %v3279, %v3275
  %v4088 = vpack.c.b16 %v3280, %v3276
  %v4089 = vpack.c.b16 %v3281, %v3277
  %v4090 = vpack.c.b16 %v3286, %v3282
  %v4091 = vpack.c.b16 %v3287, %v3283
  %v4092 = vpack.c.b16 %v3288, %v3284
  %v4093 = vpack.c.b16 %v3289, %v3285
  %v4094 = vpack.c.b16 %v3294, %v3290
  %v4095 = vpack.c.b16 %v3295, %v3291
  %v4096 = vpack.c.b16 %v3296, %v3292
  %v4097 = vpack.c.b16 %v3297, %v3293
  %v4098 = vpack.c.b16 %v3302, %v3298
  %v4099 = vpack.c.b16 %v3303, %v3299
  %v4100 = vpack.c.b16 %v3304, %v3300
  %v4101 = vpack.c.b16 %v3305, %v3301
  %v4102 = vpack.c.b16 %v3310, %v3306
  %v4103 = vpack.c.b16 %v3311, %v3307
  %v4104 = vpack.c.b16 %v3312, %v3308
  %v4105 = vpack.c.b16 %v3313, %v3309
  %v4106 = vpack.c.b16 %v3318, %v3314
  %v4107 = vpack.c.b16 %v3319, %v3315
  %v4108 = vpack.c.b16 %v3320, %v3316
  %v4109 = vpack.c.b16 %v3321, %v3317
  %v4110 = vpack.c.b16 %v3326, %v3322
  %v4111 = vpack.c.b16 %v3327, %v3323
  %v4112 = vpack.c.b16 %v3328, %v3324
  %v4113 = vpack.c.b16 %v3329, %v3325
  %vm4898 = vcmask 523264
  %v4900 = vsel %vm4898, %v953, 0
  %4902 = vmatprep.subr.bf16.mxu0 %v3331
  %4903 = vmatpush1.bf16.msra.mxu0 %v3330
  %4904 = vmatprep.subr.bf16.mxu0 %v3335
  %4905 = vmatpush1.bf16.msra.mxu0 %v3334
  %4906 = vmatprep.subr.bf16.mxu0 %v3339
  %4907 = vmatpush1.bf16.msra.mxu0 %v3338
  %4908 = vmatprep.subr.bf16.mxu0 %v3343
  %4909 = vmatpush1.bf16.msra.mxu0 %v3342
  %4910 = vmatprep.subr.bf16.mxu0 %v3347
  %4911 = vmatpush1.bf16.msra.mxu0 %v3346
  %4912 = vmatprep.subr.bf16.mxu0 %v3351
  %4913 = vmatpush1.bf16.msra.mxu0 %v3350
  %4914 = vmatprep.subr.bf16.mxu0 %v3355
  %4915 = vmatpush1.bf16.msra.mxu0 %v3354
  %4916 = vmatprep.subr.bf16.mxu0 %v3359
  %4917 = vmatpush1.bf16.msra.mxu0 %v3358
  %4918 = vmatprep.subr.bf16.mxu0 %v3363
  %4919 = vmatpush1.bf16.msra.mxu0 %v3362
  %4920 = vmatprep.subr.bf16.mxu0 %v3367
  %4921 = vmatpush1.bf16.msra.mxu0 %v3366
  %4922 = vmatprep.subr.bf16.mxu0 %v3371
  %4923 = vmatpush1.bf16.msra.mxu0 %v3370
  %4924 = vmatprep.subr.bf16.mxu0 %v3375
  %4925 = vmatpush1.bf16.msra.mxu0 %v3374
  %4926 = vmatprep.subr.bf16.mxu0 %v3379
  %4927 = vmatpush1.bf16.msra.mxu0 %v3378
  %4928 = vmatprep.subr.bf16.mxu0 %v3383
  %4929 = vmatpush1.bf16.msra.mxu0 %v3382
  %4930 = vmatprep.subr.bf16.mxu0 %v3387
  %4931 = vmatpush1.bf16.msra.mxu0 %v3386
  %4932 = vmatprep.subr.bf16.mxu0 %v3391
  %4933 = vmatpush1.bf16.msra.mxu0 %v3390
  %4934 = vmatprep.mubr.bf16.mxu0 %v930
  %4935 = vmatmul.mubr.bf16.gmra.mrb[0].mxu0 %v929
  %v4936 = vpop.f32.mrb[0].mxu0
  %v4937 = vadd.f32 %v836, %v4936
  %v4938 = vpop.f32.mrb[0].mxu0
  %v4939 = vadd.f32 %v840, %v4938
  %v4940 = vpop.f32.mrb[0].mxu0
  %v4941 = vadd.f32 %v836, %v4940
  %v4942 = vpop.f32.mrb[0].mxu0
  %v4943 = vadd.f32 %v840, %v4942
  %4944 = vdwg.mxu0
  %4945 = vmatprep.subr.bf16.mxu0 %v3395
  %4946 = vmatpush1.bf16.msra.mxu0 %v3394
  %4947 = vmatprep.subr.bf16.mxu0 %v3399
  %4948 = vmatpush1.bf16.msra.mxu0 %v3398
  %4949 = vmatprep.subr.bf16.mxu0 %v3403
  %4950 = vmatpush1.bf16.msra.mxu0 %v3402
  %4951 = vmatprep.subr.bf16.mxu0 %v3407
  %4952 = vmatpush1.bf16.msra.mxu0 %v3406
  %4953 = vmatprep.subr.bf16.mxu0 %v3411
  %4954 = vmatpush1.bf16.msra.mxu0 %v3410
  %4955 = vmatprep.subr.bf16.mxu0 %v3415
  %4956 = vmatpush1.bf16.msra.mxu0 %v3414
  %4957 = vmatprep.subr.bf16.mxu0 %v3419
  %4958 = vmatpush1.bf16.msra.mxu0 %v3418
  %4959 = vmatprep.subr.bf16.mxu0 %v3423
  %4960 = vmatpush1.bf16.msra.mxu0 %v3422
  %4961 = vmatprep.subr.bf16.mxu0 %v3427
  %4962 = vmatpush1.bf16.msra.mxu0 %v3426
  %4963 = vmatprep.subr.bf16.mxu0 %v3431
  %4964 = vmatpush1.bf16.msra.mxu0 %v3430
  %4965 = vmatprep.subr.bf16.mxu0 %v3435
  %4966 = vmatpush1.bf16.msra.mxu0 %v3434
  %4967 = vmatprep.subr.bf16.mxu0 %v3439
  %4968 = vmatpush1.bf16.msra.mxu0 %v3438
  %4969 = vmatprep.subr.bf16.mxu0 %v3443
  %4970 = vmatpush1.bf16.msra.mxu0 %v3442
  %4971 = vmatprep.subr.bf16.mxu0 %v3447
  %4972 = vmatpush1.bf16.msra.mxu0 %v3446
  %4973 = vmatprep.subr.bf16.mxu0 %v3451
  %4974 = vmatpush1.bf16.msra.mxu0 %v3450
  %4975 = vmatprep.subr.bf16.mxu0 %v3455
  %4976 = vmatpush1.bf16.msra.mxu0 %v3454
  %4977 = vmatprep.mubr.bf16.mxu0 %v932
  %4978 = vmatmul.mubr.bf16.gmra.mrb[0].mxu0 %v931
  %v4979 = vpop.f32.mrb[0].mxu0
  %v4980 = vadd.f32 %v4937, %v4979
  %v4981 = vpop.f32.mrb[0].mxu0
  %v4982 = vadd.f32 %v4939, %v4981
  %v4983 = vpop.f32.mrb[0].mxu0
  %v4984 = vadd.f32 %v4941, %v4983
  %v4985 = vpop.f32.mrb[0].mxu0
  %v4986 = vadd.f32 %v4943, %v4985
  %4987 = vdwg.mxu0
  %4988 = vmatprep.subr.bf16.mxu0 %v3459
  %4989 = vmatpush1.bf16.msra.mxu0 %v3458
  %4990 = vmatprep.subr.bf16.mxu0 %v3463
  %4991 = vmatpush1.bf16.msra.mxu0 %v3462
  %4992 = vmatprep.subr.bf16.mxu0 %v3467
  %4993 = vmatpush1.bf16.msra.mxu0 %v3466
  %4994 = vmatprep.subr.bf16.mxu0 %v3471
  %4995 = vmatpush1.bf16.msra.mxu0 %v3470
  %4996 = vmatprep.subr.bf16.mxu0 %v3475
  %4997 = vmatpush1.bf16.msra.mxu0 %v3474
  %4998 = vmatprep.subr.bf16.mxu0 %v3479
  %4999 = vmatpush1.bf16.msra.mxu0 %v3478
  %5000 = vmatprep.subr.bf16.mxu0 %v3483
  %5001 = vmatpush1.bf16.msra.mxu0 %v3482
  %5002 = vmatprep.subr.bf16.mxu0 %v3487
  %5003 = vmatpush1.bf16.msra.mxu0 %v3486
  %5004 = vmatprep.subr.bf16.mxu0 %v3491
  %5005 = vmatpush1.bf16.msra.mxu0 %v3490
  %5006 = vmatprep.subr.bf16.mxu0 %v3495
  %5007 = vmatpush1.bf16.msra.mxu0 %v3494
  %5008 = vmatprep.subr.bf16.mxu0 %v3499
  %5009 = vmatpush1.bf16.msra.mxu0 %v3498
  %5010 = vmatprep.subr.bf16.mxu0 %v3503
  %5011 = vmatpush1.bf16.msra.mxu0 %v3502
  %5012 = vmatprep.subr.bf16.mxu0 %v3507
  %5013 = vmatpush1.bf16.msra.mxu0 %v3506
  %5014 = vmatprep.subr.bf16.mxu0 %v3511
  %5015 = vmatpush1.bf16.msra.mxu0 %v3510
  %5016 = vmatprep.subr.bf16.mxu0 %v3515
  %5017 = vmatpush1.bf16.msra.mxu0 %v3514
  %5018 = vmatprep.subr.bf16.mxu0 %v3519
  %5019 = vmatpush1.bf16.msra.mxu0 %v3518
  %5020 = vmatprep.mubr.bf16.mxu0 %v934
  %5021 = vmatmul.mubr.bf16.gmra.mrb[0].mxu0 %v933
  %v5022 = vpop.f32.mrb[0].mxu0
  %v5023 = vadd.f32 %v4980, %v5022
  %v5024 = vpop.f32.mrb[0].mxu0
  %v5025 = vadd.f32 %v4982, %v5024
  %v5026 = vpop.f32.mrb[0].mxu0
  %v5027 = vadd.f32 %v4984, %v5026
  %v5028 = vpop.f32.mrb[0].mxu0
  %v5029 = vadd.f32 %v4986, %v5028
  %5030 = vdwg.mxu0
  %5031 = vmatprep.subr.bf16.mxu0 %v3523
  %5032 = vmatpush1.bf16.msra.mxu0 %v3522
  %5033 = vmatprep.subr.bf16.mxu0 %v3527
  %5034 = vmatpush1.bf16.msra.mxu0 %v3526
  %5035 = vmatprep.subr.bf16.mxu0 %v3531
  %5036 = vmatpush1.bf16.msra.mxu0 %v3530
  %5037 = vmatprep.subr.bf16.mxu0 %v3535
  %5038 = vmatpush1.bf16.msra.mxu0 %v3534
  %5039 = vmatprep.subr.bf16.mxu0 %v3539
  %5040 = vmatpush1.bf16.msra.mxu0 %v3538
  %5041 = vmatprep.subr.bf16.mxu0 %v3543
  %5042 = vmatpush1.bf16.msra.mxu0 %v3542
  %5043 = vmatprep.subr.bf16.mxu0 %v3547
  %5044 = vmatpush1.bf16.msra.mxu0 %v3546
  %5045 = vmatprep.subr.bf16.mxu0 %v3551
  %5046 = vmatpush1.bf16.msra.mxu0 %v3550
  %5047 = vmatprep.subr.bf16.mxu0 %v3555
  %5048 = vmatpush1.bf16.msra.mxu0 %v3554
  %5049 = vmatprep.subr.bf16.mxu0 %v3559
  %5050 = vmatpush1.bf16.msra.mxu0 %v3558
  %5051 = vmatprep.subr.bf16.mxu0 %v3563
  %5052 = vmatpush1.bf16.msra.mxu0 %v3562
  %5053 = vmatprep.subr.bf16.mxu0 %v3567
  %5054 = vmatpush1.bf16.msra.mxu0 %v3566
  %5055 = vmatprep.subr.bf16.mxu0 %v3571
  %5056 = vmatpush1.bf16.msra.mxu0 %v3570
  %5057 = vmatprep.subr.bf16.mxu0 %v3575
  %5058 = vmatpush1.bf16.msra.mxu0 %v3574
  %5059 = vmatprep.subr.bf16.mxu0 %v3579
  %5060 = vmatpush1.bf16.msra.mxu0 %v3578
  %5061 = vmatprep.subr.bf16.mxu0 %v3583
  %5062 = vmatpush1.bf16.msra.mxu0 %v3582
  %5063 = vmatprep.mubr.bf16.mxu0 %v936
  %5064 = vmatmul.mubr.bf16.gmra.mrb[0].mxu0 %v935
  %v5065 = vpop.f32.mrb[0].mxu0
  %v5066 = vadd.f32 %v5023, %v5065
  %v5067 = vpop.f32.mrb[0].mxu0
  %v5068 = vadd.f32 %v5025, %v5067
  %v5069 = vpop.f32.mrb[0].mxu0
  %v5070 = vadd.f32 %v5027, %v5069
  %v5071 = vpop.f32.mrb[0].mxu0
  %v5072 = vadd.f32 %v5029, %v5071
  %5073 = vdwg.mxu0
  %5074 = vmatprep.subr.bf16.mxu0 %v3587
  %5075 = vmatpush1.bf16.msra.mxu0 %v3586
  %5076 = vmatprep.subr.bf16.mxu0 %v3591
  %5077 = vmatpush1.bf16.msra.mxu0 %v3590
  %5078 = vmatprep.subr.bf16.mxu0 %v3595
  %5079 = vmatpush1.bf16.msra.mxu0 %v3594
  %5080 = vmatprep.subr.bf16.mxu0 %v3599
  %5081 = vmatpush1.bf16.msra.mxu0 %v3598
  %5082 = vmatprep.subr.bf16.mxu0 %v3603
  %5083 = vmatpush1.bf16.msra.mxu0 %v3602
  %5084 = vmatprep.subr.bf16.mxu0 %v3607
  %5085 = vmatpush1.bf16.msra.mxu0 %v3606
  %5086 = vmatprep.subr.bf16.mxu0 %v3611
  %5087 = vmatpush1.bf16.msra.mxu0 %v3610
  %5088 = vmatprep.subr.bf16.mxu0 %v3615
  %5089 = vmatpush1.bf16.msra.mxu0 %v3614
  %5090 = vmatprep.subr.bf16.mxu0 %v3619
  %5091 = vmatpush1.bf16.msra.mxu0 %v3618
  %5092 = vmatprep.subr.bf16.mxu0 %v3623
  %5093 = vmatpush1.bf16.msra.mxu0 %v3622
  %5094 = vmatprep.subr.bf16.mxu0 %v3627
  %5095 = vmatpush1.bf16.msra.mxu0 %v3626
  %5096 = vmatprep.subr.bf16.mxu0 %v3631
  %5097 = vmatpush1.bf16.msra.mxu0 %v3630
  %5098 = vmatprep.subr.bf16.mxu0 %v3635
  %5099 = vmatpush1.bf16.msra.mxu0 %v3634
  %5100 = vmatprep.subr.bf16.mxu0 %v3639
  %5101 = vmatpush1.bf16.msra.mxu0 %v3638
  %5102 = vmatprep.subr.bf16.mxu0 %v3643
  %5103 = vmatpush1.bf16.msra.mxu0 %v3642
  %5104 = vmatprep.subr.bf16.mxu0 %v3647
  %5105 = vmatpush1.bf16.msra.mxu0 %v3646
  %5106 = vmatprep.mubr.bf16.mxu0 %v938
  %5107 = vmatmul.mubr.bf16.gmra.mrb[0].mxu0 %v937
  %v5108 = vpop.f32.mrb[0].mxu0
  %v5109 = vadd.f32 %v5066, %v5108
  %v5110 = vpop.f32.mrb[0].mxu0
  %v5111 = vadd.f32 %v5068, %v5110
  %v5112 = vpop.f32.mrb[0].mxu0
  %v5113 = vadd.f32 %v5070, %v5112
  %v5114 = vpop.f32.mrb[0].mxu0
  %v5115 = vadd.f32 %v5072, %v5114
  %5116 = vdwg.mxu0
  %5117 = vmatprep.subr.bf16.mxu0 %v3651
  %5118 = vmatpush1.bf16.msra.mxu0 %v3650
  %5119 = vmatprep.subr.bf16.mxu0 %v3655
  %5120 = vmatpush1.bf16.msra.mxu0 %v3654
  %5121 = vmatprep.subr.bf16.mxu0 %v3659
  %5122 = vmatpush1.bf16.msra.mxu0 %v3658
  %5123 = vmatprep.subr.bf16.mxu0 %v3663
  %5124 = vmatpush1.bf16.msra.mxu0 %v3662
  %5125 = vmatprep.subr.bf16.mxu0 %v3667
  %5126 = vmatpush1.bf16.msra.mxu0 %v3666
  %5127 = vmatprep.subr.bf16.mxu0 %v3671
  %5128 = vmatpush1.bf16.msra.mxu0 %v3670
  %5129 = vmatprep.subr.bf16.mxu0 %v3675
  %5130 = vmatpush1.bf16.msra.mxu0 %v3674
  %5131 = vmatprep.subr.bf16.mxu0 %v3679
  %5132 = vmatpush1.bf16.msra.mxu0 %v3678
  %5133 = vmatprep.subr.bf16.mxu0 %v3683
  %5134 = vmatpush1.bf16.msra.mxu0 %v3682
  %5135 = vmatprep.subr.bf16.mxu0 %v3687
  %5136 = vmatpush1.bf16.msra.mxu0 %v3686
  %5137 = vmatprep.subr.bf16.mxu0 %v3691
  %5138 = vmatpush1.bf16.msra.mxu0 %v3690
  %5139 = vmatprep.subr.bf16.mxu0 %v3695
  %5140 = vmatpush1.bf16.msra.mxu0 %v3694
  %5141 = vmatprep.subr.bf16.mxu0 %v3699
  %5142 = vmatpush1.bf16.msra.mxu0 %v3698
  %5143 = vmatprep.subr.bf16.mxu0 %v3703
  %5144 = vmatpush1.bf16.msra.mxu0 %v3702
  %5145 = vmatprep.subr.bf16.mxu0 %v3707
  %5146 = vmatpush1.bf16.msra.mxu0 %v3706
  %5147 = vmatprep.subr.bf16.mxu0 %v3711
  %5148 = vmatpush1.bf16.msra.mxu0 %v3710
  %5149 = vmatprep.mubr.bf16.mxu0 %v940
  %5150 = vmatmul.mubr.bf16.gmra.mrb[0].mxu0 %v939
  %v5151 = vpop.f32.mrb[0].mxu0
  %v5152 = vadd.f32 %v5109, %v5151
  %v5153 = vpop.f32.mrb[0].mxu0
  %v5154 = vadd.f32 %v5111, %v5153
  %v5155 = vpop.f32.mrb[0].mxu0
  %v5156 = vadd.f32 %v5113, %v5155
  %v5157 = vpop.f32.mrb[0].mxu0
  %v5158 = vadd.f32 %v5115, %v5157
  %5159 = vdwg.mxu0
  %5160 = vmatprep.subr.bf16.mxu0 %v3715
  %5161 = vmatpush1.bf16.msra.mxu0 %v3714
  %5162 = vmatprep.subr.bf16.mxu0 %v3719
  %5163 = vmatpush1.bf16.msra.mxu0 %v3718
  %5164 = vmatprep.subr.bf16.mxu0 %v3723
  %5165 = vmatpush1.bf16.msra.mxu0 %v3722
  %5166 = vmatprep.subr.bf16.mxu0 %v3727
  %5167 = vmatpush1.bf16.msra.mxu0 %v3726
  %5168 = vmatprep.subr.bf16.mxu0 %v3731
  %5169 = vmatpush1.bf16.msra.mxu0 %v3730
  %5170 = vmatprep.subr.bf16.mxu0 %v3735
  %5171 = vmatpush1.bf16.msra.mxu0 %v3734
  %5172 = vmatprep.subr.bf16.mxu0 %v3739
  %5173 = vmatpush1.bf16.msra.mxu0 %v3738
  %5174 = vmatprep.subr.bf16.mxu0 %v3743
  %5175 = vmatpush1.bf16.msra.mxu0 %v3742
  %5176 = vmatprep.subr.bf16.mxu0 %v3747
  %5177 = vmatpush1.bf16.msra.mxu0 %v3746
  %5178 = vmatprep.subr.bf16.mxu0 %v3751
  %5179 = vmatpush1.bf16.msra.mxu0 %v3750
  %5180 = vmatprep.subr.bf16.mxu0 %v3755
  %5181 = vmatpush1.bf16.msra.mxu0 %v3754
  %5182 = vmatprep.subr.bf16.mxu0 %v3759
  %5183 = vmatpush1.bf16.msra.mxu0 %v3758
  %5184 = vmatprep.subr.bf16.mxu0 %v3763
  %5185 = vmatpush1.bf16.msra.mxu0 %v3762
  %5186 = vmatprep.subr.bf16.mxu0 %v3767
  %5187 = vmatpush1.bf16.msra.mxu0 %v3766
  %5188 = vmatprep.subr.bf16.mxu0 %v3771
  %5189 = vmatpush1.bf16.msra.mxu0 %v3770
  %5190 = vmatprep.subr.bf16.mxu0 %v3775
  %5191 = vmatpush1.bf16.msra.mxu0 %v3774
  %5192 = vmatprep.mubr.bf16.mxu0 %v942
  %5193 = vmatmul.mubr.bf16.gmra.mrb[0].mxu0 %v941
  %v5194 = vpop.f32.mrb[0].mxu0
  %v5195 = vadd.f32 %v5152, %v5194
  %v5196 = vpop.f32.mrb[0].mxu0
  %v5197 = vadd.f32 %v5154, %v5196
  %v5198 = vpop.f32.mrb[0].mxu0
  %v5199 = vadd.f32 %v5156, %v5198
  %v5200 = vpop.f32.mrb[0].mxu0
  %v5201 = vadd.f32 %v5158, %v5200
  %5202 = vdwg.mxu0
  %5203 = vmatprep.subr.bf16.mxu0 %v3779
  %5204 = vmatpush1.bf16.msra.mxu0 %v3778
  %5205 = vmatprep.subr.bf16.mxu0 %v3783
  %5206 = vmatpush1.bf16.msra.mxu0 %v3782
  %5207 = vmatprep.subr.bf16.mxu0 %v3787
  %5208 = vmatpush1.bf16.msra.mxu0 %v3786
  %5209 = vmatprep.subr.bf16.mxu0 %v3791
  %5210 = vmatpush1.bf16.msra.mxu0 %v3790
  %5211 = vmatprep.subr.bf16.mxu0 %v3795
  %5212 = vmatpush1.bf16.msra.mxu0 %v3794
  %5213 = vmatprep.subr.bf16.mxu0 %v3799
  %5214 = vmatpush1.bf16.msra.mxu0 %v3798
  %5215 = vmatprep.subr.bf16.mxu0 %v3803
  %5216 = vmatpush1.bf16.msra.mxu0 %v3802
  %5217 = vmatprep.subr.bf16.mxu0 %v3807
  %5218 = vmatpush1.bf16.msra.mxu0 %v3806
  %5219 = vmatprep.subr.bf16.mxu0 %v3811
  %5220 = vmatpush1.bf16.msra.mxu0 %v3810
  %5221 = vmatprep.subr.bf16.mxu0 %v3815
  %5222 = vmatpush1.bf16.msra.mxu0 %v3814
  %5223 = vmatprep.subr.bf16.mxu0 %v3819
  %5224 = vmatpush1.bf16.msra.mxu0 %v3818
  %5225 = vmatprep.subr.bf16.mxu0 %v3823
  %5226 = vmatpush1.bf16.msra.mxu0 %v3822
  %5227 = vmatprep.subr.bf16.mxu0 %v3827
  %5228 = vmatpush1.bf16.msra.mxu0 %v3826
  %5229 = vmatprep.subr.bf16.mxu0 %v3831
  %5230 = vmatpush1.bf16.msra.mxu0 %v3830
  %5231 = vmatprep.subr.bf16.mxu0 %v3835
  %5232 = vmatpush1.bf16.msra.mxu0 %v3834
  %5233 = vmatprep.subr.bf16.mxu0 %v3839
  %5234 = vmatpush1.bf16.msra.mxu0 %v3838
  %5235 = vmatprep.mubr.bf16.mxu0 %v944
  %5236 = vmatmul.mubr.bf16.gmra.mrb[0].mxu0 %v943
  %v5237 = vpop.f32.mrb[0].mxu0
  %v5238 = vadd.f32 %v5195, %v5237
  %v5239 = vpop.f32.mrb[0].mxu0
  %v5240 = vadd.f32 %v5197, %v5239
  %v5241 = vpop.f32.mrb[0].mxu0
  %v5242 = vadd.f32 %v5199, %v5241
  %v5243 = vpop.f32.mrb[0].mxu0
  %v5244 = vadd.f32 %v5201, %v5243
  %5245 = vdwg.mxu0
  %5246 = vmatprep.subr.bf16.mxu0 %v3843
  %5247 = vmatpush1.bf16.msra.mxu0 %v3842
  %5248 = vmatprep.subr.bf16.mxu0 %v3847
  %5249 = vmatpush1.bf16.msra.mxu0 %v3846
  %5250 = vmatprep.subr.bf16.mxu0 %v3851
  %5251 = vmatpush1.bf16.msra.mxu0 %v3850
  %5252 = vmatprep.subr.bf16.mxu0 %v3855
  %5253 = vmatpush1.bf16.msra.mxu0 %v3854
  %5254 = vmatprep.subr.bf16.mxu0 %v3859
  %5255 = vmatpush1.bf16.msra.mxu0 %v3858
  %5256 = vmatprep.subr.bf16.mxu0 %v3863
  %5257 = vmatpush1.bf16.msra.mxu0 %v3862
  %5258 = vmatprep.subr.bf16.mxu0 %v3867
  %5259 = vmatpush1.bf16.msra.mxu0 %v3866
  %5260 = vmatprep.subr.bf16.mxu0 %v3871
  %5261 = vmatpush1.bf16.msra.mxu0 %v3870
  %5262 = vmatprep.subr.bf16.mxu0 %v3875
  %5263 = vmatpush1.bf16.msra.mxu0 %v3874
  %5264 = vmatprep.subr.bf16.mxu0 %v3879
  %5265 = vmatpush1.bf16.msra.mxu0 %v3878
  %5266 = vmatprep.subr.bf16.mxu0 %v3883
  %5267 = vmatpush1.bf16.msra.mxu0 %v3882
  %5268 = vmatprep.subr.bf16.mxu0 %v3887
  %5269 = vmatpush1.bf16.msra.mxu0 %v3886
  %5270 = vmatprep.subr.bf16.mxu0 %v3891
  %5271 = vmatpush1.bf16.msra.mxu0 %v3890
  %5272 = vmatprep.subr.bf16.mxu0 %v3895
  %5273 = vmatpush1.bf16.msra.mxu0 %v3894
  %5274 = vmatprep.subr.bf16.mxu0 %v3899
  %5275 = vmatpush1.bf16.msra.mxu0 %v3898
  %5276 = vmatprep.subr.bf16.mxu0 %v3903
  %5277 = vmatpush1.bf16.msra.mxu0 %v3902
  %5278 = vmatprep.mubr.bf16.mxu0 %v946
  %5279 = vmatmul.mubr.bf16.gmra.mrb[0].mxu0 %v945
  %v5280 = vpop.f32.mrb[0].mxu0
  %v5281 = vadd.f32 %v5238, %v5280
  %v5282 = vpop.f32.mrb[0].mxu0
  %v5283 = vadd.f32 %v5240, %v5282
  %v5284 = vpop.f32.mrb[0].mxu0
  %v5285 = vadd.f32 %v5242, %v5284
  %v5286 = vpop.f32.mrb[0].mxu0
  %v5287 = vadd.f32 %v5244, %v5286
  %5288 = vdwg.mxu0
  %5289 = vmatprep.subr.bf16.mxu0 %v3907
  %5290 = vmatpush1.bf16.msra.mxu0 %v3906
  %5291 = vmatprep.subr.bf16.mxu0 %v3911
  %5292 = vmatpush1.bf16.msra.mxu0 %v3910
  %5293 = vmatprep.subr.bf16.mxu0 %v3915
  %5294 = vmatpush1.bf16.msra.mxu0 %v3914
  %5295 = vmatprep.subr.bf16.mxu0 %v3919
  %5296 = vmatpush1.bf16.msra.mxu0 %v3918
  %5297 = vmatprep.subr.bf16.mxu0 %v3923
  %5298 = vmatpush1.bf16.msra.mxu0 %v3922
  %5299 = vmatprep.subr.bf16.mxu0 %v3927
  %5300 = vmatpush1.bf16.msra.mxu0 %v3926
  %5301 = vmatprep.subr.bf16.mxu0 %v3931
  %5302 = vmatpush1.bf16.msra.mxu0 %v3930
  %5303 = vmatprep.subr.bf16.mxu0 %v3935
  %5304 = vmatpush1.bf16.msra.mxu0 %v3934
  %5305 = vmatprep.subr.bf16.mxu0 %v3939
  %5306 = vmatpush1.bf16.msra.mxu0 %v3938
  %5307 = vmatprep.subr.bf16.mxu0 %v3943
  %5308 = vmatpush1.bf16.msra.mxu0 %v3942
  %5309 = vmatprep.subr.bf16.mxu0 %v3947
  %5310 = vmatpush1.bf16.msra.mxu0 %v3946
  %5311 = vmatprep.subr.bf16.mxu0 %v3951
  %5312 = vmatpush1.bf16.msra.mxu0 %v3950
  %5313 = vmatprep.subr.bf16.mxu0 %v3955
  %5314 = vmatpush1.bf16.msra.mxu0 %v3954
  %5315 = vmatprep.subr.bf16.mxu0 %v3959
  %5316 = vmatpush1.bf16.msra.mxu0 %v3958
  %5317 = vmatprep.subr.bf16.mxu0 %v3963
  %5318 = vmatpush1.bf16.msra.mxu0 %v3962
  %5319 = vmatprep.subr.bf16.mxu0 %v3967
  %5320 = vmatpush1.bf16.msra.mxu0 %v3966
  %5321 = vmatprep.mubr.bf16.mxu0 %v948
  %5322 = vmatmul.mubr.bf16.gmra.mrb[0].mxu0 %v947
  %v5323 = vpop.f32.mrb[0].mxu0
  %v5324 = vadd.f32 %v5281, %v5323
  %v5325 = vpop.f32.mrb[0].mxu0
  %v5326 = vadd.f32 %v5283, %v5325
  %v5327 = vpop.f32.mrb[0].mxu0
  %v5328 = vadd.f32 %v5285, %v5327
  %v5329 = vpop.f32.mrb[0].mxu0
  %v5330 = vadd.f32 %v5287, %v5329
  %5331 = vdwg.mxu0
  %5332 = vmatprep.subr.bf16.mxu0 %v3971
  %5333 = vmatpush1.bf16.msra.mxu0 %v3970
  %5334 = vmatprep.subr.bf16.mxu0 %v3975
  %5335 = vmatpush1.bf16.msra.mxu0 %v3974
  %5336 = vmatprep.subr.bf16.mxu0 %v3979
  %5337 = vmatpush1.bf16.msra.mxu0 %v3978
  %5338 = vmatprep.subr.bf16.mxu0 %v3983
  %5339 = vmatpush1.bf16.msra.mxu0 %v3982
  %5340 = vmatprep.subr.bf16.mxu0 %v3987
  %5341 = vmatpush1.bf16.msra.mxu0 %v3986
  %5342 = vmatprep.subr.bf16.mxu0 %v3991
  %5343 = vmatpush1.bf16.msra.mxu0 %v3990
  %5344 = vmatprep.subr.bf16.mxu0 %v3995
  %5345 = vmatpush1.bf16.msra.mxu0 %v3994
  %5346 = vmatprep.subr.bf16.mxu0 %v3999
  %5347 = vmatpush1.bf16.msra.mxu0 %v3998
  %5348 = vmatprep.subr.bf16.mxu0 %v4003
  %5349 = vmatpush1.bf16.msra.mxu0 %v4002
  %5350 = vmatprep.subr.bf16.mxu0 %v4007
  %5351 = vmatpush1.bf16.msra.mxu0 %v4006
  %5352 = vmatprep.subr.bf16.mxu0 %v4011
  %5353 = vmatpush1.bf16.msra.mxu0 %v4010
  %5354 = vmatprep.subr.bf16.mxu0 %v4015
  %5355 = vmatpush1.bf16.msra.mxu0 %v4014
  %5356 = vmatprep.subr.bf16.mxu0 %v4019
  %5357 = vmatpush1.bf16.msra.mxu0 %v4018
  %5358 = vmatprep.subr.bf16.mxu0 %v4023
  %5359 = vmatpush1.bf16.msra.mxu0 %v4022
  %5360 = vmatprep.subr.bf16.mxu0 %v4027
  %5361 = vmatpush1.bf16.msra.mxu0 %v4026
  %5362 = vmatprep.subr.bf16.mxu0 %v4031
  %5363 = vmatpush1.bf16.msra.mxu0 %v4030
  %5364 = vmatprep.mubr.bf16.mxu0 %v950
  %5365 = vmatmul.mubr.bf16.gmra.mrb[0].mxu0 %v949
  %v5366 = vpop.f32.mrb[0].mxu0
  %v5367 = vadd.f32 %v5324, %v5366
  %v5368 = vpop.f32.mrb[0].mxu0
  %v5369 = vadd.f32 %v5326, %v5368
  %v5370 = vpop.f32.mrb[0].mxu0
  %v5371 = vadd.f32 %v5328, %v5370
  %v5372 = vpop.f32.mrb[0].mxu0
  %v5373 = vadd.f32 %v5330, %v5372
  %5374 = vdwg.mxu0
  %5375 = vmatprep.subr.bf16.mxu0 %v4035
  %5376 = vmatpush1.bf16.msra.mxu0 %v4034
  %5377 = vmatprep.subr.bf16.mxu0 %v4039
  %5378 = vmatpush1.bf16.msra.mxu0 %v4038
  %5379 = vmatprep.subr.bf16.mxu0 %v4043
  %5380 = vmatpush1.bf16.msra.mxu0 %v4042
  %5381 = vmatprep.subr.bf16.mxu0 %v4047
  %5382 = vmatpush1.bf16.msra.mxu0 %v4046
  %5383 = vmatprep.subr.bf16.mxu0 %v4051
  %5384 = vmatpush1.bf16.msra.mxu0 %v4050
  %5385 = vmatprep.subr.bf16.mxu0 %v4055
  %5386 = vmatpush1.bf16.msra.mxu0 %v4054
  %5387 = vmatprep.subr.bf16.mxu0 %v4059
  %5388 = vmatpush1.bf16.msra.mxu0 %v4058
  %5389 = vmatprep.subr.bf16.mxu0 %v4063
  %5390 = vmatpush1.bf16.msra.mxu0 %v4062
  %5391 = vmatprep.subr.bf16.mxu0 %v4067
  %5392 = vmatpush1.bf16.msra.mxu0 %v4066
  %5393 = vmatprep.subr.bf16.mxu0 %v4071
  %5394 = vmatpush1.bf16.msra.mxu0 %v4070
  %5395 = vmatprep.subr.bf16.mxu0 %v4075
  %5396 = vmatpush1.bf16.msra.mxu0 %v4074
  %5397 = vmatprep.subr.bf16.mxu0 %v4079
  %5398 = vmatpush1.bf16.msra.mxu0 %v4078
  %5399 = vmatprep.subr.bf16.mxu0 %v4083
  %5400 = vmatpush1.bf16.msra.mxu0 %v4082
  %5401 = vmatprep.subr.bf16.mxu0 %v4087
  %5402 = vmatpush1.bf16.msra.mxu0 %v4086
  %5403 = vmatprep.subr.bf16.mxu0 %v4091
  %5404 = vmatpush1.bf16.msra.mxu0 %v4090
  %5405 = vmatprep.subr.bf16.mxu0 %v4095
  %5406 = vmatpush1.bf16.msra.mxu0 %v4094
  %5407 = vmatprep.mubr.bf16.mxu0 %v952
  %5408 = vmatmul.mubr.bf16.gmra.mrb[0].mxu0 %v951
  %v5409 = vpop.f32.mrb[0].mxu0
  %v5410 = vadd.f32 %v5367, %v5409
  %v5411 = vpop.f32.mrb[0].mxu0
  %v5412 = vadd.f32 %v5369, %v5411
  %v5413 = vpop.f32.mrb[0].mxu0
  %v5414 = vadd.f32 %v5371, %v5413
  %v5415 = vpop.f32.mrb[0].mxu0
  %v5416 = vadd.f32 %v5373, %v5415
  %5417 = vdwg.mxu0
  %5418 = vmatprep.subr.bf16.mxu0 %v4099
  %5419 = vmatpush1.bf16.msra.mxu0 %v4098
  %5420 = vmatprep.subr.bf16.mxu0 %v4103
  %5421 = vmatpush1.bf16.msra.mxu0 %v4102
  %5422 = vmatprep.subr.bf16.mxu0 %v4107
  %5423 = vmatpush1.bf16.msra.mxu0 %v4106
  %5424 = vmatprep.subr.bf16.mxu0 %v4111
  %5425 = vmatpush1.bf16.msra.mxu0 %v4110
  %5426 = vmatprep.subr.bf16.mxu0 0
  %5427 = vmatpush1.bf16.msra.mxu0 0
  %5428 = vmatprep.subr.bf16.mxu0 0
  %5429 = vmatpush1.bf16.msra.mxu0 0
  %5430 = vmatprep.subr.bf16.mxu0 0
  %5431 = vmatpush1.bf16.msra.mxu0 0
  %5432 = vmatprep.subr.bf16.mxu0 0
  %5433 = vmatpush1.bf16.msra.mxu0 0
  %5434 = vmatprep.subr.bf16.mxu0 0
  %5435 = vmatpush1.bf16.msra.mxu0 0
  %5436 = vmatprep.subr.bf16.mxu0 0
  %5437 = vmatpush1.bf16.msra.mxu0 0
  %5438 = vmatprep.subr.bf16.mxu0 0
  %5439 = vmatpush1.bf16.msra.mxu0 0
  %5440 = vmatprep.subr.bf16.mxu0 0
  %5441 = vmatpush1.bf16.msra.mxu0 0
  %5442 = vmatprep.subr.bf16.mxu0 0
  %5443 = vmatpush1.bf16.msra.mxu0 0
  %5444 = vmatprep.subr.bf16.mxu0 0
  %5445 = vmatpush1.bf16.msra.mxu0 0
  %5446 = vmatprep.subr.bf16.mxu0 0
  %5447 = vmatpush1.bf16.msra.mxu0 0
  %5448 = vmatprep.subr.bf16.mxu0 0
  %5449 = vmatpush1.bf16.msra.mxu0 0
  %5450 = vmatprep.mubr.bf16.mxu0 0
  %5451 = vmatmul.mubr.bf16.gmra.mrb[0].mxu0 %v4900
  %v5452 = vpop.f32.mrb[0].mxu0
  %v5453 = vadd.f32 %v5410, %v5452
  %v5454 = vpop.f32.mrb[0].mxu0
  %v5455 = vadd.f32 %v5412, %v5454
  %v5456 = vpop.f32.mrb[0].mxu0
  %v5457 = vadd.f32 %v5414, %v5456
  %v5458 = vpop.f32.mrb[0].mxu0
  %v5459 = vadd.f32 %v5416, %v5458
  %5460 = vdwg.mxu0
  %5461 = vmatprep.subr.bf16.mxu0 %v3333
  %5462 = vmatpush1.bf16.msra.mxu0 %v3332
  %5463 = vmatprep.subr.bf16.mxu0 %v3337
  %5464 = vmatpush1.bf16.msra.mxu0 %v3336
  %5465 = vmatprep.subr.bf16.mxu0 %v3341
  %5466 = vmatpush1.bf16.msra.mxu0 %v3340
  %5467 = vmatprep.subr.bf16.mxu0 %v3345
  %5468 = vmatpush1.bf16.msra.mxu0 %v3344
  %5469 = vmatprep.subr.bf16.mxu0 %v3349
  %5470 = vmatpush1.bf16.msra.mxu0 %v3348
  %5471 = vmatprep.subr.bf16.mxu0 %v3353
  %5472 = vmatpush1.bf16.msra.mxu0 %v3352
  %5473 = vmatprep.subr.bf16.mxu0 %v3357
  %5474 = vmatpush1.bf16.msra.mxu0 %v3356
  %5475 = vmatprep.subr.bf16.mxu0 %v3361
  %5476 = vmatpush1.bf16.msra.mxu0 %v3360
  %5477 = vmatprep.subr.bf16.mxu0 %v3365
  %5478 = vmatpush1.bf16.msra.mxu0 %v3364
  %5479 = vmatprep.subr.bf16.mxu0 %v3369
  %5480 = vmatpush1.bf16.msra.mxu0 %v3368
  %5481 = vmatprep.subr.bf16.mxu0 %v3373
  %5482 = vmatpush1.bf16.msra.mxu0 %v3372
  %5483 = vmatprep.subr.bf16.mxu0 %v3377
  %5484 = vmatpush1.bf16.msra.mxu0 %v3376
  %5485 = vmatprep.subr.bf16.mxu0 %v3381
  %5486 = vmatpush1.bf16.msra.mxu0 %v3380
  %5487 = vmatprep.subr.bf16.mxu0 %v3385
  %5488 = vmatpush1.bf16.msra.mxu0 %v3384
  %5489 = vmatprep.subr.bf16.mxu0 %v3389
  %5490 = vmatpush1.bf16.msra.mxu0 %v3388
  %5491 = vmatprep.subr.bf16.mxu0 %v3393
  %5492 = vmatpush1.bf16.msra.mxu0 %v3392
  %5493 = vmatprep.mubr.bf16.mxu0 %v930
  %5494 = vmatmul.mubr.bf16.gmra.mrb[0].mxu0 %v929
  %v5495 = vpop.f32.mrb[0].mxu0
  %v5496 = vadd.f32 %v844, %v5495
  %v5497 = vpop.f32.mrb[0].mxu0
  %v5498 = vadd.f32 %v848, %v5497
  %v5499 = vpop.f32.mrb[0].mxu0
  %v5500 = vadd.f32 %v844, %v5499
  %v5501 = vpop.f32.mrb[0].mxu0
  %v5502 = vadd.f32 %v848, %v5501
  %5503 = vdwg.mxu0
  %5504 = vmatprep.subr.bf16.mxu0 %v3397
  %5505 = vmatpush1.bf16.msra.mxu0 %v3396
  %5506 = vmatprep.subr.bf16.mxu0 %v3401
  %5507 = vmatpush1.bf16.msra.mxu0 %v3400
  %5508 = vmatprep.subr.bf16.mxu0 %v3405
  %5509 = vmatpush1.bf16.msra.mxu0 %v3404
  %5510 = vmatprep.subr.bf16.mxu0 %v3409
  %5511 = vmatpush1.bf16.msra.mxu0 %v3408
  %5512 = vmatprep.subr.bf16.mxu0 %v3413
  %5513 = vmatpush1.bf16.msra.mxu0 %v3412
  %5514 = vmatprep.subr.bf16.mxu0 %v3417
  %5515 = vmatpush1.bf16.msra.mxu0 %v3416
  %5516 = vmatprep.subr.bf16.mxu0 %v3421
  %5517 = vmatpush1.bf16.msra.mxu0 %v3420
  %5518 = vmatprep.subr.bf16.mxu0 %v3425
  %5519 = vmatpush1.bf16.msra.mxu0 %v3424
  %5520 = vmatprep.subr.bf16.mxu0 %v3429
  %5521 = vmatpush1.bf16.msra.mxu0 %v3428
  %5522 = vmatprep.subr.bf16.mxu0 %v3433
  %5523 = vmatpush1.bf16.msra.mxu0 %v3432
  %5524 = vmatprep.subr.bf16.mxu0 %v3437
  %5525 = vmatpush1.bf16.msra.mxu0 %v3436
  %5526 = vmatprep.subr.bf16.mxu0 %v3441
  %5527 = vmatpush1.bf16.msra.mxu0 %v3440
  %5528 = vmatprep.subr.bf16.mxu0 %v3445
  %5529 = vmatpush1.bf16.msra.mxu0 %v3444
  %5530 = vmatprep.subr.bf16.mxu0 %v3449
  %5531 = vmatpush1.bf16.msra.mxu0 %v3448
  %5532 = vmatprep.subr.bf16.mxu0 %v3453
  %5533 = vmatpush1.bf16.msra.mxu0 %v3452
  %5534 = vmatprep.subr.bf16.mxu0 %v3457
  %5535 = vmatpush1.bf16.msra.mxu0 %v3456
  %5536 = vmatprep.mubr.bf16.mxu0 %v932
  %5537 = vmatmul.mubr.bf16.gmra.mrb[0].mxu0 %v931
  %v5538 = vpop.f32.mrb[0].mxu0
  %v5539 = vadd.f32 %v5496, %v5538
  %v5540 = vpop.f32.mrb[0].mxu0
  %v5541 = vadd.f32 %v5498, %v5540
  %v5542 = vpop.f32.mrb[0].mxu0
  %v5543 = vadd.f32 %v5500, %v5542
  %v5544 = vpop.f32.mrb[0].mxu0
  %v5545 = vadd.f32 %v5502, %v5544
  %5546 = vdwg.mxu0
  %5547 = vmatprep.subr.bf16.mxu0 %v3461
  %5548 = vmatpush1.bf16.msra.mxu0 %v3460
  %5549 = vmatprep.subr.bf16.mxu0 %v3465
  %5550 = vmatpush1.bf16.msra.mxu0 %v3464
  %5551 = vmatprep.subr.bf16.mxu0 %v3469
  %5552 = vmatpush1.bf16.msra.mxu0 %v3468
  %5553 = vmatprep.subr.bf16.mxu0 %v3473
  %5554 = vmatpush1.bf16.msra.mxu0 %v3472
  %5555 = vmatprep.subr.bf16.mxu0 %v3477
  %5556 = vmatpush1.bf16.msra.mxu0 %v3476
  %5557 = vmatprep.subr.bf16.mxu0 %v3481
  %5558 = vmatpush1.bf16.msra.mxu0 %v3480
  %5559 = vmatprep.subr.bf16.mxu0 %v3485
  %5560 = vmatpush1.bf16.msra.mxu0 %v3484
  %5561 = vmatprep.subr.bf16.mxu0 %v3489
  %5562 = vmatpush1.bf16.msra.mxu0 %v3488
  %5563 = vmatprep.subr.bf16.mxu0 %v3493
  %5564 = vmatpush1.bf16.msra.mxu0 %v3492
  %5565 = vmatprep.subr.bf16.mxu0 %v3497
  %5566 = vmatpush1.bf16.msra.mxu0 %v3496
  %5567 = vmatprep.subr.bf16.mxu0 %v3501
  %5568 = vmatpush1.bf16.msra.mxu0 %v3500
  %5569 = vmatprep.subr.bf16.mxu0 %v3505
  %5570 = vmatpush1.bf16.msra.mxu0 %v3504
  %5571 = vmatprep.subr.bf16.mxu0 %v3509
  %5572 = vmatpush1.bf16.msra.mxu0 %v3508
  %5573 = vmatprep.subr.bf16.mxu0 %v3513
  %5574 = vmatpush1.bf16.msra.mxu0 %v3512
  %5575 = vmatprep.subr.bf16.mxu0 %v3517
  %5576 = vmatpush1.bf16.msra.mxu0 %v3516
  %5577 = vmatprep.subr.bf16.mxu0 %v3521
  %5578 = vmatpush1.bf16.msra.mxu0 %v3520
  %5579 = vmatprep.mubr.bf16.mxu0 %v934
  %5580 = vmatmul.mubr.bf16.gmra.mrb[0].mxu0 %v933
  %v5581 = vpop.f32.mrb[0].mxu0
  %v5582 = vadd.f32 %v5539, %v5581
  %v5583 = vpop.f32.mrb[0].mxu0
  %v5584 = vadd.f32 %v5541, %v5583
  %v5585 = vpop.f32.mrb[0].mxu0
  %v5586 = vadd.f32 %v5543, %v5585
  %v5587 = vpop.f32.mrb[0].mxu0
  %v5588 = vadd.f32 %v5545, %v5587
  %5589 = vdwg.mxu0
  %5590 = vmatprep.subr.bf16.mxu0 %v3525
  %5591 = vmatpush1.bf16.msra.mxu0 %v3524
  %5592 = vmatprep.subr.bf16.mxu0 %v3529
  %5593 = vmatpush1.bf16.msra.mxu0 %v3528
  %5594 = vmatprep.subr.bf16.mxu0 %v3533
  %5595 = vmatpush1.bf16.msra.mxu0 %v3532
  %5596 = vmatprep.subr.bf16.mxu0 %v3537
  %5597 = vmatpush1.bf16.msra.mxu0 %v3536
  %5598 = vmatprep.subr.bf16.mxu0 %v3541
  %5599 = vmatpush1.bf16.msra.mxu0 %v3540
  %5600 = vmatprep.subr.bf16.mxu0 %v3545
  %5601 = vmatpush1.bf16.msra.mxu0 %v3544
  %5602 = vmatprep.subr.bf16.mxu0 %v3549
  %5603 = vmatpush1.bf16.msra.mxu0 %v3548
  %5604 = vmatprep.subr.bf16.mxu0 %v3553
  %5605 = vmatpush1.bf16.msra.mxu0 %v3552
  %5606 = vmatprep.subr.bf16.mxu0 %v3557
  %5607 = vmatpush1.bf16.msra.mxu0 %v3556
  %5608 = vmatprep.subr.bf16.mxu0 %v3561
  %5609 = vmatpush1.bf16.msra.mxu0 %v3560
  %5610 = vmatprep.subr.bf16.mxu0 %v3565
  %5611 = vmatpush1.bf16.msra.mxu0 %v3564
  %5612 = vmatprep.subr.bf16.mxu0 %v3569
  %5613 = vmatpush1.bf16.msra.mxu0 %v3568
  %5614 = vmatprep.subr.bf16.mxu0 %v3573
  %5615 = vmatpush1.bf16.msra.mxu0 %v3572
  %5616 = vmatprep.subr.bf16.mxu0 %v3577
  %5617 = vmatpush1.bf16.msra.mxu0 %v3576
  %5618 = vmatprep.subr.bf16.mxu0 %v3581
  %5619 = vmatpush1.bf16.msra.mxu0 %v3580
  %5620 = vmatprep.subr.bf16.mxu0 %v3585
  %5621 = vmatpush1.bf16.msra.mxu0 %v3584
  %5622 = vmatprep.mubr.bf16.mxu0 %v936
  %5623 = vmatmul.mubr.bf16.gmra.mrb[0].mxu0 %v935
  %v5624 = vpop.f32.mrb[0].mxu0
  %v5625 = vadd.f32 %v5582, %v5624
  %v5626 = vpop.f32.mrb[0].mxu0
  %v5627 = vadd.f32 %v5584, %v5626
  %v5628 = vpop.f32.mrb[0].mxu0
  %v5629 = vadd.f32 %v5586, %v5628
  %v5630 = vpop.f32.mrb[0].mxu0
  %v5631 = vadd.f32 %v5588, %v5630
  %5632 = vdwg.mxu0
  %5633 = vmatprep.subr.bf16.mxu0 %v3589
  %5634 = vmatpush1.bf16.msra.mxu0 %v3588
  %5635 = vmatprep.subr.bf16.mxu0 %v3593
  %5636 = vmatpush1.bf16.msra.mxu0 %v3592
  %5637 = vmatprep.subr.bf16.mxu0 %v3597
  %5638 = vmatpush1.bf16.msra.mxu0 %v3596
  %5639 = vmatprep.subr.bf16.mxu0 %v3601
  %5640 = vmatpush1.bf16.msra.mxu0 %v3600
  %5641 = vmatprep.subr.bf16.mxu0 %v3605
  %5642 = vmatpush1.bf16.msra.mxu0 %v3604
  %5643 = vmatprep.subr.bf16.mxu0 %v3609
  %5644 = vmatpush1.bf16.msra.mxu0 %v3608
  %5645 = vmatprep.subr.bf16.mxu0 %v3613
  %5646 = vmatpush1.bf16.msra.mxu0 %v3612
  %5647 = vmatprep.subr.bf16.mxu0 %v3617
  %5648 = vmatpush1.bf16.msra.mxu0 %v3616
  %5649 = vmatprep.subr.bf16.mxu0 %v3621
  %5650 = vmatpush1.bf16.msra.mxu0 %v3620
  %5651 = vmatprep.subr.bf16.mxu0 %v3625
  %5652 = vmatpush1.bf16.msra.mxu0 %v3624
  %5653 = vmatprep.subr.bf16.mxu0 %v3629
  %5654 = vmatpush1.bf16.msra.mxu0 %v3628
  %5655 = vmatprep.subr.bf16.mxu0 %v3633
  %5656 = vmatpush1.bf16.msra.mxu0 %v3632
  %5657 = vmatprep.subr.bf16.mxu0 %v3637
  %5658 = vmatpush1.bf16.msra.mxu0 %v3636
  %5659 = vmatprep.subr.bf16.mxu0 %v3641
  %5660 = vmatpush1.bf16.msra.mxu0 %v3640
  %5661 = vmatprep.subr.bf16.mxu0 %v3645
  %5662 = vmatpush1.bf16.msra.mxu0 %v3644
  %5663 = vmatprep.subr.bf16.mxu0 %v3649
  %5664 = vmatpush1.bf16.msra.mxu0 %v3648
  %5665 = vmatprep.mubr.bf16.mxu0 %v938
  %5666 = vmatmul.mubr.bf16.gmra.mrb[0].mxu0 %v937
  %v5667 = vpop.f32.mrb[0].mxu0
  %v5668 = vadd.f32 %v5625, %v5667
  %v5669 = vpop.f32.mrb[0].mxu0
  %v5670 = vadd.f32 %v5627, %v5669
  %v5671 = vpop.f32.mrb[0].mxu0
  %v5672 = vadd.f32 %v5629, %v5671
  %v5673 = vpop.f32.mrb[0].mxu0
  %v5674 = vadd.f32 %v5631, %v5673
  %5675 = vdwg.mxu0
  %5676 = vmatprep.subr.bf16.mxu0 %v3653
  %5677 = vmatpush1.bf16.msra.mxu0 %v3652
  %5678 = vmatprep.subr.bf16.mxu0 %v3657
  %5679 = vmatpush1.bf16.msra.mxu0 %v3656
  %5680 = vmatprep.subr.bf16.mxu0 %v3661
  %5681 = vmatpush1.bf16.msra.mxu0 %v3660
  %5682 = vmatprep.subr.bf16.mxu0 %v3665
  %5683 = vmatpush1.bf16.msra.mxu0 %v3664
  %5684 = vmatprep.subr.bf16.mxu0 %v3669
  %5685 = vmatpush1.bf16.msra.mxu0 %v3668
  %5686 = vmatprep.subr.bf16.mxu0 %v3673
  %5687 = vmatpush1.bf16.msra.mxu0 %v3672
  %5688 = vmatprep.subr.bf16.mxu0 %v3677
  %5689 = vmatpush1.bf16.msra.mxu0 %v3676
  %5690 = vmatprep.subr.bf16.mxu0 %v3681
  %5691 = vmatpush1.bf16.msra.mxu0 %v3680
  %5692 = vmatprep.subr.bf16.mxu0 %v3685
  %5693 = vmatpush1.bf16.msra.mxu0 %v3684
  %5694 = vmatprep.subr.bf16.mxu0 %v3689
  %5695 = vmatpush1.bf16.msra.mxu0 %v3688
  %5696 = vmatprep.subr.bf16.mxu0 %v3693
  %5697 = vmatpush1.bf16.msra.mxu0 %v3692
  %5698 = vmatprep.subr.bf16.mxu0 %v3697
  %5699 = vmatpush1.bf16.msra.mxu0 %v3696
  %5700 = vmatprep.subr.bf16.mxu0 %v3701
  %5701 = vmatpush1.bf16.msra.mxu0 %v3700
  %5702 = vmatprep.subr.bf16.mxu0 %v3705
  %5703 = vmatpush1.bf16.msra.mxu0 %v3704
  %5704 = vmatprep.subr.bf16.mxu0 %v3709
  %5705 = vmatpush1.bf16.msra.mxu0 %v3708
  %5706 = vmatprep.subr.bf16.mxu0 %v3713
  %5707 = vmatpush1.bf16.msra.mxu0 %v3712
  %5708 = vmatprep.mubr.bf16.mxu0 %v940
  %5709 = vmatmul.mubr.bf16.gmra.mrb[0].mxu0 %v939
  %v5710 = vpop.f32.mrb[0].mxu0
  %v5711 = vadd.f32 %v5668, %v5710
  %v5712 = vpop.f32.mrb[0].mxu0
  %v5713 = vadd.f32 %v5670, %v5712
  %v5714 = vpop.f32.mrb[0].mxu0
  %v5715 = vadd.f32 %v5672, %v5714
  %v5716 = vpop.f32.mrb[0].mxu0
  %v5717 = vadd.f32 %v5674, %v5716
  %5718 = vdwg.mxu0
  %5719 = vmatprep.subr.bf16.mxu0 %v3717
  %5720 = vmatpush1.bf16.msra.mxu0 %v3716
  %5721 = vmatprep.subr.bf16.mxu0 %v3721
  %5722 = vmatpush1.bf16.msra.mxu0 %v3720
  %5723 = vmatprep.subr.bf16.mxu0 %v3725
  %5724 = vmatpush1.bf16.msra.mxu0 %v3724
  %5725 = vmatprep.subr.bf16.mxu0 %v3729
  %5726 = vmatpush1.bf16.msra.mxu0 %v3728
  %5727 = vmatprep.subr.bf16.mxu0 %v3733
  %5728 = vmatpush1.bf16.msra.mxu0 %v3732
  %5729 = vmatprep.subr.bf16.mxu0 %v3737
  %5730 = vmatpush1.bf16.msra.mxu0 %v3736
  %5731 = vmatprep.subr.bf16.mxu0 %v3741
  %5732 = vmatpush1.bf16.msra.mxu0 %v3740
  %5733 = vmatprep.subr.bf16.mxu0 %v3745
  %5734 = vmatpush1.bf16.msra.mxu0 %v3744
  %5735 = vmatprep.subr.bf16.mxu0 %v3749
  %5736 = vmatpush1.bf16.msra.mxu0 %v3748
  %5737 = vmatprep.subr.bf16.mxu0 %v3753
  %5738 = vmatpush1.bf16.msra.mxu0 %v3752
  %5739 = vmatprep.subr.bf16.mxu0 %v3757
  %5740 = vmatpush1.bf16.msra.mxu0 %v3756
  %5741 = vmatprep.subr.bf16.mxu0 %v3761
  %5742 = vmatpush1.bf16.msra.mxu0 %v3760
  %5743 = vmatprep.subr.bf16.mxu0 %v3765
  %5744 = vmatpush1.bf16.msra.mxu0 %v3764
  %5745 = vmatprep.subr.bf16.mxu0 %v3769
  %5746 = vmatpush1.bf16.msra.mxu0 %v3768
  %5747 = vmatprep.subr.bf16.mxu0 %v3773
  %5748 = vmatpush1.bf16.msra.mxu0 %v3772
  %5749 = vmatprep.subr.bf16.mxu0 %v3777
  %5750 = vmatpush1.bf16.msra.mxu0 %v3776
  %5751 = vmatprep.mubr.bf16.mxu0 %v942
  %5752 = vmatmul.mubr.bf16.gmra.mrb[0].mxu0 %v941
  %v5753 = vpop.f32.mrb[0].mxu0
  %v5754 = vadd.f32 %v5711, %v5753
  %v5755 = vpop.f32.mrb[0].mxu0
  %v5756 = vadd.f32 %v5713, %v5755
  %v5757 = vpop.f32.mrb[0].mxu0
  %v5758 = vadd.f32 %v5715, %v5757
  %v5759 = vpop.f32.mrb[0].mxu0
  %v5760 = vadd.f32 %v5717, %v5759
  %5761 = vdwg.mxu0
  %5762 = vmatprep.subr.bf16.mxu0 %v3781
  %5763 = vmatpush1.bf16.msra.mxu0 %v3780
  %5764 = vmatprep.subr.bf16.mxu0 %v3785
  %5765 = vmatpush1.bf16.msra.mxu0 %v3784
  %5766 = vmatprep.subr.bf16.mxu0 %v3789
  %5767 = vmatpush1.bf16.msra.mxu0 %v3788
  %5768 = vmatprep.subr.bf16.mxu0 %v3793
  %5769 = vmatpush1.bf16.msra.mxu0 %v3792
  %5770 = vmatprep.subr.bf16.mxu0 %v3797
  %5771 = vmatpush1.bf16.msra.mxu0 %v3796
  %5772 = vmatprep.subr.bf16.mxu0 %v3801
  %5773 = vmatpush1.bf16.msra.mxu0 %v3800
  %5774 = vmatprep.subr.bf16.mxu0 %v3805
  %5775 = vmatpush1.bf16.msra.mxu0 %v3804
  %5776 = vmatprep.subr.bf16.mxu0 %v3809
  %5777 = vmatpush1.bf16.msra.mxu0 %v3808
  %5778 = vmatprep.subr.bf16.mxu0 %v3813
  %5779 = vmatpush1.bf16.msra.mxu0 %v3812
  %5780 = vmatprep.subr.bf16.mxu0 %v3817
  %5781 = vmatpush1.bf16.msra.mxu0 %v3816
  %5782 = vmatprep.subr.bf16.mxu0 %v3821
  %5783 = vmatpush1.bf16.msra.mxu0 %v3820
  %5784 = vmatprep.subr.bf16.mxu0 %v3825
  %5785 = vmatpush1.bf16.msra.mxu0 %v3824
  %5786 = vmatprep.subr.bf16.mxu0 %v3829
  %5787 = vmatpush1.bf16.msra.mxu0 %v3828
  %5788 = vmatprep.subr.bf16.mxu0 %v3833
  %5789 = vmatpush1.bf16.msra.mxu0 %v3832
  %5790 = vmatprep.subr.bf16.mxu0 %v3837
  %5791 = vmatpush1.bf16.msra.mxu0 %v3836
  %5792 = vmatprep.subr.bf16.mxu0 %v3841
  %5793 = vmatpush1.bf16.msra.mxu0 %v3840
  %5794 = vmatprep.mubr.bf16.mxu0 %v944
  %5795 = vmatmul.mubr.bf16.gmra.mrb[0].mxu0 %v943
  %v5796 = vpop.f32.mrb[0].mxu0
  %v5797 = vadd.f32 %v5754, %v5796
  %v5798 = vpop.f32.mrb[0].mxu0
  %v5799 = vadd.f32 %v5756, %v5798
  %v5800 = vpop.f32.mrb[0].mxu0
  %v5801 = vadd.f32 %v5758, %v5800
  %v5802 = vpop.f32.mrb[0].mxu0
  %v5803 = vadd.f32 %v5760, %v5802
  %5804 = vdwg.mxu0
  %5805 = vmatprep.subr.bf16.mxu0 %v3845
  %5806 = vmatpush1.bf16.msra.mxu0 %v3844
  %5807 = vmatprep.subr.bf16.mxu0 %v3849
  %5808 = vmatpush1.bf16.msra.mxu0 %v3848
  %5809 = vmatprep.subr.bf16.mxu0 %v3853
  %5810 = vmatpush1.bf16.msra.mxu0 %v3852
  %5811 = vmatprep.subr.bf16.mxu0 %v3857
  %5812 = vmatpush1.bf16.msra.mxu0 %v3856
  %5813 = vmatprep.subr.bf16.mxu0 %v3861
  %5814 = vmatpush1.bf16.msra.mxu0 %v3860
  %5815 = vmatprep.subr.bf16.mxu0 %v3865
  %5816 = vmatpush1.bf16.msra.mxu0 %v3864
  %5817 = vmatprep.subr.bf16.mxu0 %v3869
  %5818 = vmatpush1.bf16.msra.mxu0 %v3868
  %5819 = vmatprep.subr.bf16.mxu0 %v3873
  %5820 = vmatpush1.bf16.msra.mxu0 %v3872
  %5821 = vmatprep.subr.bf16.mxu0 %v3877
  %5822 = vmatpush1.bf16.msra.mxu0 %v3876
  %5823 = vmatprep.subr.bf16.mxu0 %v3881
  %5824 = vmatpush1.bf16.msra.mxu0 %v3880
  %5825 = vmatprep.subr.bf16.mxu0 %v3885
  %5826 = vmatpush1.bf16.msra.mxu0 %v3884
  %5827 = vmatprep.subr.bf16.mxu0 %v3889
  %5828 = vmatpush1.bf16.msra.mxu0 %v3888
  %5829 = vmatprep.subr.bf16.mxu0 %v3893
  %5830 = vmatpush1.bf16.msra.mxu0 %v3892
  %5831 = vmatprep.subr.bf16.mxu0 %v3897
  %5832 = vmatpush1.bf16.msra.mxu0 %v3896
  %5833 = vmatprep.subr.bf16.mxu0 %v3901
  %5834 = vmatpush1.bf16.msra.mxu0 %v3900
  %5835 = vmatprep.subr.bf16.mxu0 %v3905
  %5836 = vmatpush1.bf16.msra.mxu0 %v3904
  %5837 = vmatprep.mubr.bf16.mxu0 %v946
  %5838 = vmatmul.mubr.bf16.gmra.mrb[0].mxu0 %v945
  %v5839 = vpop.f32.mrb[0].mxu0
  %v5840 = vadd.f32 %v5797, %v5839
  %v5841 = vpop.f32.mrb[0].mxu0
  %v5842 = vadd.f32 %v5799, %v5841
  %v5843 = vpop.f32.mrb[0].mxu0
  %v5844 = vadd.f32 %v5801, %v5843
  %v5845 = vpop.f32.mrb[0].mxu0
  %v5846 = vadd.f32 %v5803, %v5845
  %5847 = vdwg.mxu0
  %5848 = vmatprep.subr.bf16.mxu0 %v3909
  %5849 = vmatpush1.bf16.msra.mxu0 %v3908
  %5850 = vmatprep.subr.bf16.mxu0 %v3913
  %5851 = vmatpush1.bf16.msra.mxu0 %v3912
  %5852 = vmatprep.subr.bf16.mxu0 %v3917
  %5853 = vmatpush1.bf16.msra.mxu0 %v3916
  %5854 = vmatprep.subr.bf16.mxu0 %v3921
  %5855 = vmatpush1.bf16.msra.mxu0 %v3920
  %5856 = vmatprep.subr.bf16.mxu0 %v3925
  %5857 = vmatpush1.bf16.msra.mxu0 %v3924
  %5858 = vmatprep.subr.bf16.mxu0 %v3929
  %5859 = vmatpush1.bf16.msra.mxu0 %v3928
  %5860 = vmatprep.subr.bf16.mxu0 %v3933
  %5861 = vmatpush1.bf16.msra.mxu0 %v3932
  %5862 = vmatprep.subr.bf16.mxu0 %v3937
  %5863 = vmatpush1.bf16.msra.mxu0 %v3936
  %5864 = vmatprep.subr.bf16.mxu0 %v3941
  %5865 = vmatpush1.bf16.msra.mxu0 %v3940
  %5866 = vmatprep.subr.bf16.mxu0 %v3945
  %5867 = vmatpush1.bf16.msra.mxu0 %v3944
  %5868 = vmatprep.subr.bf16.mxu0 %v3949
  %5869 = vmatpush1.bf16.msra.mxu0 %v3948
  %5870 = vmatprep.subr.bf16.mxu0 %v3953
  %5871 = vmatpush1.bf16.msra.mxu0 %v3952
  %5872 = vmatprep.subr.bf16.mxu0 %v3957
  %5873 = vmatpush1.bf16.msra.mxu0 %v3956
  %5874 = vmatprep.subr.bf16.mxu0 %v3961
  %5875 = vmatpush1.bf16.msra.mxu0 %v3960
  %5876 = vmatprep.subr.bf16.mxu0 %v3965
  %5877 = vmatpush1.bf16.msra.mxu0 %v3964
  %5878 = vmatprep.subr.bf16.mxu0 %v3969
  %5879 = vmatpush1.bf16.msra.mxu0 %v3968
  %5880 = vmatprep.mubr.bf16.mxu0 %v948
  %5881 = vmatmul.mubr.bf16.gmra.mrb[0].mxu0 %v947
  %v5882 = vpop.f32.mrb[0].mxu0
  %v5883 = vadd.f32 %v5840, %v5882
  %v5884 = vpop.f32.mrb[0].mxu0
  %v5885 = vadd.f32 %v5842, %v5884
  %v5886 = vpop.f32.mrb[0].mxu0
  %v5887 = vadd.f32 %v5844, %v5886
  %v5888 = vpop.f32.mrb[0].mxu0
  %v5889 = vadd.f32 %v5846, %v5888
  %5890 = vdwg.mxu0
  %5891 = vmatprep.subr.bf16.mxu0 %v3973
  %5892 = vmatpush1.bf16.msra.mxu0 %v3972
  %5893 = vmatprep.subr.bf16.mxu0 %v3977
  %5894 = vmatpush1.bf16.msra.mxu0 %v3976
  %5895 = vmatprep.subr.bf16.mxu0 %v3981
  %5896 = vmatpush1.bf16.msra.mxu0 %v3980
  %5897 = vmatprep.subr.bf16.mxu0 %v3985
  %5898 = vmatpush1.bf16.msra.mxu0 %v3984
  %5899 = vmatprep.subr.bf16.mxu0 %v3989
  %5900 = vmatpush1.bf16.msra.mxu0 %v3988
  %5901 = vmatprep.subr.bf16.mxu0 %v3993
  %5902 = vmatpush1.bf16.msra.mxu0 %v3992
  %5903 = vmatprep.subr.bf16.mxu0 %v3997
  %5904 = vmatpush1.bf16.msra.mxu0 %v3996
  %5905 = vmatprep.subr.bf16.mxu0 %v4001
  %5906 = vmatpush1.bf16.msra.mxu0 %v4000
  %5907 = vmatprep.subr.bf16.mxu0 %v4005
  %5908 = vmatpush1.bf16.msra.mxu0 %v4004
  %5909 = vmatprep.subr.bf16.mxu0 %v4009
  %5910 = vmatpush1.bf16.msra.mxu0 %v4008
  %5911 = vmatprep.subr.bf16.mxu0 %v4013
  %5912 = vmatpush1.bf16.msra.mxu0 %v4012
  %5913 = vmatprep.subr.bf16.mxu0 %v4017
  %5914 = vmatpush1.bf16.msra.mxu0 %v4016
  %5915 = vmatprep.subr.bf16.mxu0 %v4021
  %5916 = vmatpush1.bf16.msra.mxu0 %v4020
  %5917 = vmatprep.subr.bf16.mxu0 %v4025
  %5918 = vmatpush1.bf16.msra.mxu0 %v4024
  %5919 = vmatprep.subr.bf16.mxu0 %v4029
  %5920 = vmatpush1.bf16.msra.mxu0 %v4028
  %5921 = vmatprep.subr.bf16.mxu0 %v4033
  %5922 = vmatpush1.bf16.msra.mxu0 %v4032
  %5923 = vmatprep.mubr.bf16.mxu0 %v950
  %5924 = vmatmul.mubr.bf16.gmra.mrb[0].mxu0 %v949
  %v5925 = vpop.f32.mrb[0].mxu0
  %v5926 = vadd.f32 %v5883, %v5925
  %v5927 = vpop.f32.mrb[0].mxu0
  %v5928 = vadd.f32 %v5885, %v5927
  %v5929 = vpop.f32.mrb[0].mxu0
  %v5930 = vadd.f32 %v5887, %v5929
  %v5931 = vpop.f32.mrb[0].mxu0
  %v5932 = vadd.f32 %v5889, %v5931
  %5933 = vdwg.mxu0
  %5934 = vmatprep.subr.bf16.mxu0 %v4037
  %5935 = vmatpush1.bf16.msra.mxu0 %v4036
  %5936 = vmatprep.subr.bf16.mxu0 %v4041
  %5937 = vmatpush1.bf16.msra.mxu0 %v4040
  %5938 = vmatprep.subr.bf16.mxu0 %v4045
  %5939 = vmatpush1.bf16.msra.mxu0 %v4044
  %5940 = vmatprep.subr.bf16.mxu0 %v4049
  %5941 = vmatpush1.bf16.msra.mxu0 %v4048
  %5942 = vmatprep.subr.bf16.mxu0 %v4053
  %5943 = vmatpush1.bf16.msra.mxu0 %v4052
  %5944 = vmatprep.subr.bf16.mxu0 %v4057
  %5945 = vmatpush1.bf16.msra.mxu0 %v4056
  %5946 = vmatprep.subr.bf16.mxu0 %v4061
  %5947 = vmatpush1.bf16.msra.mxu0 %v4060
  %5948 = vmatprep.subr.bf16.mxu0 %v4065
  %5949 = vmatpush1.bf16.msra.mxu0 %v4064
  %5950 = vmatprep.subr.bf16.mxu0 %v4069
  %5951 = vmatpush1.bf16.msra.mxu0 %v4068
  %5952 = vmatprep.subr.bf16.mxu0 %v4073
  %5953 = vmatpush1.bf16.msra.mxu0 %v4072
  %5954 = vmatprep.subr.bf16.mxu0 %v4077
  %5955 = vmatpush1.bf16.msra.mxu0 %v4076
  %5956 = vmatprep.subr.bf16.mxu0 %v4081
  %5957 = vmatpush1.bf16.msra.mxu0 %v4080
  %5958 = vmatprep.subr.bf16.mxu0 %v4085
  %5959 = vmatpush1.bf16.msra.mxu0 %v4084
  %5960 = vmatprep.subr.bf16.mxu0 %v4089
  %5961 = vmatpush1.bf16.msra.mxu0 %v4088
  %5962 = vmatprep.subr.bf16.mxu0 %v4093
  %5963 = vmatpush1.bf16.msra.mxu0 %v4092
  %5964 = vmatprep.subr.bf16.mxu0 %v4097
  %5965 = vmatpush1.bf16.msra.mxu0 %v4096
  %5966 = vmatprep.mubr.bf16.mxu0 %v952
  %5967 = vmatmul.mubr.bf16.gmra.mrb[0].mxu0 %v951
  %v5968 = vpop.f32.mrb[0].mxu0
  %v5969 = vadd.f32 %v5926, %v5968
  %v5970 = vpop.f32.mrb[0].mxu0
  %v5971 = vadd.f32 %v5928, %v5970
  %v5972 = vpop.f32.mrb[0].mxu0
  %v5973 = vadd.f32 %v5930, %v5972
  %v5974 = vpop.f32.mrb[0].mxu0
  %v5975 = vadd.f32 %v5932, %v5974
  %5976 = vdwg.mxu0
  %5977 = vmatprep.subr.bf16.mxu0 %v4101
  %5978 = vmatpush1.bf16.msra.mxu0 %v4100
  %5979 = vmatprep.subr.bf16.mxu0 %v4105
  %5980 = vmatpush1.bf16.msra.mxu0 %v4104
  %5981 = vmatprep.subr.bf16.mxu0 %v4109
  %5982 = vmatpush1.bf16.msra.mxu0 %v4108
  %5983 = vmatprep.subr.bf16.mxu0 %v4113
  %5984 = vmatpush1.bf16.msra.mxu0 %v4112
  %5985 = vmatprep.subr.bf16.mxu0 0
  %5986 = vmatpush1.bf16.msra.mxu0 0
  %5987 = vmatprep.subr.bf16.mxu0 0
  %5988 = vmatpush1.bf16.msra.mxu0 0
  %5989 = vmatprep.subr.bf16.mxu0 0
  %5990 = vmatpush1.bf16.msra.mxu0 0
  %5991 = vmatprep.subr.bf16.mxu0 0
  %5992 = vmatpush1.bf16.msra.mxu0 0
  %5993 = vmatprep.subr.bf16.mxu0 0
  %5994 = vmatpush1.bf16.msra.mxu0 0
  %5995 = vmatprep.subr.bf16.mxu0 0
  %5996 = vmatpush1.bf16.msra.mxu0 0
  %5997 = vmatprep.subr.bf16.mxu0 0
  %5998 = vmatpush1.bf16.msra.mxu0 0
  %5999 = vmatprep.subr.bf16.mxu0 0
  %6000 = vmatpush1.bf16.msra.mxu0 0
  %6001 = vmatprep.subr.bf16.mxu0 0
  %6002 = vmatpush1.bf16.msra.mxu0 0
  %6003 = vmatprep.subr.bf16.mxu0 0
  %6004 = vmatpush1.bf16.msra.mxu0 0
  %6005 = vmatprep.subr.bf16.mxu0 0
  %6006 = vmatpush1.bf16.msra.mxu0 0
  %6007 = vmatprep.subr.bf16.mxu0 0
  %6008 = vmatpush1.bf16.msra.mxu0 0
  %6009 = vmatprep.mubr.bf16.mxu0 0
  %6010 = vmatmul.mubr.bf16.gmra.mrb[0].mxu0 %v4900
  %v6011 = vpop.f32.mrb[0].mxu0
  %v6012 = vadd.f32 %v5969, %v6011
  %v6013 = vpop.f32.mrb[0].mxu0
  %v6014 = vadd.f32 %v5971, %v6013
  %v6015 = vpop.f32.mrb[0].mxu0
  %v6016 = vadd.f32 %v5973, %v6015
  %v6017 = vpop.f32.mrb[0].mxu0
  %v6018 = vadd.f32 %v5975, %v6017
  %6019 = vdwg.mxu0
  %v6020 = vmax.f32 %v5453, 0.0
  %v6021 = vmax.f32 %v5455, 0.0
  %v6022 = vmax.f32 %v6012, 0.0
  %v6023 = vmax.f32 %v6014, 0.0
  %v6024 = vmax.f32 %v5457, 0.0
  %v6025 = vmax.f32 %v5459, 0.0
  %v6026 = vmax.f32 %v6016, 0.0
  %v6027 = vmax.f32 %v6018, 0.0
  %v6028 = vpack.c.bf16 %v6024, %v6020
  %v6029 = vpack.c.bf16 %v6025, %v6021
  %v6030 = vpack.c.bf16 %v6026, %v6022
  %v6031 = vpack.c.bf16 %v6027, %v6023
  %v6032 = vld [vmem:[%s3] sm:$0xf]
  %v6033 = vld [vmem:[%s3 + $0x4] sm:$0xf]
  %v6034 = vld [vmem:[%s3 + $0x8] sm:$0xf]
  %v6035 = vld [vmem:[%s3 + $0xc] sm:$0xf]
  %v6036 = vld [vmem:[%s3 + $0x10] sm:$0xf]
  %v6037 = vld [vmem:[%s3 + $0x14] sm:$0xf]
  %v6038 = vld [vmem:[%s3 + $0x18] sm:$0xf]
  %v6039 = vld [vmem:[%s3 + $0x1c] sm:$0xf]
  %v6040 = vld [vmem:[%s3 + $0x20] sm:$0xf]
  %v6041 = vld [vmem:[%s3 + $0x24] sm:$0xf]
  %v6042 = vld [vmem:[%s3 + $0x28] sm:$0xf]
  %v6043 = vld [vmem:[%s3 + $0x2c] sm:$0xf]
  %v6044 = vld [vmem:[%s3 + $0x30] sm:$0xf]
  %v6045 = vld [vmem:[%s3 + $0x34] sm:$0xf]
  %v6046 = vld [vmem:[%s3 + $0x38] sm:$0xf]
  %v6047 = vld [vmem:[%s3 + $0x3c] sm:$0xf]
  %v6048 = vld [vmem:[%s3 + $0x40] sm:$0xf]
  %v6049 = vld [vmem:[%s3 + $0x44] sm:$0xf]
  %v6050 = vld [vmem:[%s3 + $0x48] sm:$0xf]
  %v6051 = vld [vmem:[%s3 + $0x4c] sm:$0xf]
  %v6052 = vld [vmem:[%s3 + $0x50] sm:$0xf]
  %v6053 = vld [vmem:[%s3 + $0x54] sm:$0xf]
  %v6054 = vld [vmem:[%s3 + $0x58] sm:$0xf]
  %v6055 = vld [vmem:[%s3 + $0x5c] sm:$0xf]
  %v6056 = vld [vmem:[%s3 + $0x60] sm:$0xf]
  %v6057 = vld [vmem:[%s3 + $0x64] sm:$0xf]
  %v6058 = vld [vmem:[%s3 + $0x68] sm:$0xf]
  %v6059 = vld [vmem:[%s3 + $0x6c] sm:$0xf]
  %v6060 = vld [vmem:[%s3 + $0x70] sm:$0xf]
  %v6061 = vld [vmem:[%s3 + $0x74] sm:$0xf]
  %v6062 = vld [vmem:[%s3 + $0x78] sm:$0xf]
  %v6063 = vld [vmem:[%s3 + $0x7c] sm:$0xf]
  %v6064 = vld [vmem:[%s3 + $0x80] sm:$0xf]
  %v6065 = vld [vmem:[%s3 + $0x84] sm:$0xf]
  %v6066 = vld [vmem:[%s3 + $0x88] sm:$0xf]
  %v6067 = vld [vmem:[%s3 + $0x8c] sm:$0xf]
  %v6068 = vld [vmem:[%s3 + $0x90] sm:$0xf]
  %v6069 = vld [vmem:[%s3 + $0x94] sm:$0xf]
  %v6070 = vld [vmem:[%s3 + $0x98] sm:$0xf]
  %v6071 = vld [vmem:[%s3 + $0x9c] sm:$0xf]
  %v6072 = vld [vmem:[%s3 + $0xa0] sm:$0xf]
  %v6073 = vld [vmem:[%s3 + $0xa4] sm:$0xf]
  %v6074 = vld [vmem:[%s3 + $0xa8] sm:$0xf]
  %v6075 = vld [vmem:[%s3 + $0xac] sm:$0xf]
  %v6076 = vld [vmem:[%s3 + $0xb0] sm:$0xf]
  %v6077 = vld [vmem:[%s3 + $0xb4] sm:$0xf]
  %v6078 = vld [vmem:[%s3 + $0xb8] sm:$0xf]
  %v6079 = vld [vmem:[%s3 + $0xbc] sm:$0xf]
  %v6080 = vld [vmem:[%s3 + $0xc0] sm:$0xf]
  %v6081 = vld [vmem:[%s3 + $0xc4] sm:$0xf]
  %v6082 = vld [vmem:[%s3 + $0xc8] sm:$0xf]
  %v6083 = vld [vmem:[%s3 + $0xcc] sm:$0xf]
  %v6084 = vld [vmem:[%s3 + $0xd0] sm:$0xf]
  %v6085 = vld [vmem:[%s3 + $0xd4] sm:$0xf]
  %v6086 = vld [vmem:[%s3 + $0xd8] sm:$0xf]
  %v6087 = vld [vmem:[%s3 + $0xdc] sm:$0xf]
  %v6088 = vld [vmem:[%s3 + $0xe0] sm:$0xf]
  %v6089 = vld [vmem:[%s3 + $0xe4] sm:$0xf]
  %v6090 = vld [vmem:[%s3 + $0xe8] sm:$0xf]
  %v6091 = vld [vmem:[%s3 + $0xec] sm:$0xf]
  %v6092 = vld [vmem:[%s3 + $0xf0] sm:$0xf]
  %v6093 = vld [vmem:[%s3 + $0xf4] sm:$0xf]
  %v6094 = vld [vmem:[%s3 + $0xf8] sm:$0xf]
  %v6095 = vld [vmem:[%s3 + $0xfc] sm:$0xf]
  %v6096 = vld [vmem:[%s4] sm:$0x1]
  %v6098 = vlaneseq
  %v6099 = vshrl.u32 %v6098, 7
  %v6100 = vsub.s32 0, %v6099
  %v6101 = vrot.slane %v6096, %v6100
  %v6167 = vunpack.c.l.b16 %v6032
  %v6168 = vunpack.c.l.b16 %v6033
  %v6169 = vunpack.c.l.b16 %v6034
  %v6170 = vunpack.c.l.b16 %v6035
  %v6171 = vunpack.c.l.b16 %v6036
  %v6172 = vunpack.c.l.b16 %v6037
  %v6173 = vunpack.c.l.b16 %v6038
  %v6174 = vunpack.c.l.b16 %v6039
  %v6175 = vunpack.c.l.b16 %v6040
  %v6176 = vunpack.c.l.b16 %v6041
  %v6177 = vunpack.c.l.b16 %v6042
  %v6178 = vunpack.c.l.b16 %v6043
  %v6179 = vunpack.c.l.b16 %v6044
  %v6180 = vunpack.c.l.b16 %v6045
  %v6181 = vunpack.c.l.b16 %v6046
  %v6182 = vunpack.c.l.b16 %v6047
  %v6183 = vunpack.c.l.b16 %v6048
  %v6184 = vunpack.c.l.b16 %v6049
  %v6185 = vunpack.c.l.b16 %v6050
  %v6186 = vunpack.c.l.b16 %v6051
  %v6187 = vunpack.c.l.b16 %v6052
  %v6188 = vunpack.c.l.b16 %v6053
  %v6189 = vunpack.c.l.b16 %v6054
  %v6190 = vunpack.c.l.b16 %v6055
  %v6191 = vunpack.c.l.b16 %v6056
  %v6192 = vunpack.c.l.b16 %v6057
  %v6193 = vunpack.c.l.b16 %v6058
  %v6194 = vunpack.c.l.b16 %v6059
  %v6195 = vunpack.c.l.b16 %v6060
  %v6196 = vunpack.c.l.b16 %v6061
  %v6197 = vunpack.c.l.b16 %v6062
  %v6198 = vunpack.c.l.b16 %v6063
  %v6199 = vunpack.c.l.b16 %v6064
  %v6200 = vunpack.c.l.b16 %v6065
  %v6201 = vunpack.c.l.b16 %v6066
  %v6202 = vunpack.c.l.b16 %v6067
  %v6203 = vunpack.c.l.b16 %v6068
  %v6204 = vunpack.c.l.b16 %v6069
  %v6205 = vunpack.c.l.b16 %v6070
  %v6206 = vunpack.c.l.b16 %v6071
  %v6207 = vunpack.c.l.b16 %v6072
  %v6208 = vunpack.c.l.b16 %v6073
  %v6209 = vunpack.c.l.b16 %v6074
  %v6210 = vunpack.c.l.b16 %v6075
  %v6211 = vunpack.c.l.b16 %v6076
  %v6212 = vunpack.c.l.b16 %v6077
  %v6213 = vunpack.c.l.b16 %v6078
  %v6214 = vunpack.c.l.b16 %v6079
  %v6215 = vunpack.c.l.b16 %v6080
  %v6216 = vunpack.c.l.b16 %v6081
  %v6217 = vunpack.c.l.b16 %v6082
  %v6218 = vunpack.c.l.b16 %v6083
  %v6219 = vunpack.c.l.b16 %v6084
  %v6220 = vunpack.c.l.b16 %v6085
  %v6221 = vunpack.c.l.b16 %v6086
  %v6222 = vunpack.c.l.b16 %v6087
  %v6223 = vunpack.c.l.b16 %v6088
  %v6224 = vunpack.c.l.b16 %v6089
  %v6225 = vunpack.c.l.b16 %v6090
  %v6226 = vunpack.c.l.b16 %v6091
  %v6227 = vunpack.c.l.b16 %v6092
  %v6228 = vunpack.c.l.b16 %v6093
  %v6229 = vunpack.c.l.b16 %v6094
  %v6230 = vunpack.c.l.b16 %v6095
  %v6231 = vpack.c.b16 %v6168, %v6167
  %v6232 = vpack.c.b16 %v6170, %v6169
  %v6233 = vpack.c.b16 %v6172, %v6171
  %v6234 = vpack.c.b16 %v6174, %v6173
  %v6235 = vpack.c.b16 %v6176, %v6175
  %v6236 = vpack.c.b16 %v6178, %v6177
  %v6237 = vpack.c.b16 %v6180, %v6179
  %v6238 = vpack.c.b16 %v6182, %v6181
  %v6239 = vpack.c.b16 %v6184, %v6183
  %v6240 = vpack.c.b16 %v6186, %v6185
  %v6241 = vpack.c.b16 %v6188, %v6187
  %v6242 = vpack.c.b16 %v6190, %v6189
  %v6243 = vpack.c.b16 %v6192, %v6191
  %v6244 = vpack.c.b16 %v6194, %v6193
  %v6245 = vpack.c.b16 %v6196, %v6195
  %v6246 = vpack.c.b16 %v6198, %v6197
  %v6247 = vpack.c.b16 %v6200, %v6199
  %v6248 = vpack.c.b16 %v6202, %v6201
  %v6249 = vpack.c.b16 %v6204, %v6203
  %v6250 = vpack.c.b16 %v6206, %v6205
  %v6251 = vpack.c.b16 %v6208, %v6207
  %v6252 = vpack.c.b16 %v6210, %v6209
  %v6253 = vpack.c.b16 %v6212, %v6211
  %v6254 = vpack.c.b16 %v6214, %v6213
  %v6255 = vpack.c.b16 %v6216, %v6215
  %v6256 = vpack.c.b16 %v6218, %v6217
  %v6257 = vpack.c.b16 %v6220, %v6219
  %v6258 = vpack.c.b16 %v6222, %v6221
  %v6259 = vpack.c.b16 %v6224, %v6223
  %v6260 = vpack.c.b16 %v6226, %v6225
  %v6261 = vpack.c.b16 %v6228, %v6227
  %v6262 = vpack.c.b16 %v6230, %v6229
  %6295 = vmatprep.subr.bf16.mxu0 0
  %6296 = vmatpush1.bf16.msra.mxu0 %v6231
  %6297 = vmatprep.subr.bf16.mxu0 0
  %6298 = vmatpush1.bf16.msra.mxu0 %v6232
  %6299 = vmatprep.subr.bf16.mxu0 0
  %6300 = vmatpush1.bf16.msra.mxu0 %v6233
  %6301 = vmatprep.subr.bf16.mxu0 0
  %6302 = vmatpush1.bf16.msra.mxu0 %v6234
  %6303 = vmatprep.subr.bf16.mxu0 0
  %6304 = vmatpush1.bf16.msra.mxu0 %v6235
  %6305 = vmatprep.subr.bf16.mxu0 0
  %6306 = vmatpush1.bf16.msra.mxu0 %v6236
  %6307 = vmatprep.subr.bf16.mxu0 0
  %6308 = vmatpush1.bf16.msra.mxu0 %v6237
  %6309 = vmatprep.subr.bf16.mxu0 0
  %6310 = vmatpush1.bf16.msra.mxu0 %v6238
  %6311 = vmatprep.subr.bf16.mxu0 0
  %6312 = vmatpush1.bf16.msra.mxu0 %v6239
  %6313 = vmatprep.subr.bf16.mxu0 0
  %6314 = vmatpush1.bf16.msra.mxu0 %v6240
  %6315 = vmatprep.subr.bf16.mxu0 0
  %6316 = vmatpush1.bf16.msra.mxu0 %v6241
  %6317 = vmatprep.subr.bf16.mxu0 0
  %6318 = vmatpush1.bf16.msra.mxu0 %v6242
  %6319 = vmatprep.subr.bf16.mxu0 0
  %6320 = vmatpush1.bf16.msra.mxu0 %v6243
  %6321 = vmatprep.subr.bf16.mxu0 0
  %6322 = vmatpush1.bf16.msra.mxu0 %v6244
  %6323 = vmatprep.subr.bf16.mxu0 0
  %6324 = vmatpush1.bf16.msra.mxu0 %v6245
  %6325 = vmatprep.subr.bf16.mxu0 0
  %6326 = vmatpush1.bf16.msra.mxu0 %v6246
  %6327 = vmatprep.mubr.bf16.mxu0 %v6029
  %6328 = vmatmul.mubr.bf16.gmra.mrb[0].mxu0 %v6028
  %v6329 = vpop.f32.mrb[0].mxu0
  %v6330 = vadd.f32 %v6101, %v6329
  %v6331 = vpop.f32.mrb[0].mxu0
  %v6332 = vpop.f32.mrb[0].mxu0
  %v6333 = vadd.f32 %v6101, %v6332
  %v6334 = vpop.f32.mrb[0].mxu0
  %6335 = vdwg.mxu0
  %6336 = vmatprep.subr.bf16.mxu0 0
  %6337 = vmatpush1.bf16.msra.mxu0 %v6247
  %6338 = vmatprep.subr.bf16.mxu0 0
  %6339 = vmatpush1.bf16.msra.mxu0 %v6248
  %6340 = vmatprep.subr.bf16.mxu0 0
  %6341 = vmatpush1.bf16.msra.mxu0 %v6249
  %6342 = vmatprep.subr.bf16.mxu0 0
  %6343 = vmatpush1.bf16.msra.mxu0 %v6250
  %6344 = vmatprep.subr.bf16.mxu0 0
  %6345 = vmatpush1.bf16.msra.mxu0 %v6251
  %6346 = vmatprep.subr.bf16.mxu0 0
  %6347 = vmatpush1.bf16.msra.mxu0 %v6252
  %6348 = vmatprep.subr.bf16.mxu0 0
  %6349 = vmatpush1.bf16.msra.mxu0 %v6253
  %6350 = vmatprep.subr.bf16.mxu0 0
  %6351 = vmatpush1.bf16.msra.mxu0 %v6254
  %6352 = vmatprep.subr.bf16.mxu0 0
  %6353 = vmatpush1.bf16.msra.mxu0 %v6255
  %6354 = vmatprep.subr.bf16.mxu0 0
  %6355 = vmatpush1.bf16.msra.mxu0 %v6256
  %6356 = vmatprep.subr.bf16.mxu0 0
  %6357 = vmatpush1.bf16.msra.mxu0 %v6257
  %6358 = vmatprep.subr.bf16.mxu0 0
  %6359 = vmatpush1.bf16.msra.mxu0 %v6258
  %6360 = vmatprep.subr.bf16.mxu0 0
  %6361 = vmatpush1.bf16.msra.mxu0 %v6259
  %6362 = vmatprep.subr.bf16.mxu0 0
  %6363 = vmatpush1.bf16.msra.mxu0 %v6260
  %6364 = vmatprep.subr.bf16.mxu0 0
  %6365 = vmatpush1.bf16.msra.mxu0 %v6261
  %6366 = vmatprep.subr.bf16.mxu0 0
  %6367 = vmatpush1.bf16.msra.mxu0 %v6262
  %6368 = vmatprep.mubr.bf16.mxu0 %v6031
  %6369 = vmatmul.mubr.bf16.gmra.mrb[0].mxu0 %v6030
  %v6370 = vpop.f32.mrb[0].mxu0
  %v6371 = vadd.f32 %v6330, %v6370
  %v6372 = vpop.f32.mrb[0].mxu0
  %v6373 = vpop.f32.mrb[0].mxu0
  %v6374 = vadd.f32 %v6333, %v6373
  %v6375 = vpop.f32.mrb[0].mxu0
  %6376 = vdwg.mxu0
  %vm6377 = vcmask 15360
  %6378 = vst.msk [vmem:[%s5] sm:$0xff] %vm6377, %v6371
  %6379 = vst.msk [vmem:[%s5 + $0x8] sm:$0xff] %vm6377, %v6374
  // Predicated region
  $region22: #{forward.7} parent=0 // pred_check
    _
  $region23: #{forward.7} parent=0 // pred_check_branch
    %6381 = sbr.rel (0) target = $region25
  $region24: #{forward.7} parent=0 // pred_region
    _
  $region25: #{forward.7} parent=0 // pred_fallthru
    _
  // Predicated region
  $region26: #{forward.7} parent=0 // pred_check
    _
  $region27: #{forward.7} parent=0 // pred_check_branch
    %6383 = sbr.rel (0) target = $region29
  $region28: #{forward.7} parent=0 // pred_region
    _
  $region29: #{forward.7} parent=0 // pred_fallthru
    _

</llo_original>
